<compile_context>
chip_gen: v6e
topology: v6e:2x2x1
jax: 0.10.0
libtpu: 0.0.40
codegen_flags: <defaults>
</compile_context>

<pallas_src>
import functools

import numpy as np
import jax
import jax.numpy as jnp
from jax import lax
from jax.experimental import pallas as pl
from jax.experimental.pallas import tpu as pltpu


def _round8(x):
    return ((x + 7) // 8) * 8


class _BlockGeom:
    """Static geometry for one Conv3x3(pad=1)+BN+ReLU+MaxPool2x2 block, with the
    (H+2, W+2) zero-padded image flattened row-major into a (P, Cin) slab."""

    def __init__(self, H, W, cin, cout):
        assert H % 2 == 0 and W % 2 == 0
        self.H, self.W, self.cin, self.cout = H, W, cin, cout
        self.Hp, self.Wp = H + 2, W + 2
        self.L = self.Hp * self.Wp                     # real padded-image rows
        # Row extents of intermediate slabs.  Rows beyond the valid region hold
        # junk but are never selected downstream.
        self.R_v = _round8((H - 2) * self.Wp + W)      # 2x2-pool source rows
        self.R_h = _round8(self.R_v + self.Wp)         # horizontal-max rows
        self.R_y = _round8(self.R_h + 1)               # conv output rows
        self.P = _round8(self.R_y + 2 * self.Wp + 2)   # input slab rows
        assert self.P >= self.L
        self.tap_offsets = [kh * self.Wp + kw for kh in range(3) for kw in range(3)]
        self.Ho, self.Wo = H // 2, W // 2              # pooled output image


def _mid_selection(g, g_next):
    """(g_next.P, g.R_v) 0/1 matrix: pool-decimate this block's vmax slab and
    scatter it straight into the next block's zero-padded flat input slab."""
    assert g.Ho == g_next.H and g.Wo == g_next.W and g.cout == g_next.cin
    S = np.zeros((g_next.P, g.R_v), np.float32)
    for i in range(g.Ho):
        for j in range(g.Wo):
            dst = (i + 1) * g_next.Wp + (j + 1)        # interior of padded next image
            src = (2 * i) * g.Wp + (2 * j)             # top-left of 2x2 window
            S[dst, src] = 1.0
    return S


def _final_selection(g):
    """(Ho*Wo, g.R_v): pool-decimate the last block into (h, w) row order."""
    S = np.zeros((g.Ho * g.Wo, g.R_v), np.float32)
    for i in range(g.Ho):
        for j in range(g.Wo):
            S[i * g.Wo + j, (2 * i) * g.Wp + (2 * j)] = 1.0
    return S


# ----------------------------------------------------------------------------
# Fused backbone kernel: conv(im2col matmul) + bias + ReLU + pool(selection
# matmul) for every block, chunk images per grid step.
# ----------------------------------------------------------------------------
def _backbone_kernel(*refs, geoms, chunk, use_im2col):
    x_ref, out_ref = refs[0], refs[-1]
    prm = refs[1:-1]                                   # (w, bias, sel) per block
    for img in range(chunk):
        a = x_ref[img]                                 # (P0, Cin0) flat padded slab
        for bi, g in enumerate(geoms):
            w_ref, bias_ref, sel_ref = prm[3 * bi], prm[3 * bi + 1], prm[3 * bi + 2]
            taps = [a[off:off + g.R_y, :] for off in g.tap_offsets]
            if use_im2col:
                im = jnp.concatenate(taps, axis=1)     # (R_y, 9*cin)
                y = jnp.dot(im, w_ref[...], preferred_element_type=jnp.float32)
            else:
                # fallback: 9 shifted matmuls (same math)
                y = jnp.zeros((g.R_y, g.cout), jnp.float32)
                for k in range(9):
                    y = y + jnp.dot(taps[k], w_ref[k * g.cin:(k + 1) * g.cin, :],
                                    preferred_element_type=jnp.float32)
            y = jnp.maximum(y + bias_ref[...], 0.0)    # folded BN bias + ReLU
            # 2x2 max-pool: shifted maxima, then decimate + re-pad via matmul
            hm = jnp.maximum(y[0:g.R_h, :], y[1:g.R_h + 1, :])
            vm = jnp.maximum(hm[0:g.R_v, :], hm[g.Wp:g.Wp + g.R_v, :])
            a = jnp.dot(sel_ref[...], vm, preferred_element_type=jnp.float32)
        out_ref[img] = a.astype(out_ref.dtype)         # (Hf*Wf, C_last)


# ----------------------------------------------------------------------------
# Feature backbone (plays the role of `self.feature = model_func()`)
# ----------------------------------------------------------------------------
class ConvFeaturePallas:
    def __init__(self, key, in_ch=4, hid=(8, 16), hw=16, eps=1e-5):
        chans = (in_ch,) + tuple(hid)
        keys = jax.random.split(key, 4 * len(hid))
        self.eps = eps
        self.blocks = []
        self.geoms = []
        H = W = hw
        for i in range(len(hid)):
            cin, cout = chans[i], chans[i + 1]
            k0, k1, k2, k3 = keys[4 * i:4 * i + 4]
            w = jax.random.normal(k0, (3, 3, cin, cout), jnp.float32) * 0.1
            b = jax.random.normal(k1, (cout,), jnp.float32) * 0.05
            gamma = jax.random.uniform(k2, (cout,), jnp.float32, 0.5, 1.5)
            beta = jax.random.normal(k3, (cout,), jnp.float32) * 0.1
            mean = jnp.zeros((cout,), jnp.float32)
            var = jnp.ones((cout,), jnp.float32)
            self.blocks.append((w, b, gamma, beta, mean, var))
            g = _BlockGeom(H, W, cin, cout)
            self.geoms.append(g)
            H, W = g.Ho, g.Wo
        self.final_feat_dim = H * W * chans[-1]

        # Fold BN scale into the conv weights, BN shift into a single bias.
        self.folded = []
        for (w, b, gamma, beta, mean, var), g in zip(self.blocks, self.geoms):
            scale = gamma / jnp.sqrt(var + eps)
            w_eff = (w.reshape(9 * g.cin, g.cout) * scale[None, :]).astype(jnp.float32)
            b_eff = ((b - mean) * scale + beta).reshape(1, g.cout).astype(jnp.float32)
            self.folded.append((w_eff, b_eff))

        # Constant 0/1 pool/decimate/re-pad selection matrices.
        self.sel = []
        for i, g in enumerate(self.geoms):
            if i + 1 < len(self.geoms):
                S = _mid_selection(g, self.geoms[i + 1])
            else:
                S = _final_selection(g)
            self.sel.append(jnp.asarray(S))

        self._use_im2col = None
        self._cache = {}

    # ---- host-side input prep: one transpose + pad of the raw input --------
    def _prep_input(self, x_nchw, npad):
        g0 = self.geoms[0]
        N = x_nchw.shape[0]
        x = jnp.transpose(x_nchw, (0, 2, 3, 1)).astype(jnp.float32)   # NHWC
        x = jnp.pad(x, ((0, npad - N), (1, 1), (1, 1), (0, 0)))
        x = x.reshape(npad, g0.L, g0.cin)
        return jnp.pad(x, ((0, 0), (0, g0.P - g0.L), (0, 0)))

    def _make_call(self, N, use_im2col):
        G = 2 if N >= 2 else 1            # >=2 parallel steps -> both v7x cores
        chunk = -(-N // G)                # images per grid step
        npad = G * chunk
        g0, gl = self.geoms[0], self.geoms[-1]
        out_rows = gl.Ho * gl.Wo

        kernel = functools.partial(_backbone_kernel, geoms=tuple(self.geoms),
                                   chunk=chunk, use_im2col=use_im2col)

        in_specs = [pl.BlockSpec((chunk, g0.P, g0.cin), lambda i: (i, 0, 0))]
        params = []
        for (w_eff, b_eff), S in zip(self.folded, self.sel):
            params += [w_eff, b_eff, S]
            in_specs += [pl.BlockSpec(w_eff.shape, lambda i: (0, 0)),
                         pl.BlockSpec(b_eff.shape, lambda i: (0, 0)),
                         pl.BlockSpec(S.shape, lambda i: (0, 0))]

        call = pl.pallas_call(
            kernel,
            out_shape=jax.ShapeDtypeStruct((npad, out_rows, gl.cout), jnp.float32),
            grid=(G,),
            in_specs=in_specs,
            out_specs=pl.BlockSpec((chunk, out_rows, gl.cout), lambda i: (i, 0, 0)),
            compiler_params=pltpu.CompilerParams(dimension_semantics=("parallel",)),
        )

        def fwd(x_nchw, *ps):
            xs = self._prep_input(x_nchw, npad)
            out = call(xs, *ps)
            return out.reshape(npad, out_rows * gl.cout)[:N]

        return jax.jit(fwd), params

    def _get(self, N, use_im2col):
        key = (N, bool(use_im2col))
        if key not in self._cache:
            self._cache[key] = self._make_call(N, use_im2col)
        return self._cache[key]

    def forward(self, x_nchw):
        N = int(x_nchw.shape[0])
        if self._use_im2col is None:
            # Prefer the single im2col matmul per conv; fall back to the proven
            # 9-shifted-matmul path if lane-axis concat fails to lower.
            try:
                fn, ps = self._get(N, True)
                out = jax.block_until_ready(fn(x_nchw, *ps))
                self._use_im2col = True
                return out
            except Exception:
                self._use_im2col = False
        fn, ps = self._get(N, self._use_im2col)
        return fn(x_nchw, *ps)

    # pure-JAX reference (for correctness check)
    def forward_ref(self, x_nchw):
        x = jnp.transpose(x_nchw, (0, 2, 3, 1))
        for (w, b, g, be, m, v) in self.blocks:
            y = lax.conv_general_dilated(
                x, w, (1, 1), ((1, 1), (1, 1)),
                dimension_numbers=("NHWC", "HWIO", "NHWC"))
            scale = g / jnp.sqrt(v + self.eps)
            y = (y + b - m) * scale + be
            y = jnp.maximum(y, 0.0)
            x = lax.reduce_window(y, -jnp.inf, lax.max,
                                  (1, 2, 2, 1), (1, 2, 2, 1), "VALID")
        return x.reshape(x.shape[0], -1)


# ----------------------------------------------------------------------------
# MetaTemplate (forward + feature parsing; training/loss loops are host logic)
# ----------------------------------------------------------------------------
class MetaTemplatePallas:
    def __init__(self, model_func, n_way, n_support, change_way=True):
        self.n_way = n_way
        self.n_support = n_support
        self.n_query = -1
        self.feature = model_func()
        self.feat_dim = self.feature.final_feat_dim
        self.change_way = change_way

    def forward(self, x):
        # x: (N, C, H, W) NCHW, matching the PyTorch module's forward
        return self.feature.forward(x)

    def parse_feature(self, x, is_feature):
        # x: (n_way, n_support + n_query, C, H, W) episodic tensor
        if is_feature:
            z_all = x
        else:
            xr = x.reshape((self.n_way * (self.n_support + self.n_query),) + x.shape[2:])
            z_all = self.feature.forward(xr)
            z_all = z_all.reshape(self.n_way, self.n_support + self.n_query, -1)
        z_support = z_all[:, :self.n_support]
        z_query = z_all[:, self.n_support:]
        return z_support, z_query

    # TODO(synk): set_forward / set_forward_loss / total_loss are abstract in
    # the reference module; train/test loops, CrossEntropy loss, accuracy and
    # the SGD linear probe (set_forward_adaptation) are host-side training
    # logic, not kernels.


if __name__ == "__main__":
    key = jax.random.PRNGKey(0)
    k_param, k_x = jax.random.split(key)

    feature = ConvFeaturePallas(k_param, in_ch=4, hid=(8, 16), hw=16)
    model = MetaTemplatePallas(lambda: feature, n_way=2, n_support=1)

    # plain forward on a small image batch (NCHW, like PyTorch)
    x = jax.random.normal(k_x, (2, 4, 16, 16), jnp.float32)
    out = jax.block_until_ready(model.forward(x))

    # check against pure-JAX reference
    ref = jax.block_until_ready(feature.forward_ref(x))
    assert out.shape == (2, feature.final_feat_dim)
    assert jnp.allclose(out, ref, rtol=1e-3, atol=1e-3), "mismatch vs reference"

    # exercise episodic parsing too (n_way=2, n_support=1, n_query=2) -> N=6
    model.n_query = 2
    x_epi = jax.random.normal(jax.random.PRNGKey(1), (2, 3, 4, 16, 16), jnp.float32)
    z_s, z_q = model.parse_feature(x_epi, is_feature=False)
    jax.block_until_ready((z_s, z_q))
    assert z_s.shape == (2, 1, feature.final_feat_dim)
    assert z_q.shape == (2, 2, feature.final_feat_dim)
    z_all = jnp.concatenate([z_s, z_q], axis=1).reshape(6, -1)
    ref_epi = jax.block_until_ready(feature.forward_ref(x_epi.reshape(6, 4, 16, 16)))
    assert jnp.allclose(z_all, ref_epi, rtol=1e-3, atol=1e-3), "episodic mismatch"

    print("KERNEL_OK")
</pallas_src>

<mosaic_0001>
module attributes {stable_mosaic.version = 11 : i64} {
  func.func @_backbone_kernel(%arg0: i32, %arg1: memref<1x344x4xf32, #tpu.memory_space<vmem>>, %arg2: memref<36x8xf32, #tpu.memory_space<vmem>>, %arg3: memref<1x8xf32, #tpu.memory_space<vmem>>, %arg4: memref<120x272xf32, #tpu.memory_space<vmem>>, %arg5: memref<72x16xf32, #tpu.memory_space<vmem>>, %arg6: memref<1x16xf32, #tpu.memory_space<vmem>>, %arg7: memref<16x72xf32, #tpu.memory_space<vmem>>, %arg8: memref<1x16x16xf32, #tpu.memory_space<vmem>>) attributes {dimension_semantics = [#tpu.dimension_semantics<parallel>], iteration_bounds = array<i64: 2>, scalar_prefetch = 0 : i64, scratch_operands = 0 : i64, tpu.core_type = #tpu.core_type<tc>, window_params = [{transform_indices = @transform_0, window_bounds = array<i64: 1, 344, 4>}, {pipeline_mode = #tpu.pipeline_mode<synchronous>, transform_indices = @transform_1, window_bounds = array<i64: 36, 8>}, {pipeline_mode = #tpu.pipeline_mode<synchronous>, transform_indices = @transform_2, window_bounds = array<i64: 1, 8>}, {pipeline_mode = #tpu.pipeline_mode<synchronous>, transform_indices = @transform_3, window_bounds = array<i64: 120, 272>}, {pipeline_mode = #tpu.pipeline_mode<synchronous>, transform_indices = @transform_4, window_bounds = array<i64: 72, 16>}, {pipeline_mode = #tpu.pipeline_mode<synchronous>, transform_indices = @transform_5, window_bounds = array<i64: 1, 16>}, {pipeline_mode = #tpu.pipeline_mode<synchronous>, transform_indices = @transform_6, window_bounds = array<i64: 16, 72>}, {transform_indices = @transform_7, window_bounds = array<i64: 1, 16, 16>}]} {
    %c0 = arith.constant 0 : index
    %c0_0 = arith.constant 0 : index
    %c0_1 = arith.constant 0 : index
    %0 = vector.load %arg1[%c0, %c0_0, %c0_1] : memref<1x344x4xf32, #tpu.memory_space<vmem>>, vector<1x344x4xf32>
    %1 = vector.shape_cast %0 : vector<1x344x4xf32> to vector<344x4xf32>
    %2 = vector.extract_strided_slice %1 {offsets = [0, 0], sizes = [304, 4], strides = [1, 1]} : vector<344x4xf32> to vector<304x4xf32>
    %3 = vector.extract_strided_slice %1 {offsets = [1, 0], sizes = [304, 4], strides = [1, 1]} : vector<344x4xf32> to vector<304x4xf32>
    %4 = vector.extract_strided_slice %1 {offsets = [2, 0], sizes = [304, 4], strides = [1, 1]} : vector<344x4xf32> to vector<304x4xf32>
    %5 = vector.extract_strided_slice %1 {offsets = [18, 0], sizes = [304, 4], strides = [1, 1]} : vector<344x4xf32> to vector<304x4xf32>
    %6 = vector.extract_strided_slice %1 {offsets = [19, 0], sizes = [304, 4], strides = [1, 1]} : vector<344x4xf32> to vector<304x4xf32>
    %7 = vector.extract_strided_slice %1 {offsets = [20, 0], sizes = [304, 4], strides = [1, 1]} : vector<344x4xf32> to vector<304x4xf32>
    %8 = vector.extract_strided_slice %1 {offsets = [36, 0], sizes = [304, 4], strides = [1, 1]} : vector<344x4xf32> to vector<304x4xf32>
    %9 = vector.extract_strided_slice %1 {offsets = [37, 0], sizes = [304, 4], strides = [1, 1]} : vector<344x4xf32> to vector<304x4xf32>
    %10 = vector.extract_strided_slice %1 {offsets = [38, 0], sizes = [304, 4], strides = [1, 1]} : vector<344x4xf32> to vector<304x4xf32>
    %11 = tpu.concatenate %2, %3, %4, %5, %6, %7, %8, %9, %10 in 1 : vector<304x4xf32>, vector<304x4xf32>, vector<304x4xf32>, vector<304x4xf32>, vector<304x4xf32>, vector<304x4xf32>, vector<304x4xf32>, vector<304x4xf32>, vector<304x4xf32> -> vector<304x36xf32>
    %c0_2 = arith.constant 0 : index
    %c0_3 = arith.constant 0 : index
    %12 = vector.load %arg2[%c0_2, %c0_3] : memref<36x8xf32, #tpu.memory_space<vmem>>, vector<36x8xf32>
    %cst = arith.constant dense<0.000000e+00> : vector<304x8xf32>
    %13 = tpu.matmul %11, %12, %cst {dimension_numbers = #tpu.dot_dimension_numbers<[1], [0], [0], [1], [0, 0, 1, 1], [], []>} : vector<304x36xf32>, vector<36x8xf32>, vector<304x8xf32> -> vector<304x8xf32>
    %c0_4 = arith.constant 0 : index
    %c0_5 = arith.constant 0 : index
    %14 = vector.load %arg3[%c0_4, %c0_5] : memref<1x8xf32, #tpu.memory_space<vmem>>, vector<1x8xf32>
    %15 = vector.broadcast %14 : vector<1x8xf32> to vector<304x8xf32>
    %16 = arith.addf %13, %15 : vector<304x8xf32>
    %cst_6 = arith.constant 0.000000e+00 : f32
    %17 = vector.broadcast %cst_6 : f32 to vector<304x8xf32>
    %18 = arith.maximumf %16, %17 : vector<304x8xf32>
    %19 = vector.extract_strided_slice %18 {offsets = [0, 0], sizes = [296, 8], strides = [1, 1]} : vector<304x8xf32> to vector<296x8xf32>
    %20 = vector.extract_strided_slice %18 {offsets = [1, 0], sizes = [296, 8], strides = [1, 1]} : vector<304x8xf32> to vector<296x8xf32>
    %21 = arith.maximumf %19, %20 : vector<296x8xf32>
    %22 = vector.extract_strided_slice %21 {offsets = [0, 0], sizes = [272, 8], strides = [1, 1]} : vector<296x8xf32> to vector<272x8xf32>
    %23 = vector.extract_strided_slice %21 {offsets = [18, 0], sizes = [272, 8], strides = [1, 1]} : vector<296x8xf32> to vector<272x8xf32>
    %24 = arith.maximumf %22, %23 : vector<272x8xf32>
    %c0_7 = arith.constant 0 : index
    %c0_8 = arith.constant 0 : index
    %25 = vector.load %arg4[%c0_7, %c0_8] : memref<120x272xf32, #tpu.memory_space<vmem>>, vector<120x272xf32>
    %cst_9 = arith.constant dense<0.000000e+00> : vector<120x8xf32>
    %26 = tpu.matmul %25, %24, %cst_9 {dimension_numbers = #tpu.dot_dimension_numbers<[1], [0], [0], [1], [0, 0, 1, 1], [], []>} : vector<120x272xf32>, vector<272x8xf32>, vector<120x8xf32> -> vector<120x8xf32>
    %27 = vector.extract_strided_slice %26 {offsets = [0, 0], sizes = [96, 8], strides = [1, 1]} : vector<120x8xf32> to vector<96x8xf32>
    %28 = vector.extract_strided_slice %26 {offsets = [1, 0], sizes = [96, 8], strides = [1, 1]} : vector<120x8xf32> to vector<96x8xf32>
    %29 = vector.extract_strided_slice %26 {offsets = [2, 0], sizes = [96, 8], strides = [1, 1]} : vector<120x8xf32> to vector<96x8xf32>
    %30 = vector.extract_strided_slice %26 {offsets = [10, 0], sizes = [96, 8], strides = [1, 1]} : vector<120x8xf32> to vector<96x8xf32>
    %31 = vector.extract_strided_slice %26 {offsets = [11, 0], sizes = [96, 8], strides = [1, 1]} : vector<120x8xf32> to vector<96x8xf32>
    %32 = vector.extract_strided_slice %26 {offsets = [12, 0], sizes = [96, 8], strides = [1, 1]} : vector<120x8xf32> to vector<96x8xf32>
    %33 = vector.extract_strided_slice %26 {offsets = [20, 0], sizes = [96, 8], strides = [1, 1]} : vector<120x8xf32> to vector<96x8xf32>
    %34 = vector.extract_strided_slice %26 {offsets = [21, 0], sizes = [96, 8], strides = [1, 1]} : vector<120x8xf32> to vector<96x8xf32>
    %35 = vector.extract_strided_slice %26 {offsets = [22, 0], sizes = [96, 8], strides = [1, 1]} : vector<120x8xf32> to vector<96x8xf32>
    %36 = tpu.concatenate %27, %28, %29, %30, %31, %32, %33, %34, %35 in 1 : vector<96x8xf32>, vector<96x8xf32>, vector<96x8xf32>, vector<96x8xf32>, vector<96x8xf32>, vector<96x8xf32>, vector<96x8xf32>, vector<96x8xf32>, vector<96x8xf32> -> vector<96x72xf32>
    %c0_10 = arith.constant 0 : index
    %c0_11 = arith.constant 0 : index
    %37 = vector.load %arg5[%c0_10, %c0_11] : memref<72x16xf32, #tpu.memory_space<vmem>>, vector<72x16xf32>
    %cst_12 = arith.constant dense<0.000000e+00> : vector<96x16xf32>
    %38 = tpu.matmul %36, %37, %cst_12 {dimension_numbers = #tpu.dot_dimension_numbers<[1], [0], [0], [1], [0, 0, 1, 1], [], []>} : vector<96x72xf32>, vector<72x16xf32>, vector<96x16xf32> -> vector<96x16xf32>
    %c0_13 = arith.constant 0 : index
    %c0_14 = arith.constant 0 : index
    %39 = vector.load %arg6[%c0_13, %c0_14] : memref<1x16xf32, #tpu.memory_space<vmem>>, vector<1x16xf32>
    %40 = vector.broadcast %39 : vector<1x16xf32> to vector<96x16xf32>
    %41 = arith.addf %38, %40 : vector<96x16xf32>
    %cst_15 = arith.constant 0.000000e+00 : f32
    %42 = vector.broadcast %cst_15 : f32 to vector<96x16xf32>
    %43 = arith.maximumf %41, %42 : vector<96x16xf32>
    %44 = vector.extract_strided_slice %43 {offsets = [0, 0], sizes = [88, 16], strides = [1, 1]} : vector<96x16xf32> to vector<88x16xf32>
    %45 = vector.extract_strided_slice %43 {offsets = [1, 0], sizes = [88, 16], strides = [1, 1]} : vector<96x16xf32> to vector<88x16xf32>
    %46 = arith.maximumf %44, %45 : vector<88x16xf32>
    %47 = vector.extract_strided_slice %46 {offsets = [0, 0], sizes = [72, 16], strides = [1, 1]} : vector<88x16xf32> to vector<72x16xf32>
    %48 = vector.extract_strided_slice %46 {offsets = [10, 0], sizes = [72, 16], strides = [1, 1]} : vector<88x16xf32> to vector<72x16xf32>
    %49 = arith.maximumf %47, %48 : vector<72x16xf32>
    %c0_16 = arith.constant 0 : index
    %c0_17 = arith.constant 0 : index
    %50 = vector.load %arg7[%c0_16, %c0_17] : memref<16x72xf32, #tpu.memory_space<vmem>>, vector<16x72xf32>
    %cst_18 = arith.constant dense<0.000000e+00> : vector<16x16xf32>
    %51 = tpu.matmul %50, %49, %cst_18 {dimension_numbers = #tpu.dot_dimension_numbers<[1], [0], [0], [1], [0, 0, 1, 1], [], []>} : vector<16x72xf32>, vector<72x16xf32>, vector<16x16xf32> -> vector<16x16xf32>
    %c0_19 = arith.constant 0 : index
    %c0_20 = arith.constant 0 : index
    %c0_21 = arith.constant 0 : index
    %52 = vector.load %arg8[%c0_19, %c0_20, %c0_21] : memref<1x16x16xf32, #tpu.memory_space<vmem>>, vector<1x16x16xf32>
    %53 = vector.shape_cast %52 : vector<1x16x16xf32> to vector<16x16xf32>
    %54 = vector.shape_cast %51 : vector<16x16xf32> to vector<1x16x16xf32>
    tpu.vector_store %arg8[%c0_19, %c0_20, %c0_21], %54 {strides = array<i32>} : memref<1x16x16xf32, #tpu.memory_space<vmem>>, vector<1x16x16xf32>,
    return
  }
  func.func @transform_0(%arg0: i32) -> (i32, i32, i32) {
    %c0_i32 = arith.constant 0 : i32
    %c0_i32_0 = arith.constant 0 : i32
    %c0_i32_1 = arith.constant 0 : i32
    return %arg0, %c0_i32, %c0_i32_0 : i32, i32, i32
  }
  func.func @transform_1(%arg0: i32) -> (i32, i32) {
    %c0_i32 = arith.constant 0 : i32
    %c0_i32_0 = arith.constant 0 : i32
    %c0_i32_1 = arith.constant 0 : i32
    return %c0_i32, %c0_i32_0 : i32, i32
  }
  func.func @transform_2(%arg0: i32) -> (i32, i32) {
    %c0_i32 = arith.constant 0 : i32
    %c0_i32_0 = arith.constant 0 : i32
    %c0_i32_1 = arith.constant 0 : i32
    return %c0_i32, %c0_i32_0 : i32, i32
  }
  func.func @transform_3(%arg0: i32) -> (i32, i32) {
    %c0_i32 = arith.constant 0 : i32
    %c0_i32_0 = arith.constant 0 : i32
    %c0_i32_1 = arith.constant 0 : i32
    return %c0_i32, %c0_i32_0 : i32, i32
  }
  func.func @transform_4(%arg0: i32) -> (i32, i32) {
    %c0_i32 = arith.constant 0 : i32
    %c0_i32_0 = arith.constant 0 : i32
    %c0_i32_1 = arith.constant 0 : i32
    return %c0_i32, %c0_i32_0 : i32, i32
  }
  func.func @transform_5(%arg0: i32) -> (i32, i32) {
    %c0_i32 = arith.constant 0 : i32
    %c0_i32_0 = arith.constant 0 : i32
    %c0_i32_1 = arith.constant 0 : i32
    return %c0_i32, %c0_i32_0 : i32, i32
  }
  func.func @transform_6(%arg0: i32) -> (i32, i32) {
    %c0_i32 = arith.constant 0 : i32
    %c0_i32_0 = arith.constant 0 : i32
    %c0_i32_1 = arith.constant 0 : i32
    return %c0_i32, %c0_i32_0 : i32, i32
  }
  func.func @transform_7(%arg0: i32) -> (i32, i32, i32) {
    %c0_i32 = arith.constant 0 : i32
    %c0_i32_0 = arith.constant 0 : i32
    %c0_i32_1 = arith.constant 0 : i32
    return %arg0, %c0_i32, %c0_i32_0 : i32, i32, i32
  }
}

module attributes {stable_mosaic.version = 11 : i64} {
  func.func @_backbone_kernel(%arg0: i32, %arg1: memref<1x344x4xf32, #tpu.memory_space<vmem>>, %arg2: memref<36x8xf32, #tpu.memory_space<vmem>>, %arg3: memref<1x8xf32, #tpu.memory_space<vmem>>, %arg4: memref<120x272xf32, #tpu.memory_space<vmem>>, %arg5: memref<72x16xf32, #tpu.memory_space<vmem>>, %arg6: memref<1x16xf32, #tpu.memory_space<vmem>>, %arg7: memref<16x72xf32, #tpu.memory_space<vmem>>, %arg8: memref<1x16x16xf32, #tpu.memory_space<vmem>>) attributes {dimension_semantics = [#tpu.dimension_semantics<parallel>], iteration_bounds = array<i64: 2>, scalar_prefetch = 0 : i64, scratch_operands = 0 : i64, tpu.core_type = #tpu.core_type<tc>, window_params = [{transform_indices = @transform_0, window_bounds = array<i64: 1, 344, 4>}, {pipeline_mode = #tpu.pipeline_mode<synchronous>, transform_indices = @transform_1, window_bounds = array<i64: 36, 8>}, {pipeline_mode = #tpu.pipeline_mode<synchronous>, transform_indices = @transform_2, window_bounds = array<i64: 1, 8>}, {pipeline_mode = #tpu.pipeline_mode<synchronous>, transform_indices = @transform_3, window_bounds = array<i64: 120, 272>}, {pipeline_mode = #tpu.pipeline_mode<synchronous>, transform_indices = @transform_4, window_bounds = array<i64: 72, 16>}, {pipeline_mode = #tpu.pipeline_mode<synchronous>, transform_indices = @transform_5, window_bounds = array<i64: 1, 16>}, {pipeline_mode = #tpu.pipeline_mode<synchronous>, transform_indices = @transform_6, window_bounds = array<i64: 16, 72>}, {transform_indices = @transform_7, window_bounds = array<i64: 1, 16, 16>}]} {
    %c0 = arith.constant 0 : index
    %c0_0 = arith.constant 0 : index
    %c0_1 = arith.constant 0 : index
    %0 = vector.load %arg1[%c0, %c0_0, %c0_1] : memref<1x344x4xf32, #tpu.memory_space<vmem>>, vector<1x344x4xf32>
    %1 = vector.shape_cast %0 : vector<1x344x4xf32> to vector<344x4xf32>
    %2 = vector.extract_strided_slice %1 {offsets = [0, 0], sizes = [304, 4], strides = [1, 1]} : vector<344x4xf32> to vector<304x4xf32>
    %3 = vector.extract_strided_slice %1 {offsets = [1, 0], sizes = [304, 4], strides = [1, 1]} : vector<344x4xf32> to vector<304x4xf32>
    %4 = vector.extract_strided_slice %1 {offsets = [2, 0], sizes = [304, 4], strides = [1, 1]} : vector<344x4xf32> to vector<304x4xf32>
    %5 = vector.extract_strided_slice %1 {offsets = [18, 0], sizes = [304, 4], strides = [1, 1]} : vector<344x4xf32> to vector<304x4xf32>
    %6 = vector.extract_strided_slice %1 {offsets = [19, 0], sizes = [304, 4], strides = [1, 1]} : vector<344x4xf32> to vector<304x4xf32>
    %7 = vector.extract_strided_slice %1 {offsets = [20, 0], sizes = [304, 4], strides = [1, 1]} : vector<344x4xf32> to vector<304x4xf32>
    %8 = vector.extract_strided_slice %1 {offsets = [36, 0], sizes = [304, 4], strides = [1, 1]} : vector<344x4xf32> to vector<304x4xf32>
    %9 = vector.extract_strided_slice %1 {offsets = [37, 0], sizes = [304, 4], strides = [1, 1]} : vector<344x4xf32> to vector<304x4xf32>
    %10 = vector.extract_strided_slice %1 {offsets = [38, 0], sizes = [304, 4], strides = [1, 1]} : vector<344x4xf32> to vector<304x4xf32>
    %cst = arith.constant 0.000000e+00 : f32
    %11 = vector.broadcast %cst : f32 to vector<304x8xf32>
    %c0_2 = arith.constant 0 : index
    %c0_3 = arith.constant 0 : index
    %12 = vector.load %arg2[%c0_2, %c0_3] : memref<36x8xf32, #tpu.memory_space<vmem>>, vector<4x8xf32>
    %cst_4 = arith.constant dense<0.000000e+00> : vector<304x8xf32>
    %13 = tpu.matmul %2, %12, %cst_4 {dimension_numbers = #tpu.dot_dimension_numbers<[1], [0], [0], [1], [0, 0, 1, 1], [], []>} : vector<304x4xf32>, vector<4x8xf32>, vector<304x8xf32> -> vector<304x8xf32>
    %14 = arith.addf %11, %13 : vector<304x8xf32>
    %c4 = arith.constant 4 : index
    %c0_5 = arith.constant 0 : index
    %15 = vector.load %arg2[%c4, %c0_5] : memref<36x8xf32, #tpu.memory_space<vmem>>, vector<4x8xf32>
    %cst_6 = arith.constant dense<0.000000e+00> : vector<304x8xf32>
    %16 = tpu.matmul %3, %15, %cst_6 {dimension_numbers = #tpu.dot_dimension_numbers<[1], [0], [0], [1], [0, 0, 1, 1], [], []>} : vector<304x4xf32>, vector<4x8xf32>, vector<304x8xf32> -> vector<304x8xf32>
    %17 = arith.addf %14, %16 : vector<304x8xf32>
    %c8 = arith.constant 8 : index
    %c0_7 = arith.constant 0 : index
    %18 = vector.load %arg2[%c8, %c0_7] : memref<36x8xf32, #tpu.memory_space<vmem>>, vector<4x8xf32>
    %cst_8 = arith.constant dense<0.000000e+00> : vector<304x8xf32>
    %19 = tpu.matmul %4, %18, %cst_8 {dimension_numbers = #tpu.dot_dimension_numbers<[1], [0], [0], [1], [0, 0, 1, 1], [], []>} : vector<304x4xf32>, vector<4x8xf32>, vector<304x8xf32> -> vector<304x8xf32>
    %20 = arith.addf %17, %19 : vector<304x8xf32>
    %c12 = arith.constant 12 : index
    %c0_9 = arith.constant 0 : index
    %21 = vector.load %arg2[%c12, %c0_9] : memref<36x8xf32, #tpu.memory_space<vmem>>, vector<4x8xf32>
    %cst_10 = arith.constant dense<0.000000e+00> : vector<304x8xf32>
    %22 = tpu.matmul %5, %21, %cst_10 {dimension_numbers = #tpu.dot_dimension_numbers<[1], [0], [0], [1], [0, 0, 1, 1], [], []>} : vector<304x4xf32>, vector<4x8xf32>, vector<304x8xf32> -> vector<304x8xf32>
    %23 = arith.addf %20, %22 : vector<304x8xf32>
    %c16 = arith.constant 16 : index
    %c0_11 = arith.constant 0 : index
    %24 = vector.load %arg2[%c16, %c0_11] : memref<36x8xf32, #tpu.memory_space<vmem>>, vector<4x8xf32>
    %cst_12 = arith.constant dense<0.000000e+00> : vector<304x8xf32>
    %25 = tpu.matmul %6, %24, %cst_12 {dimension_numbers = #tpu.dot_dimension_numbers<[1], [0], [0], [1], [0, 0, 1, 1], [], []>} : vector<304x4xf32>, vector<4x8xf32>, vector<304x8xf32> -> vector<304x8xf32>
    %26 = arith.addf %23, %25 : vector<304x8xf32>
    %c20 = arith.constant 20 : index
    %c0_13 = arith.constant 0 : index
    %27 = vector.load %arg2[%c20, %c0_13] : memref<36x8xf32, #tpu.memory_space<vmem>>, vector<4x8xf32>
    %cst_14 = arith.constant dense<0.000000e+00> : vector<304x8xf32>
    %28 = tpu.matmul %7, %27, %cst_14 {dimension_numbers = #tpu.dot_dimension_numbers<[1], [0], [0], [1], [0, 0, 1, 1], [], []>} : vector<304x4xf32>, vector<4x8xf32>, vector<304x8xf32> -> vector<304x8xf32>
    %29 = arith.addf %26, %28 : vector<304x8xf32>
    %c24 = arith.constant 24 : index
    %c0_15 = arith.constant 0 : index
    %30 = vector.load %arg2[%c24, %c0_15] : memref<36x8xf32, #tpu.memory_space<vmem>>, vector<4x8xf32>
    %cst_16 = arith.constant dense<0.000000e+00> : vector<304x8xf32>
    %31 = tpu.matmul %8, %30, %cst_16 {dimension_numbers = #tpu.dot_dimension_numbers<[1], [0], [0], [1], [0, 0, 1, 1], [], []>} : vector<304x4xf32>, vector<4x8xf32>, vector<304x8xf32> -> vector<304x8xf32>
    %32 = arith.addf %29, %31 : vector<304x8xf32>
    %c28 = arith.constant 28 : index
    %c0_17 = arith.constant 0 : index
    %33 = vector.load %arg2[%c28, %c0_17] : memref<36x8xf32, #tpu.memory_space<vmem>>, vector<4x8xf32>
    %cst_18 = arith.constant dense<0.000000e+00> : vector<304x8xf32>
    %34 = tpu.matmul %9, %33, %cst_18 {dimension_numbers = #tpu.dot_dimension_numbers<[1], [0], [0], [1], [0, 0, 1, 1], [], []>} : vector<304x4xf32>, vector<4x8xf32>, vector<304x8xf32> -> vector<304x8xf32>
    %35 = arith.addf %32, %34 : vector<304x8xf32>
    %c32 = arith.constant 32 : index
    %c0_19 = arith.constant 0 : index
    %36 = vector.load %arg2[%c32, %c0_19] : memref<36x8xf32, #tpu.memory_space<vmem>>, vector<4x8xf32>
    %cst_20 = arith.constant dense<0.000000e+00> : vector<304x8xf32>
    %37 = tpu.matmul %10, %36, %cst_20 {dimension_numbers = #tpu.dot_dimension_numbers<[1], [0], [0], [1], [0, 0, 1, 1], [], []>} : vector<304x4xf32>, vector<4x8xf32>, vector<304x8xf32> -> vector<304x8xf32>
    %38 = arith.addf %35, %37 : vector<304x8xf32>
    %c0_21 = arith.constant 0 : index
    %c0_22 = arith.constant 0 : index
    %39 = vector.load %arg3[%c0_21, %c0_22] : memref<1x8xf32, #tpu.memory_space<vmem>>, vector<1x8xf32>
    %40 = vector.broadcast %39 : vector<1x8xf32> to vector<304x8xf32>
    %41 = arith.addf %38, %40 : vector<304x8xf32>
    %cst_23 = arith.constant 0.000000e+00 : f32
    %42 = vector.broadcast %cst_23 : f32 to vector<304x8xf32>
    %43 = arith.maximumf %41, %42 : vector<304x8xf32>
    %44 = vector.extract_strided_slice %43 {offsets = [0, 0], sizes = [296, 8], strides = [1, 1]} : vector<304x8xf32> to vector<296x8xf32>
    %45 = vector.extract_strided_slice %43 {offsets = [1, 0], sizes = [296, 8], strides = [1, 1]} : vector<304x8xf32> to vector<296x8xf32>
    %46 = arith.maximumf %44, %45 : vector<296x8xf32>
    %47 = vector.extract_strided_slice %46 {offsets = [0, 0], sizes = [272, 8], strides = [1, 1]} : vector<296x8xf32> to vector<272x8xf32>
    %48 = vector.extract_strided_slice %46 {offsets = [18, 0], sizes = [272, 8], strides = [1, 1]} : vector<296x8xf32> to vector<272x8xf32>
    %49 = arith.maximumf %47, %48 : vector<272x8xf32>
    %c0_24 = arith.constant 0 : index
    %c0_25 = arith.constant 0 : index
    %50 = vector.load %arg4[%c0_24, %c0_25] : memref<120x272xf32, #tpu.memory_space<vmem>>, vector<120x272xf32>
    %cst_26 = arith.constant dense<0.000000e+00> : vector<120x8xf32>
    %51 = tpu.matmul %50, %49, %cst_26 {dimension_numbers = #tpu.dot_dimension_numbers<[1], [0], [0], [1], [0, 0, 1, 1], [], []>} : vector<120x272xf32>, vector<272x8xf32>, vector<120x8xf32> -> vector<120x8xf32>
    %52 = vector.extract_strided_slice %51 {offsets = [0, 0], sizes = [96, 8], strides = [1, 1]} : vector<120x8xf32> to vector<96x8xf32>
    %53 = vector.extract_strided_slice %51 {offsets = [1, 0], sizes = [96, 8], strides = [1, 1]} : vector<120x8xf32> to vector<96x8xf32>
    %54 = vector.extract_strided_slice %51 {offsets = [2, 0], sizes = [96, 8], strides = [1, 1]} : vector<120x8xf32> to vector<96x8xf32>
    %55 = vector.extract_strided_slice %51 {offsets = [10, 0], sizes = [96, 8], strides = [1, 1]} : vector<120x8xf32> to vector<96x8xf32>
    %56 = vector.extract_strided_slice %51 {offsets = [11, 0], sizes = [96, 8], strides = [1, 1]} : vector<120x8xf32> to vector<96x8xf32>
    %57 = vector.extract_strided_slice %51 {offsets = [12, 0], sizes = [96, 8], strides = [1, 1]} : vector<120x8xf32> to vector<96x8xf32>
    %58 = vector.extract_strided_slice %51 {offsets = [20, 0], sizes = [96, 8], strides = [1, 1]} : vector<120x8xf32> to vector<96x8xf32>
    %59 = vector.extract_strided_slice %51 {offsets = [21, 0], sizes = [96, 8], strides = [1, 1]} : vector<120x8xf32> to vector<96x8xf32>
    %60 = vector.extract_strided_slice %51 {offsets = [22, 0], sizes = [96, 8], strides = [1, 1]} : vector<120x8xf32> to vector<96x8xf32>
    %cst_27 = arith.constant 0.000000e+00 : f32
    %61 = vector.broadcast %cst_27 : f32 to vector<96x16xf32>
    %c0_28 = arith.constant 0 : index
    %c0_29 = arith.constant 0 : index
    %62 = vector.load %arg5[%c0_28, %c0_29] : memref<72x16xf32, #tpu.memory_space<vmem>>, vector<8x16xf32>
    %cst_30 = arith.constant dense<0.000000e+00> : vector<96x16xf32>
    %63 = tpu.matmul %52, %62, %cst_30 {dimension_numbers = #tpu.dot_dimension_numbers<[1], [0], [0], [1], [0, 0, 1, 1], [], []>} : vector<96x8xf32>, vector<8x16xf32>, vector<96x16xf32> -> vector<96x16xf32>
    %64 = arith.addf %61, %63 : vector<96x16xf32>
    %c8_31 = arith.constant 8 : index
    %c0_32 = arith.constant 0 : index
    %65 = vector.load %arg5[%c8_31, %c0_32] : memref<72x16xf32, #tpu.memory_space<vmem>>, vector<8x16xf32>
    %cst_33 = arith.constant dense<0.000000e+00> : vector<96x16xf32>
    %66 = tpu.matmul %53, %65, %cst_33 {dimension_numbers = #tpu.dot_dimension_numbers<[1], [0], [0], [1], [0, 0, 1, 1], [], []>} : vector<96x8xf32>, vector<8x16xf32>, vector<96x16xf32> -> vector<96x16xf32>
    %67 = arith.addf %64, %66 : vector<96x16xf32>
    %c16_34 = arith.constant 16 : index
    %c0_35 = arith.constant 0 : index
    %68 = vector.load %arg5[%c16_34, %c0_35] : memref<72x16xf32, #tpu.memory_space<vmem>>, vector<8x16xf32>
    %cst_36 = arith.constant dense<0.000000e+00> : vector<96x16xf32>
    %69 = tpu.matmul %54, %68, %cst_36 {dimension_numbers = #tpu.dot_dimension_numbers<[1], [0], [0], [1], [0, 0, 1, 1], [], []>} : vector<96x8xf32>, vector<8x16xf32>, vector<96x16xf32> -> vector<96x16xf32>
    %70 = arith.addf %67, %69 : vector<96x16xf32>
    %c24_37 = arith.constant 24 : index
    %c0_38 = arith.constant 0 : index
    %71 = vector.load %arg5[%c24_37, %c0_38] : memref<72x16xf32, #tpu.memory_space<vmem>>, vector<8x16xf32>
    %cst_39 = arith.constant dense<0.000000e+00> : vector<96x16xf32>
    %72 = tpu.matmul %55, %71, %cst_39 {dimension_numbers = #tpu.dot_dimension_numbers<[1], [0], [0], [1], [0, 0, 1, 1], [], []>} : vector<96x8xf32>, vector<8x16xf32>, vector<96x16xf32> -> vector<96x16xf32>
    %73 = arith.addf %70, %72 : vector<96x16xf32>
    %c32_40 = arith.constant 32 : index
    %c0_41 = arith.constant 0 : index
    %74 = vector.load %arg5[%c32_40, %c0_41] : memref<72x16xf32, #tpu.memory_space<vmem>>, vector<8x16xf32>
    %cst_42 = arith.constant dense<0.000000e+00> : vector<96x16xf32>
    %75 = tpu.matmul %56, %74, %cst_42 {dimension_numbers = #tpu.dot_dimension_numbers<[1], [0], [0], [1], [0, 0, 1, 1], [], []>} : vector<96x8xf32>, vector<8x16xf32>, vector<96x16xf32> -> vector<96x16xf32>
    %76 = arith.addf %73, %75 : vector<96x16xf32>
    %c40 = arith.constant 40 : index
    %c0_43 = arith.constant 0 : index
    %77 = vector.load %arg5[%c40, %c0_43] : memref<72x16xf32, #tpu.memory_space<vmem>>, vector<8x16xf32>
    %cst_44 = arith.constant dense<0.000000e+00> : vector<96x16xf32>
    %78 = tpu.matmul %57, %77, %cst_44 {dimension_numbers = #tpu.dot_dimension_numbers<[1], [0], [0], [1], [0, 0, 1, 1], [], []>} : vector<96x8xf32>, vector<8x16xf32>, vector<96x16xf32> -> vector<96x16xf32>
    %79 = arith.addf %76, %78 : vector<96x16xf32>
    %c48 = arith.constant 48 : index
    %c0_45 = arith.constant 0 : index
    %80 = vector.load %arg5[%c48, %c0_45] : memref<72x16xf32, #tpu.memory_space<vmem>>, vector<8x16xf32>
    %cst_46 = arith.constant dense<0.000000e+00> : vector<96x16xf32>
    %81 = tpu.matmul %58, %80, %cst_46 {dimension_numbers = #tpu.dot_dimension_numbers<[1], [0], [0], [1], [0, 0, 1, 1], [], []>} : vector<96x8xf32>, vector<8x16xf32>, vector<96x16xf32> -> vector<96x16xf32>
    %82 = arith.addf %79, %81 : vector<96x16xf32>
    %c56 = arith.constant 56 : index
    %c0_47 = arith.constant 0 : index
    %83 = vector.load %arg5[%c56, %c0_47] : memref<72x16xf32, #tpu.memory_space<vmem>>, vector<8x16xf32>
    %cst_48 = arith.constant dense<0.000000e+00> : vector<96x16xf32>
    %84 = tpu.matmul %59, %83, %cst_48 {dimension_numbers = #tpu.dot_dimension_numbers<[1], [0], [0], [1], [0, 0, 1, 1], [], []>} : vector<96x8xf32>, vector<8x16xf32>, vector<96x16xf32> -> vector<96x16xf32>
    %85 = arith.addf %82, %84 : vector<96x16xf32>
    %c64 = arith.constant 64 : index
    %c0_49 = arith.constant 0 : index
    %86 = vector.load %arg5[%c64, %c0_49] : memref<72x16xf32, #tpu.memory_space<vmem>>, vector<8x16xf32>
    %cst_50 = arith.constant dense<0.000000e+00> : vector<96x16xf32>
    %87 = tpu.matmul %60, %86, %cst_50 {dimension_numbers = #tpu.dot_dimension_numbers<[1], [0], [0], [1], [0, 0, 1, 1], [], []>} : vector<96x8xf32>, vector<8x16xf32>, vector<96x16xf32> -> vector<96x16xf32>
    %88 = arith.addf %85, %87 : vector<96x16xf32>
    %c0_51 = arith.constant 0 : index
    %c0_52 = arith.constant 0 : index
    %89 = vector.load %arg6[%c0_51, %c0_52] : memref<1x16xf32, #tpu.memory_space<vmem>>, vector<1x16xf32>
    %90 = vector.broadcast %89 : vector<1x16xf32> to vector<96x16xf32>
    %91 = arith.addf %88, %90 : vector<96x16xf32>
    %cst_53 = arith.constant 0.000000e+00 : f32
    %92 = vector.broadcast %cst_53 : f32 to vector<96x16xf32>
    %93 = arith.maximumf %91, %92 : vector<96x16xf32>
    %94 = vector.extract_strided_slice %93 {offsets = [0, 0], sizes = [88, 16], strides = [1, 1]} : vector<96x16xf32> to vector<88x16xf32>
    %95 = vector.extract_strided_slice %93 {offsets = [1, 0], sizes = [88, 16], strides = [1, 1]} : vector<96x16xf32> to vector<88x16xf32>
    %96 = arith.maximumf %94, %95 : vector<88x16xf32>
    %97 = vector.extract_strided_slice %96 {offsets = [0, 0], sizes = [72, 16], strides = [1, 1]} : vector<88x16xf32> to vector<72x16xf32>
    %98 = vector.extract_strided_slice %96 {offsets = [10, 0], sizes = [72, 16], strides = [1, 1]} : vector<88x16xf32> to vector<72x16xf32>
    %99 = arith.maximumf %97, %98 : vector<72x16xf32>
    %c0_54 = arith.constant 0 : index
    %c0_55 = arith.constant 0 : index
    %100 = vector.load %arg7[%c0_54, %c0_55] : memref<16x72xf32, #tpu.memory_space<vmem>>, vector<16x72xf32>
    %cst_56 = arith.constant dense<0.000000e+00> : vector<16x16xf32>
    %101 = tpu.matmul %100, %99, %cst_56 {dimension_numbers = #tpu.dot_dimension_numbers<[1], [0], [0], [1], [0, 0, 1, 1], [], []>} : vector<16x72xf32>, vector<72x16xf32>, vector<16x16xf32> -> vector<16x16xf32>
    %c0_57 = arith.constant 0 : index
    %c0_58 = arith.constant 0 : index
    %c0_59 = arith.constant 0 : index
    %102 = vector.load %arg8[%c0_57, %c0_58, %c0_59] : memref<1x16x16xf32, #tpu.memory_space<vmem>>, vector<1x16x16xf32>
    %103 = vector.shape_cast %102 : vector<1x16x16xf32> to vector<16x16xf32>
    %104 = vector.shape_cast %101 : vector<16x16xf32> to vector<1x16x16xf32>
    tpu.vector_store %arg8[%c0_57, %c0_58, %c0_59], %104 {strides = array<i32>} : memref<1x16x16xf32, #tpu.memory_space<vmem>>, vector<1x16x16xf32>,
    return
  }
  func.func @transform_0(%arg0: i32) -> (i32, i32, i32) {
    %c0_i32 = arith.constant 0 : i32
    %c0_i32_0 = arith.constant 0 : i32
    %c0_i32_1 = arith.constant 0 : i32
    return %arg0, %c0_i32, %c0_i32_0 : i32, i32, i32
  }
  func.func @transform_1(%arg0: i32) -> (i32, i32) {
    %c0_i32 = arith.constant 0 : i32
    %c0_i32_0 = arith.constant 0 : i32
    %c0_i32_1 = arith.constant 0 : i32
    return %c0_i32, %c0_i32_0 : i32, i32
  }
  func.func @transform_2(%arg0: i32) -> (i32, i32) {
    %c0_i32 = arith.constant 0 : i32
    %c0_i32_0 = arith.constant 0 : i32
    %c0_i32_1 = arith.constant 0 : i32
    return %c0_i32, %c0_i32_0 : i32, i32
  }
  func.func @transform_3(%arg0: i32) -> (i32, i32) {
    %c0_i32 = arith.constant 0 : i32
    %c0_i32_0 = arith.constant 0 : i32
    %c0_i32_1 = arith.constant 0 : i32
    return %c0_i32, %c0_i32_0 : i32, i32
  }
  func.func @transform_4(%arg0: i32) -> (i32, i32) {
    %c0_i32 = arith.constant 0 : i32
    %c0_i32_0 = arith.constant 0 : i32
    %c0_i32_1 = arith.constant 0 : i32
    return %c0_i32, %c0_i32_0 : i32, i32
  }
  func.func @transform_5(%arg0: i32) -> (i32, i32) {
    %c0_i32 = arith.constant 0 : i32
    %c0_i32_0 = arith.constant 0 : i32
    %c0_i32_1 = arith.constant 0 : i32
    return %c0_i32, %c0_i32_0 : i32, i32
  }
  func.func @transform_6(%arg0: i32) -> (i32, i32) {
    %c0_i32 = arith.constant 0 : i32
    %c0_i32_0 = arith.constant 0 : i32
    %c0_i32_1 = arith.constant 0 : i32
    return %c0_i32, %c0_i32_0 : i32, i32
  }
  func.func @transform_7(%arg0: i32) -> (i32, i32, i32) {
    %c0_i32 = arith.constant 0 : i32
    %c0_i32_0 = arith.constant 0 : i32
    %c0_i32_1 = arith.constant 0 : i32
    return %arg0, %c0_i32, %c0_i32_0 : i32, i32, i32
  }
}

</mosaic_0001>

<llo_original>
// kernel: fwd.1
$region0: #{fwd.1}
  #allocation0 [shape = 'u32[]', space=smem, size = 0x4, offset = 0x4, fixed_abs, tag = 'smem constant byte address 0x4 - core index']
  #allocation1 [shape = 'u32[144,128]{1,0:T(1,128)}', space=vmem, size = 0x12000, scoped, tag = 'internal scratch']
  %s0 = inlined_call_operand.vmem [shape: f32[2,344,4], index: 0, kind: input, shape index: {}]
  %s1 = inlined_call_operand.vmem [shape: f32[36,8], index: 1, kind: input, shape index: {}]
  %s2 = inlined_call_operand.vmem [shape: f32[1,8], index: 2, kind: input, shape index: {}]
  %s3 = inlined_call_operand.vmem [shape: f32[120,272], index: 3, kind: input, shape index: {}]
  %s4 = inlined_call_operand.vmem [shape: f32[72,16], index: 4, kind: input, shape index: {}]
  %s5 = inlined_call_operand.vmem [shape: f32[1,16], index: 5, kind: input, shape index: {}]
  %s6 = inlined_call_operand.vmem [shape: f32[16,72], index: 6, kind: input, shape index: {}]
  %s7 = inlined_call_operand.vmem [shape: f32[2,16,16], index: 7, kind: output, shape index: {}]
  %s8 = sld [smem:[#allocation0]]
  $region61: #{fwd.1} parent=0
    _
  %s10 = ssub.s32 1, %s8
  %s11 = scalar_select 0, %s10, %s8
  loop: start=0, step=1, limit=4
  $region2: #{fwd.1} parent=0 // loop_pre_header
    _
  $region3: #{fwd.1} parent=0 // loop_header
    %s13 = sphi 0, %s17
    %p14 = scmp.ge.s32.totalorder %s13, 4
    %s23 = sphi 0, %s25
    %s26 = sphi 0, %s23
    %s27 = sphi 0, %s26
    %s43 = sphi 0, %s27
    %s47 = sphi 0, %s47
    %s49 = sphi 0, %s47
    %s50 = sphi 0, %s49
    %s64 = sphi 0, %s50
    %s68 = sphi 0, %s68
    %s70 = sphi 0, %s68
    %s71 = sphi 0, %s70
    %s85 = sphi 0, %s71
    %s89 = sphi 0, %s89
    %s91 = sphi 0, %s89
    %s92 = sphi 0, %s91
    %s106 = sphi 0, %s92
    %s110 = sphi 0, %s110
    %s112 = sphi 0, %s110
    %s113 = sphi 0, %s112
    %s127 = sphi 0, %s113
    %s131 = sphi 0, %s131
    %s133 = sphi 0, %s131
    %s134 = sphi 0, %s133
    %s148 = sphi 0, %s134
    %s152 = sphi 0, %s152
    %s154 = sphi 0, %s152
    %s155 = sphi 0, %s154
    %s169 = sphi 0, %s155
    %s175 = sphi 0, %s177
    %s178 = sphi 0, %s175
    %s179 = sphi 0, %s178
    %s195 = sphi 0, %s179
  $region4: #{fwd.1} parent=0 // loop_header_branch
    %16 = sbr.rel (%p14) target = $region8
  $region5: #{fwd.1} parent=0 // loop_body
    %s18 = ssub.s32 %s13, 1
    %s19 = ssub.s32 %s13, 2
    %s20 = sadd.s32 %s13, 1
    %s21 = ssub.s32 %s13, %s20
    %p22 = scmp.eq.s32.totalorder %s21, 0
    %s24 = sadd.s32 %s23, 1
    %s25 = scalar_select %p22, %s23, %s24
    %p28 = pneg %p22
    %p29 = scmp.eq.s32.totalorder %s13, 1
    %p30 = por %p28, %p29
    %p31 = scmp.ne.s32.totalorder %s23, %s26
    %p32 = scmp.eq.s32.totalorder %s13, 0
    %p33 = por %p31, %p32
    %p34 = scmp.ne.s32.totalorder %s23, %s26
    %p35 = scmp.eq.s32.totalorder %s18, 1
    %p36 = por %p34, %p35
    %p37 = scmp.ne.s32.totalorder %s26, %s27
    %p38 = scmp.eq.s32.totalorder %s18, 0
    %p39 = por %p37, %p38
    %p40 = scmp.ne.s32.totalorder %s26, %s27
    %p41 = scmp.eq.s32.totalorder %s19, 1
    %p42 = por %p40, %p41
    %p44 = scmp.ne.s32.totalorder %s27, %s43
    %p45 = scmp.eq.s32.totalorder %s19, 0
    %p46 = por %p44, %p45
    %s48 = sadd.s32 %s47, 1
    %p51 = scmp.eq.s32.totalorder %s13, 1
    %p52 = scmp.ne.s32.totalorder %s47, %s49
    %p53 = scmp.eq.s32.totalorder %s13, 0
    %p54 = por %p52, %p53
    %p55 = scmp.ne.s32.totalorder %s47, %s49
    %p56 = scmp.eq.s32.totalorder %s18, 1
    %p57 = por %p55, %p56
    %p58 = scmp.ne.s32.totalorder %s49, %s50
    %p59 = scmp.eq.s32.totalorder %s18, 0
    %p60 = por %p58, %p59
    %p61 = scmp.ne.s32.totalorder %s49, %s50
    %p62 = scmp.eq.s32.totalorder %s19, 1
    %p63 = por %p61, %p62
    %p65 = scmp.ne.s32.totalorder %s50, %s64
    %p66 = scmp.eq.s32.totalorder %s19, 0
    %p67 = por %p65, %p66
    %s69 = sadd.s32 %s68, 1
    %p72 = scmp.eq.s32.totalorder %s13, 1
    %p73 = scmp.ne.s32.totalorder %s68, %s70
    %p74 = scmp.eq.s32.totalorder %s13, 0
    %p75 = por %p73, %p74
    %p76 = scmp.ne.s32.totalorder %s68, %s70
    %p77 = scmp.eq.s32.totalorder %s18, 1
    %p78 = por %p76, %p77
    %p79 = scmp.ne.s32.totalorder %s70, %s71
    %p80 = scmp.eq.s32.totalorder %s18, 0
    %p81 = por %p79, %p80
    %p82 = scmp.ne.s32.totalorder %s70, %s71
    %p83 = scmp.eq.s32.totalorder %s19, 1
    %p84 = por %p82, %p83
    %p86 = scmp.ne.s32.totalorder %s71, %s85
    %p87 = scmp.eq.s32.totalorder %s19, 0
    %p88 = por %p86, %p87
    %s90 = sadd.s32 %s89, 1
    %p93 = scmp.eq.s32.totalorder %s13, 1
    %p94 = scmp.ne.s32.totalorder %s89, %s91
    %p95 = scmp.eq.s32.totalorder %s13, 0
    %p96 = por %p94, %p95
    %p97 = scmp.ne.s32.totalorder %s89, %s91
    %p98 = scmp.eq.s32.totalorder %s18, 1
    %p99 = por %p97, %p98
    %p100 = scmp.ne.s32.totalorder %s91, %s92
    %p101 = scmp.eq.s32.totalorder %s18, 0
    %p102 = por %p100, %p101
    %p103 = scmp.ne.s32.totalorder %s91, %s92
    %p104 = scmp.eq.s32.totalorder %s19, 1
    %p105 = por %p103, %p104
    %p107 = scmp.ne.s32.totalorder %s92, %s106
    %p108 = scmp.eq.s32.totalorder %s19, 0
    %p109 = por %p107, %p108
    %s111 = sadd.s32 %s110, 1
    %p114 = scmp.eq.s32.totalorder %s13, 1
    %p115 = scmp.ne.s32.totalorder %s110, %s112
    %p116 = scmp.eq.s32.totalorder %s13, 0
    %p117 = por %p115, %p116
    %p118 = scmp.ne.s32.totalorder %s110, %s112
    %p119 = scmp.eq.s32.totalorder %s18, 1
    %p120 = por %p118, %p119
    %p121 = scmp.ne.s32.totalorder %s112, %s113
    %p122 = scmp.eq.s32.totalorder %s18, 0
    %p123 = por %p121, %p122
    %p124 = scmp.ne.s32.totalorder %s112, %s113
    %p125 = scmp.eq.s32.totalorder %s19, 1
    %p126 = por %p124, %p125
    %p128 = scmp.ne.s32.totalorder %s113, %s127
    %p129 = scmp.eq.s32.totalorder %s19, 0
    %p130 = por %p128, %p129
    %s132 = sadd.s32 %s131, 1
    %p135 = scmp.eq.s32.totalorder %s13, 1
    %p136 = scmp.ne.s32.totalorder %s131, %s133
    %p137 = scmp.eq.s32.totalorder %s13, 0
    %p138 = por %p136, %p137
    %p139 = scmp.ne.s32.totalorder %s131, %s133
    %p140 = scmp.eq.s32.totalorder %s18, 1
    %p141 = por %p139, %p140
    %p142 = scmp.ne.s32.totalorder %s133, %s134
    %p143 = scmp.eq.s32.totalorder %s18, 0
    %p144 = por %p142, %p143
    %p145 = scmp.ne.s32.totalorder %s133, %s134
    %p146 = scmp.eq.s32.totalorder %s19, 1
    %p147 = por %p145, %p146
    %p149 = scmp.ne.s32.totalorder %s134, %s148
    %p150 = scmp.eq.s32.totalorder %s19, 0
    %p151 = por %p149, %p150
    %s153 = sadd.s32 %s152, 1
    %p156 = scmp.eq.s32.totalorder %s13, 1
    %p157 = scmp.ne.s32.totalorder %s152, %s154
    %p158 = scmp.eq.s32.totalorder %s13, 0
    %p159 = por %p157, %p158
    %p160 = scmp.ne.s32.totalorder %s152, %s154
    %p161 = scmp.eq.s32.totalorder %s18, 1
    %p162 = por %p160, %p161
    %p163 = scmp.ne.s32.totalorder %s154, %s155
    %p164 = scmp.eq.s32.totalorder %s18, 0
    %p165 = por %p163, %p164
    %p166 = scmp.ne.s32.totalorder %s154, %s155
    %p167 = scmp.eq.s32.totalorder %s19, 1
    %p168 = por %p166, %p167
    %p170 = scmp.ne.s32.totalorder %s155, %s169
    %p171 = scmp.eq.s32.totalorder %s19, 0
    %p172 = por %p170, %p171
    %s173 = ssub.s32 %s13, %s20
    %p174 = scmp.eq.s32.totalorder %s173, 0
    %s176 = sadd.s32 %s175, 1
    %s177 = scalar_select %p174, %s175, %s176
    %p180 = pneg %p174
    %p181 = scmp.eq.s32.totalorder %s13, 1
    %p182 = por %p180, %p181
    %p183 = scmp.ne.s32.totalorder %s175, %s178
    %p184 = scmp.eq.s32.totalorder %s13, 0
    %p185 = por %p183, %p184
    %p186 = scmp.ne.s32.totalorder %s175, %s178
    %p187 = scmp.eq.s32.totalorder %s18, 1
    %p188 = por %p186, %p187
    %p189 = scmp.ne.s32.totalorder %s178, %s179
    %p190 = scmp.eq.s32.totalorder %s18, 0
    %p191 = por %p189, %p190
    %p192 = scmp.ne.s32.totalorder %s178, %s179
    %p193 = scmp.eq.s32.totalorder %s19, 1
    %p194 = por %p192, %p193
    %p196 = scmp.ne.s32.totalorder %s179, %s195
    %p197 = scmp.eq.s32.totalorder %s19, 0
    %p198 = por %p196, %p197
    %p199 = scmp.le.s32.totalorder 1, %s13
    %p200 = scmp.lt.s32.totalorder %s13, 3
    %p201 = pnand %p199, %p200
    %p202 = pneg %p201
    // Predicated region
    $region9: #{fwd.1} parent=5 // pred_check
      _
    $region10: #{fwd.1} parent=5 // pred_check_branch
      %204 = sbr.rel (%p201) target = $region12
    $region11: #{fwd.1} parent=5 // pred_region
      %s205 = ssub.s32 %s13, 1
      // Predicated region
      $region13: #{fwd.1} parent=11 // pred_check
        %p206 = pneg %p60
      $region14: #{fwd.1} parent=11 // pred_check_branch
        %208 = sbr.rel (%p206) target = $region16
      $region15: #{fwd.1} parent=11 // pred_region
        _
      $region16: #{fwd.1} parent=11 // pred_fallthru
        _
      // Predicated region
      $region17: #{fwd.1} parent=11 // pred_check
        %p209 = pneg %p81
      $region18: #{fwd.1} parent=11 // pred_check_branch
        %211 = sbr.rel (%p209) target = $region20
      $region19: #{fwd.1} parent=11 // pred_region
        _
      $region20: #{fwd.1} parent=11 // pred_fallthru
        _
      // Predicated region
      $region21: #{fwd.1} parent=11 // pred_check
        %p212 = pneg %p102
      $region22: #{fwd.1} parent=11 // pred_check_branch
        %214 = sbr.rel (%p212) target = $region24
      $region23: #{fwd.1} parent=11 // pred_region
        _
      $region24: #{fwd.1} parent=11 // pred_fallthru
        _
      // Predicated region
      $region25: #{fwd.1} parent=11 // pred_check
        %p215 = pneg %p123
      $region26: #{fwd.1} parent=11 // pred_check_branch
        %217 = sbr.rel (%p215) target = $region28
      $region27: #{fwd.1} parent=11 // pred_region
        _
      $region28: #{fwd.1} parent=11 // pred_fallthru
        _
      // Predicated region
      $region29: #{fwd.1} parent=11 // pred_check
        %p218 = pneg %p144
      $region30: #{fwd.1} parent=11 // pred_check_branch
        %220 = sbr.rel (%p218) target = $region32
      $region31: #{fwd.1} parent=11 // pred_region
        _
      $region32: #{fwd.1} parent=11 // pred_fallthru
        _
      // Predicated region
      $region33: #{fwd.1} parent=11 // pred_check
        %p221 = pneg %p165
      $region34: #{fwd.1} parent=11 // pred_check_branch
        %223 = sbr.rel (%p221) target = $region36
      $region35: #{fwd.1} parent=11 // pred_region
        _
      $region36: #{fwd.1} parent=11 // pred_fallthru
        _
    $region12: #{fwd.1} parent=5 // pred_fallthru
      _
    %p224 = scmp.lt.s32.totalorder %s13, 2
    // Predicated region
    $region37: #{fwd.1} parent=5 // pred_check
      %p225 = pneg %p224
    $region38: #{fwd.1} parent=5 // pred_check_branch
      %227 = sbr.rel (%p225) target = $region40
    $region39: #{fwd.1} parent=5 // pred_region
      // Predicated region
      $region41: #{fwd.1} parent=39 // pred_check
        %p228 = pneg %p33
      $region42: #{fwd.1} parent=39 // pred_check_branch
        %230 = sbr.rel (%p228) target = $region44
      $region43: #{fwd.1} parent=39 // pred_region
        %p231 = scmp.lt.s32.totalorder %s13, 1
        %s232 = scalar_select %p231, %s13, 1
        %s233 = smul.addr %s232, 43
        %s234 = smul.addr %s233, 8
        %s235 = scalar_lea.vmem %s0, %s234
      $region44: #{fwd.1} parent=39 // pred_fallthru
        _
    $region40: #{fwd.1} parent=5 // pred_fallthru
      _
    %p236 = scmp.le.s32.totalorder 1, %s13
    %p237 = scmp.lt.s32.totalorder %s13, 3
    %p238 = pnand %p236, %p237
    %p239 = pneg %p238
    // Predicated region
    $region45: #{fwd.1} parent=5 // pred_check
      _
    $region46: #{fwd.1} parent=5 // pred_check_branch
      %241 = sbr.rel (%p238) target = $region48
    $region47: #{fwd.1} parent=5 // pred_region
      %s242 = ssub.s32 %s13, 1
      %p243 = scmp.lt.s32.totalorder %s18, 1
      %s244 = scalar_select %p243, %s18, 1
      %s245 = smul.addr %s244, 43
      %s246 = smul.addr %s245, 8
      %s247 = scalar_lea.vmem %s0, %s246
      %p248 = pneg %p39
      %p249 = pneg %p36
      %p250 = pneg %p60
      %p251 = pneg %p57
      %p252 = pneg %p81
      %p253 = pneg %p78
      %p254 = pneg %p102
      %p255 = pneg %p99
      %p256 = pneg %p123
      %p257 = pneg %p120
      %p258 = pneg %p144
      %p259 = pneg %p141
      %p260 = pneg %p165
      %p261 = pneg %p162
      %p262 = pneg %p191
      %p263 = pneg %p188
      %p264 = scmp.lt.s32.totalorder %s18, 1
      %s265 = scalar_select %p264, %s18, 1
      %s266 = smul.addr %s265, 2
      %s267 = smul.addr %s266, 8
      %s268 = scalar_lea.vmem %s7, %s267
      %p269 = scmp.lt.s32.totalorder %s18, 1
      %s270 = scalar_select %p269, %s18, 1
      %s271 = smul.addr %s270, 43
      %s272 = smul.addr %s271, 8
      %s273 = scalar_lea.vmem %s0, %s272
      %p274 = scmp.lt.s32.totalorder %s18, 1
      %s275 = scalar_select %p274, %s18, 1
      %s276 = smul.addr %s275, 2
      %s277 = smul.addr %s276, 8
      %s278 = scalar_lea.vmem %s7, %s277
      %v279 = vld [vmem:[%s273] sm:$0xff]
      %v280 = vld [vmem:[%s273 + $0x8] sm:$0xff]
      %v281 = vld [vmem:[%s273 + $0x10] sm:$0xff]
      %v282 = vld [vmem:[%s273 + $0x18] sm:$0xff]
      %v283 = vld [vmem:[%s273 + $0x20] sm:$0xff]
      %v284 = vld [vmem:[%s273 + $0x28] sm:$0xff]
      %v285 = vld [vmem:[%s273 + $0x30] sm:$0xff]
      %v286 = vld [vmem:[%s273 + $0x38] sm:$0xff]
      %v287 = vld [vmem:[%s273 + $0x40] sm:$0xff]
      %v288 = vld [vmem:[%s273 + $0x48] sm:$0xff]
      %v289 = vld [vmem:[%s273 + $0x50] sm:$0xff]
      %v290 = vld [vmem:[%s273 + $0x58] sm:$0xff]
      %v291 = vld [vmem:[%s273 + $0x60] sm:$0xff]
      %v292 = vld [vmem:[%s273 + $0x68] sm:$0xff]
      %v293 = vld [vmem:[%s273 + $0x70] sm:$0xff]
      %v294 = vld [vmem:[%s273 + $0x78] sm:$0xff]
      %v295 = vld [vmem:[%s273 + $0x80] sm:$0xff]
      %v296 = vld [vmem:[%s273 + $0x88] sm:$0xff]
      %v297 = vld [vmem:[%s273 + $0x90] sm:$0xff]
      %v298 = vld [vmem:[%s273 + $0x98] sm:$0xff]
      %v299 = vld [vmem:[%s273 + $0xa0] sm:$0xff]
      %v300 = vld [vmem:[%s273 + $0xa8] sm:$0xff]
      %v301 = vld [vmem:[%s273 + $0xb0] sm:$0xff]
      %v302 = vld [vmem:[%s273 + $0xb8] sm:$0xff]
      %v303 = vld [vmem:[%s273 + $0xc0] sm:$0xff]
      %v304 = vld [vmem:[%s273 + $0xc8] sm:$0xff]
      %v305 = vld [vmem:[%s273 + $0xd0] sm:$0xff]
      %v306 = vld [vmem:[%s273 + $0xd8] sm:$0xff]
      %v307 = vld [vmem:[%s273 + $0xe0] sm:$0xff]
      %v308 = vld [vmem:[%s273 + $0xe8] sm:$0xff]
      %v309 = vld [vmem:[%s273 + $0xf0] sm:$0xff]
      %v310 = vld [vmem:[%s273 + $0xf8] sm:$0xff]
      %v311 = vld [vmem:[%s273 + $0x100] sm:$0xff]
      %v312 = vld [vmem:[%s273 + $0x108] sm:$0xff]
      %v313 = vld [vmem:[%s273 + $0x110] sm:$0xff]
      %v314 = vld [vmem:[%s273 + $0x118] sm:$0xff]
      %v315 = vld [vmem:[%s273 + $0x120] sm:$0xff]
      %v316 = vld [vmem:[%s273 + $0x128] sm:$0xff]
      %v317 = vld [vmem:[%s273 + $0x130] sm:$0xff]
      %v318 = vld [vmem:[%s273 + $0x138] sm:$0xff]
      %v319 = vld [vmem:[%s273 + $0x140] sm:$0xff]
      %v320 = vld [vmem:[%s273 + $0x148] sm:$0xff]
      %v321 = vld [vmem:[%s273 + $0x150] sm:$0xff]
      %vm361 = vcmask 1046528
      %v362 = vrot.slane %v279, 1
      %v363 = vrot.slane %v280, 1
      %v364 = vsel %vm361, %v362, %v363
      %v365 = vrot.slane %v281, 1
      %v366 = vsel %vm361, %v363, %v365
      %v367 = vrot.slane %v282, 1
      %v368 = vsel %vm361, %v365, %v367
      %v369 = vrot.slane %v283, 1
      %v370 = vsel %vm361, %v367, %v369
      %v371 = vrot.slane %v284, 1
      %v372 = vsel %vm361, %v369, %v371
      %v373 = vrot.slane %v285, 1
      %v374 = vsel %vm361, %v371, %v373
      %v375 = vrot.slane %v286, 1
      %v376 = vsel %vm361, %v373, %v375
      %v377 = vrot.slane %v287, 1
      %v378 = vsel %vm361, %v375, %v377
      %v379 = vrot.slane %v288, 1
      %v380 = vsel %vm361, %v377, %v379
      %v381 = vrot.slane %v289, 1
      %v382 = vsel %vm361, %v379, %v381
      %v383 = vrot.slane %v290, 1
      %v384 = vsel %vm361, %v381, %v383
      %v385 = vrot.slane %v291, 1
      %v386 = vsel %vm361, %v383, %v385
      %v387 = vrot.slane %v292, 1
      %v388 = vsel %vm361, %v385, %v387
      %v389 = vrot.slane %v293, 1
      %v390 = vsel %vm361, %v387, %v389
      %v391 = vrot.slane %v294, 1
      %v392 = vsel %vm361, %v389, %v391
      %v393 = vrot.slane %v295, 1
      %v394 = vsel %vm361, %v391, %v393
      %v395 = vrot.slane %v296, 1
      %v396 = vsel %vm361, %v393, %v395
      %v397 = vrot.slane %v297, 1
      %v398 = vsel %vm361, %v395, %v397
      %v399 = vrot.slane %v298, 1
      %v400 = vsel %vm361, %v397, %v399
      %v401 = vrot.slane %v299, 1
      %v402 = vsel %vm361, %v399, %v401
      %v403 = vrot.slane %v300, 1
      %v404 = vsel %vm361, %v401, %v403
      %v405 = vrot.slane %v301, 1
      %v406 = vsel %vm361, %v403, %v405
      %v407 = vrot.slane %v302, 1
      %v408 = vsel %vm361, %v405, %v407
      %v409 = vrot.slane %v303, 1
      %v410 = vsel %vm361, %v407, %v409
      %v411 = vrot.slane %v304, 1
      %v412 = vsel %vm361, %v409, %v411
      %v413 = vrot.slane %v305, 1
      %v414 = vsel %vm361, %v411, %v413
      %v415 = vrot.slane %v306, 1
      %v416 = vsel %vm361, %v413, %v415
      %v417 = vrot.slane %v307, 1
      %v418 = vsel %vm361, %v415, %v417
      %v419 = vrot.slane %v308, 1
      %v420 = vsel %vm361, %v417, %v419
      %v421 = vrot.slane %v309, 1
      %v422 = vsel %vm361, %v419, %v421
      %v423 = vrot.slane %v310, 1
      %v424 = vsel %vm361, %v421, %v423
      %v425 = vrot.slane %v311, 1
      %v426 = vsel %vm361, %v423, %v425
      %v427 = vrot.slane %v312, 1
      %v428 = vsel %vm361, %v425, %v427
      %v429 = vrot.slane %v313, 1
      %v430 = vsel %vm361, %v427, %v429
      %v431 = vrot.slane %v314, 1
      %v432 = vsel %vm361, %v429, %v431
      %v433 = vrot.slane %v315, 1
      %v434 = vsel %vm361, %v431, %v433
      %v435 = vrot.slane %v316, 1
      %v436 = vsel %vm361, %v433, %v435
      %v437 = vrot.slane %v317, 1
      %v438 = vsel %vm361, %v435, %v437
      %439 = vrot.lane.b32.xlu0 %v364, 4
      %v440 = vpop.permute.xlu0 %439
      %441 = vrot.lane.b32.xlu0 %v366, 4
      %v442 = vpop.permute.xlu0 %441
      %443 = vrot.lane.b32.xlu0 %v368, 4
      %v444 = vpop.permute.xlu0 %443
      %445 = vrot.lane.b32.xlu0 %v370, 4
      %v446 = vpop.permute.xlu0 %445
      %447 = vrot.lane.b32.xlu0 %v372, 4
      %v448 = vpop.permute.xlu0 %447
      %449 = vrot.lane.b32.xlu0 %v374, 4
      %v450 = vpop.permute.xlu0 %449
      %451 = vrot.lane.b32.xlu0 %v376, 4
      %v452 = vpop.permute.xlu0 %451
      %453 = vrot.lane.b32.xlu0 %v378, 4
      %v454 = vpop.permute.xlu0 %453
      %455 = vrot.lane.b32.xlu0 %v380, 4
      %v456 = vpop.permute.xlu0 %455
      %457 = vrot.lane.b32.xlu0 %v382, 4
      %v458 = vpop.permute.xlu0 %457
      %459 = vrot.lane.b32.xlu0 %v384, 4
      %v460 = vpop.permute.xlu0 %459
      %461 = vrot.lane.b32.xlu0 %v386, 4
      %v462 = vpop.permute.xlu0 %461
      %463 = vrot.lane.b32.xlu0 %v388, 4
      %v464 = vpop.permute.xlu0 %463
      %465 = vrot.lane.b32.xlu0 %v390, 4
      %v466 = vpop.permute.xlu0 %465
      %467 = vrot.lane.b32.xlu0 %v392, 4
      %v468 = vpop.permute.xlu0 %467
      %469 = vrot.lane.b32.xlu0 %v394, 4
      %v470 = vpop.permute.xlu0 %469
      %471 = vrot.lane.b32.xlu0 %v396, 4
      %v472 = vpop.permute.xlu0 %471
      %473 = vrot.lane.b32.xlu0 %v398, 4
      %v474 = vpop.permute.xlu0 %473
      %475 = vrot.lane.b32.xlu0 %v400, 4
      %v476 = vpop.permute.xlu0 %475
      %477 = vrot.lane.b32.xlu0 %v402, 4
      %v478 = vpop.permute.xlu0 %477
      %479 = vrot.lane.b32.xlu0 %v404, 4
      %v480 = vpop.permute.xlu0 %479
      %481 = vrot.lane.b32.xlu0 %v406, 4
      %v482 = vpop.permute.xlu0 %481
      %483 = vrot.lane.b32.xlu0 %v408, 4
      %v484 = vpop.permute.xlu0 %483
      %485 = vrot.lane.b32.xlu0 %v410, 4
      %v486 = vpop.permute.xlu0 %485
      %487 = vrot.lane.b32.xlu0 %v412, 4
      %v488 = vpop.permute.xlu0 %487
      %489 = vrot.lane.b32.xlu0 %v414, 4
      %v490 = vpop.permute.xlu0 %489
      %491 = vrot.lane.b32.xlu0 %v416, 4
      %v492 = vpop.permute.xlu0 %491
      %493 = vrot.lane.b32.xlu0 %v418, 4
      %v494 = vpop.permute.xlu0 %493
      %495 = vrot.lane.b32.xlu0 %v420, 4
      %v496 = vpop.permute.xlu0 %495
      %497 = vrot.lane.b32.xlu0 %v422, 4
      %v498 = vpop.permute.xlu0 %497
      %499 = vrot.lane.b32.xlu0 %v424, 4
      %v500 = vpop.permute.xlu0 %499
      %501 = vrot.lane.b32.xlu0 %v426, 4
      %v502 = vpop.permute.xlu0 %501
      %503 = vrot.lane.b32.xlu0 %v428, 4
      %v504 = vpop.permute.xlu0 %503
      %505 = vrot.lane.b32.xlu0 %v430, 4
      %v506 = vpop.permute.xlu0 %505
      %507 = vrot.lane.b32.xlu0 %v432, 4
      %v508 = vpop.permute.xlu0 %507
      %509 = vrot.lane.b32.xlu0 %v434, 4
      %v510 = vpop.permute.xlu0 %509
      %511 = vrot.lane.b32.xlu0 %v436, 4
      %v512 = vpop.permute.xlu0 %511
      %513 = vrot.lane.b32.xlu0 %v438, 4
      %v514 = vpop.permute.xlu0 %513
      %vm553 = vcmask 1045504
      %v554 = vrot.slane %v279, 2
      %v555 = vrot.slane %v280, 2
      %v556 = vsel %vm553, %v554, %v555
      %v557 = vrot.slane %v281, 2
      %v558 = vsel %vm553, %v555, %v557
      %v559 = vrot.slane %v282, 2
      %v560 = vsel %vm553, %v557, %v559
      %v561 = vrot.slane %v283, 2
      %v562 = vsel %vm553, %v559, %v561
      %v563 = vrot.slane %v284, 2
      %v564 = vsel %vm553, %v561, %v563
      %v565 = vrot.slane %v285, 2
      %v566 = vsel %vm553, %v563, %v565
      %v567 = vrot.slane %v286, 2
      %v568 = vsel %vm553, %v565, %v567
      %v569 = vrot.slane %v287, 2
      %v570 = vsel %vm553, %v567, %v569
      %v571 = vrot.slane %v288, 2
      %v572 = vsel %vm553, %v569, %v571
      %v573 = vrot.slane %v289, 2
      %v574 = vsel %vm553, %v571, %v573
      %v575 = vrot.slane %v290, 2
      %v576 = vsel %vm553, %v573, %v575
      %v577 = vrot.slane %v291, 2
      %v578 = vsel %vm553, %v575, %v577
      %v579 = vrot.slane %v292, 2
      %v580 = vsel %vm553, %v577, %v579
      %v581 = vrot.slane %v293, 2
      %v582 = vsel %vm553, %v579, %v581
      %v583 = vrot.slane %v294, 2
      %v584 = vsel %vm553, %v581, %v583
      %v585 = vrot.slane %v295, 2
      %v586 = vsel %vm553, %v583, %v585
      %v587 = vrot.slane %v296, 2
      %v588 = vsel %vm553, %v585, %v587
      %v589 = vrot.slane %v297, 2
      %v590 = vsel %vm553, %v587, %v589
      %v591 = vrot.slane %v298, 2
      %v592 = vsel %vm553, %v589, %v591
      %v593 = vrot.slane %v299, 2
      %v594 = vsel %vm553, %v591, %v593
      %v595 = vrot.slane %v300, 2
      %v596 = vsel %vm553, %v593, %v595
      %v597 = vrot.slane %v301, 2
      %v598 = vsel %vm553, %v595, %v597
      %v599 = vrot.slane %v302, 2
      %v600 = vsel %vm553, %v597, %v599
      %v601 = vrot.slane %v303, 2
      %v602 = vsel %vm553, %v599, %v601
      %v603 = vrot.slane %v304, 2
      %v604 = vsel %vm553, %v601, %v603
      %v605 = vrot.slane %v305, 2
      %v606 = vsel %vm553, %v603, %v605
      %v607 = vrot.slane %v306, 2
      %v608 = vsel %vm553, %v605, %v607
      %v609 = vrot.slane %v307, 2
      %v610 = vsel %vm553, %v607, %v609
      %v611 = vrot.slane %v308, 2
      %v612 = vsel %vm553, %v609, %v611
      %v613 = vrot.slane %v309, 2
      %v614 = vsel %vm553, %v611, %v613
      %v615 = vrot.slane %v310, 2
      %v616 = vsel %vm553, %v613, %v615
      %v617 = vrot.slane %v311, 2
      %v618 = vsel %vm553, %v615, %v617
      %v619 = vrot.slane %v312, 2
      %v620 = vsel %vm553, %v617, %v619
      %v621 = vrot.slane %v313, 2
      %v622 = vsel %vm553, %v619, %v621
      %v623 = vrot.slane %v314, 2
      %v624 = vsel %vm553, %v621, %v623
      %v625 = vrot.slane %v315, 2
      %v626 = vsel %vm553, %v623, %v625
      %v627 = vrot.slane %v316, 2
      %v628 = vsel %vm553, %v625, %v627
      %v629 = vrot.slane %v317, 2
      %v630 = vsel %vm553, %v627, %v629
      %631 = vrot.lane.b32.xlu0 %v556, 8
      %v632 = vpop.permute.xlu0 %631
      %633 = vrot.lane.b32.xlu0 %v558, 8
      %v634 = vpop.permute.xlu0 %633
      %635 = vrot.lane.b32.xlu0 %v560, 8
      %v636 = vpop.permute.xlu0 %635
      %637 = vrot.lane.b32.xlu0 %v562, 8
      %v638 = vpop.permute.xlu0 %637
      %639 = vrot.lane.b32.xlu0 %v564, 8
      %v640 = vpop.permute.xlu0 %639
      %641 = vrot.lane.b32.xlu0 %v566, 8
      %v642 = vpop.permute.xlu0 %641
      %643 = vrot.lane.b32.xlu0 %v568, 8
      %v644 = vpop.permute.xlu0 %643
      %645 = vrot.lane.b32.xlu0 %v570, 8
      %v646 = vpop.permute.xlu0 %645
      %647 = vrot.lane.b32.xlu0 %v572, 8
      %v648 = vpop.permute.xlu0 %647
      %649 = vrot.lane.b32.xlu0 %v574, 8
      %v650 = vpop.permute.xlu0 %649
      %651 = vrot.lane.b32.xlu0 %v576, 8
      %v652 = vpop.permute.xlu0 %651
      %653 = vrot.lane.b32.xlu0 %v578, 8
      %v654 = vpop.permute.xlu0 %653
      %655 = vrot.lane.b32.xlu0 %v580, 8
      %v656 = vpop.permute.xlu0 %655
      %657 = vrot.lane.b32.xlu0 %v582, 8
      %v658 = vpop.permute.xlu0 %657
      %659 = vrot.lane.b32.xlu0 %v584, 8
      %v660 = vpop.permute.xlu0 %659
      %661 = vrot.lane.b32.xlu0 %v586, 8
      %v662 = vpop.permute.xlu0 %661
      %663 = vrot.lane.b32.xlu0 %v588, 8
      %v664 = vpop.permute.xlu0 %663
      %665 = vrot.lane.b32.xlu0 %v590, 8
      %v666 = vpop.permute.xlu0 %665
      %667 = vrot.lane.b32.xlu0 %v592, 8
      %v668 = vpop.permute.xlu0 %667
      %669 = vrot.lane.b32.xlu0 %v594, 8
      %v670 = vpop.permute.xlu0 %669
      %671 = vrot.lane.b32.xlu0 %v596, 8
      %v672 = vpop.permute.xlu0 %671
      %673 = vrot.lane.b32.xlu0 %v598, 8
      %v674 = vpop.permute.xlu0 %673
      %675 = vrot.lane.b32.xlu0 %v600, 8
      %v676 = vpop.permute.xlu0 %675
      %677 = vrot.lane.b32.xlu0 %v602, 8
      %v678 = vpop.permute.xlu0 %677
      %679 = vrot.lane.b32.xlu0 %v604, 8
      %v680 = vpop.permute.xlu0 %679
      %681 = vrot.lane.b32.xlu0 %v606, 8
      %v682 = vpop.permute.xlu0 %681
      %683 = vrot.lane.b32.xlu0 %v608, 8
      %v684 = vpop.permute.xlu0 %683
      %685 = vrot.lane.b32.xlu0 %v610, 8
      %v686 = vpop.permute.xlu0 %685
      %687 = vrot.lane.b32.xlu0 %v612, 8
      %v688 = vpop.permute.xlu0 %687
      %689 = vrot.lane.b32.xlu0 %v614, 8
      %v690 = vpop.permute.xlu0 %689
      %691 = vrot.lane.b32.xlu0 %v616, 8
      %v692 = vpop.permute.xlu0 %691
      %693 = vrot.lane.b32.xlu0 %v618, 8
      %v694 = vpop.permute.xlu0 %693
      %695 = vrot.lane.b32.xlu0 %v620, 8
      %v696 = vpop.permute.xlu0 %695
      %697 = vrot.lane.b32.xlu0 %v622, 8
      %v698 = vpop.permute.xlu0 %697
      %699 = vrot.lane.b32.xlu0 %v624, 8
      %v700 = vpop.permute.xlu0 %699
      %701 = vrot.lane.b32.xlu0 %v626, 8
      %v702 = vpop.permute.xlu0 %701
      %703 = vrot.lane.b32.xlu0 %v628, 8
      %v704 = vpop.permute.xlu0 %703
      %705 = vrot.lane.b32.xlu0 %v630, 8
      %v706 = vpop.permute.xlu0 %705
      %v747 = vrot.slane %v318, 2
      %v748 = vsel %vm553, %v629, %v747
      %v749 = vrot.slane %v319, 2
      %v750 = vsel %vm553, %v747, %v749
      %751 = vrot.lane.b32.xlu0 %v560, 12
      %v752 = vpop.permute.xlu0 %751
      %753 = vrot.lane.b32.xlu0 %v562, 12
      %v754 = vpop.permute.xlu0 %753
      %755 = vrot.lane.b32.xlu0 %v564, 12
      %v756 = vpop.permute.xlu0 %755
      %757 = vrot.lane.b32.xlu0 %v566, 12
      %v758 = vpop.permute.xlu0 %757
      %759 = vrot.lane.b32.xlu0 %v568, 12
      %v760 = vpop.permute.xlu0 %759
      %761 = vrot.lane.b32.xlu0 %v570, 12
      %v762 = vpop.permute.xlu0 %761
      %763 = vrot.lane.b32.xlu0 %v572, 12
      %v764 = vpop.permute.xlu0 %763
      %765 = vrot.lane.b32.xlu0 %v574, 12
      %v766 = vpop.permute.xlu0 %765
      %767 = vrot.lane.b32.xlu0 %v576, 12
      %v768 = vpop.permute.xlu0 %767
      %769 = vrot.lane.b32.xlu0 %v578, 12
      %v770 = vpop.permute.xlu0 %769
      %771 = vrot.lane.b32.xlu0 %v580, 12
      %v772 = vpop.permute.xlu0 %771
      %773 = vrot.lane.b32.xlu0 %v582, 12
      %v774 = vpop.permute.xlu0 %773
      %775 = vrot.lane.b32.xlu0 %v584, 12
      %v776 = vpop.permute.xlu0 %775
      %777 = vrot.lane.b32.xlu0 %v586, 12
      %v778 = vpop.permute.xlu0 %777
      %779 = vrot.lane.b32.xlu0 %v588, 12
      %v780 = vpop.permute.xlu0 %779
      %781 = vrot.lane.b32.xlu0 %v590, 12
      %v782 = vpop.permute.xlu0 %781
      %783 = vrot.lane.b32.xlu0 %v592, 12
      %v784 = vpop.permute.xlu0 %783
      %785 = vrot.lane.b32.xlu0 %v594, 12
      %v786 = vpop.permute.xlu0 %785
      %787 = vrot.lane.b32.xlu0 %v596, 12
      %v788 = vpop.permute.xlu0 %787
      %789 = vrot.lane.b32.xlu0 %v598, 12
      %v790 = vpop.permute.xlu0 %789
      %791 = vrot.lane.b32.xlu0 %v600, 12
      %v792 = vpop.permute.xlu0 %791
      %793 = vrot.lane.b32.xlu0 %v602, 12
      %v794 = vpop.permute.xlu0 %793
      %795 = vrot.lane.b32.xlu0 %v604, 12
      %v796 = vpop.permute.xlu0 %795
      %797 = vrot.lane.b32.xlu0 %v606, 12
      %v798 = vpop.permute.xlu0 %797
      %799 = vrot.lane.b32.xlu0 %v608, 12
      %v800 = vpop.permute.xlu0 %799
      %801 = vrot.lane.b32.xlu0 %v610, 12
      %v802 = vpop.permute.xlu0 %801
      %803 = vrot.lane.b32.xlu0 %v612, 12
      %v804 = vpop.permute.xlu0 %803
      %805 = vrot.lane.b32.xlu0 %v614, 12
      %v806 = vpop.permute.xlu0 %805
      %807 = vrot.lane.b32.xlu0 %v616, 12
      %v808 = vpop.permute.xlu0 %807
      %809 = vrot.lane.b32.xlu0 %v618, 12
      %v810 = vpop.permute.xlu0 %809
      %811 = vrot.lane.b32.xlu0 %v620, 12
      %v812 = vpop.permute.xlu0 %811
      %813 = vrot.lane.b32.xlu0 %v622, 12
      %v814 = vpop.permute.xlu0 %813
      %815 = vrot.lane.b32.xlu0 %v624, 12
      %v816 = vpop.permute.xlu0 %815
      %817 = vrot.lane.b32.xlu0 %v626, 12
      %v818 = vpop.permute.xlu0 %817
      %819 = vrot.lane.b32.xlu0 %v628, 12
      %v820 = vpop.permute.xlu0 %819
      %821 = vrot.lane.b32.xlu0 %v630, 12
      %v822 = vpop.permute.xlu0 %821
      %823 = vrot.lane.b32.xlu0 %v748, 12
      %v824 = vpop.permute.xlu0 %823
      %825 = vrot.lane.b32.xlu0 %v750, 12
      %v826 = vpop.permute.xlu0 %825
      %vm865 = vcmask 1044480
      %v866 = vrot.slane %v281, 3
      %v867 = vrot.slane %v282, 3
      %v868 = vsel %vm865, %v866, %v867
      %v869 = vrot.slane %v283, 3
      %v870 = vsel %vm865, %v867, %v869
      %v871 = vrot.slane %v284, 3
      %v872 = vsel %vm865, %v869, %v871
      %v873 = vrot.slane %v285, 3
      %v874 = vsel %vm865, %v871, %v873
      %v875 = vrot.slane %v286, 3
      %v876 = vsel %vm865, %v873, %v875
      %v877 = vrot.slane %v287, 3
      %v878 = vsel %vm865, %v875, %v877
      %v879 = vrot.slane %v288, 3
      %v880 = vsel %vm865, %v877, %v879
      %v881 = vrot.slane %v289, 3
      %v882 = vsel %vm865, %v879, %v881
      %v883 = vrot.slane %v290, 3
      %v884 = vsel %vm865, %v881, %v883
      %v885 = vrot.slane %v291, 3
      %v886 = vsel %vm865, %v883, %v885
      %v887 = vrot.slane %v292, 3
      %v888 = vsel %vm865, %v885, %v887
      %v889 = vrot.slane %v293, 3
      %v890 = vsel %vm865, %v887, %v889
      %v891 = vrot.slane %v294, 3
      %v892 = vsel %vm865, %v889, %v891
      %v893 = vrot.slane %v295, 3
      %v894 = vsel %vm865, %v891, %v893
      %v895 = vrot.slane %v296, 3
      %v896 = vsel %vm865, %v893, %v895
      %v897 = vrot.slane %v297, 3
      %v898 = vsel %vm865, %v895, %v897
      %v899 = vrot.slane %v298, 3
      %v900 = vsel %vm865, %v897, %v899
      %v901 = vrot.slane %v299, 3
      %v902 = vsel %vm865, %v899, %v901
      %v903 = vrot.slane %v300, 3
      %v904 = vsel %vm865, %v901, %v903
      %v905 = vrot.slane %v301, 3
      %v906 = vsel %vm865, %v903, %v905
      %v907 = vrot.slane %v302, 3
      %v908 = vsel %vm865, %v905, %v907
      %v909 = vrot.slane %v303, 3
      %v910 = vsel %vm865, %v907, %v909
      %v911 = vrot.slane %v304, 3
      %v912 = vsel %vm865, %v909, %v911
      %v913 = vrot.slane %v305, 3
      %v914 = vsel %vm865, %v911, %v913
      %v915 = vrot.slane %v306, 3
      %v916 = vsel %vm865, %v913, %v915
      %v917 = vrot.slane %v307, 3
      %v918 = vsel %vm865, %v915, %v917
      %v919 = vrot.slane %v308, 3
      %v920 = vsel %vm865, %v917, %v919
      %v921 = vrot.slane %v309, 3
      %v922 = vsel %vm865, %v919, %v921
      %v923 = vrot.slane %v310, 3
      %v924 = vsel %vm865, %v921, %v923
      %v925 = vrot.slane %v311, 3
      %v926 = vsel %vm865, %v923, %v925
      %v927 = vrot.slane %v312, 3
      %v928 = vsel %vm865, %v925, %v927
      %v929 = vrot.slane %v313, 3
      %v930 = vsel %vm865, %v927, %v929
      %v931 = vrot.slane %v314, 3
      %v932 = vsel %vm865, %v929, %v931
      %v933 = vrot.slane %v315, 3
      %v934 = vsel %vm865, %v931, %v933
      %v935 = vrot.slane %v316, 3
      %v936 = vsel %vm865, %v933, %v935
      %v937 = vrot.slane %v317, 3
      %v938 = vsel %vm865, %v935, %v937
      %v939 = vrot.slane %v318, 3
      %v940 = vsel %vm865, %v937, %v939
      %v941 = vrot.slane %v319, 3
      %v942 = vsel %vm865, %v939, %v941
      %943 = vrot.lane.b32.xlu0 %v868, 16
      %v944 = vpop.permute.xlu0 %943
      %945 = vrot.lane.b32.xlu0 %v870, 16
      %v946 = vpop.permute.xlu0 %945
      %947 = vrot.lane.b32.xlu0 %v872, 16
      %v948 = vpop.permute.xlu0 %947
      %949 = vrot.lane.b32.xlu0 %v874, 16
      %v950 = vpop.permute.xlu0 %949
      %951 = vrot.lane.b32.xlu0 %v876, 16
      %v952 = vpop.permute.xlu0 %951
      %953 = vrot.lane.b32.xlu0 %v878, 16
      %v954 = vpop.permute.xlu0 %953
      %955 = vrot.lane.b32.xlu0 %v880, 16
      %v956 = vpop.permute.xlu0 %955
      %957 = vrot.lane.b32.xlu0 %v882, 16
      %v958 = vpop.permute.xlu0 %957
      %959 = vrot.lane.b32.xlu0 %v884, 16
      %v960 = vpop.permute.xlu0 %959
      %961 = vrot.lane.b32.xlu0 %v886, 16
      %v962 = vpop.permute.xlu0 %961
      %963 = vrot.lane.b32.xlu0 %v888, 16
      %v964 = vpop.permute.xlu0 %963
      %965 = vrot.lane.b32.xlu0 %v890, 16
      %v966 = vpop.permute.xlu0 %965
      %967 = vrot.lane.b32.xlu0 %v892, 16
      %v968 = vpop.permute.xlu0 %967
      %969 = vrot.lane.b32.xlu0 %v894, 16
      %v970 = vpop.permute.xlu0 %969
      %971 = vrot.lane.b32.xlu0 %v896, 16
      %v972 = vpop.permute.xlu0 %971
      %973 = vrot.lane.b32.xlu0 %v898, 16
      %v974 = vpop.permute.xlu0 %973
      %975 = vrot.lane.b32.xlu0 %v900, 16
      %v976 = vpop.permute.xlu0 %975
      %977 = vrot.lane.b32.xlu0 %v902, 16
      %v978 = vpop.permute.xlu0 %977
      %979 = vrot.lane.b32.xlu0 %v904, 16
      %v980 = vpop.permute.xlu0 %979
      %981 = vrot.lane.b32.xlu0 %v906, 16
      %v982 = vpop.permute.xlu0 %981
      %983 = vrot.lane.b32.xlu0 %v908, 16
      %v984 = vpop.permute.xlu0 %983
      %985 = vrot.lane.b32.xlu0 %v910, 16
      %v986 = vpop.permute.xlu0 %985
      %987 = vrot.lane.b32.xlu0 %v912, 16
      %v988 = vpop.permute.xlu0 %987
      %989 = vrot.lane.b32.xlu0 %v914, 16
      %v990 = vpop.permute.xlu0 %989
      %991 = vrot.lane.b32.xlu0 %v916, 16
      %v992 = vpop.permute.xlu0 %991
      %993 = vrot.lane.b32.xlu0 %v918, 16
      %v994 = vpop.permute.xlu0 %993
      %995 = vrot.lane.b32.xlu0 %v920, 16
      %v996 = vpop.permute.xlu0 %995
      %997 = vrot.lane.b32.xlu0 %v922, 16
      %v998 = vpop.permute.xlu0 %997
      %999 = vrot.lane.b32.xlu0 %v924, 16
      %v1000 = vpop.permute.xlu0 %999
      %1001 = vrot.lane.b32.xlu0 %v926, 16
      %v1002 = vpop.permute.xlu0 %1001
      %1003 = vrot.lane.b32.xlu0 %v928, 16
      %v1004 = vpop.permute.xlu0 %1003
      %1005 = vrot.lane.b32.xlu0 %v930, 16
      %v1006 = vpop.permute.xlu0 %1005
      %1007 = vrot.lane.b32.xlu0 %v932, 16
      %v1008 = vpop.permute.xlu0 %1007
      %1009 = vrot.lane.b32.xlu0 %v934, 16
      %v1010 = vpop.permute.xlu0 %1009
      %1011 = vrot.lane.b32.xlu0 %v936, 16
      %v1012 = vpop.permute.xlu0 %1011
      %1013 = vrot.lane.b32.xlu0 %v938, 16
      %v1014 = vpop.permute.xlu0 %1013
      %1015 = vrot.lane.b32.xlu0 %v940, 16
      %v1016 = vpop.permute.xlu0 %1015
      %1017 = vrot.lane.b32.xlu0 %v942, 16
      %v1018 = vpop.permute.xlu0 %1017
      %vm1057 = vcmask 1043456
      %v1058 = vrot.slane %v281, 4
      %v1059 = vrot.slane %v282, 4
      %v1060 = vsel %vm1057, %v1058, %v1059
      %v1061 = vrot.slane %v283, 4
      %v1062 = vsel %vm1057, %v1059, %v1061
      %v1063 = vrot.slane %v284, 4
      %v1064 = vsel %vm1057, %v1061, %v1063
      %v1065 = vrot.slane %v285, 4
      %v1066 = vsel %vm1057, %v1063, %v1065
      %v1067 = vrot.slane %v286, 4
      %v1068 = vsel %vm1057, %v1065, %v1067
      %v1069 = vrot.slane %v287, 4
      %v1070 = vsel %vm1057, %v1067, %v1069
      %v1071 = vrot.slane %v288, 4
      %v1072 = vsel %vm1057, %v1069, %v1071
      %v1073 = vrot.slane %v289, 4
      %v1074 = vsel %vm1057, %v1071, %v1073
      %v1075 = vrot.slane %v290, 4
      %v1076 = vsel %vm1057, %v1073, %v1075
      %v1077 = vrot.slane %v291, 4
      %v1078 = vsel %vm1057, %v1075, %v1077
      %v1079 = vrot.slane %v292, 4
      %v1080 = vsel %vm1057, %v1077, %v1079
      %v1081 = vrot.slane %v293, 4
      %v1082 = vsel %vm1057, %v1079, %v1081
      %v1083 = vrot.slane %v294, 4
      %v1084 = vsel %vm1057, %v1081, %v1083
      %v1085 = vrot.slane %v295, 4
      %v1086 = vsel %vm1057, %v1083, %v1085
      %v1087 = vrot.slane %v296, 4
      %v1088 = vsel %vm1057, %v1085, %v1087
      %v1089 = vrot.slane %v297, 4
      %v1090 = vsel %vm1057, %v1087, %v1089
      %v1091 = vrot.slane %v298, 4
      %v1092 = vsel %vm1057, %v1089, %v1091
      %v1093 = vrot.slane %v299, 4
      %v1094 = vsel %vm1057, %v1091, %v1093
      %v1095 = vrot.slane %v300, 4
      %v1096 = vsel %vm1057, %v1093, %v1095
      %v1097 = vrot.slane %v301, 4
      %v1098 = vsel %vm1057, %v1095, %v1097
      %v1099 = vrot.slane %v302, 4
      %v1100 = vsel %vm1057, %v1097, %v1099
      %v1101 = vrot.slane %v303, 4
      %v1102 = vsel %vm1057, %v1099, %v1101
      %v1103 = vrot.slane %v304, 4
      %v1104 = vsel %vm1057, %v1101, %v1103
      %v1105 = vrot.slane %v305, 4
      %v1106 = vsel %vm1057, %v1103, %v1105
      %v1107 = vrot.slane %v306, 4
      %v1108 = vsel %vm1057, %v1105, %v1107
      %v1109 = vrot.slane %v307, 4
      %v1110 = vsel %vm1057, %v1107, %v1109
      %v1111 = vrot.slane %v308, 4
      %v1112 = vsel %vm1057, %v1109, %v1111
      %v1113 = vrot.slane %v309, 4
      %v1114 = vsel %vm1057, %v1111, %v1113
      %v1115 = vrot.slane %v310, 4
      %v1116 = vsel %vm1057, %v1113, %v1115
      %v1117 = vrot.slane %v311, 4
      %v1118 = vsel %vm1057, %v1115, %v1117
      %v1119 = vrot.slane %v312, 4
      %v1120 = vsel %vm1057, %v1117, %v1119
      %v1121 = vrot.slane %v313, 4
      %v1122 = vsel %vm1057, %v1119, %v1121
      %v1123 = vrot.slane %v314, 4
      %v1124 = vsel %vm1057, %v1121, %v1123
      %v1125 = vrot.slane %v315, 4
      %v1126 = vsel %vm1057, %v1123, %v1125
      %v1127 = vrot.slane %v316, 4
      %v1128 = vsel %vm1057, %v1125, %v1127
      %v1129 = vrot.slane %v317, 4
      %v1130 = vsel %vm1057, %v1127, %v1129
      %v1131 = vrot.slane %v318, 4
      %v1132 = vsel %vm1057, %v1129, %v1131
      %v1133 = vrot.slane %v319, 4
      %v1134 = vsel %vm1057, %v1131, %v1133
      %1135 = vrot.lane.b32.xlu0 %v1060, 20
      %v1136 = vpop.permute.xlu0 %1135
      %1137 = vrot.lane.b32.xlu0 %v1062, 20
      %v1138 = vpop.permute.xlu0 %1137
      %1139 = vrot.lane.b32.xlu0 %v1064, 20
      %v1140 = vpop.permute.xlu0 %1139
      %1141 = vrot.lane.b32.xlu0 %v1066, 20
      %v1142 = vpop.permute.xlu0 %1141
      %1143 = vrot.lane.b32.xlu0 %v1068, 20
      %v1144 = vpop.permute.xlu0 %1143
      %1145 = vrot.lane.b32.xlu0 %v1070, 20
      %v1146 = vpop.permute.xlu0 %1145
      %1147 = vrot.lane.b32.xlu0 %v1072, 20
      %v1148 = vpop.permute.xlu0 %1147
      %1149 = vrot.lane.b32.xlu0 %v1074, 20
      %v1150 = vpop.permute.xlu0 %1149
      %1151 = vrot.lane.b32.xlu0 %v1076, 20
      %v1152 = vpop.permute.xlu0 %1151
      %1153 = vrot.lane.b32.xlu0 %v1078, 20
      %v1154 = vpop.permute.xlu0 %1153
      %1155 = vrot.lane.b32.xlu0 %v1080, 20
      %v1156 = vpop.permute.xlu0 %1155
      %1157 = vrot.lane.b32.xlu0 %v1082, 20
      %v1158 = vpop.permute.xlu0 %1157
      %1159 = vrot.lane.b32.xlu0 %v1084, 20
      %v1160 = vpop.permute.xlu0 %1159
      %1161 = vrot.lane.b32.xlu0 %v1086, 20
      %v1162 = vpop.permute.xlu0 %1161
      %1163 = vrot.lane.b32.xlu0 %v1088, 20
      %v1164 = vpop.permute.xlu0 %1163
      %1165 = vrot.lane.b32.xlu0 %v1090, 20
      %v1166 = vpop.permute.xlu0 %1165
      %1167 = vrot.lane.b32.xlu0 %v1092, 20
      %v1168 = vpop.permute.xlu0 %1167
      %1169 = vrot.lane.b32.xlu0 %v1094, 20
      %v1170 = vpop.permute.xlu0 %1169
      %1171 = vrot.lane.b32.xlu0 %v1096, 20
      %v1172 = vpop.permute.xlu0 %1171
      %1173 = vrot.lane.b32.xlu0 %v1098, 20
      %v1174 = vpop.permute.xlu0 %1173
      %1175 = vrot.lane.b32.xlu0 %v1100, 20
      %v1176 = vpop.permute.xlu0 %1175
      %1177 = vrot.lane.b32.xlu0 %v1102, 20
      %v1178 = vpop.permute.xlu0 %1177
      %1179 = vrot.lane.b32.xlu0 %v1104, 20
      %v1180 = vpop.permute.xlu0 %1179
      %1181 = vrot.lane.b32.xlu0 %v1106, 20
      %v1182 = vpop.permute.xlu0 %1181
      %1183 = vrot.lane.b32.xlu0 %v1108, 20
      %v1184 = vpop.permute.xlu0 %1183
      %1185 = vrot.lane.b32.xlu0 %v1110, 20
      %v1186 = vpop.permute.xlu0 %1185
      %1187 = vrot.lane.b32.xlu0 %v1112, 20
      %v1188 = vpop.permute.xlu0 %1187
      %1189 = vrot.lane.b32.xlu0 %v1114, 20
      %v1190 = vpop.permute.xlu0 %1189
      %1191 = vrot.lane.b32.xlu0 %v1116, 20
      %v1192 = vpop.permute.xlu0 %1191
      %1193 = vrot.lane.b32.xlu0 %v1118, 20
      %v1194 = vpop.permute.xlu0 %1193
      %1195 = vrot.lane.b32.xlu0 %v1120, 20
      %v1196 = vpop.permute.xlu0 %1195
      %1197 = vrot.lane.b32.xlu0 %v1122, 20
      %v1198 = vpop.permute.xlu0 %1197
      %1199 = vrot.lane.b32.xlu0 %v1124, 20
      %v1200 = vpop.permute.xlu0 %1199
      %1201 = vrot.lane.b32.xlu0 %v1126, 20
      %v1202 = vpop.permute.xlu0 %1201
      %1203 = vrot.lane.b32.xlu0 %v1128, 20
      %v1204 = vpop.permute.xlu0 %1203
      %1205 = vrot.lane.b32.xlu0 %v1130, 20
      %v1206 = vpop.permute.xlu0 %1205
      %1207 = vrot.lane.b32.xlu0 %v1132, 20
      %v1208 = vpop.permute.xlu0 %1207
      %1209 = vrot.lane.b32.xlu0 %v1134, 20
      %v1210 = vpop.permute.xlu0 %1209
      %v1251 = vrot.slane %v320, 4
      %v1252 = vsel %vm1057, %v1133, %v1251
      %v1253 = vrot.slane %v321, 4
      %v1254 = vsel %vm1057, %v1251, %v1253
      %1255 = vrot.lane.b32.xlu0 %v1064, 24
      %v1256 = vpop.permute.xlu0 %1255
      %1257 = vrot.lane.b32.xlu0 %v1066, 24
      %v1258 = vpop.permute.xlu0 %1257
      %1259 = vrot.lane.b32.xlu0 %v1068, 24
      %v1260 = vpop.permute.xlu0 %1259
      %1261 = vrot.lane.b32.xlu0 %v1070, 24
      %v1262 = vpop.permute.xlu0 %1261
      %1263 = vrot.lane.b32.xlu0 %v1072, 24
      %v1264 = vpop.permute.xlu0 %1263
      %1265 = vrot.lane.b32.xlu0 %v1074, 24
      %v1266 = vpop.permute.xlu0 %1265
      %1267 = vrot.lane.b32.xlu0 %v1076, 24
      %v1268 = vpop.permute.xlu0 %1267
      %1269 = vrot.lane.b32.xlu0 %v1078, 24
      %v1270 = vpop.permute.xlu0 %1269
      %1271 = vrot.lane.b32.xlu0 %v1080, 24
      %v1272 = vpop.permute.xlu0 %1271
      %1273 = vrot.lane.b32.xlu0 %v1082, 24
      %v1274 = vpop.permute.xlu0 %1273
      %1275 = vrot.lane.b32.xlu0 %v1084, 24
      %v1276 = vpop.permute.xlu0 %1275
      %1277 = vrot.lane.b32.xlu0 %v1086, 24
      %v1278 = vpop.permute.xlu0 %1277
      %1279 = vrot.lane.b32.xlu0 %v1088, 24
      %v1280 = vpop.permute.xlu0 %1279
      %1281 = vrot.lane.b32.xlu0 %v1090, 24
      %v1282 = vpop.permute.xlu0 %1281
      %1283 = vrot.lane.b32.xlu0 %v1092, 24
      %v1284 = vpop.permute.xlu0 %1283
      %1285 = vrot.lane.b32.xlu0 %v1094, 24
      %v1286 = vpop.permute.xlu0 %1285
      %1287 = vrot.lane.b32.xlu0 %v1096, 24
      %v1288 = vpop.permute.xlu0 %1287
      %1289 = vrot.lane.b32.xlu0 %v1098, 24
      %v1290 = vpop.permute.xlu0 %1289
      %1291 = vrot.lane.b32.xlu0 %v1100, 24
      %v1292 = vpop.permute.xlu0 %1291
      %1293 = vrot.lane.b32.xlu0 %v1102, 24
      %v1294 = vpop.permute.xlu0 %1293
      %1295 = vrot.lane.b32.xlu0 %v1104, 24
      %v1296 = vpop.permute.xlu0 %1295
      %1297 = vrot.lane.b32.xlu0 %v1106, 24
      %v1298 = vpop.permute.xlu0 %1297
      %1299 = vrot.lane.b32.xlu0 %v1108, 24
      %v1300 = vpop.permute.xlu0 %1299
      %1301 = vrot.lane.b32.xlu0 %v1110, 24
      %v1302 = vpop.permute.xlu0 %1301
      %1303 = vrot.lane.b32.xlu0 %v1112, 24
      %v1304 = vpop.permute.xlu0 %1303
      %1305 = vrot.lane.b32.xlu0 %v1114, 24
      %v1306 = vpop.permute.xlu0 %1305
      %1307 = vrot.lane.b32.xlu0 %v1116, 24
      %v1308 = vpop.permute.xlu0 %1307
      %1309 = vrot.lane.b32.xlu0 %v1118, 24
      %v1310 = vpop.permute.xlu0 %1309
      %1311 = vrot.lane.b32.xlu0 %v1120, 24
      %v1312 = vpop.permute.xlu0 %1311
      %1313 = vrot.lane.b32.xlu0 %v1122, 24
      %v1314 = vpop.permute.xlu0 %1313
      %1315 = vrot.lane.b32.xlu0 %v1124, 24
      %v1316 = vpop.permute.xlu0 %1315
      %1317 = vrot.lane.b32.xlu0 %v1126, 24
      %v1318 = vpop.permute.xlu0 %1317
      %1319 = vrot.lane.b32.xlu0 %v1128, 24
      %v1320 = vpop.permute.xlu0 %1319
      %1321 = vrot.lane.b32.xlu0 %v1130, 24
      %v1322 = vpop.permute.xlu0 %1321
      %1323 = vrot.lane.b32.xlu0 %v1132, 24
      %v1324 = vpop.permute.xlu0 %1323
      %1325 = vrot.lane.b32.xlu0 %v1134, 24
      %v1326 = vpop.permute.xlu0 %1325
      %1327 = vrot.lane.b32.xlu0 %v1252, 24
      %v1328 = vpop.permute.xlu0 %1327
      %1329 = vrot.lane.b32.xlu0 %v1254, 24
      %v1330 = vpop.permute.xlu0 %1329
      %vm1369 = vcmask 1042432
      %v1370 = vrot.slane %v283, 5
      %v1371 = vrot.slane %v284, 5
      %v1372 = vsel %vm1369, %v1370, %v1371
      %v1373 = vrot.slane %v285, 5
      %v1374 = vsel %vm1369, %v1371, %v1373
      %v1375 = vrot.slane %v286, 5
      %v1376 = vsel %vm1369, %v1373, %v1375
      %v1377 = vrot.slane %v287, 5
      %v1378 = vsel %vm1369, %v1375, %v1377
      %v1379 = vrot.slane %v288, 5
      %v1380 = vsel %vm1369, %v1377, %v1379
      %v1381 = vrot.slane %v289, 5
      %v1382 = vsel %vm1369, %v1379, %v1381
      %v1383 = vrot.slane %v290, 5
      %v1384 = vsel %vm1369, %v1381, %v1383
      %v1385 = vrot.slane %v291, 5
      %v1386 = vsel %vm1369, %v1383, %v1385
      %v1387 = vrot.slane %v292, 5
      %v1388 = vsel %vm1369, %v1385, %v1387
      %v1389 = vrot.slane %v293, 5
      %v1390 = vsel %vm1369, %v1387, %v1389
      %v1391 = vrot.slane %v294, 5
      %v1392 = vsel %vm1369, %v1389, %v1391
      %v1393 = vrot.slane %v295, 5
      %v1394 = vsel %vm1369, %v1391, %v1393
      %v1395 = vrot.slane %v296, 5
      %v1396 = vsel %vm1369, %v1393, %v1395
      %v1397 = vrot.slane %v297, 5
      %v1398 = vsel %vm1369, %v1395, %v1397
      %v1399 = vrot.slane %v298, 5
      %v1400 = vsel %vm1369, %v1397, %v1399
      %v1401 = vrot.slane %v299, 5
      %v1402 = vsel %vm1369, %v1399, %v1401
      %v1403 = vrot.slane %v300, 5
      %v1404 = vsel %vm1369, %v1401, %v1403
      %v1405 = vrot.slane %v301, 5
      %v1406 = vsel %vm1369, %v1403, %v1405
      %v1407 = vrot.slane %v302, 5
      %v1408 = vsel %vm1369, %v1405, %v1407
      %v1409 = vrot.slane %v303, 5
      %v1410 = vsel %vm1369, %v1407, %v1409
      %v1411 = vrot.slane %v304, 5
      %v1412 = vsel %vm1369, %v1409, %v1411
      %v1413 = vrot.slane %v305, 5
      %v1414 = vsel %vm1369, %v1411, %v1413
      %v1415 = vrot.slane %v306, 5
      %v1416 = vsel %vm1369, %v1413, %v1415
      %v1417 = vrot.slane %v307, 5
      %v1418 = vsel %vm1369, %v1415, %v1417
      %v1419 = vrot.slane %v308, 5
      %v1420 = vsel %vm1369, %v1417, %v1419
      %v1421 = vrot.slane %v309, 5
      %v1422 = vsel %vm1369, %v1419, %v1421
      %v1423 = vrot.slane %v310, 5
      %v1424 = vsel %vm1369, %v1421, %v1423
      %v1425 = vrot.slane %v311, 5
      %v1426 = vsel %vm1369, %v1423, %v1425
      %v1427 = vrot.slane %v312, 5
      %v1428 = vsel %vm1369, %v1425, %v1427
      %v1429 = vrot.slane %v313, 5
      %v1430 = vsel %vm1369, %v1427, %v1429
      %v1431 = vrot.slane %v314, 5
      %v1432 = vsel %vm1369, %v1429, %v1431
      %v1433 = vrot.slane %v315, 5
      %v1434 = vsel %vm1369, %v1431, %v1433
      %v1435 = vrot.slane %v316, 5
      %v1436 = vsel %vm1369, %v1433, %v1435
      %v1437 = vrot.slane %v317, 5
      %v1438 = vsel %vm1369, %v1435, %v1437
      %v1439 = vrot.slane %v318, 5
      %v1440 = vsel %vm1369, %v1437, %v1439
      %v1441 = vrot.slane %v319, 5
      %v1442 = vsel %vm1369, %v1439, %v1441
      %v1443 = vrot.slane %v320, 5
      %v1444 = vsel %vm1369, %v1441, %v1443
      %v1445 = vrot.slane %v321, 5
      %v1446 = vsel %vm1369, %v1443, %v1445
      %1447 = vrot.lane.b32.xlu0 %v1372, 28
      %v1448 = vpop.permute.xlu0 %1447
      %1449 = vrot.lane.b32.xlu0 %v1374, 28
      %v1450 = vpop.permute.xlu0 %1449
      %1451 = vrot.lane.b32.xlu0 %v1376, 28
      %v1452 = vpop.permute.xlu0 %1451
      %1453 = vrot.lane.b32.xlu0 %v1378, 28
      %v1454 = vpop.permute.xlu0 %1453
      %1455 = vrot.lane.b32.xlu0 %v1380, 28
      %v1456 = vpop.permute.xlu0 %1455
      %1457 = vrot.lane.b32.xlu0 %v1382, 28
      %v1458 = vpop.permute.xlu0 %1457
      %1459 = vrot.lane.b32.xlu0 %v1384, 28
      %v1460 = vpop.permute.xlu0 %1459
      %1461 = vrot.lane.b32.xlu0 %v1386, 28
      %v1462 = vpop.permute.xlu0 %1461
      %1463 = vrot.lane.b32.xlu0 %v1388, 28
      %v1464 = vpop.permute.xlu0 %1463
      %1465 = vrot.lane.b32.xlu0 %v1390, 28
      %v1466 = vpop.permute.xlu0 %1465
      %1467 = vrot.lane.b32.xlu0 %v1392, 28
      %v1468 = vpop.permute.xlu0 %1467
      %1469 = vrot.lane.b32.xlu0 %v1394, 28
      %v1470 = vpop.permute.xlu0 %1469
      %1471 = vrot.lane.b32.xlu0 %v1396, 28
      %v1472 = vpop.permute.xlu0 %1471
      %1473 = vrot.lane.b32.xlu0 %v1398, 28
      %v1474 = vpop.permute.xlu0 %1473
      %1475 = vrot.lane.b32.xlu0 %v1400, 28
      %v1476 = vpop.permute.xlu0 %1475
      %1477 = vrot.lane.b32.xlu0 %v1402, 28
      %v1478 = vpop.permute.xlu0 %1477
      %1479 = vrot.lane.b32.xlu0 %v1404, 28
      %v1480 = vpop.permute.xlu0 %1479
      %1481 = vrot.lane.b32.xlu0 %v1406, 28
      %v1482 = vpop.permute.xlu0 %1481
      %1483 = vrot.lane.b32.xlu0 %v1408, 28
      %v1484 = vpop.permute.xlu0 %1483
      %1485 = vrot.lane.b32.xlu0 %v1410, 28
      %v1486 = vpop.permute.xlu0 %1485
      %1487 = vrot.lane.b32.xlu0 %v1412, 28
      %v1488 = vpop.permute.xlu0 %1487
      %1489 = vrot.lane.b32.xlu0 %v1414, 28
      %v1490 = vpop.permute.xlu0 %1489
      %1491 = vrot.lane.b32.xlu0 %v1416, 28
      %v1492 = vpop.permute.xlu0 %1491
      %1493 = vrot.lane.b32.xlu0 %v1418, 28
      %v1494 = vpop.permute.xlu0 %1493
      %1495 = vrot.lane.b32.xlu0 %v1420, 28
      %v1496 = vpop.permute.xlu0 %1495
      %1497 = vrot.lane.b32.xlu0 %v1422, 28
      %v1498 = vpop.permute.xlu0 %1497
      %1499 = vrot.lane.b32.xlu0 %v1424, 28
      %v1500 = vpop.permute.xlu0 %1499
      %1501 = vrot.lane.b32.xlu0 %v1426, 28
      %v1502 = vpop.permute.xlu0 %1501
      %1503 = vrot.lane.b32.xlu0 %v1428, 28
      %v1504 = vpop.permute.xlu0 %1503
      %1505 = vrot.lane.b32.xlu0 %v1430, 28
      %v1506 = vpop.permute.xlu0 %1505
      %1507 = vrot.lane.b32.xlu0 %v1432, 28
      %v1508 = vpop.permute.xlu0 %1507
      %1509 = vrot.lane.b32.xlu0 %v1434, 28
      %v1510 = vpop.permute.xlu0 %1509
      %1511 = vrot.lane.b32.xlu0 %v1436, 28
      %v1512 = vpop.permute.xlu0 %1511
      %1513 = vrot.lane.b32.xlu0 %v1438, 28
      %v1514 = vpop.permute.xlu0 %1513
      %1515 = vrot.lane.b32.xlu0 %v1440, 28
      %v1516 = vpop.permute.xlu0 %1515
      %1517 = vrot.lane.b32.xlu0 %v1442, 28
      %v1518 = vpop.permute.xlu0 %1517
      %1519 = vrot.lane.b32.xlu0 %v1444, 28
      %v1520 = vpop.permute.xlu0 %1519
      %1521 = vrot.lane.b32.xlu0 %v1446, 28
      %v1522 = vpop.permute.xlu0 %1521
      %vm1561 = vcmask 1041408
      %v1562 = vrot.slane %v283, 6
      %v1563 = vrot.slane %v284, 6
      %v1564 = vsel %vm1561, %v1562, %v1563
      %v1565 = vrot.slane %v285, 6
      %v1566 = vsel %vm1561, %v1563, %v1565
      %v1567 = vrot.slane %v286, 6
      %v1568 = vsel %vm1561, %v1565, %v1567
      %v1569 = vrot.slane %v287, 6
      %v1570 = vsel %vm1561, %v1567, %v1569
      %v1571 = vrot.slane %v288, 6
      %v1572 = vsel %vm1561, %v1569, %v1571
      %v1573 = vrot.slane %v289, 6
      %v1574 = vsel %vm1561, %v1571, %v1573
      %v1575 = vrot.slane %v290, 6
      %v1576 = vsel %vm1561, %v1573, %v1575
      %v1577 = vrot.slane %v291, 6
      %v1578 = vsel %vm1561, %v1575, %v1577
      %v1579 = vrot.slane %v292, 6
      %v1580 = vsel %vm1561, %v1577, %v1579
      %v1581 = vrot.slane %v293, 6
      %v1582 = vsel %vm1561, %v1579, %v1581
      %v1583 = vrot.slane %v294, 6
      %v1584 = vsel %vm1561, %v1581, %v1583
      %v1585 = vrot.slane %v295, 6
      %v1586 = vsel %vm1561, %v1583, %v1585
      %v1587 = vrot.slane %v296, 6
      %v1588 = vsel %vm1561, %v1585, %v1587
      %v1589 = vrot.slane %v297, 6
      %v1590 = vsel %vm1561, %v1587, %v1589
      %v1591 = vrot.slane %v298, 6
      %v1592 = vsel %vm1561, %v1589, %v1591
      %v1593 = vrot.slane %v299, 6
      %v1594 = vsel %vm1561, %v1591, %v1593
      %v1595 = vrot.slane %v300, 6
      %v1596 = vsel %vm1561, %v1593, %v1595
      %v1597 = vrot.slane %v301, 6
      %v1598 = vsel %vm1561, %v1595, %v1597
      %v1599 = vrot.slane %v302, 6
      %v1600 = vsel %vm1561, %v1597, %v1599
      %v1601 = vrot.slane %v303, 6
      %v1602 = vsel %vm1561, %v1599, %v1601
      %v1603 = vrot.slane %v304, 6
      %v1604 = vsel %vm1561, %v1601, %v1603
      %v1605 = vrot.slane %v305, 6
      %v1606 = vsel %vm1561, %v1603, %v1605
      %v1607 = vrot.slane %v306, 6
      %v1608 = vsel %vm1561, %v1605, %v1607
      %v1609 = vrot.slane %v307, 6
      %v1610 = vsel %vm1561, %v1607, %v1609
      %v1611 = vrot.slane %v308, 6
      %v1612 = vsel %vm1561, %v1609, %v1611
      %v1613 = vrot.slane %v309, 6
      %v1614 = vsel %vm1561, %v1611, %v1613
      %v1615 = vrot.slane %v310, 6
      %v1616 = vsel %vm1561, %v1613, %v1615
      %v1617 = vrot.slane %v311, 6
      %v1618 = vsel %vm1561, %v1615, %v1617
      %v1619 = vrot.slane %v312, 6
      %v1620 = vsel %vm1561, %v1617, %v1619
      %v1621 = vrot.slane %v313, 6
      %v1622 = vsel %vm1561, %v1619, %v1621
      %v1623 = vrot.slane %v314, 6
      %v1624 = vsel %vm1561, %v1621, %v1623
      %v1625 = vrot.slane %v315, 6
      %v1626 = vsel %vm1561, %v1623, %v1625
      %v1627 = vrot.slane %v316, 6
      %v1628 = vsel %vm1561, %v1625, %v1627
      %v1629 = vrot.slane %v317, 6
      %v1630 = vsel %vm1561, %v1627, %v1629
      %v1631 = vrot.slane %v318, 6
      %v1632 = vsel %vm1561, %v1629, %v1631
      %v1633 = vrot.slane %v319, 6
      %v1634 = vsel %vm1561, %v1631, %v1633
      %v1635 = vrot.slane %v320, 6
      %v1636 = vsel %vm1561, %v1633, %v1635
      %v1637 = vrot.slane %v321, 6
      %v1638 = vsel %vm1561, %v1635, %v1637
      %1639 = vrot.lane.b32.xlu0 %v1564, 32
      %v1640 = vpop.permute.xlu0 %1639
      %1641 = vrot.lane.b32.xlu0 %v1566, 32
      %v1642 = vpop.permute.xlu0 %1641
      %1643 = vrot.lane.b32.xlu0 %v1568, 32
      %v1644 = vpop.permute.xlu0 %1643
      %1645 = vrot.lane.b32.xlu0 %v1570, 32
      %v1646 = vpop.permute.xlu0 %1645
      %1647 = vrot.lane.b32.xlu0 %v1572, 32
      %v1648 = vpop.permute.xlu0 %1647
      %1649 = vrot.lane.b32.xlu0 %v1574, 32
      %v1650 = vpop.permute.xlu0 %1649
      %1651 = vrot.lane.b32.xlu0 %v1576, 32
      %v1652 = vpop.permute.xlu0 %1651
      %1653 = vrot.lane.b32.xlu0 %v1578, 32
      %v1654 = vpop.permute.xlu0 %1653
      %1655 = vrot.lane.b32.xlu0 %v1580, 32
      %v1656 = vpop.permute.xlu0 %1655
      %1657 = vrot.lane.b32.xlu0 %v1582, 32
      %v1658 = vpop.permute.xlu0 %1657
      %1659 = vrot.lane.b32.xlu0 %v1584, 32
      %v1660 = vpop.permute.xlu0 %1659
      %1661 = vrot.lane.b32.xlu0 %v1586, 32
      %v1662 = vpop.permute.xlu0 %1661
      %1663 = vrot.lane.b32.xlu0 %v1588, 32
      %v1664 = vpop.permute.xlu0 %1663
      %1665 = vrot.lane.b32.xlu0 %v1590, 32
      %v1666 = vpop.permute.xlu0 %1665
      %1667 = vrot.lane.b32.xlu0 %v1592, 32
      %v1668 = vpop.permute.xlu0 %1667
      %1669 = vrot.lane.b32.xlu0 %v1594, 32
      %v1670 = vpop.permute.xlu0 %1669
      %1671 = vrot.lane.b32.xlu0 %v1596, 32
      %v1672 = vpop.permute.xlu0 %1671
      %1673 = vrot.lane.b32.xlu0 %v1598, 32
      %v1674 = vpop.permute.xlu0 %1673
      %1675 = vrot.lane.b32.xlu0 %v1600, 32
      %v1676 = vpop.permute.xlu0 %1675
      %1677 = vrot.lane.b32.xlu0 %v1602, 32
      %v1678 = vpop.permute.xlu0 %1677
      %1679 = vrot.lane.b32.xlu0 %v1604, 32
      %v1680 = vpop.permute.xlu0 %1679
      %1681 = vrot.lane.b32.xlu0 %v1606, 32
      %v1682 = vpop.permute.xlu0 %1681
      %1683 = vrot.lane.b32.xlu0 %v1608, 32
      %v1684 = vpop.permute.xlu0 %1683
      %1685 = vrot.lane.b32.xlu0 %v1610, 32
      %v1686 = vpop.permute.xlu0 %1685
      %1687 = vrot.lane.b32.xlu0 %v1612, 32
      %v1688 = vpop.permute.xlu0 %1687
      %1689 = vrot.lane.b32.xlu0 %v1614, 32
      %v1690 = vpop.permute.xlu0 %1689
      %1691 = vrot.lane.b32.xlu0 %v1616, 32
      %v1692 = vpop.permute.xlu0 %1691
      %1693 = vrot.lane.b32.xlu0 %v1618, 32
      %v1694 = vpop.permute.xlu0 %1693
      %1695 = vrot.lane.b32.xlu0 %v1620, 32
      %v1696 = vpop.permute.xlu0 %1695
      %1697 = vrot.lane.b32.xlu0 %v1622, 32
      %v1698 = vpop.permute.xlu0 %1697
      %1699 = vrot.lane.b32.xlu0 %v1624, 32
      %v1700 = vpop.permute.xlu0 %1699
      %1701 = vrot.lane.b32.xlu0 %v1626, 32
      %v1702 = vpop.permute.xlu0 %1701
      %1703 = vrot.lane.b32.xlu0 %v1628, 32
      %v1704 = vpop.permute.xlu0 %1703
      %1705 = vrot.lane.b32.xlu0 %v1630, 32
      %v1706 = vpop.permute.xlu0 %1705
      %1707 = vrot.lane.b32.xlu0 %v1632, 32
      %v1708 = vpop.permute.xlu0 %1707
      %1709 = vrot.lane.b32.xlu0 %v1634, 32
      %v1710 = vpop.permute.xlu0 %1709
      %1711 = vrot.lane.b32.xlu0 %v1636, 32
      %v1712 = vpop.permute.xlu0 %1711
      %1713 = vrot.lane.b32.xlu0 %v1638, 32
      %v1714 = vpop.permute.xlu0 %1713
      %vm1753 = vcmask 31744
      %v1754 = vsel %vm1753, %v279, %v440
      %v1755 = vsel %vm1753, %v280, %v442
      %v1756 = vsel %vm1753, %v281, %v444
      %v1757 = vsel %vm1753, %v282, %v446
      %v1758 = vsel %vm1753, %v283, %v448
      %v1759 = vsel %vm1753, %v284, %v450
      %v1760 = vsel %vm1753, %v285, %v452
      %v1761 = vsel %vm1753, %v286, %v454
      %v1762 = vsel %vm1753, %v287, %v456
      %v1763 = vsel %vm1753, %v288, %v458
      %v1764 = vsel %vm1753, %v289, %v460
      %v1765 = vsel %vm1753, %v290, %v462
      %v1766 = vsel %vm1753, %v291, %v464
      %v1767 = vsel %vm1753, %v292, %v466
      %v1768 = vsel %vm1753, %v293, %v468
      %v1769 = vsel %vm1753, %v294, %v470
      %v1770 = vsel %vm1753, %v295, %v472
      %v1771 = vsel %vm1753, %v296, %v474
      %v1772 = vsel %vm1753, %v297, %v476
      %v1773 = vsel %vm1753, %v298, %v478
      %v1774 = vsel %vm1753, %v299, %v480
      %v1775 = vsel %vm1753, %v300, %v482
      %v1776 = vsel %vm1753, %v301, %v484
      %v1777 = vsel %vm1753, %v302, %v486
      %v1778 = vsel %vm1753, %v303, %v488
      %v1779 = vsel %vm1753, %v304, %v490
      %v1780 = vsel %vm1753, %v305, %v492
      %v1781 = vsel %vm1753, %v306, %v494
      %v1782 = vsel %vm1753, %v307, %v496
      %v1783 = vsel %vm1753, %v308, %v498
      %v1784 = vsel %vm1753, %v309, %v500
      %v1785 = vsel %vm1753, %v310, %v502
      %v1786 = vsel %vm1753, %v311, %v504
      %v1787 = vsel %vm1753, %v312, %v506
      %v1788 = vsel %vm1753, %v313, %v508
      %v1789 = vsel %vm1753, %v314, %v510
      %v1790 = vsel %vm1753, %v315, %v512
      %v1791 = vsel %vm1753, %v316, %v514
      %vm1792 = vcmask 64512
      %v1793 = vsel %vm1792, %v1754, %v632
      %v1794 = vsel %vm1792, %v1755, %v634
      %v1795 = vsel %vm1792, %v1756, %v636
      %v1796 = vsel %vm1792, %v1757, %v638
      %v1797 = vsel %vm1792, %v1758, %v640
      %v1798 = vsel %vm1792, %v1759, %v642
      %v1799 = vsel %vm1792, %v1760, %v644
      %v1800 = vsel %vm1792, %v1761, %v646
      %v1801 = vsel %vm1792, %v1762, %v648
      %v1802 = vsel %vm1792, %v1763, %v650
      %v1803 = vsel %vm1792, %v1764, %v652
      %v1804 = vsel %vm1792, %v1765, %v654
      %v1805 = vsel %vm1792, %v1766, %v656
      %v1806 = vsel %vm1792, %v1767, %v658
      %v1807 = vsel %vm1792, %v1768, %v660
      %v1808 = vsel %vm1792, %v1769, %v662
      %v1809 = vsel %vm1792, %v1770, %v664
      %v1810 = vsel %vm1792, %v1771, %v666
      %v1811 = vsel %vm1792, %v1772, %v668
      %v1812 = vsel %vm1792, %v1773, %v670
      %v1813 = vsel %vm1792, %v1774, %v672
      %v1814 = vsel %vm1792, %v1775, %v674
      %v1815 = vsel %vm1792, %v1776, %v676
      %v1816 = vsel %vm1792, %v1777, %v678
      %v1817 = vsel %vm1792, %v1778, %v680
      %v1818 = vsel %vm1792, %v1779, %v682
      %v1819 = vsel %vm1792, %v1780, %v684
      %v1820 = vsel %vm1792, %v1781, %v686
      %v1821 = vsel %vm1792, %v1782, %v688
      %v1822 = vsel %vm1792, %v1783, %v690
      %v1823 = vsel %vm1792, %v1784, %v692
      %v1824 = vsel %vm1792, %v1785, %v694
      %v1825 = vsel %vm1792, %v1786, %v696
      %v1826 = vsel %vm1792, %v1787, %v698
      %v1827 = vsel %vm1792, %v1788, %v700
      %v1828 = vsel %vm1792, %v1789, %v702
      %v1829 = vsel %vm1792, %v1790, %v704
      %v1830 = vsel %vm1792, %v1791, %v706
      %vm1831 = vcmask 97280
      %v1832 = vsel %vm1831, %v1793, %v752
      %v1833 = vsel %vm1831, %v1794, %v754
      %v1834 = vsel %vm1831, %v1795, %v756
      %v1835 = vsel %vm1831, %v1796, %v758
      %v1836 = vsel %vm1831, %v1797, %v760
      %v1837 = vsel %vm1831, %v1798, %v762
      %v1838 = vsel %vm1831, %v1799, %v764
      %v1839 = vsel %vm1831, %v1800, %v766
      %v1840 = vsel %vm1831, %v1801, %v768
      %v1841 = vsel %vm1831, %v1802, %v770
      %v1842 = vsel %vm1831, %v1803, %v772
      %v1843 = vsel %vm1831, %v1804, %v774
      %v1844 = vsel %vm1831, %v1805, %v776
      %v1845 = vsel %vm1831, %v1806, %v778
      %v1846 = vsel %vm1831, %v1807, %v780
      %v1847 = vsel %vm1831, %v1808, %v782
      %v1848 = vsel %vm1831, %v1809, %v784
      %v1849 = vsel %vm1831, %v1810, %v786
      %v1850 = vsel %vm1831, %v1811, %v788
      %v1851 = vsel %vm1831, %v1812, %v790
      %v1852 = vsel %vm1831, %v1813, %v792
      %v1853 = vsel %vm1831, %v1814, %v794
      %v1854 = vsel %vm1831, %v1815, %v796
      %v1855 = vsel %vm1831, %v1816, %v798
      %v1856 = vsel %vm1831, %v1817, %v800
      %v1857 = vsel %vm1831, %v1818, %v802
      %v1858 = vsel %vm1831, %v1819, %v804
      %v1859 = vsel %vm1831, %v1820, %v806
      %v1860 = vsel %vm1831, %v1821, %v808
      %v1861 = vsel %vm1831, %v1822, %v810
      %v1862 = vsel %vm1831, %v1823, %v812
      %v1863 = vsel %vm1831, %v1824, %v814
      %v1864 = vsel %vm1831, %v1825, %v816
      %v1865 = vsel %vm1831, %v1826, %v818
      %v1866 = vsel %vm1831, %v1827, %v820
      %v1867 = vsel %vm1831, %v1828, %v822
      %v1868 = vsel %vm1831, %v1829, %v824
      %v1869 = vsel %vm1831, %v1830, %v826
      %vm1870 = vcmask 130048
      %v1871 = vsel %vm1870, %v1832, %v944
      %v1872 = vsel %vm1870, %v1833, %v946
      %v1873 = vsel %vm1870, %v1834, %v948
      %v1874 = vsel %vm1870, %v1835, %v950
      %v1875 = vsel %vm1870, %v1836, %v952
      %v1876 = vsel %vm1870, %v1837, %v954
      %v1877 = vsel %vm1870, %v1838, %v956
      %v1878 = vsel %vm1870, %v1839, %v958
      %v1879 = vsel %vm1870, %v1840, %v960
      %v1880 = vsel %vm1870, %v1841, %v962
      %v1881 = vsel %vm1870, %v1842, %v964
      %v1882 = vsel %vm1870, %v1843, %v966
      %v1883 = vsel %vm1870, %v1844, %v968
      %v1884 = vsel %vm1870, %v1845, %v970
      %v1885 = vsel %vm1870, %v1846, %v972
      %v1886 = vsel %vm1870, %v1847, %v974
      %v1887 = vsel %vm1870, %v1848, %v976
      %v1888 = vsel %vm1870, %v1849, %v978
      %v1889 = vsel %vm1870, %v1850, %v980
      %v1890 = vsel %vm1870, %v1851, %v982
      %v1891 = vsel %vm1870, %v1852, %v984
      %v1892 = vsel %vm1870, %v1853, %v986
      %v1893 = vsel %vm1870, %v1854, %v988
      %v1894 = vsel %vm1870, %v1855, %v990
      %v1895 = vsel %vm1870, %v1856, %v992
      %v1896 = vsel %vm1870, %v1857, %v994
      %v1897 = vsel %vm1870, %v1858, %v996
      %v1898 = vsel %vm1870, %v1859, %v998
      %v1899 = vsel %vm1870, %v1860, %v1000
      %v1900 = vsel %vm1870, %v1861, %v1002
      %v1901 = vsel %vm1870, %v1862, %v1004
      %v1902 = vsel %vm1870, %v1863, %v1006
      %v1903 = vsel %vm1870, %v1864, %v1008
      %v1904 = vsel %vm1870, %v1865, %v1010
      %v1905 = vsel %vm1870, %v1866, %v1012
      %v1906 = vsel %vm1870, %v1867, %v1014
      %v1907 = vsel %vm1870, %v1868, %v1016
      %v1908 = vsel %vm1870, %v1869, %v1018
      %vm1909 = vcmask 162816
      %v1910 = vsel %vm1909, %v1871, %v1136
      %v1911 = vsel %vm1909, %v1872, %v1138
      %v1912 = vsel %vm1909, %v1873, %v1140
      %v1913 = vsel %vm1909, %v1874, %v1142
      %v1914 = vsel %vm1909, %v1875, %v1144
      %v1915 = vsel %vm1909, %v1876, %v1146
      %v1916 = vsel %vm1909, %v1877, %v1148
      %v1917 = vsel %vm1909, %v1878, %v1150
      %v1918 = vsel %vm1909, %v1879, %v1152
      %v1919 = vsel %vm1909, %v1880, %v1154
      %v1920 = vsel %vm1909, %v1881, %v1156
      %v1921 = vsel %vm1909, %v1882, %v1158
      %v1922 = vsel %vm1909, %v1883, %v1160
      %v1923 = vsel %vm1909, %v1884, %v1162
      %v1924 = vsel %vm1909, %v1885, %v1164
      %v1925 = vsel %vm1909, %v1886, %v1166
      %v1926 = vsel %vm1909, %v1887, %v1168
      %v1927 = vsel %vm1909, %v1888, %v1170
      %v1928 = vsel %vm1909, %v1889, %v1172
      %v1929 = vsel %vm1909, %v1890, %v1174
      %v1930 = vsel %vm1909, %v1891, %v1176
      %v1931 = vsel %vm1909, %v1892, %v1178
      %v1932 = vsel %vm1909, %v1893, %v1180
      %v1933 = vsel %vm1909, %v1894, %v1182
      %v1934 = vsel %vm1909, %v1895, %v1184
      %v1935 = vsel %vm1909, %v1896, %v1186
      %v1936 = vsel %vm1909, %v1897, %v1188
      %v1937 = vsel %vm1909, %v1898, %v1190
      %v1938 = vsel %vm1909, %v1899, %v1192
      %v1939 = vsel %vm1909, %v1900, %v1194
      %v1940 = vsel %vm1909, %v1901, %v1196
      %v1941 = vsel %vm1909, %v1902, %v1198
      %v1942 = vsel %vm1909, %v1903, %v1200
      %v1943 = vsel %vm1909, %v1904, %v1202
      %v1944 = vsel %vm1909, %v1905, %v1204
      %v1945 = vsel %vm1909, %v1906, %v1206
      %v1946 = vsel %vm1909, %v1907, %v1208
      %v1947 = vsel %vm1909, %v1908, %v1210
      %vm1948 = vcmask 195584
      %v1949 = vsel %vm1948, %v1910, %v1256
      %v1950 = vsel %vm1948, %v1911, %v1258
      %v1951 = vsel %vm1948, %v1912, %v1260
      %v1952 = vsel %vm1948, %v1913, %v1262
      %v1953 = vsel %vm1948, %v1914, %v1264
      %v1954 = vsel %vm1948, %v1915, %v1266
      %v1955 = vsel %vm1948, %v1916, %v1268
      %v1956 = vsel %vm1948, %v1917, %v1270
      %v1957 = vsel %vm1948, %v1918, %v1272
      %v1958 = vsel %vm1948, %v1919, %v1274
      %v1959 = vsel %vm1948, %v1920, %v1276
      %v1960 = vsel %vm1948, %v1921, %v1278
      %v1961 = vsel %vm1948, %v1922, %v1280
      %v1962 = vsel %vm1948, %v1923, %v1282
      %v1963 = vsel %vm1948, %v1924, %v1284
      %v1964 = vsel %vm1948, %v1925, %v1286
      %v1965 = vsel %vm1948, %v1926, %v1288
      %v1966 = vsel %vm1948, %v1927, %v1290
      %v1967 = vsel %vm1948, %v1928, %v1292
      %v1968 = vsel %vm1948, %v1929, %v1294
      %v1969 = vsel %vm1948, %v1930, %v1296
      %v1970 = vsel %vm1948, %v1931, %v1298
      %v1971 = vsel %vm1948, %v1932, %v1300
      %v1972 = vsel %vm1948, %v1933, %v1302
      %v1973 = vsel %vm1948, %v1934, %v1304
      %v1974 = vsel %vm1948, %v1935, %v1306
      %v1975 = vsel %vm1948, %v1936, %v1308
      %v1976 = vsel %vm1948, %v1937, %v1310
      %v1977 = vsel %vm1948, %v1938, %v1312
      %v1978 = vsel %vm1948, %v1939, %v1314
      %v1979 = vsel %vm1948, %v1940, %v1316
      %v1980 = vsel %vm1948, %v1941, %v1318
      %v1981 = vsel %vm1948, %v1942, %v1320
      %v1982 = vsel %vm1948, %v1943, %v1322
      %v1983 = vsel %vm1948, %v1944, %v1324
      %v1984 = vsel %vm1948, %v1945, %v1326
      %v1985 = vsel %vm1948, %v1946, %v1328
      %v1986 = vsel %vm1948, %v1947, %v1330
      %vm1987 = vcmask 228352
      %v1988 = vsel %vm1987, %v1949, %v1448
      %v1989 = vsel %vm1987, %v1950, %v1450
      %v1990 = vsel %vm1987, %v1951, %v1452
      %v1991 = vsel %vm1987, %v1952, %v1454
      %v1992 = vsel %vm1987, %v1953, %v1456
      %v1993 = vsel %vm1987, %v1954, %v1458
      %v1994 = vsel %vm1987, %v1955, %v1460
      %v1995 = vsel %vm1987, %v1956, %v1462
      %v1996 = vsel %vm1987, %v1957, %v1464
      %v1997 = vsel %vm1987, %v1958, %v1466
      %v1998 = vsel %vm1987, %v1959, %v1468
      %v1999 = vsel %vm1987, %v1960, %v1470
      %v2000 = vsel %vm1987, %v1961, %v1472
      %v2001 = vsel %vm1987, %v1962, %v1474
      %v2002 = vsel %vm1987, %v1963, %v1476
      %v2003 = vsel %vm1987, %v1964, %v1478
      %v2004 = vsel %vm1987, %v1965, %v1480
      %v2005 = vsel %vm1987, %v1966, %v1482
      %v2006 = vsel %vm1987, %v1967, %v1484
      %v2007 = vsel %vm1987, %v1968, %v1486
      %v2008 = vsel %vm1987, %v1969, %v1488
      %v2009 = vsel %vm1987, %v1970, %v1490
      %v2010 = vsel %vm1987, %v1971, %v1492
      %v2011 = vsel %vm1987, %v1972, %v1494
      %v2012 = vsel %vm1987, %v1973, %v1496
      %v2013 = vsel %vm1987, %v1974, %v1498
      %v2014 = vsel %vm1987, %v1975, %v1500
      %v2015 = vsel %vm1987, %v1976, %v1502
      %v2016 = vsel %vm1987, %v1977, %v1504
      %v2017 = vsel %vm1987, %v1978, %v1506
      %v2018 = vsel %vm1987, %v1979, %v1508
      %v2019 = vsel %vm1987, %v1980, %v1510
      %v2020 = vsel %vm1987, %v1981, %v1512
      %v2021 = vsel %vm1987, %v1982, %v1514
      %v2022 = vsel %vm1987, %v1983, %v1516
      %v2023 = vsel %vm1987, %v1984, %v1518
      %v2024 = vsel %vm1987, %v1985, %v1520
      %v2025 = vsel %vm1987, %v1986, %v1522
      %vm2026 = vcmask 261120
      %v2027 = vsel %vm2026, %v1988, %v1640
      %v2028 = vsel %vm2026, %v1989, %v1642
      %v2029 = vsel %vm2026, %v1990, %v1644
      %v2030 = vsel %vm2026, %v1991, %v1646
      %v2031 = vsel %vm2026, %v1992, %v1648
      %v2032 = vsel %vm2026, %v1993, %v1650
      %v2033 = vsel %vm2026, %v1994, %v1652
      %v2034 = vsel %vm2026, %v1995, %v1654
      %v2035 = vsel %vm2026, %v1996, %v1656
      %v2036 = vsel %vm2026, %v1997, %v1658
      %v2037 = vsel %vm2026, %v1998, %v1660
      %v2038 = vsel %vm2026, %v1999, %v1662
      %v2039 = vsel %vm2026, %v2000, %v1664
      %v2040 = vsel %vm2026, %v2001, %v1666
      %v2041 = vsel %vm2026, %v2002, %v1668
      %v2042 = vsel %vm2026, %v2003, %v1670
      %v2043 = vsel %vm2026, %v2004, %v1672
      %v2044 = vsel %vm2026, %v2005, %v1674
      %v2045 = vsel %vm2026, %v2006, %v1676
      %v2046 = vsel %vm2026, %v2007, %v1678
      %v2047 = vsel %vm2026, %v2008, %v1680
      %v2048 = vsel %vm2026, %v2009, %v1682
      %v2049 = vsel %vm2026, %v2010, %v1684
      %v2050 = vsel %vm2026, %v2011, %v1686
      %v2051 = vsel %vm2026, %v2012, %v1688
      %v2052 = vsel %vm2026, %v2013, %v1690
      %v2053 = vsel %vm2026, %v2014, %v1692
      %v2054 = vsel %vm2026, %v2015, %v1694
      %v2055 = vsel %vm2026, %v2016, %v1696
      %v2056 = vsel %vm2026, %v2017, %v1698
      %v2057 = vsel %vm2026, %v2018, %v1700
      %v2058 = vsel %vm2026, %v2019, %v1702
      %v2059 = vsel %vm2026, %v2020, %v1704
      %v2060 = vsel %vm2026, %v2021, %v1706
      %v2061 = vsel %vm2026, %v2022, %v1708
      %v2062 = vsel %vm2026, %v2023, %v1710
      %v2063 = vsel %vm2026, %v2024, %v1712
      %v2064 = vsel %vm2026, %v2025, %v1714
      %v2065 = vld [vmem:[%s1] sm:$0xff]
      %v2066 = vld [vmem:[%s1 + $0x8] sm:$0xff]
      %v2067 = vld [vmem:[%s1 + $0x10] sm:$0xff]
      %v2068 = vld [vmem:[%s1 + $0x18] sm:$0xff]
      %v2069 = vld [vmem:[%s1 + $0x20] sm:$0xf]
      %v2070 = vld [vmem:[%s2] sm:$0x1]
      %v2072 = vlaneseq
      %v2073 = vshrl.u32 %v2072, 7
      %v2074 = vsub.s32 0, %v2073
      %v2075 = vrot.slane %v2070, %v2074
      %vm2077 = vcmask 293888
      %v2079 = vsel %vm2077, %v2027, 0
      %v2082 = vsel %vm2077, %v2028, 0
      %v2085 = vsel %vm2077, %v2029, 0
      %v2088 = vsel %vm2077, %v2030, 0
      %v2091 = vsel %vm2077, %v2031, 0
      %v2094 = vsel %vm2077, %v2032, 0
      %v2097 = vsel %vm2077, %v2033, 0
      %v2100 = vsel %vm2077, %v2034, 0
      %v2103 = vsel %vm2077, %v2035, 0
      %v2106 = vsel %vm2077, %v2036, 0
      %v2109 = vsel %vm2077, %v2037, 0
      %v2112 = vsel %vm2077, %v2038, 0
      %v2115 = vsel %vm2077, %v2039, 0
      %v2118 = vsel %vm2077, %v2040, 0
      %v2121 = vsel %vm2077, %v2041, 0
      %v2124 = vsel %vm2077, %v2042, 0
      %v2127 = vsel %vm2077, %v2043, 0
      %v2130 = vsel %vm2077, %v2044, 0
      %v2133 = vsel %vm2077, %v2045, 0
      %v2136 = vsel %vm2077, %v2046, 0
      %v2139 = vsel %vm2077, %v2047, 0
      %v2142 = vsel %vm2077, %v2048, 0
      %v2145 = vsel %vm2077, %v2049, 0
      %v2148 = vsel %vm2077, %v2050, 0
      %v2151 = vsel %vm2077, %v2051, 0
      %v2154 = vsel %vm2077, %v2052, 0
      %v2157 = vsel %vm2077, %v2053, 0
      %v2160 = vsel %vm2077, %v2054, 0
      %v2163 = vsel %vm2077, %v2055, 0
      %v2166 = vsel %vm2077, %v2056, 0
      %v2169 = vsel %vm2077, %v2057, 0
      %v2172 = vsel %vm2077, %v2058, 0
      %v2175 = vsel %vm2077, %v2059, 0
      %v2178 = vsel %vm2077, %v2060, 0
      %v2181 = vsel %vm2077, %v2061, 0
      %v2184 = vsel %vm2077, %v2062, 0
      %v2187 = vsel %vm2077, %v2063, 0
      %v2190 = vsel %vm2077, %v2064, 0
      %v2193 = vsel %vm1057, %v2069, 0
      %2195 = vmatprep.subr.mxu0 0.0
      %2196 = vmatpush1.msra.mxu0 0.0
      %2197 = vmatprep.subr.mxu0 0.0
      %2198 = vmatpush1.msra.mxu0 0.0
      %2199 = vmatprep.subr.mxu0 0.0
      %2200 = vmatpush1.msra.mxu0 0.0
      %2201 = vmatprep.subr.mxu0 0.0
      %2202 = vmatpush1.msra.mxu0 0.0
      %2203 = vmatprep.subr.mxu0 0.0
      %2204 = vmatpush1.msra.mxu0 0.0
      %2205 = vmatprep.subr.mxu0 0.0
      %2206 = vmatpush1.msra.mxu0 0.0
      %2207 = vmatprep.subr.mxu0 0.0
      %2208 = vmatpush1.msra.mxu0 0.0
      %2209 = vmatprep.subr.mxu0 0.0
      %2210 = vmatpush1.msra.mxu0 0.0
      %2211 = vmatprep.subr.mxu0 0.0
      %2212 = vmatpush1.msra.mxu0 0.0
      %2213 = vmatprep.subr.mxu0 0.0
      %2214 = vmatpush1.msra.mxu0 0.0
      %2215 = vmatprep.subr.mxu0 0.0
      %2216 = vmatpush1.msra.mxu0 0.0
      %2217 = vmatprep.subr.mxu0 0.0
      %2218 = vmatpush1.msra.mxu0 %v2193
      %2219 = vmatprep.subr.mxu0 0.0
      %2220 = vmatpush1.msra.mxu0 %v2068
      %2221 = vmatprep.subr.mxu0 0.0
      %2222 = vmatpush1.msra.mxu0 %v2067
      %2223 = vmatprep.subr.mxu0 0.0
      %2224 = vmatpush1.msra.mxu0 %v2066
      %2225 = vmatprep.subr.mxu0 0.0
      %2226 = vmatpush1.msra.mxu0 %v2065
      %2227 = vmatprep.subr.mxu0 0.0
      %2228 = vmatpush2.msra.mxu0 0.0
      %2229 = vmatprep.subr.mxu0 0.0
      %2230 = vmatpush2.msra.mxu0 0.0
      %2231 = vmatprep.subr.mxu0 0.0
      %2232 = vmatpush2.msra.mxu0 0.0
      %2233 = vmatprep.subr.mxu0 0.0
      %2234 = vmatpush2.msra.mxu0 0.0
      %2235 = vmatprep.subr.mxu0 0.0
      %2236 = vmatpush2.msra.mxu0 0.0
      %2237 = vmatprep.subr.mxu0 0.0
      %2238 = vmatpush2.msra.mxu0 0.0
      %2239 = vmatprep.subr.mxu0 0.0
      %2240 = vmatpush2.msra.mxu0 0.0
      %2241 = vmatprep.subr.mxu0 0.0
      %2242 = vmatpush2.msra.mxu0 0.0
      %2243 = vmatprep.subr.mxu0 0.0
      %2244 = vmatpush2.msra.mxu0 0.0
      %2245 = vmatprep.subr.mxu0 0.0
      %2246 = vmatpush2.msra.mxu0 0.0
      %2247 = vmatprep.subr.mxu0 0.0
      %2248 = vmatpush2.msra.mxu0 0.0
      %2249 = vmatprep.subr.mxu0 0.0
      %2250 = vmatpush2.msra.mxu0 0.0
      %2251 = vmatprep.subr.mxu0 0.0
      %2252 = vmatpush2.msra.mxu0 0.0
      %2253 = vmatprep.subr.mxu0 0.0
      %2254 = vmatpush2.msra.mxu0 0.0
      %2255 = vmatprep.subr.mxu0 0.0
      %2256 = vmatpush2.msra.mxu0 0.0
      %2257 = vmatprep.subr.mxu0 0.0
      %2258 = vmatpush2.msra.mxu0 0.0
      %2259 = vmatprep.mubr.f32.mxu0 0.0
      %2260 = vmatmul.mubr.f32.gmra.mxu0 %v2079
      %v2261 = vpop.f32.mrf.mxu0
      %v2262 = vadd.f32 %v2075, %v2261
      %v2263 = vpop.f32.mrf.mxu0
      %2264 = vmatprep.mubr.f32.mxu0 0.0
      %2265 = vmatmul.mubr.f32.gmra.mxu0 %v2082
      %v2266 = vpop.f32.mrf.mxu0
      %v2267 = vadd.f32 %v2075, %v2266
      %v2268 = vpop.f32.mrf.mxu0
      %2269 = vmatprep.mubr.f32.mxu0 0.0
      %2270 = vmatmul.mubr.f32.gmra.mxu0 %v2085
      %v2271 = vpop.f32.mrf.mxu0
      %v2272 = vadd.f32 %v2075, %v2271
      %v2273 = vpop.f32.mrf.mxu0
      %2274 = vmatprep.mubr.f32.mxu0 0.0
      %2275 = vmatmul.mubr.f32.gmra.mxu0 %v2088
      %v2276 = vpop.f32.mrf.mxu0
      %v2277 = vadd.f32 %v2075, %v2276
      %v2278 = vpop.f32.mrf.mxu0
      %2279 = vmatprep.mubr.f32.mxu0 0.0
      %2280 = vmatmul.mubr.f32.gmra.mxu0 %v2091
      %v2281 = vpop.f32.mrf.mxu0
      %v2282 = vadd.f32 %v2075, %v2281
      %v2283 = vpop.f32.mrf.mxu0
      %2284 = vmatprep.mubr.f32.mxu0 0.0
      %2285 = vmatmul.mubr.f32.gmra.mxu0 %v2094
      %v2286 = vpop.f32.mrf.mxu0
      %v2287 = vadd.f32 %v2075, %v2286
      %v2288 = vpop.f32.mrf.mxu0
      %2289 = vmatprep.mubr.f32.mxu0 0.0
      %2290 = vmatmul.mubr.f32.gmra.mxu0 %v2097
      %v2291 = vpop.f32.mrf.mxu0
      %v2292 = vadd.f32 %v2075, %v2291
      %v2293 = vpop.f32.mrf.mxu0
      %2294 = vmatprep.mubr.f32.mxu0 0.0
      %2295 = vmatmul.mubr.f32.gmra.mxu0 %v2100
      %v2296 = vpop.f32.mrf.mxu0
      %v2297 = vadd.f32 %v2075, %v2296
      %v2298 = vpop.f32.mrf.mxu0
      %2299 = vmatprep.mubr.f32.mxu0 0.0
      %2300 = vmatmul.mubr.f32.gmra.mxu0 %v2103
      %v2301 = vpop.f32.mrf.mxu0
      %v2302 = vadd.f32 %v2075, %v2301
      %v2303 = vpop.f32.mrf.mxu0
      %2304 = vmatprep.mubr.f32.mxu0 0.0
      %2305 = vmatmul.mubr.f32.gmra.mxu0 %v2106
      %v2306 = vpop.f32.mrf.mxu0
      %v2307 = vadd.f32 %v2075, %v2306
      %v2308 = vpop.f32.mrf.mxu0
      %2309 = vmatprep.mubr.f32.mxu0 0.0
      %2310 = vmatmul.mubr.f32.gmra.mxu0 %v2109
      %v2311 = vpop.f32.mrf.mxu0
      %v2312 = vadd.f32 %v2075, %v2311
      %v2313 = vpop.f32.mrf.mxu0
      %2314 = vmatprep.mubr.f32.mxu0 0.0
      %2315 = vmatmul.mubr.f32.gmra.mxu0 %v2112
      %v2316 = vpop.f32.mrf.mxu0
      %v2317 = vadd.f32 %v2075, %v2316
      %v2318 = vpop.f32.mrf.mxu0
      %2319 = vmatprep.mubr.f32.mxu0 0.0
      %2320 = vmatmul.mubr.f32.gmra.mxu0 %v2115
      %v2321 = vpop.f32.mrf.mxu0
      %v2322 = vadd.f32 %v2075, %v2321
      %v2323 = vpop.f32.mrf.mxu0
      %2324 = vmatprep.mubr.f32.mxu0 0.0
      %2325 = vmatmul.mubr.f32.gmra.mxu0 %v2118
      %v2326 = vpop.f32.mrf.mxu0
      %v2327 = vadd.f32 %v2075, %v2326
      %v2328 = vpop.f32.mrf.mxu0
      %2329 = vmatprep.mubr.f32.mxu0 0.0
      %2330 = vmatmul.mubr.f32.gmra.mxu0 %v2121
      %v2331 = vpop.f32.mrf.mxu0
      %v2332 = vadd.f32 %v2075, %v2331
      %v2333 = vpop.f32.mrf.mxu0
      %2334 = vmatprep.mubr.f32.mxu0 0.0
      %2335 = vmatmul.mubr.f32.gmra.mxu0 %v2124
      %v2336 = vpop.f32.mrf.mxu0
      %v2337 = vadd.f32 %v2075, %v2336
      %v2338 = vpop.f32.mrf.mxu0
      %2339 = vmatprep.mubr.f32.mxu0 0.0
      %2340 = vmatmul.mubr.f32.gmra.mxu0 %v2127
      %v2341 = vpop.f32.mrf.mxu0
      %v2342 = vadd.f32 %v2075, %v2341
      %v2343 = vpop.f32.mrf.mxu0
      %2344 = vmatprep.mubr.f32.mxu0 0.0
      %2345 = vmatmul.mubr.f32.gmra.mxu0 %v2130
      %v2346 = vpop.f32.mrf.mxu0
      %v2347 = vadd.f32 %v2075, %v2346
      %v2348 = vpop.f32.mrf.mxu0
      %2349 = vmatprep.mubr.f32.mxu0 0.0
      %2350 = vmatmul.mubr.f32.gmra.mxu0 %v2133
      %v2351 = vpop.f32.mrf.mxu0
      %v2352 = vadd.f32 %v2075, %v2351
      %v2353 = vpop.f32.mrf.mxu0
      %2354 = vmatprep.mubr.f32.mxu0 0.0
      %2355 = vmatmul.mubr.f32.gmra.mxu0 %v2136
      %v2356 = vpop.f32.mrf.mxu0
      %v2357 = vadd.f32 %v2075, %v2356
      %v2358 = vpop.f32.mrf.mxu0
      %2359 = vmatprep.mubr.f32.mxu0 0.0
      %2360 = vmatmul.mubr.f32.gmra.mxu0 %v2139
      %v2361 = vpop.f32.mrf.mxu0
      %v2362 = vadd.f32 %v2075, %v2361
      %v2363 = vpop.f32.mrf.mxu0
      %2364 = vmatprep.mubr.f32.mxu0 0.0
      %2365 = vmatmul.mubr.f32.gmra.mxu0 %v2142
      %v2366 = vpop.f32.mrf.mxu0
      %v2367 = vadd.f32 %v2075, %v2366
      %v2368 = vpop.f32.mrf.mxu0
      %2369 = vmatprep.mubr.f32.mxu0 0.0
      %2370 = vmatmul.mubr.f32.gmra.mxu0 %v2145
      %v2371 = vpop.f32.mrf.mxu0
      %v2372 = vadd.f32 %v2075, %v2371
      %v2373 = vpop.f32.mrf.mxu0
      %2374 = vmatprep.mubr.f32.mxu0 0.0
      %2375 = vmatmul.mubr.f32.gmra.mxu0 %v2148
      %v2376 = vpop.f32.mrf.mxu0
      %v2377 = vadd.f32 %v2075, %v2376
      %v2378 = vpop.f32.mrf.mxu0
      %2379 = vmatprep.mubr.f32.mxu0 0.0
      %2380 = vmatmul.mubr.f32.gmra.mxu0 %v2151
      %v2381 = vpop.f32.mrf.mxu0
      %v2382 = vadd.f32 %v2075, %v2381
      %v2383 = vpop.f32.mrf.mxu0
      %2384 = vmatprep.mubr.f32.mxu0 0.0
      %2385 = vmatmul.mubr.f32.gmra.mxu0 %v2154
      %v2386 = vpop.f32.mrf.mxu0
      %v2387 = vadd.f32 %v2075, %v2386
      %v2388 = vpop.f32.mrf.mxu0
      %2389 = vmatprep.mubr.f32.mxu0 0.0
      %2390 = vmatmul.mubr.f32.gmra.mxu0 %v2157
      %v2391 = vpop.f32.mrf.mxu0
      %v2392 = vadd.f32 %v2075, %v2391
      %v2393 = vpop.f32.mrf.mxu0
      %2394 = vmatprep.mubr.f32.mxu0 0.0
      %2395 = vmatmul.mubr.f32.gmra.mxu0 %v2160
      %v2396 = vpop.f32.mrf.mxu0
      %v2397 = vadd.f32 %v2075, %v2396
      %v2398 = vpop.f32.mrf.mxu0
      %2399 = vmatprep.mubr.f32.mxu0 0.0
      %2400 = vmatmul.mubr.f32.gmra.mxu0 %v2163
      %v2401 = vpop.f32.mrf.mxu0
      %v2402 = vadd.f32 %v2075, %v2401
      %v2403 = vpop.f32.mrf.mxu0
      %2404 = vmatprep.mubr.f32.mxu0 0.0
      %2405 = vmatmul.mubr.f32.gmra.mxu0 %v2166
      %v2406 = vpop.f32.mrf.mxu0
      %v2407 = vadd.f32 %v2075, %v2406
      %v2408 = vpop.f32.mrf.mxu0
      %2409 = vmatprep.mubr.f32.mxu0 0.0
      %2410 = vmatmul.mubr.f32.gmra.mxu0 %v2169
      %v2411 = vpop.f32.mrf.mxu0
      %v2412 = vadd.f32 %v2075, %v2411
      %v2413 = vpop.f32.mrf.mxu0
      %2414 = vmatprep.mubr.f32.mxu0 0.0
      %2415 = vmatmul.mubr.f32.gmra.mxu0 %v2172
      %v2416 = vpop.f32.mrf.mxu0
      %v2417 = vadd.f32 %v2075, %v2416
      %v2418 = vpop.f32.mrf.mxu0
      %2419 = vmatprep.mubr.f32.mxu0 0.0
      %2420 = vmatmul.mubr.f32.gmra.mxu0 %v2175
      %v2421 = vpop.f32.mrf.mxu0
      %v2422 = vadd.f32 %v2075, %v2421
      %v2423 = vpop.f32.mrf.mxu0
      %2424 = vmatprep.mubr.f32.mxu0 0.0
      %2425 = vmatmul.mubr.f32.gmra.mxu0 %v2178
      %v2426 = vpop.f32.mrf.mxu0
      %v2427 = vadd.f32 %v2075, %v2426
      %v2428 = vpop.f32.mrf.mxu0
      %2429 = vmatprep.mubr.f32.mxu0 0.0
      %2430 = vmatmul.mubr.f32.gmra.mxu0 %v2181
      %v2431 = vpop.f32.mrf.mxu0
      %v2432 = vadd.f32 %v2075, %v2431
      %v2433 = vpop.f32.mrf.mxu0
      %2434 = vmatprep.mubr.f32.mxu0 0.0
      %2435 = vmatmul.mubr.f32.gmra.mxu0 %v2184
      %v2436 = vpop.f32.mrf.mxu0
      %v2437 = vadd.f32 %v2075, %v2436
      %v2438 = vpop.f32.mrf.mxu0
      %2439 = vmatprep.mubr.f32.mxu0 0.0
      %2440 = vmatmul.mubr.f32.gmra.mxu0 %v2187
      %v2441 = vpop.f32.mrf.mxu0
      %v2442 = vadd.f32 %v2075, %v2441
      %v2443 = vpop.f32.mrf.mxu0
      %2444 = vmatprep.mubr.f32.mxu0 0.0
      %2445 = vmatmul.mubr.f32.gmra.mxu0 %v2190
      %v2446 = vpop.f32.mrf.mxu0
      %v2447 = vadd.f32 %v2075, %v2446
      %v2448 = vpop.f32.mrf.mxu0
      %2449 = vdwg.mxu0
      %v2450 = vmax.f32 %v2262, 0.0
      %v2451 = vmax.f32 %v2267, 0.0
      %v2452 = vmax.f32 %v2272, 0.0
      %v2453 = vmax.f32 %v2277, 0.0
      %v2454 = vmax.f32 %v2282, 0.0
      %v2455 = vmax.f32 %v2287, 0.0
      %v2456 = vmax.f32 %v2292, 0.0
      %v2457 = vmax.f32 %v2297, 0.0
      %v2458 = vmax.f32 %v2302, 0.0
      %v2459 = vmax.f32 %v2307, 0.0
      %v2460 = vmax.f32 %v2312, 0.0
      %v2461 = vmax.f32 %v2317, 0.0
      %v2462 = vmax.f32 %v2322, 0.0
      %v2463 = vmax.f32 %v2327, 0.0
      %v2464 = vmax.f32 %v2332, 0.0
      %v2465 = vmax.f32 %v2337, 0.0
      %v2466 = vmax.f32 %v2342, 0.0
      %v2467 = vmax.f32 %v2347, 0.0
      %v2468 = vmax.f32 %v2352, 0.0
      %v2469 = vmax.f32 %v2357, 0.0
      %v2470 = vmax.f32 %v2362, 0.0
      %v2471 = vmax.f32 %v2367, 0.0
      %v2472 = vmax.f32 %v2372, 0.0
      %v2473 = vmax.f32 %v2377, 0.0
      %v2474 = vmax.f32 %v2382, 0.0
      %v2475 = vmax.f32 %v2387, 0.0
      %v2476 = vmax.f32 %v2392, 0.0
      %v2477 = vmax.f32 %v2397, 0.0
      %v2478 = vmax.f32 %v2402, 0.0
      %v2479 = vmax.f32 %v2407, 0.0
      %v2480 = vmax.f32 %v2412, 0.0
      %v2481 = vmax.f32 %v2417, 0.0
      %v2482 = vmax.f32 %v2422, 0.0
      %v2483 = vmax.f32 %v2427, 0.0
      %v2484 = vmax.f32 %v2432, 0.0
      %v2485 = vmax.f32 %v2437, 0.0
      %v2486 = vmax.f32 %v2442, 0.0
      %v2487 = vmax.f32 %v2447, 0.0
      %v2526 = vrot.slane %v2450, 1
      %v2527 = vrot.slane %v2451, 1
      %v2528 = vsel %vm361, %v2526, %v2527
      %v2529 = vrot.slane %v2452, 1
      %v2530 = vsel %vm361, %v2527, %v2529
      %v2531 = vrot.slane %v2453, 1
      %v2532 = vsel %vm361, %v2529, %v2531
      %v2533 = vrot.slane %v2454, 1
      %v2534 = vsel %vm361, %v2531, %v2533
      %v2535 = vrot.slane %v2455, 1
      %v2536 = vsel %vm361, %v2533, %v2535
      %v2537 = vrot.slane %v2456, 1
      %v2538 = vsel %vm361, %v2535, %v2537
      %v2539 = vrot.slane %v2457, 1
      %v2540 = vsel %vm361, %v2537, %v2539
      %v2541 = vrot.slane %v2458, 1
      %v2542 = vsel %vm361, %v2539, %v2541
      %v2543 = vrot.slane %v2459, 1
      %v2544 = vsel %vm361, %v2541, %v2543
      %v2545 = vrot.slane %v2460, 1
      %v2546 = vsel %vm361, %v2543, %v2545
      %v2547 = vrot.slane %v2461, 1
      %v2548 = vsel %vm361, %v2545, %v2547
      %v2549 = vrot.slane %v2462, 1
      %v2550 = vsel %vm361, %v2547, %v2549
      %v2551 = vrot.slane %v2463, 1
      %v2552 = vsel %vm361, %v2549, %v2551
      %v2553 = vrot.slane %v2464, 1
      %v2554 = vsel %vm361, %v2551, %v2553
      %v2555 = vrot.slane %v2465, 1
      %v2556 = vsel %vm361, %v2553, %v2555
      %v2557 = vrot.slane %v2466, 1
      %v2558 = vsel %vm361, %v2555, %v2557
      %v2559 = vrot.slane %v2467, 1
      %v2560 = vsel %vm361, %v2557, %v2559
      %v2561 = vrot.slane %v2468, 1
      %v2562 = vsel %vm361, %v2559, %v2561
      %v2563 = vrot.slane %v2469, 1
      %v2564 = vsel %vm361, %v2561, %v2563
      %v2565 = vrot.slane %v2470, 1
      %v2566 = vsel %vm361, %v2563, %v2565
      %v2567 = vrot.slane %v2471, 1
      %v2568 = vsel %vm361, %v2565, %v2567
      %v2569 = vrot.slane %v2472, 1
      %v2570 = vsel %vm361, %v2567, %v2569
      %v2571 = vrot.slane %v2473, 1
      %v2572 = vsel %vm361, %v2569, %v2571
      %v2573 = vrot.slane %v2474, 1
      %v2574 = vsel %vm361, %v2571, %v2573
      %v2575 = vrot.slane %v2475, 1
      %v2576 = vsel %vm361, %v2573, %v2575
      %v2577 = vrot.slane %v2476, 1
      %v2578 = vsel %vm361, %v2575, %v2577
      %v2579 = vrot.slane %v2477, 1
      %v2580 = vsel %vm361, %v2577, %v2579
      %v2581 = vrot.slane %v2478, 1
      %v2582 = vsel %vm361, %v2579, %v2581
      %v2583 = vrot.slane %v2479, 1
      %v2584 = vsel %vm361, %v2581, %v2583
      %v2585 = vrot.slane %v2480, 1
      %v2586 = vsel %vm361, %v2583, %v2585
      %v2587 = vrot.slane %v2481, 1
      %v2588 = vsel %vm361, %v2585, %v2587
      %v2589 = vrot.slane %v2482, 1
      %v2590 = vsel %vm361, %v2587, %v2589
      %v2591 = vrot.slane %v2483, 1
      %v2592 = vsel %vm361, %v2589, %v2591
      %v2593 = vrot.slane %v2484, 1
      %v2594 = vsel %vm361, %v2591, %v2593
      %v2595 = vrot.slane %v2485, 1
      %v2596 = vsel %vm361, %v2593, %v2595
      %v2597 = vrot.slane %v2486, 1
      %v2598 = vsel %vm361, %v2595, %v2597
      %v2599 = vrot.slane %v2487, 1
      %v2600 = vsel %vm361, %v2597, %v2599
      %v2638 = vmax.f32 %v2450, %v2528
      %v2639 = vmax.f32 %v2451, %v2530
      %v2640 = vmax.f32 %v2452, %v2532
      %v2641 = vmax.f32 %v2453, %v2534
      %v2642 = vmax.f32 %v2454, %v2536
      %v2643 = vmax.f32 %v2455, %v2538
      %v2644 = vmax.f32 %v2456, %v2540
      %v2645 = vmax.f32 %v2457, %v2542
      %v2646 = vmax.f32 %v2458, %v2544
      %v2647 = vmax.f32 %v2459, %v2546
      %v2648 = vmax.f32 %v2460, %v2548
      %v2649 = vmax.f32 %v2461, %v2550
      %v2650 = vmax.f32 %v2462, %v2552
      %v2651 = vmax.f32 %v2463, %v2554
      %v2652 = vmax.f32 %v2464, %v2556
      %v2653 = vmax.f32 %v2465, %v2558
      %v2654 = vmax.f32 %v2466, %v2560
      %v2655 = vmax.f32 %v2467, %v2562
      %v2656 = vmax.f32 %v2468, %v2564
      %v2657 = vmax.f32 %v2469, %v2566
      %v2658 = vmax.f32 %v2470, %v2568
      %v2659 = vmax.f32 %v2471, %v2570
      %v2660 = vmax.f32 %v2472, %v2572
      %v2661 = vmax.f32 %v2473, %v2574
      %v2662 = vmax.f32 %v2474, %v2576
      %v2663 = vmax.f32 %v2475, %v2578
      %v2664 = vmax.f32 %v2476, %v2580
      %v2665 = vmax.f32 %v2477, %v2582
      %v2666 = vmax.f32 %v2478, %v2584
      %v2667 = vmax.f32 %v2479, %v2586
      %v2668 = vmax.f32 %v2480, %v2588
      %v2669 = vmax.f32 %v2481, %v2590
      %v2670 = vmax.f32 %v2482, %v2592
      %v2671 = vmax.f32 %v2483, %v2594
      %v2672 = vmax.f32 %v2484, %v2596
      %v2673 = vmax.f32 %v2485, %v2598
      %v2674 = vmax.f32 %v2486, %v2600
      %v2710 = vrot.slane %v2640, 2
      %v2711 = vrot.slane %v2641, 2
      %v2712 = vsel %vm553, %v2710, %v2711
      %v2713 = vrot.slane %v2642, 2
      %v2714 = vsel %vm553, %v2711, %v2713
      %v2715 = vrot.slane %v2643, 2
      %v2716 = vsel %vm553, %v2713, %v2715
      %v2717 = vrot.slane %v2644, 2
      %v2718 = vsel %vm553, %v2715, %v2717
      %v2719 = vrot.slane %v2645, 2
      %v2720 = vsel %vm553, %v2717, %v2719
      %v2721 = vrot.slane %v2646, 2
      %v2722 = vsel %vm553, %v2719, %v2721
      %v2723 = vrot.slane %v2647, 2
      %v2724 = vsel %vm553, %v2721, %v2723
      %v2725 = vrot.slane %v2648, 2
      %v2726 = vsel %vm553, %v2723, %v2725
      %v2727 = vrot.slane %v2649, 2
      %v2728 = vsel %vm553, %v2725, %v2727
      %v2729 = vrot.slane %v2650, 2
      %v2730 = vsel %vm553, %v2727, %v2729
      %v2731 = vrot.slane %v2651, 2
      %v2732 = vsel %vm553, %v2729, %v2731
      %v2733 = vrot.slane %v2652, 2
      %v2734 = vsel %vm553, %v2731, %v2733
      %v2735 = vrot.slane %v2653, 2
      %v2736 = vsel %vm553, %v2733, %v2735
      %v2737 = vrot.slane %v2654, 2
      %v2738 = vsel %vm553, %v2735, %v2737
      %v2739 = vrot.slane %v2655, 2
      %v2740 = vsel %vm553, %v2737, %v2739
      %v2741 = vrot.slane %v2656, 2
      %v2742 = vsel %vm553, %v2739, %v2741
      %v2743 = vrot.slane %v2657, 2
      %v2744 = vsel %vm553, %v2741, %v2743
      %v2745 = vrot.slane %v2658, 2
      %v2746 = vsel %vm553, %v2743, %v2745
      %v2747 = vrot.slane %v2659, 2
      %v2748 = vsel %vm553, %v2745, %v2747
      %v2749 = vrot.slane %v2660, 2
      %v2750 = vsel %vm553, %v2747, %v2749
      %v2751 = vrot.slane %v2661, 2
      %v2752 = vsel %vm553, %v2749, %v2751
      %v2753 = vrot.slane %v2662, 2
      %v2754 = vsel %vm553, %v2751, %v2753
      %v2755 = vrot.slane %v2663, 2
      %v2756 = vsel %vm553, %v2753, %v2755
      %v2757 = vrot.slane %v2664, 2
      %v2758 = vsel %vm553, %v2755, %v2757
      %v2759 = vrot.slane %v2665, 2
      %v2760 = vsel %vm553, %v2757, %v2759
      %v2761 = vrot.slane %v2666, 2
      %v2762 = vsel %vm553, %v2759, %v2761
      %v2763 = vrot.slane %v2667, 2
      %v2764 = vsel %vm553, %v2761, %v2763
      %v2765 = vrot.slane %v2668, 2
      %v2766 = vsel %vm553, %v2763, %v2765
      %v2767 = vrot.slane %v2669, 2
      %v2768 = vsel %vm553, %v2765, %v2767
      %v2769 = vrot.slane %v2670, 2
      %v2770 = vsel %vm553, %v2767, %v2769
      %v2771 = vrot.slane %v2671, 2
      %v2772 = vsel %vm553, %v2769, %v2771
      %v2773 = vrot.slane %v2672, 2
      %v2774 = vsel %vm553, %v2771, %v2773
      %v2775 = vrot.slane %v2673, 2
      %v2776 = vsel %vm553, %v2773, %v2775
      %v2777 = vrot.slane %v2674, 2
      %v2778 = vsel %vm553, %v2775, %v2777
      %v2813 = vmax.f32 %v2638, %v2712
      %v2814 = vmax.f32 %v2639, %v2714
      %v2815 = vmax.f32 %v2640, %v2716
      %v2816 = vmax.f32 %v2641, %v2718
      %v2817 = vmax.f32 %v2642, %v2720
      %v2818 = vmax.f32 %v2643, %v2722
      %v2819 = vmax.f32 %v2644, %v2724
      %v2820 = vmax.f32 %v2645, %v2726
      %v2821 = vmax.f32 %v2646, %v2728
      %v2822 = vmax.f32 %v2647, %v2730
      %v2823 = vmax.f32 %v2648, %v2732
      %v2824 = vmax.f32 %v2649, %v2734
      %v2825 = vmax.f32 %v2650, %v2736
      %v2826 = vmax.f32 %v2651, %v2738
      %v2827 = vmax.f32 %v2652, %v2740
      %v2828 = vmax.f32 %v2653, %v2742
      %v2829 = vmax.f32 %v2654, %v2744
      %v2830 = vmax.f32 %v2655, %v2746
      %v2831 = vmax.f32 %v2656, %v2748
      %v2832 = vmax.f32 %v2657, %v2750
      %v2833 = vmax.f32 %v2658, %v2752
      %v2834 = vmax.f32 %v2659, %v2754
      %v2835 = vmax.f32 %v2660, %v2756
      %v2836 = vmax.f32 %v2661, %v2758
      %v2837 = vmax.f32 %v2662, %v2760
      %v2838 = vmax.f32 %v2663, %v2762
      %v2839 = vmax.f32 %v2664, %v2764
      %v2840 = vmax.f32 %v2665, %v2766
      %v2841 = vmax.f32 %v2666, %v2768
      %v2842 = vmax.f32 %v2667, %v2770
      %v2843 = vmax.f32 %v2668, %v2772
      %v2844 = vmax.f32 %v2669, %v2774
      %v2845 = vmax.f32 %v2670, %v2776
      %v2846 = vmax.f32 %v2671, %v2778
      %v2847 = vld [vmem:[%s3] sm:$0xff]
      %v2848 = vld [vmem:[%s3 + $0x8] sm:$0xff]
      %v2849 = vld [vmem:[%s3 + $0x10] sm:$0xff]
      %v2850 = vld [vmem:[%s3 + $0x18] sm:$0xff]
      %v2851 = vld [vmem:[%s3 + $0x20] sm:$0xff]
      %v2852 = vld [vmem:[%s3 + $0x28] sm:$0xff]
      %v2853 = vld [vmem:[%s3 + $0x30] sm:$0xff]
      %v2854 = vld [vmem:[%s3 + $0x38] sm:$0xff]
      %v2855 = vld [vmem:[%s3 + $0x40] sm:$0xff]
      %v2856 = vld [vmem:[%s3 + $0x48] sm:$0xff]
      %v2857 = vld [vmem:[%s3 + $0x50] sm:$0xff]
      %v2858 = vld [vmem:[%s3 + $0x58] sm:$0xff]
      %v2859 = vld [vmem:[%s3 + $0x60] sm:$0xff]
      %v2860 = vld [vmem:[%s3 + $0x68] sm:$0xff]
      %v2861 = vld [vmem:[%s3 + $0x70] sm:$0xff]
      %v2862 = vld [vmem:[%s3 + $0x78] sm:$0xff]
      %v2863 = vld [vmem:[%s3 + $0x80] sm:$0xff]
      %v2864 = vld [vmem:[%s3 + $0x88] sm:$0xff]
      %v2865 = vld [vmem:[%s3 + $0x90] sm:$0xff]
      %v2866 = vld [vmem:[%s3 + $0x98] sm:$0xff]
      %v2867 = vld [vmem:[%s3 + $0xa0] sm:$0xff]
      %v2868 = vld [vmem:[%s3 + $0xa8] sm:$0xff]
      %v2869 = vld [vmem:[%s3 + $0xb0] sm:$0xff]
      %v2870 = vld [vmem:[%s3 + $0xb8] sm:$0xff]
      %v2871 = vld [vmem:[%s3 + $0xc0] sm:$0xff]
      %v2872 = vld [vmem:[%s3 + $0xc8] sm:$0xff]
      %v2873 = vld [vmem:[%s3 + $0xd0] sm:$0xff]
      %v2874 = vld [vmem:[%s3 + $0xd8] sm:$0xff]
      %v2875 = vld [vmem:[%s3 + $0xe0] sm:$0xff]
      %v2876 = vld [vmem:[%s3 + $0xe8] sm:$0xff]
      %v2877 = vld [vmem:[%s3 + $0xf0] sm:$0xff]
      %v2878 = vld [vmem:[%s3 + $0xf8] sm:$0xff]
      %v2879 = vld [vmem:[%s3 + $0x100] sm:$0xff]
      %v2880 = vld [vmem:[%s3 + $0x108] sm:$0xff]
      %v2881 = vld [vmem:[%s3 + $0x110] sm:$0xff]
      %v2882 = vld [vmem:[%s3 + $0x118] sm:$0xff]
      %v2883 = vld [vmem:[%s3 + $0x120] sm:$0xff]
      %v2884 = vld [vmem:[%s3 + $0x128] sm:$0xff]
      %v2885 = vld [vmem:[%s3 + $0x130] sm:$0xff]
      %v2886 = vld [vmem:[%s3 + $0x138] sm:$0xff]
      %v2887 = vld [vmem:[%s3 + $0x140] sm:$0xff]
      %v2888 = vld [vmem:[%s3 + $0x148] sm:$0xff]
      %v2889 = vld [vmem:[%s3 + $0x150] sm:$0xff]
      %v2890 = vld [vmem:[%s3 + $0x158] sm:$0xff]
      %v2891 = vld [vmem:[%s3 + $0x160] sm:$0xff]
      %v2893 = vsel %vm1870, %v2849, 0
      %v2896 = vsel %vm1870, %v2852, 0
      %v2899 = vsel %vm1870, %v2855, 0
      %v2902 = vsel %vm1870, %v2858, 0
      %v2905 = vsel %vm1870, %v2861, 0
      %v2908 = vsel %vm1870, %v2864, 0
      %v2911 = vsel %vm1870, %v2867, 0
      %v2914 = vsel %vm1870, %v2870, 0
      %v2917 = vsel %vm1870, %v2873, 0
      %v2920 = vsel %vm1870, %v2876, 0
      %v2923 = vsel %vm1870, %v2879, 0
      %v2926 = vsel %vm1870, %v2882, 0
      %v2929 = vsel %vm1870, %v2885, 0
      %v2932 = vsel %vm1870, %v2888, 0
      %v2935 = vsel %vm1870, %v2891, 0
      %2937 = vmatprep.subr.mxu0 0.0
      %2938 = vmatpush1.msra.mxu0 %v2828
      %2939 = vmatprep.subr.mxu0 0.0
      %2940 = vmatpush1.msra.mxu0 %v2827
      %2941 = vmatprep.subr.mxu0 0.0
      %2942 = vmatpush1.msra.mxu0 %v2826
      %2943 = vmatprep.subr.mxu0 0.0
      %2944 = vmatpush1.msra.mxu0 %v2825
      %2945 = vmatprep.subr.mxu0 0.0
      %2946 = vmatpush1.msra.mxu0 %v2824
      %2947 = vmatprep.subr.mxu0 0.0
      %2948 = vmatpush1.msra.mxu0 %v2823
      %2949 = vmatprep.subr.mxu0 0.0
      %2950 = vmatpush1.msra.mxu0 %v2822
      %2951 = vmatprep.subr.mxu0 0.0
      %2952 = vmatpush1.msra.mxu0 %v2821
      %2953 = vmatprep.subr.mxu0 0.0
      %2954 = vmatpush1.msra.mxu0 %v2820
      %2955 = vmatprep.subr.mxu0 0.0
      %2956 = vmatpush1.msra.mxu0 %v2819
      %2957 = vmatprep.subr.mxu0 0.0
      %2958 = vmatpush1.msra.mxu0 %v2818
      %2959 = vmatprep.subr.mxu0 0.0
      %2960 = vmatpush1.msra.mxu0 %v2817
      %2961 = vmatprep.subr.mxu0 0.0
      %2962 = vmatpush1.msra.mxu0 %v2816
      %2963 = vmatprep.subr.mxu0 0.0
      %2964 = vmatpush1.msra.mxu0 %v2815
      %2965 = vmatprep.subr.mxu0 0.0
      %2966 = vmatpush1.msra.mxu0 %v2814
      %2967 = vmatprep.subr.mxu0 0.0
      %2968 = vmatpush1.msra.mxu0 %v2813
      %2969 = vmatprep.subr.mxu0 0.0
      %2970 = vmatpush2.msra.mxu0 %v2844
      %2971 = vmatprep.subr.mxu0 0.0
      %2972 = vmatpush2.msra.mxu0 %v2843
      %2973 = vmatprep.subr.mxu0 0.0
      %2974 = vmatpush2.msra.mxu0 %v2842
      %2975 = vmatprep.subr.mxu0 0.0
      %2976 = vmatpush2.msra.mxu0 %v2841
      %2977 = vmatprep.subr.mxu0 0.0
      %2978 = vmatpush2.msra.mxu0 %v2840
      %2979 = vmatprep.subr.mxu0 0.0
      %2980 = vmatpush2.msra.mxu0 %v2839
      %2981 = vmatprep.subr.mxu0 0.0
      %2982 = vmatpush2.msra.mxu0 %v2838
      %2983 = vmatprep.subr.mxu0 0.0
      %2984 = vmatpush2.msra.mxu0 %v2837
      %2985 = vmatprep.subr.mxu0 0.0
      %2986 = vmatpush2.msra.mxu0 %v2836
      %2987 = vmatprep.subr.mxu0 0.0
      %2988 = vmatpush2.msra.mxu0 %v2835
      %2989 = vmatprep.subr.mxu0 0.0
      %2990 = vmatpush2.msra.mxu0 %v2834
      %2991 = vmatprep.subr.mxu0 0.0
      %2992 = vmatpush2.msra.mxu0 %v2833
      %2993 = vmatprep.subr.mxu0 0.0
      %2994 = vmatpush2.msra.mxu0 %v2832
      %2995 = vmatprep.subr.mxu0 0.0
      %2996 = vmatpush2.msra.mxu0 %v2831
      %2997 = vmatprep.subr.mxu0 0.0
      %2998 = vmatpush2.msra.mxu0 %v2830
      %2999 = vmatprep.subr.mxu0 0.0
      %3000 = vmatpush2.msra.mxu0 %v2829
      %3001 = vmatprep.mubr.f32.mxu0 %v2848
      %3002 = vmatmul.mubr.f32.gmra.mxu0 %v2847
      %v3003 = vpop.f32.mrf.mxu0
      %v3004 = vadd.f32 0.0, %v3003
      %v3005 = vpop.f32.mrf.mxu0
      %3006 = vmatprep.mubr.f32.mxu0 %v2851
      %3007 = vmatmul.mubr.f32.gmra.mxu0 %v2850
      %v3008 = vpop.f32.mrf.mxu0
      %v3009 = vadd.f32 0.0, %v3008
      %v3010 = vpop.f32.mrf.mxu0
      %3011 = vmatprep.mubr.f32.mxu0 %v2854
      %3012 = vmatmul.mubr.f32.gmra.mxu0 %v2853
      %v3013 = vpop.f32.mrf.mxu0
      %v3014 = vadd.f32 0.0, %v3013
      %v3015 = vpop.f32.mrf.mxu0
      %3016 = vmatprep.mubr.f32.mxu0 %v2857
      %3017 = vmatmul.mubr.f32.gmra.mxu0 %v2856
      %v3018 = vpop.f32.mrf.mxu0
      %v3019 = vadd.f32 0.0, %v3018
      %v3020 = vpop.f32.mrf.mxu0
      %3021 = vmatprep.mubr.f32.mxu0 %v2860
      %3022 = vmatmul.mubr.f32.gmra.mxu0 %v2859
      %v3023 = vpop.f32.mrf.mxu0
      %v3024 = vadd.f32 0.0, %v3023
      %v3025 = vpop.f32.mrf.mxu0
      %3026 = vmatprep.mubr.f32.mxu0 %v2863
      %3027 = vmatmul.mubr.f32.gmra.mxu0 %v2862
      %v3028 = vpop.f32.mrf.mxu0
      %v3029 = vadd.f32 0.0, %v3028
      %v3030 = vpop.f32.mrf.mxu0
      %3031 = vmatprep.mubr.f32.mxu0 %v2866
      %3032 = vmatmul.mubr.f32.gmra.mxu0 %v2865
      %v3033 = vpop.f32.mrf.mxu0
      %v3034 = vadd.f32 0.0, %v3033
      %v3035 = vpop.f32.mrf.mxu0
      %3036 = vmatprep.mubr.f32.mxu0 %v2869
      %3037 = vmatmul.mubr.f32.gmra.mxu0 %v2868
      %v3038 = vpop.f32.mrf.mxu0
      %v3039 = vadd.f32 0.0, %v3038
      %v3040 = vpop.f32.mrf.mxu0
      %3041 = vmatprep.mubr.f32.mxu0 %v2872
      %3042 = vmatmul.mubr.f32.gmra.mxu0 %v2871
      %v3043 = vpop.f32.mrf.mxu0
      %v3044 = vadd.f32 0.0, %v3043
      %v3045 = vpop.f32.mrf.mxu0
      %3046 = vmatprep.mubr.f32.mxu0 %v2875
      %3047 = vmatmul.mubr.f32.gmra.mxu0 %v2874
      %v3048 = vpop.f32.mrf.mxu0
      %v3049 = vadd.f32 0.0, %v3048
      %v3050 = vpop.f32.mrf.mxu0
      %3051 = vmatprep.mubr.f32.mxu0 %v2878
      %3052 = vmatmul.mubr.f32.gmra.mxu0 %v2877
      %v3053 = vpop.f32.mrf.mxu0
      %v3054 = vadd.f32 0.0, %v3053
      %v3055 = vpop.f32.mrf.mxu0
      %3056 = vmatprep.mubr.f32.mxu0 %v2881
      %3057 = vmatmul.mubr.f32.gmra.mxu0 %v2880
      %v3058 = vpop.f32.mrf.mxu0
      %v3059 = vadd.f32 0.0, %v3058
      %v3060 = vpop.f32.mrf.mxu0
      %3061 = vmatprep.mubr.f32.mxu0 %v2884
      %3062 = vmatmul.mubr.f32.gmra.mxu0 %v2883
      %v3063 = vpop.f32.mrf.mxu0
      %v3064 = vadd.f32 0.0, %v3063
      %v3065 = vpop.f32.mrf.mxu0
      %3066 = vmatprep.mubr.f32.mxu0 %v2887
      %3067 = vmatmul.mubr.f32.gmra.mxu0 %v2886
      %v3068 = vpop.f32.mrf.mxu0
      %v3069 = vadd.f32 0.0, %v3068
      %v3070 = vpop.f32.mrf.mxu0
      %3071 = vmatprep.mubr.f32.mxu0 %v2890
      %3072 = vmatmul.mubr.f32.gmra.mxu0 %v2889
      %v3073 = vpop.f32.mrf.mxu0
      %v3074 = vadd.f32 0.0, %v3073
      %v3075 = vpop.f32.mrf.mxu0
      %3076 = vdwg.mxu0
      %3077 = vmatprep.subr.mxu0 0.0
      %3078 = vmatpush1.msra.mxu0 0.0
      %3079 = vmatprep.subr.mxu0 0.0
      %3080 = vmatpush1.msra.mxu0 0.0
      %3081 = vmatprep.subr.mxu0 0.0
      %3082 = vmatpush1.msra.mxu0 0.0
      %3083 = vmatprep.subr.mxu0 0.0
      %3084 = vmatpush1.msra.mxu0 0.0
      %3085 = vmatprep.subr.mxu0 0.0
      %3086 = vmatpush1.msra.mxu0 0.0
      %3087 = vmatprep.subr.mxu0 0.0
      %3088 = vmatpush1.msra.mxu0 0.0
      %3089 = vmatprep.subr.mxu0 0.0
      %3090 = vmatpush1.msra.mxu0 0.0
      %3091 = vmatprep.subr.mxu0 0.0
      %3092 = vmatpush1.msra.mxu0 0.0
      %3093 = vmatprep.subr.mxu0 0.0
      %3094 = vmatpush1.msra.mxu0 0.0
      %3095 = vmatprep.subr.mxu0 0.0
      %3096 = vmatpush1.msra.mxu0 0.0
      %3097 = vmatprep.subr.mxu0 0.0
      %3098 = vmatpush1.msra.mxu0 0.0
      %3099 = vmatprep.subr.mxu0 0.0
      %3100 = vmatpush1.msra.mxu0 0.0
      %3101 = vmatprep.subr.mxu0 0.0
      %3102 = vmatpush1.msra.mxu0 0.0
      %3103 = vmatprep.subr.mxu0 0.0
      %3104 = vmatpush1.msra.mxu0 0.0
      %3105 = vmatprep.subr.mxu0 0.0
      %3106 = vmatpush1.msra.mxu0 %v2846
      %3107 = vmatprep.subr.mxu0 0.0
      %3108 = vmatpush1.msra.mxu0 %v2845
      %3109 = vmatprep.subr.mxu0 0.0
      %3110 = vmatpush2.msra.mxu0 0.0
      %3111 = vmatprep.subr.mxu0 0.0
      %3112 = vmatpush2.msra.mxu0 0.0
      %3113 = vmatprep.subr.mxu0 0.0
      %3114 = vmatpush2.msra.mxu0 0.0
      %3115 = vmatprep.subr.mxu0 0.0
      %3116 = vmatpush2.msra.mxu0 0.0
      %3117 = vmatprep.subr.mxu0 0.0
      %3118 = vmatpush2.msra.mxu0 0.0
      %3119 = vmatprep.subr.mxu0 0.0
      %3120 = vmatpush2.msra.mxu0 0.0
      %3121 = vmatprep.subr.mxu0 0.0
      %3122 = vmatpush2.msra.mxu0 0.0
      %3123 = vmatprep.subr.mxu0 0.0
      %3124 = vmatpush2.msra.mxu0 0.0
      %3125 = vmatprep.subr.mxu0 0.0
      %3126 = vmatpush2.msra.mxu0 0.0
      %3127 = vmatprep.subr.mxu0 0.0
      %3128 = vmatpush2.msra.mxu0 0.0
      %3129 = vmatprep.subr.mxu0 0.0
      %3130 = vmatpush2.msra.mxu0 0.0
      %3131 = vmatprep.subr.mxu0 0.0
      %3132 = vmatpush2.msra.mxu0 0.0
      %3133 = vmatprep.subr.mxu0 0.0
      %3134 = vmatpush2.msra.mxu0 0.0
      %3135 = vmatprep.subr.mxu0 0.0
      %3136 = vmatpush2.msra.mxu0 0.0
      %3137 = vmatprep.subr.mxu0 0.0
      %3138 = vmatpush2.msra.mxu0 0.0
      %3139 = vmatprep.subr.mxu0 0.0
      %3140 = vmatpush2.msra.mxu0 0.0
      %3141 = vmatprep.mubr.f32.mxu0 0.0
      %3142 = vmatmul.mubr.f32.gmra.mxu0 %v2893
      %v3143 = vpop.f32.mrf.mxu0
      %v3144 = vadd.f32 %v3004, %v3143
      %v3145 = vpop.f32.mrf.mxu0
      %3146 = vmatprep.mubr.f32.mxu0 0.0
      %3147 = vmatmul.mubr.f32.gmra.mxu0 %v2896
      %v3148 = vpop.f32.mrf.mxu0
      %v3149 = vadd.f32 %v3009, %v3148
      %v3150 = vpop.f32.mrf.mxu0
      %3151 = vmatprep.mubr.f32.mxu0 0.0
      %3152 = vmatmul.mubr.f32.gmra.mxu0 %v2899
      %v3153 = vpop.f32.mrf.mxu0
      %v3154 = vadd.f32 %v3014, %v3153
      %v3155 = vpop.f32.mrf.mxu0
      %3156 = vmatprep.mubr.f32.mxu0 0.0
      %3157 = vmatmul.mubr.f32.gmra.mxu0 %v2902
      %v3158 = vpop.f32.mrf.mxu0
      %v3159 = vadd.f32 %v3019, %v3158
      %v3160 = vpop.f32.mrf.mxu0
      %3161 = vmatprep.mubr.f32.mxu0 0.0
      %3162 = vmatmul.mubr.f32.gmra.mxu0 %v2905
      %v3163 = vpop.f32.mrf.mxu0
      %v3164 = vadd.f32 %v3024, %v3163
      %v3165 = vpop.f32.mrf.mxu0
      %3166 = vmatprep.mubr.f32.mxu0 0.0
      %3167 = vmatmul.mubr.f32.gmra.mxu0 %v2908
      %v3168 = vpop.f32.mrf.mxu0
      %v3169 = vadd.f32 %v3029, %v3168
      %v3170 = vpop.f32.mrf.mxu0
      %3171 = vmatprep.mubr.f32.mxu0 0.0
      %3172 = vmatmul.mubr.f32.gmra.mxu0 %v2911
      %v3173 = vpop.f32.mrf.mxu0
      %v3174 = vadd.f32 %v3034, %v3173
      %v3175 = vpop.f32.mrf.mxu0
      %3176 = vmatprep.mubr.f32.mxu0 0.0
      %3177 = vmatmul.mubr.f32.gmra.mxu0 %v2914
      %v3178 = vpop.f32.mrf.mxu0
      %v3179 = vadd.f32 %v3039, %v3178
      %v3180 = vpop.f32.mrf.mxu0
      %3181 = vmatprep.mubr.f32.mxu0 0.0
      %3182 = vmatmul.mubr.f32.gmra.mxu0 %v2917
      %v3183 = vpop.f32.mrf.mxu0
      %v3184 = vadd.f32 %v3044, %v3183
      %v3185 = vpop.f32.mrf.mxu0
      %3186 = vmatprep.mubr.f32.mxu0 0.0
      %3187 = vmatmul.mubr.f32.gmra.mxu0 %v2920
      %v3188 = vpop.f32.mrf.mxu0
      %v3189 = vadd.f32 %v3049, %v3188
      %v3190 = vpop.f32.mrf.mxu0
      %3191 = vmatprep.mubr.f32.mxu0 0.0
      %3192 = vmatmul.mubr.f32.gmra.mxu0 %v2923
      %v3193 = vpop.f32.mrf.mxu0
      %v3194 = vadd.f32 %v3054, %v3193
      %v3195 = vpop.f32.mrf.mxu0
      %3196 = vmatprep.mubr.f32.mxu0 0.0
      %3197 = vmatmul.mubr.f32.gmra.mxu0 %v2926
      %v3198 = vpop.f32.mrf.mxu0
      %v3199 = vadd.f32 %v3059, %v3198
      %v3200 = vpop.f32.mrf.mxu0
      %3201 = vmatprep.mubr.f32.mxu0 0.0
      %3202 = vmatmul.mubr.f32.gmra.mxu0 %v2929
      %v3203 = vpop.f32.mrf.mxu0
      %v3204 = vadd.f32 %v3064, %v3203
      %v3205 = vpop.f32.mrf.mxu0
      %3206 = vmatprep.mubr.f32.mxu0 0.0
      %3207 = vmatmul.mubr.f32.gmra.mxu0 %v2932
      %v3208 = vpop.f32.mrf.mxu0
      %v3209 = vadd.f32 %v3069, %v3208
      %v3210 = vpop.f32.mrf.mxu0
      %3211 = vmatprep.mubr.f32.mxu0 0.0
      %3212 = vmatmul.mubr.f32.gmra.mxu0 %v2935
      %v3213 = vpop.f32.mrf.mxu0
      %v3214 = vadd.f32 %v3074, %v3213
      %v3215 = vpop.f32.mrf.mxu0
      %3216 = vdwg.mxu0
      %v3230 = vrot.slane %v3144, 1
      %v3231 = vrot.slane %v3149, 1
      %v3232 = vsel %vm361, %v3230, %v3231
      %v3233 = vrot.slane %v3154, 1
      %v3234 = vsel %vm361, %v3231, %v3233
      %v3235 = vrot.slane %v3159, 1
      %v3236 = vsel %vm361, %v3233, %v3235
      %v3237 = vrot.slane %v3164, 1
      %v3238 = vsel %vm361, %v3235, %v3237
      %v3239 = vrot.slane %v3169, 1
      %v3240 = vsel %vm361, %v3237, %v3239
      %v3241 = vrot.slane %v3174, 1
      %v3242 = vsel %vm361, %v3239, %v3241
      %v3243 = vrot.slane %v3179, 1
      %v3244 = vsel %vm361, %v3241, %v3243
      %v3245 = vrot.slane %v3184, 1
      %v3246 = vsel %vm361, %v3243, %v3245
      %v3247 = vrot.slane %v3189, 1
      %v3248 = vsel %vm361, %v3245, %v3247
      %v3249 = vrot.slane %v3194, 1
      %v3250 = vsel %vm361, %v3247, %v3249
      %v3251 = vrot.slane %v3199, 1
      %v3252 = vsel %vm361, %v3249, %v3251
      %v3253 = vrot.slane %v3204, 1
      %v3254 = vsel %vm361, %v3251, %v3253
      %3255 = vrot.lane.b32.xlu0 %v3232, 8
      %v3256 = vpop.permute.xlu0 %3255
      %3257 = vrot.lane.b32.xlu0 %v3234, 8
      %v3258 = vpop.permute.xlu0 %3257
      %3259 = vrot.lane.b32.xlu0 %v3236, 8
      %v3260 = vpop.permute.xlu0 %3259
      %3261 = vrot.lane.b32.xlu0 %v3238, 8
      %v3262 = vpop.permute.xlu0 %3261
      %3263 = vrot.lane.b32.xlu0 %v3240, 8
      %v3264 = vpop.permute.xlu0 %3263
      %3265 = vrot.lane.b32.xlu0 %v3242, 8
      %v3266 = vpop.permute.xlu0 %3265
      %3267 = vrot.lane.b32.xlu0 %v3244, 8
      %v3268 = vpop.permute.xlu0 %3267
      %3269 = vrot.lane.b32.xlu0 %v3246, 8
      %v3270 = vpop.permute.xlu0 %3269
      %3271 = vrot.lane.b32.xlu0 %v3248, 8
      %v3272 = vpop.permute.xlu0 %3271
      %3273 = vrot.lane.b32.xlu0 %v3250, 8
      %v3274 = vpop.permute.xlu0 %3273
      %3275 = vrot.lane.b32.xlu0 %v3252, 8
      %v3276 = vpop.permute.xlu0 %3275
      %3277 = vrot.lane.b32.xlu0 %v3254, 8
      %v3278 = vpop.permute.xlu0 %3277
      %v3291 = vrot.slane %v3144, 2
      %v3292 = vrot.slane %v3149, 2
      %v3293 = vsel %vm553, %v3291, %v3292
      %v3294 = vrot.slane %v3154, 2
      %v3295 = vsel %vm553, %v3292, %v3294
      %v3296 = vrot.slane %v3159, 2
      %v3297 = vsel %vm553, %v3294, %v3296
      %v3298 = vrot.slane %v3164, 2
      %v3299 = vsel %vm553, %v3296, %v3298
      %v3300 = vrot.slane %v3169, 2
      %v3301 = vsel %vm553, %v3298, %v3300
      %v3302 = vrot.slane %v3174, 2
      %v3303 = vsel %vm553, %v3300, %v3302
      %v3304 = vrot.slane %v3179, 2
      %v3305 = vsel %vm553, %v3302, %v3304
      %v3306 = vrot.slane %v3184, 2
      %v3307 = vsel %vm553, %v3304, %v3306
      %v3308 = vrot.slane %v3189, 2
      %v3309 = vsel %vm553, %v3306, %v3308
      %v3310 = vrot.slane %v3194, 2
      %v3311 = vsel %vm553, %v3308, %v3310
      %v3312 = vrot.slane %v3199, 2
      %v3313 = vsel %vm553, %v3310, %v3312
      %v3314 = vrot.slane %v3204, 2
      %v3315 = vsel %vm553, %v3312, %v3314
      %3316 = vrot.lane.b32.xlu0 %v3293, 16
      %v3317 = vpop.permute.xlu0 %3316
      %3318 = vrot.lane.b32.xlu0 %v3295, 16
      %v3319 = vpop.permute.xlu0 %3318
      %3320 = vrot.lane.b32.xlu0 %v3297, 16
      %v3321 = vpop.permute.xlu0 %3320
      %3322 = vrot.lane.b32.xlu0 %v3299, 16
      %v3323 = vpop.permute.xlu0 %3322
      %3324 = vrot.lane.b32.xlu0 %v3301, 16
      %v3325 = vpop.permute.xlu0 %3324
      %3326 = vrot.lane.b32.xlu0 %v3303, 16
      %v3327 = vpop.permute.xlu0 %3326
      %3328 = vrot.lane.b32.xlu0 %v3305, 16
      %v3329 = vpop.permute.xlu0 %3328
      %3330 = vrot.lane.b32.xlu0 %v3307, 16
      %v3331 = vpop.permute.xlu0 %3330
      %3332 = vrot.lane.b32.xlu0 %v3309, 16
      %v3333 = vpop.permute.xlu0 %3332
      %3334 = vrot.lane.b32.xlu0 %v3311, 16
      %v3335 = vpop.permute.xlu0 %3334
      %3336 = vrot.lane.b32.xlu0 %v3313, 16
      %v3337 = vpop.permute.xlu0 %3336
      %3338 = vrot.lane.b32.xlu0 %v3315, 16
      %v3339 = vpop.permute.xlu0 %3338
      %v3353 = vrot.slane %v3209, 2
      %v3354 = vsel %vm553, %v3314, %v3353
      %3355 = vrot.lane.b32.xlu0 %v3295, 24
      %v3356 = vpop.permute.xlu0 %3355
      %3357 = vrot.lane.b32.xlu0 %v3297, 24
      %v3358 = vpop.permute.xlu0 %3357
      %3359 = vrot.lane.b32.xlu0 %v3299, 24
      %v3360 = vpop.permute.xlu0 %3359
      %3361 = vrot.lane.b32.xlu0 %v3301, 24
      %v3362 = vpop.permute.xlu0 %3361
      %3363 = vrot.lane.b32.xlu0 %v3303, 24
      %v3364 = vpop.permute.xlu0 %3363
      %3365 = vrot.lane.b32.xlu0 %v3305, 24
      %v3366 = vpop.permute.xlu0 %3365
      %3367 = vrot.lane.b32.xlu0 %v3307, 24
      %v3368 = vpop.permute.xlu0 %3367
      %3369 = vrot.lane.b32.xlu0 %v3309, 24
      %v3370 = vpop.permute.xlu0 %3369
      %3371 = vrot.lane.b32.xlu0 %v3311, 24
      %v3372 = vpop.permute.xlu0 %3371
      %3373 = vrot.lane.b32.xlu0 %v3313, 24
      %v3374 = vpop.permute.xlu0 %3373
      %3375 = vrot.lane.b32.xlu0 %v3315, 24
      %v3376 = vpop.permute.xlu0 %3375
      %3377 = vrot.lane.b32.xlu0 %v3354, 24
      %v3378 = vpop.permute.xlu0 %3377
      %v3391 = vrot.slane %v3149, 3
      %v3392 = vrot.slane %v3154, 3
      %v3393 = vsel %vm865, %v3391, %v3392
      %v3394 = vrot.slane %v3159, 3
      %v3395 = vsel %vm865, %v3392, %v3394
      %v3396 = vrot.slane %v3164, 3
      %v3397 = vsel %vm865, %v3394, %v3396
      %v3398 = vrot.slane %v3169, 3
      %v3399 = vsel %vm865, %v3396, %v3398
      %v3400 = vrot.slane %v3174, 3
      %v3401 = vsel %vm865, %v3398, %v3400
      %v3402 = vrot.slane %v3179, 3
      %v3403 = vsel %vm865, %v3400, %v3402
      %v3404 = vrot.slane %v3184, 3
      %v3405 = vsel %vm865, %v3402, %v3404
      %v3406 = vrot.slane %v3189, 3
      %v3407 = vsel %vm865, %v3404, %v3406
      %v3408 = vrot.slane %v3194, 3
      %v3409 = vsel %vm865, %v3406, %v3408
      %v3410 = vrot.slane %v3199, 3
      %v3411 = vsel %vm865, %v3408, %v3410
      %v3412 = vrot.slane %v3204, 3
      %v3413 = vsel %vm865, %v3410, %v3412
      %v3414 = vrot.slane %v3209, 3
      %v3415 = vsel %vm865, %v3412, %v3414
      %3416 = vrot.lane.b32.xlu0 %v3393, 32
      %v3417 = vpop.permute.xlu0 %3416
      %3418 = vrot.lane.b32.xlu0 %v3395, 32
      %v3419 = vpop.permute.xlu0 %3418
      %3420 = vrot.lane.b32.xlu0 %v3397, 32
      %v3421 = vpop.permute.xlu0 %3420
      %3422 = vrot.lane.b32.xlu0 %v3399, 32
      %v3423 = vpop.permute.xlu0 %3422
      %3424 = vrot.lane.b32.xlu0 %v3401, 32
      %v3425 = vpop.permute.xlu0 %3424
      %3426 = vrot.lane.b32.xlu0 %v3403, 32
      %v3427 = vpop.permute.xlu0 %3426
      %3428 = vrot.lane.b32.xlu0 %v3405, 32
      %v3429 = vpop.permute.xlu0 %3428
      %3430 = vrot.lane.b32.xlu0 %v3407, 32
      %v3431 = vpop.permute.xlu0 %3430
      %3432 = vrot.lane.b32.xlu0 %v3409, 32
      %v3433 = vpop.permute.xlu0 %3432
      %3434 = vrot.lane.b32.xlu0 %v3411, 32
      %v3435 = vpop.permute.xlu0 %3434
      %3436 = vrot.lane.b32.xlu0 %v3413, 32
      %v3437 = vpop.permute.xlu0 %3436
      %3438 = vrot.lane.b32.xlu0 %v3415, 32
      %v3439 = vpop.permute.xlu0 %3438
      %v3452 = vrot.slane %v3149, 4
      %v3453 = vrot.slane %v3154, 4
      %v3454 = vsel %vm1057, %v3452, %v3453
      %v3455 = vrot.slane %v3159, 4
      %v3456 = vsel %vm1057, %v3453, %v3455
      %v3457 = vrot.slane %v3164, 4
      %v3458 = vsel %vm1057, %v3455, %v3457
      %v3459 = vrot.slane %v3169, 4
      %v3460 = vsel %vm1057, %v3457, %v3459
      %v3461 = vrot.slane %v3174, 4
      %v3462 = vsel %vm1057, %v3459, %v3461
      %v3463 = vrot.slane %v3179, 4
      %v3464 = vsel %vm1057, %v3461, %v3463
      %v3465 = vrot.slane %v3184, 4
      %v3466 = vsel %vm1057, %v3463, %v3465
      %v3467 = vrot.slane %v3189, 4
      %v3468 = vsel %vm1057, %v3465, %v3467
      %v3469 = vrot.slane %v3194, 4
      %v3470 = vsel %vm1057, %v3467, %v3469
      %v3471 = vrot.slane %v3199, 4
      %v3472 = vsel %vm1057, %v3469, %v3471
      %v3473 = vrot.slane %v3204, 4
      %v3474 = vsel %vm1057, %v3471, %v3473
      %v3475 = vrot.slane %v3209, 4
      %v3476 = vsel %vm1057, %v3473, %v3475
      %3477 = vrot.lane.b32.xlu0 %v3454, 40
      %v3478 = vpop.permute.xlu0 %3477
      %3479 = vrot.lane.b32.xlu0 %v3456, 40
      %v3480 = vpop.permute.xlu0 %3479
      %3481 = vrot.lane.b32.xlu0 %v3458, 40
      %v3482 = vpop.permute.xlu0 %3481
      %3483 = vrot.lane.b32.xlu0 %v3460, 40
      %v3484 = vpop.permute.xlu0 %3483
      %3485 = vrot.lane.b32.xlu0 %v3462, 40
      %v3486 = vpop.permute.xlu0 %3485
      %3487 = vrot.lane.b32.xlu0 %v3464, 40
      %v3488 = vpop.permute.xlu0 %3487
      %3489 = vrot.lane.b32.xlu0 %v3466, 40
      %v3490 = vpop.permute.xlu0 %3489
      %3491 = vrot.lane.b32.xlu0 %v3468, 40
      %v3492 = vpop.permute.xlu0 %3491
      %3493 = vrot.lane.b32.xlu0 %v3470, 40
      %v3494 = vpop.permute.xlu0 %3493
      %3495 = vrot.lane.b32.xlu0 %v3472, 40
      %v3496 = vpop.permute.xlu0 %3495
      %3497 = vrot.lane.b32.xlu0 %v3474, 40
      %v3498 = vpop.permute.xlu0 %3497
      %3499 = vrot.lane.b32.xlu0 %v3476, 40
      %v3500 = vpop.permute.xlu0 %3499
      %v3514 = vrot.slane %v3214, 4
      %v3515 = vsel %vm1057, %v3475, %v3514
      %3516 = vrot.lane.b32.xlu0 %v3456, 48
      %v3517 = vpop.permute.xlu0 %3516
      %3518 = vrot.lane.b32.xlu0 %v3458, 48
      %v3519 = vpop.permute.xlu0 %3518
      %3520 = vrot.lane.b32.xlu0 %v3460, 48
      %v3521 = vpop.permute.xlu0 %3520
      %3522 = vrot.lane.b32.xlu0 %v3462, 48
      %v3523 = vpop.permute.xlu0 %3522
      %3524 = vrot.lane.b32.xlu0 %v3464, 48
      %v3525 = vpop.permute.xlu0 %3524
      %3526 = vrot.lane.b32.xlu0 %v3466, 48
      %v3527 = vpop.permute.xlu0 %3526
      %3528 = vrot.lane.b32.xlu0 %v3468, 48
      %v3529 = vpop.permute.xlu0 %3528
      %3530 = vrot.lane.b32.xlu0 %v3470, 48
      %v3531 = vpop.permute.xlu0 %3530
      %3532 = vrot.lane.b32.xlu0 %v3472, 48
      %v3533 = vpop.permute.xlu0 %3532
      %3534 = vrot.lane.b32.xlu0 %v3474, 48
      %v3535 = vpop.permute.xlu0 %3534
      %3536 = vrot.lane.b32.xlu0 %v3476, 48
      %v3537 = vpop.permute.xlu0 %3536
      %3538 = vrot.lane.b32.xlu0 %v3515, 48
      %v3539 = vpop.permute.xlu0 %3538
      %v3552 = vrot.slane %v3154, 5
      %v3553 = vrot.slane %v3159, 5
      %v3554 = vsel %vm1369, %v3552, %v3553
      %v3555 = vrot.slane %v3164, 5
      %v3556 = vsel %vm1369, %v3553, %v3555
      %v3557 = vrot.slane %v3169, 5
      %v3558 = vsel %vm1369, %v3555, %v3557
      %v3559 = vrot.slane %v3174, 5
      %v3560 = vsel %vm1369, %v3557, %v3559
      %v3561 = vrot.slane %v3179, 5
      %v3562 = vsel %vm1369, %v3559, %v3561
      %v3563 = vrot.slane %v3184, 5
      %v3564 = vsel %vm1369, %v3561, %v3563
      %v3565 = vrot.slane %v3189, 5
      %v3566 = vsel %vm1369, %v3563, %v3565
      %v3567 = vrot.slane %v3194, 5
      %v3568 = vsel %vm1369, %v3565, %v3567
      %v3569 = vrot.slane %v3199, 5
      %v3570 = vsel %vm1369, %v3567, %v3569
      %v3571 = vrot.slane %v3204, 5
      %v3572 = vsel %vm1369, %v3569, %v3571
      %v3573 = vrot.slane %v3209, 5
      %v3574 = vsel %vm1369, %v3571, %v3573
      %v3575 = vrot.slane %v3214, 5
      %v3576 = vsel %vm1369, %v3573, %v3575
      %3577 = vrot.lane.b32.xlu0 %v3554, 56
      %v3578 = vpop.permute.xlu0 %3577
      %3579 = vrot.lane.b32.xlu0 %v3556, 56
      %v3580 = vpop.permute.xlu0 %3579
      %3581 = vrot.lane.b32.xlu0 %v3558, 56
      %v3582 = vpop.permute.xlu0 %3581
      %3583 = vrot.lane.b32.xlu0 %v3560, 56
      %v3584 = vpop.permute.xlu0 %3583
      %3585 = vrot.lane.b32.xlu0 %v3562, 56
      %v3586 = vpop.permute.xlu0 %3585
      %3587 = vrot.lane.b32.xlu0 %v3564, 56
      %v3588 = vpop.permute.xlu0 %3587
      %3589 = vrot.lane.b32.xlu0 %v3566, 56
      %v3590 = vpop.permute.xlu0 %3589
      %3591 = vrot.lane.b32.xlu0 %v3568, 56
      %v3592 = vpop.permute.xlu0 %3591
      %3593 = vrot.lane.b32.xlu0 %v3570, 56
      %v3594 = vpop.permute.xlu0 %3593
      %3595 = vrot.lane.b32.xlu0 %v3572, 56
      %v3596 = vpop.permute.xlu0 %3595
      %3597 = vrot.lane.b32.xlu0 %v3574, 56
      %v3598 = vpop.permute.xlu0 %3597
      %3599 = vrot.lane.b32.xlu0 %v3576, 56
      %v3600 = vpop.permute.xlu0 %3599
      %v3613 = vrot.slane %v3154, 6
      %v3614 = vrot.slane %v3159, 6
      %v3615 = vsel %vm1561, %v3613, %v3614
      %v3616 = vrot.slane %v3164, 6
      %v3617 = vsel %vm1561, %v3614, %v3616
      %v3618 = vrot.slane %v3169, 6
      %v3619 = vsel %vm1561, %v3616, %v3618
      %v3620 = vrot.slane %v3174, 6
      %v3621 = vsel %vm1561, %v3618, %v3620
      %v3622 = vrot.slane %v3179, 6
      %v3623 = vsel %vm1561, %v3620, %v3622
      %v3624 = vrot.slane %v3184, 6
      %v3625 = vsel %vm1561, %v3622, %v3624
      %v3626 = vrot.slane %v3189, 6
      %v3627 = vsel %vm1561, %v3624, %v3626
      %v3628 = vrot.slane %v3194, 6
      %v3629 = vsel %vm1561, %v3626, %v3628
      %v3630 = vrot.slane %v3199, 6
      %v3631 = vsel %vm1561, %v3628, %v3630
      %v3632 = vrot.slane %v3204, 6
      %v3633 = vsel %vm1561, %v3630, %v3632
      %v3634 = vrot.slane %v3209, 6
      %v3635 = vsel %vm1561, %v3632, %v3634
      %v3636 = vrot.slane %v3214, 6
      %v3637 = vsel %vm1561, %v3634, %v3636
      %3638 = vrot.lane.b32.xlu0 %v3615, 64
      %v3639 = vpop.permute.xlu0 %3638
      %3640 = vrot.lane.b32.xlu0 %v3617, 64
      %v3641 = vpop.permute.xlu0 %3640
      %3642 = vrot.lane.b32.xlu0 %v3619, 64
      %v3643 = vpop.permute.xlu0 %3642
      %3644 = vrot.lane.b32.xlu0 %v3621, 64
      %v3645 = vpop.permute.xlu0 %3644
      %3646 = vrot.lane.b32.xlu0 %v3623, 64
      %v3647 = vpop.permute.xlu0 %3646
      %3648 = vrot.lane.b32.xlu0 %v3625, 64
      %v3649 = vpop.permute.xlu0 %3648
      %3650 = vrot.lane.b32.xlu0 %v3627, 64
      %v3651 = vpop.permute.xlu0 %3650
      %3652 = vrot.lane.b32.xlu0 %v3629, 64
      %v3653 = vpop.permute.xlu0 %3652
      %3654 = vrot.lane.b32.xlu0 %v3631, 64
      %v3655 = vpop.permute.xlu0 %3654
      %3656 = vrot.lane.b32.xlu0 %v3633, 64
      %v3657 = vpop.permute.xlu0 %3656
      %3658 = vrot.lane.b32.xlu0 %v3635, 64
      %v3659 = vpop.permute.xlu0 %3658
      %3660 = vrot.lane.b32.xlu0 %v3637, 64
      %v3661 = vpop.permute.xlu0 %3660
      %v3674 = vsel %vm1792, %v3144, %v3256
      %v3675 = vsel %vm1792, %v3149, %v3258
      %v3676 = vsel %vm1792, %v3154, %v3260
      %v3677 = vsel %vm1792, %v3159, %v3262
      %v3678 = vsel %vm1792, %v3164, %v3264
      %v3679 = vsel %vm1792, %v3169, %v3266
      %v3680 = vsel %vm1792, %v3174, %v3268
      %v3681 = vsel %vm1792, %v3179, %v3270
      %v3682 = vsel %vm1792, %v3184, %v3272
      %v3683 = vsel %vm1792, %v3189, %v3274
      %v3684 = vsel %vm1792, %v3194, %v3276
      %v3685 = vsel %vm1792, %v3199, %v3278
      %v3686 = vsel %vm1870, %v3674, %v3317
      %v3687 = vsel %vm1870, %v3675, %v3319
      %v3688 = vsel %vm1870, %v3676, %v3321
      %v3689 = vsel %vm1870, %v3677, %v3323
      %v3690 = vsel %vm1870, %v3678, %v3325
      %v3691 = vsel %vm1870, %v3679, %v3327
      %v3692 = vsel %vm1870, %v3680, %v3329
      %v3693 = vsel %vm1870, %v3681, %v3331
      %v3694 = vsel %vm1870, %v3682, %v3333
      %v3695 = vsel %vm1870, %v3683, %v3335
      %v3696 = vsel %vm1870, %v3684, %v3337
      %v3697 = vsel %vm1870, %v3685, %v3339
      %v3698 = vsel %vm1948, %v3686, %v3356
      %v3699 = vsel %vm1948, %v3687, %v3358
      %v3700 = vsel %vm1948, %v3688, %v3360
      %v3701 = vsel %vm1948, %v3689, %v3362
      %v3702 = vsel %vm1948, %v3690, %v3364
      %v3703 = vsel %vm1948, %v3691, %v3366
      %v3704 = vsel %vm1948, %v3692, %v3368
      %v3705 = vsel %vm1948, %v3693, %v3370
      %v3706 = vsel %vm1948, %v3694, %v3372
      %v3707 = vsel %vm1948, %v3695, %v3374
      %v3708 = vsel %vm1948, %v3696, %v3376
      %v3709 = vsel %vm1948, %v3697, %v3378
      %v3710 = vsel %vm2026, %v3698, %v3417
      %v3711 = vsel %vm2026, %v3699, %v3419
      %v3712 = vsel %vm2026, %v3700, %v3421
      %v3713 = vsel %vm2026, %v3701, %v3423
      %v3714 = vsel %vm2026, %v3702, %v3425
      %v3715 = vsel %vm2026, %v3703, %v3427
      %v3716 = vsel %vm2026, %v3704, %v3429
      %v3717 = vsel %vm2026, %v3705, %v3431
      %v3718 = vsel %vm2026, %v3706, %v3433
      %v3719 = vsel %vm2026, %v3707, %v3435
      %v3720 = vsel %vm2026, %v3708, %v3437
      %v3721 = vsel %vm2026, %v3709, %v3439
      %vm3722 = vcmask 326656
      %v3723 = vsel %vm3722, %v3710, %v3478
      %v3724 = vsel %vm3722, %v3711, %v3480
      %v3725 = vsel %vm3722, %v3712, %v3482
      %v3726 = vsel %vm3722, %v3713, %v3484
      %v3727 = vsel %vm3722, %v3714, %v3486
      %v3728 = vsel %vm3722, %v3715, %v3488
      %v3729 = vsel %vm3722, %v3716, %v3490
      %v3730 = vsel %vm3722, %v3717, %v3492
      %v3731 = vsel %vm3722, %v3718, %v3494
      %v3732 = vsel %vm3722, %v3719, %v3496
      %v3733 = vsel %vm3722, %v3720, %v3498
      %v3734 = vsel %vm3722, %v3721, %v3500
      %vm3735 = vcmask 392192
      %v3736 = vsel %vm3735, %v3723, %v3517
      %v3737 = vsel %vm3735, %v3724, %v3519
      %v3738 = vsel %vm3735, %v3725, %v3521
      %v3739 = vsel %vm3735, %v3726, %v3523
      %v3740 = vsel %vm3735, %v3727, %v3525
      %v3741 = vsel %vm3735, %v3728, %v3527
      %v3742 = vsel %vm3735, %v3729, %v3529
      %v3743 = vsel %vm3735, %v3730, %v3531
      %v3744 = vsel %vm3735, %v3731, %v3533
      %v3745 = vsel %vm3735, %v3732, %v3535
      %v3746 = vsel %vm3735, %v3733, %v3537
      %v3747 = vsel %vm3735, %v3734, %v3539
      %vm3748 = vcmask 457728
      %v3749 = vsel %vm3748, %v3736, %v3578
      %v3750 = vsel %vm3748, %v3737, %v3580
      %v3751 = vsel %vm3748, %v3738, %v3582
      %v3752 = vsel %vm3748, %v3739, %v3584
      %v3753 = vsel %vm3748, %v3740, %v3586
      %v3754 = vsel %vm3748, %v3741, %v3588
      %v3755 = vsel %vm3748, %v3742, %v3590
      %v3756 = vsel %vm3748, %v3743, %v3592
      %v3757 = vsel %vm3748, %v3744, %v3594
      %v3758 = vsel %vm3748, %v3745, %v3596
      %v3759 = vsel %vm3748, %v3746, %v3598
      %v3760 = vsel %vm3748, %v3747, %v3600
      %vm3761 = vcmask 523264
      %v3762 = vsel %vm3761, %v3749, %v3639
      %v3763 = vsel %vm3761, %v3750, %v3641
      %v3764 = vsel %vm3761, %v3751, %v3643
      %v3765 = vsel %vm3761, %v3752, %v3645
      %v3766 = vsel %vm3761, %v3753, %v3647
      %v3767 = vsel %vm3761, %v3754, %v3649
      %v3768 = vsel %vm3761, %v3755, %v3651
      %v3769 = vsel %vm3761, %v3756, %v3653
      %v3770 = vsel %vm3761, %v3757, %v3655
      %v3771 = vsel %vm3761, %v3758, %v3657
      %v3772 = vsel %vm3761, %v3759, %v3659
      %v3773 = vsel %vm3761, %v3760, %v3661
      %v3774 = vld [vmem:[%s4] sm:$0xff]
      %v3775 = vld [vmem:[%s4 + $0x8] sm:$0xff]
      %v3776 = vld [vmem:[%s4 + $0x10] sm:$0xff]
      %v3777 = vld [vmem:[%s4 + $0x18] sm:$0xff]
      %v3778 = vld [vmem:[%s4 + $0x20] sm:$0xff]
      %v3779 = vld [vmem:[%s4 + $0x28] sm:$0xff]
      %v3780 = vld [vmem:[%s4 + $0x30] sm:$0xff]
      %v3781 = vld [vmem:[%s4 + $0x38] sm:$0xff]
      %v3782 = vld [vmem:[%s4 + $0x40] sm:$0xff]
      %v3783 = vld [vmem:[%s5] sm:$0x1]
      %v3785 = vlaneseq
      %v3786 = vshrl.u32 %v3785, 7
      %v3787 = vsub.s32 0, %v3786
      %v3788 = vrot.slane %v3783, %v3787
      %vm3790 = vcmask 588800
      %v3792 = vsel %vm3790, %v3762, 0
      %v3795 = vsel %vm3790, %v3763, 0
      %v3798 = vsel %vm3790, %v3764, 0
      %v3801 = vsel %vm3790, %v3765, 0
      %v3804 = vsel %vm3790, %v3766, 0
      %v3807 = vsel %vm3790, %v3767, 0
      %v3810 = vsel %vm3790, %v3768, 0
      %v3813 = vsel %vm3790, %v3769, 0
      %v3816 = vsel %vm3790, %v3770, 0
      %v3819 = vsel %vm3790, %v3771, 0
      %v3822 = vsel %vm3790, %v3772, 0
      %v3825 = vsel %vm3790, %v3773, 0
      %3827 = vmatprep.subr.mxu0 0.0
      %3828 = vmatpush1.msra.mxu0 0.0
      %3829 = vmatprep.subr.mxu0 0.0
      %3830 = vmatpush1.msra.mxu0 0.0
      %3831 = vmatprep.subr.mxu0 0.0
      %3832 = vmatpush1.msra.mxu0 0.0
      %3833 = vmatprep.subr.mxu0 0.0
      %3834 = vmatpush1.msra.mxu0 0.0
      %3835 = vmatprep.subr.mxu0 0.0
      %3836 = vmatpush1.msra.mxu0 0.0
      %3837 = vmatprep.subr.mxu0 0.0
      %3838 = vmatpush1.msra.mxu0 0.0
      %3839 = vmatprep.subr.mxu0 0.0
      %3840 = vmatpush1.msra.mxu0 0.0
      %3841 = vmatprep.subr.mxu0 0.0
      %3842 = vmatpush1.msra.mxu0 %v3782
      %3843 = vmatprep.subr.mxu0 0.0
      %3844 = vmatpush1.msra.mxu0 %v3781
      %3845 = vmatprep.subr.mxu0 0.0
      %3846 = vmatpush1.msra.mxu0 %v3780
      %3847 = vmatprep.subr.mxu0 0.0
      %3848 = vmatpush1.msra.mxu0 %v3779
      %3849 = vmatprep.subr.mxu0 0.0
      %3850 = vmatpush1.msra.mxu0 %v3778
      %3851 = vmatprep.subr.mxu0 0.0
      %3852 = vmatpush1.msra.mxu0 %v3777
      %3853 = vmatprep.subr.mxu0 0.0
      %3854 = vmatpush1.msra.mxu0 %v3776
      %3855 = vmatprep.subr.mxu0 0.0
      %3856 = vmatpush1.msra.mxu0 %v3775
      %3857 = vmatprep.subr.mxu0 0.0
      %3858 = vmatpush1.msra.mxu0 %v3774
      %3859 = vmatprep.subr.mxu0 0.0
      %3860 = vmatpush2.msra.mxu0 0.0
      %3861 = vmatprep.subr.mxu0 0.0
      %3862 = vmatpush2.msra.mxu0 0.0
      %3863 = vmatprep.subr.mxu0 0.0
      %3864 = vmatpush2.msra.mxu0 0.0
      %3865 = vmatprep.subr.mxu0 0.0
      %3866 = vmatpush2.msra.mxu0 0.0
      %3867 = vmatprep.subr.mxu0 0.0
      %3868 = vmatpush2.msra.mxu0 0.0
      %3869 = vmatprep.subr.mxu0 0.0
      %3870 = vmatpush2.msra.mxu0 0.0
      %3871 = vmatprep.subr.mxu0 0.0
      %3872 = vmatpush2.msra.mxu0 0.0
      %3873 = vmatprep.subr.mxu0 0.0
      %3874 = vmatpush2.msra.mxu0 0.0
      %3875 = vmatprep.subr.mxu0 0.0
      %3876 = vmatpush2.msra.mxu0 0.0
      %3877 = vmatprep.subr.mxu0 0.0
      %3878 = vmatpush2.msra.mxu0 0.0
      %3879 = vmatprep.subr.mxu0 0.0
      %3880 = vmatpush2.msra.mxu0 0.0
      %3881 = vmatprep.subr.mxu0 0.0
      %3882 = vmatpush2.msra.mxu0 0.0
      %3883 = vmatprep.subr.mxu0 0.0
      %3884 = vmatpush2.msra.mxu0 0.0
      %3885 = vmatprep.subr.mxu0 0.0
      %3886 = vmatpush2.msra.mxu0 0.0
      %3887 = vmatprep.subr.mxu0 0.0
      %3888 = vmatpush2.msra.mxu0 0.0
      %3889 = vmatprep.subr.mxu0 0.0
      %3890 = vmatpush2.msra.mxu0 0.0
      %3891 = vmatprep.mubr.f32.mxu0 0.0
      %3892 = vmatmul.mubr.f32.gmra.mxu0 %v3792
      %v3893 = vpop.f32.mrf.mxu0
      %v3894 = vadd.f32 %v3788, %v3893
      %v3895 = vpop.f32.mrf.mxu0
      %3896 = vmatprep.mubr.f32.mxu0 0.0
      %3897 = vmatmul.mubr.f32.gmra.mxu0 %v3795
      %v3898 = vpop.f32.mrf.mxu0
      %v3899 = vadd.f32 %v3788, %v3898
      %v3900 = vpop.f32.mrf.mxu0
      %3901 = vmatprep.mubr.f32.mxu0 0.0
      %3902 = vmatmul.mubr.f32.gmra.mxu0 %v3798
      %v3903 = vpop.f32.mrf.mxu0
      %v3904 = vadd.f32 %v3788, %v3903
      %v3905 = vpop.f32.mrf.mxu0
      %3906 = vmatprep.mubr.f32.mxu0 0.0
      %3907 = vmatmul.mubr.f32.gmra.mxu0 %v3801
      %v3908 = vpop.f32.mrf.mxu0
      %v3909 = vadd.f32 %v3788, %v3908
      %v3910 = vpop.f32.mrf.mxu0
      %3911 = vmatprep.mubr.f32.mxu0 0.0
      %3912 = vmatmul.mubr.f32.gmra.mxu0 %v3804
      %v3913 = vpop.f32.mrf.mxu0
      %v3914 = vadd.f32 %v3788, %v3913
      %v3915 = vpop.f32.mrf.mxu0
      %3916 = vmatprep.mubr.f32.mxu0 0.0
      %3917 = vmatmul.mubr.f32.gmra.mxu0 %v3807
      %v3918 = vpop.f32.mrf.mxu0
      %v3919 = vadd.f32 %v3788, %v3918
      %v3920 = vpop.f32.mrf.mxu0
      %3921 = vmatprep.mubr.f32.mxu0 0.0
      %3922 = vmatmul.mubr.f32.gmra.mxu0 %v3810
      %v3923 = vpop.f32.mrf.mxu0
      %v3924 = vadd.f32 %v3788, %v3923
      %v3925 = vpop.f32.mrf.mxu0
      %3926 = vmatprep.mubr.f32.mxu0 0.0
      %3927 = vmatmul.mubr.f32.gmra.mxu0 %v3813
      %v3928 = vpop.f32.mrf.mxu0
      %v3929 = vadd.f32 %v3788, %v3928
      %v3930 = vpop.f32.mrf.mxu0
      %3931 = vmatprep.mubr.f32.mxu0 0.0
      %3932 = vmatmul.mubr.f32.gmra.mxu0 %v3816
      %v3933 = vpop.f32.mrf.mxu0
      %v3934 = vadd.f32 %v3788, %v3933
      %v3935 = vpop.f32.mrf.mxu0
      %3936 = vmatprep.mubr.f32.mxu0 0.0
      %3937 = vmatmul.mubr.f32.gmra.mxu0 %v3819
      %v3938 = vpop.f32.mrf.mxu0
      %v3939 = vadd.f32 %v3788, %v3938
      %v3940 = vpop.f32.mrf.mxu0
      %3941 = vmatprep.mubr.f32.mxu0 0.0
      %3942 = vmatmul.mubr.f32.gmra.mxu0 %v3822
      %v3943 = vpop.f32.mrf.mxu0
      %v3944 = vadd.f32 %v3788, %v3943
      %v3945 = vpop.f32.mrf.mxu0
      %3946 = vmatprep.mubr.f32.mxu0 0.0
      %3947 = vmatmul.mubr.f32.gmra.mxu0 %v3825
      %v3948 = vpop.f32.mrf.mxu0
      %v3949 = vadd.f32 %v3788, %v3948
      %v3950 = vpop.f32.mrf.mxu0
      %3951 = vdwg.mxu0
      %v3952 = vmax.f32 %v3894, 0.0
      %v3953 = vmax.f32 %v3899, 0.0
      %v3954 = vmax.f32 %v3904, 0.0
      %v3955 = vmax.f32 %v3909, 0.0
      %v3956 = vmax.f32 %v3914, 0.0
      %v3957 = vmax.f32 %v3919, 0.0
      %v3958 = vmax.f32 %v3924, 0.0
      %v3959 = vmax.f32 %v3929, 0.0
      %v3960 = vmax.f32 %v3934, 0.0
      %v3961 = vmax.f32 %v3939, 0.0
      %v3962 = vmax.f32 %v3944, 0.0
      %v3963 = vmax.f32 %v3949, 0.0
      %v3976 = vrot.slane %v3952, 1
      %v3977 = vrot.slane %v3953, 1
      %v3978 = vsel %vm361, %v3976, %v3977
      %v3979 = vrot.slane %v3954, 1
      %v3980 = vsel %vm361, %v3977, %v3979
      %v3981 = vrot.slane %v3955, 1
      %v3982 = vsel %vm361, %v3979, %v3981
      %v3983 = vrot.slane %v3956, 1
      %v3984 = vsel %vm361, %v3981, %v3983
      %v3985 = vrot.slane %v3957, 1
      %v3986 = vsel %vm361, %v3983, %v3985
      %v3987 = vrot.slane %v3958, 1
      %v3988 = vsel %vm361, %v3985, %v3987
      %v3989 = vrot.slane %v3959, 1
      %v3990 = vsel %vm361, %v3987, %v3989
      %v3991 = vrot.slane %v3960, 1
      %v3992 = vsel %vm361, %v3989, %v3991
      %v3993 = vrot.slane %v3961, 1
      %v3994 = vsel %vm361, %v3991, %v3993
      %v3995 = vrot.slane %v3962, 1
      %v3996 = vsel %vm361, %v3993, %v3995
      %v3997 = vrot.slane %v3963, 1
      %v3998 = vsel %vm361, %v3995, %v3997
      %v4010 = vmax.f32 %v3952, %v3978
      %v4011 = vmax.f32 %v3953, %v3980
      %v4012 = vmax.f32 %v3954, %v3982
      %v4013 = vmax.f32 %v3955, %v3984
      %v4014 = vmax.f32 %v3956, %v3986
      %v4015 = vmax.f32 %v3957, %v3988
      %v4016 = vmax.f32 %v3958, %v3990
      %v4017 = vmax.f32 %v3959, %v3992
      %v4018 = vmax.f32 %v3960, %v3994
      %v4019 = vmax.f32 %v3961, %v3996
      %v4020 = vmax.f32 %v3962, %v3998
      %v4031 = vrot.slane %v4011, 2
      %v4032 = vrot.slane %v4012, 2
      %v4033 = vsel %vm553, %v4031, %v4032
      %v4034 = vrot.slane %v4013, 2
      %v4035 = vsel %vm553, %v4032, %v4034
      %v4036 = vrot.slane %v4014, 2
      %v4037 = vsel %vm553, %v4034, %v4036
      %v4038 = vrot.slane %v4015, 2
      %v4039 = vsel %vm553, %v4036, %v4038
      %v4040 = vrot.slane %v4016, 2
      %v4041 = vsel %vm553, %v4038, %v4040
      %v4042 = vrot.slane %v4017, 2
      %v4043 = vsel %vm553, %v4040, %v4042
      %v4044 = vrot.slane %v4018, 2
      %v4045 = vsel %vm553, %v4042, %v4044
      %v4046 = vrot.slane %v4019, 2
      %v4047 = vsel %vm553, %v4044, %v4046
      %v4048 = vrot.slane %v4020, 2
      %v4049 = vsel %vm553, %v4046, %v4048
      %v4059 = vmax.f32 %v4010, %v4033
      %v4060 = vmax.f32 %v4011, %v4035
      %v4061 = vmax.f32 %v4012, %v4037
      %v4062 = vmax.f32 %v4013, %v4039
      %v4063 = vmax.f32 %v4014, %v4041
      %v4064 = vmax.f32 %v4015, %v4043
      %v4065 = vmax.f32 %v4016, %v4045
      %v4066 = vmax.f32 %v4017, %v4047
      %v4067 = vmax.f32 %v4018, %v4049
      %v4068 = vld [vmem:[%s6] sm:$0xff]
      %v4069 = vld [vmem:[%s6 + $0x8] sm:$0xff]
      %v4071 = vsel %vm3790, %v4068, 0
      %v4074 = vsel %vm3790, %v4069, 0
      %4076 = vmatprep.subr.mxu0 0.0
      %4077 = vmatpush1.msra.mxu0 0.0
      %4078 = vmatprep.subr.mxu0 0.0
      %4079 = vmatpush1.msra.mxu0 0.0
      %4080 = vmatprep.subr.mxu0 0.0
      %4081 = vmatpush1.msra.mxu0 0.0
      %4082 = vmatprep.subr.mxu0 0.0
      %4083 = vmatpush1.msra.mxu0 0.0
      %4084 = vmatprep.subr.mxu0 0.0
      %4085 = vmatpush1.msra.mxu0 0.0
      %4086 = vmatprep.subr.mxu0 0.0
      %4087 = vmatpush1.msra.mxu0 0.0
      %4088 = vmatprep.subr.mxu0 0.0
      %4089 = vmatpush1.msra.mxu0 0.0
      %4090 = vmatprep.subr.mxu0 0.0
      %4091 = vmatpush1.msra.mxu0 %v4067
      %4092 = vmatprep.subr.mxu0 0.0
      %4093 = vmatpush1.msra.mxu0 %v4066
      %4094 = vmatprep.subr.mxu0 0.0
      %4095 = vmatpush1.msra.mxu0 %v4065
      %4096 = vmatprep.subr.mxu0 0.0
      %4097 = vmatpush1.msra.mxu0 %v4064
      %4098 = vmatprep.subr.mxu0 0.0
      %4099 = vmatpush1.msra.mxu0 %v4063
      %4100 = vmatprep.subr.mxu0 0.0
      %4101 = vmatpush1.msra.mxu0 %v4062
      %4102 = vmatprep.subr.mxu0 0.0
      %4103 = vmatpush1.msra.mxu0 %v4061
      %4104 = vmatprep.subr.mxu0 0.0
      %4105 = vmatpush1.msra.mxu0 %v4060
      %4106 = vmatprep.subr.mxu0 0.0
      %4107 = vmatpush1.msra.mxu0 %v4059
      %4108 = vmatprep.subr.mxu0 0.0
      %4109 = vmatpush2.msra.mxu0 0.0
      %4110 = vmatprep.subr.mxu0 0.0
      %4111 = vmatpush2.msra.mxu0 0.0
      %4112 = vmatprep.subr.mxu0 0.0
      %4113 = vmatpush2.msra.mxu0 0.0
      %4114 = vmatprep.subr.mxu0 0.0
      %4115 = vmatpush2.msra.mxu0 0.0
      %4116 = vmatprep.subr.mxu0 0.0
      %4117 = vmatpush2.msra.mxu0 0.0
      %4118 = vmatprep.subr.mxu0 0.0
      %4119 = vmatpush2.msra.mxu0 0.0
      %4120 = vmatprep.subr.mxu0 0.0
      %4121 = vmatpush2.msra.mxu0 0.0
      %4122 = vmatprep.subr.mxu0 0.0
      %4123 = vmatpush2.msra.mxu0 0.0
      %4124 = vmatprep.subr.mxu0 0.0
      %4125 = vmatpush2.msra.mxu0 0.0
      %4126 = vmatprep.subr.mxu0 0.0
      %4127 = vmatpush2.msra.mxu0 0.0
      %4128 = vmatprep.subr.mxu0 0.0
      %4129 = vmatpush2.msra.mxu0 0.0
      %4130 = vmatprep.subr.mxu0 0.0
      %4131 = vmatpush2.msra.mxu0 0.0
      %4132 = vmatprep.subr.mxu0 0.0
      %4133 = vmatpush2.msra.mxu0 0.0
      %4134 = vmatprep.subr.mxu0 0.0
      %4135 = vmatpush2.msra.mxu0 0.0
      %4136 = vmatprep.subr.mxu0 0.0
      %4137 = vmatpush2.msra.mxu0 0.0
      %4138 = vmatprep.subr.mxu0 0.0
      %4139 = vmatpush2.msra.mxu0 0.0
      %4140 = vmatprep.mubr.f32.mxu0 0.0
      %4141 = vmatmul.mubr.f32.gmra.mxu0 %v4071
      %v4142 = vpop.f32.mrf.mxu0
      %v4143 = vadd.f32 0.0, %v4142
      %v4144 = vpop.f32.mrf.mxu0
      %4145 = vmatprep.mubr.f32.mxu0 0.0
      %4146 = vmatmul.mubr.f32.gmra.mxu0 %v4074
      %v4147 = vpop.f32.mrf.mxu0
      %v4148 = vadd.f32 0.0, %v4147
      %v4149 = vpop.f32.mrf.mxu0
      %4150 = vdwg.mxu0
      %4151 = vst.msk [vmem:[%s278] sm:$0xff] %vm1870, %v4143
      %4152 = vst.msk [vmem:[%s278 + $0x8] sm:$0xff] %vm1870, %v4148
      %p4153 = scmp.lt.s32.totalorder %s18, 1
      %s4154 = scalar_select %p4153, %s18, 1
      %s4155 = smul.addr %s4154, 2
      %s4156 = smul.addr %s4155, 8
      %s4157 = scalar_lea.vmem %s7, %s4156
      // Predicated region
      $region49: #{fwd.1} parent=47 // pred_check
        %p4158 = pneg %p188
      $region50: #{fwd.1} parent=47 // pred_check_branch
        %4160 = sbr.rel (%p4158) target = $region52
      $region51: #{fwd.1} parent=47 // pred_region
        _
      $region52: #{fwd.1} parent=47 // pred_fallthru
        _
    $region48: #{fwd.1} parent=5 // pred_fallthru
      _
    %p4161 = scmp.le.s32.totalorder 2, %s13
    // Predicated region
    $region53: #{fwd.1} parent=5 // pred_check
      %p4162 = pneg %p4161
    $region54: #{fwd.1} parent=5 // pred_check_branch
      %4164 = sbr.rel (%p4162) target = $region56
    $region55: #{fwd.1} parent=5 // pred_region
      %s4165 = ssub.s32 %s13, 2
      // Predicated region
      $region57: #{fwd.1} parent=55 // pred_check
        %p4166 = pneg %p194
      $region58: #{fwd.1} parent=55 // pred_check_branch
        %4168 = sbr.rel (%p4166) target = $region60
      $region59: #{fwd.1} parent=55 // pred_region
        %p4169 = scmp.lt.s32.totalorder %s19, 1
        %s4170 = scalar_select %p4169, %s19, 1
        %s4171 = smul.addr %s4170, 2
        %s4172 = smul.addr %s4171, 8
        %s4173 = scalar_lea.vmem %s7, %s4172
      $region60: #{fwd.1} parent=55 // pred_fallthru
        _
    $region56: #{fwd.1} parent=5 // pred_fallthru
      _
  $region6: #{fwd.1} parent=0 // loop_footer
    %s17 = sadd.s32 1, %s13
  $region7: #{fwd.1} parent=0 // loop_footer_branch
    %12 = sbr.rel target = $region3
  $region8: #{fwd.1} parent=0 // loop_exit
    _

// kernel: fwd.1
$region0: #{fwd.1}
  #allocation0 [shape = 'u32[]', space=smem, size = 0x4, offset = 0x4, fixed_abs, tag = 'smem constant byte address 0x4 - core index']
  #allocation1 [shape = 'u32[144,128]{1,0:T(1,128)}', space=vmem, size = 0x12000, scoped, tag = 'internal scratch']
  %s0 = inlined_call_operand.vmem [shape: f32[2,344,4], index: 0, kind: input, shape index: {}]
  %s1 = inlined_call_operand.vmem [shape: f32[36,8], index: 1, kind: input, shape index: {}]
  %s2 = inlined_call_operand.vmem [shape: f32[1,8], index: 2, kind: input, shape index: {}]
  %s3 = inlined_call_operand.vmem [shape: f32[120,272], index: 3, kind: input, shape index: {}]
  %s4 = inlined_call_operand.vmem [shape: f32[72,16], index: 4, kind: input, shape index: {}]
  %s5 = inlined_call_operand.vmem [shape: f32[1,16], index: 5, kind: input, shape index: {}]
  %s6 = inlined_call_operand.vmem [shape: f32[16,72], index: 6, kind: input, shape index: {}]
  %s7 = inlined_call_operand.vmem [shape: f32[2,16,16], index: 7, kind: output, shape index: {}]
  %s8 = sld [smem:[#allocation0]]
  $region61: #{fwd.1} parent=0
    _
  %s10 = ssub.s32 1, %s8
  %s11 = scalar_select 0, %s10, %s8
  loop: start=0, step=1, limit=4
  $region2: #{fwd.1} parent=0 // loop_pre_header
    _
  $region3: #{fwd.1} parent=0 // loop_header
    %s13 = sphi 0, %s17
    %p14 = scmp.ge.s32.totalorder %s13, 4
    %s23 = sphi 0, %s25
    %s26 = sphi 0, %s23
    %s27 = sphi 0, %s26
    %s43 = sphi 0, %s27
    %s47 = sphi 0, %s47
    %s49 = sphi 0, %s47
    %s50 = sphi 0, %s49
    %s64 = sphi 0, %s50
    %s68 = sphi 0, %s68
    %s70 = sphi 0, %s68
    %s71 = sphi 0, %s70
    %s85 = sphi 0, %s71
    %s89 = sphi 0, %s89
    %s91 = sphi 0, %s89
    %s92 = sphi 0, %s91
    %s106 = sphi 0, %s92
    %s110 = sphi 0, %s110
    %s112 = sphi 0, %s110
    %s113 = sphi 0, %s112
    %s127 = sphi 0, %s113
    %s131 = sphi 0, %s131
    %s133 = sphi 0, %s131
    %s134 = sphi 0, %s133
    %s148 = sphi 0, %s134
    %s152 = sphi 0, %s152
    %s154 = sphi 0, %s152
    %s155 = sphi 0, %s154
    %s169 = sphi 0, %s155
    %s175 = sphi 0, %s177
    %s178 = sphi 0, %s175
    %s179 = sphi 0, %s178
    %s195 = sphi 0, %s179
  $region4: #{fwd.1} parent=0 // loop_header_branch
    %16 = sbr.rel (%p14) target = $region8
  $region5: #{fwd.1} parent=0 // loop_body
    %s18 = ssub.s32 %s13, 1
    %s19 = ssub.s32 %s13, 2
    %s20 = sadd.s32 %s13, 1
    %s21 = ssub.s32 %s13, %s20
    %p22 = scmp.eq.s32.totalorder %s21, 0
    %s24 = sadd.s32 %s23, 1
    %s25 = scalar_select %p22, %s23, %s24
    %p28 = pneg %p22
    %p29 = scmp.eq.s32.totalorder %s13, 1
    %p30 = por %p28, %p29
    %p31 = scmp.ne.s32.totalorder %s23, %s26
    %p32 = scmp.eq.s32.totalorder %s13, 0
    %p33 = por %p31, %p32
    %p34 = scmp.ne.s32.totalorder %s23, %s26
    %p35 = scmp.eq.s32.totalorder %s18, 1
    %p36 = por %p34, %p35
    %p37 = scmp.ne.s32.totalorder %s26, %s27
    %p38 = scmp.eq.s32.totalorder %s18, 0
    %p39 = por %p37, %p38
    %p40 = scmp.ne.s32.totalorder %s26, %s27
    %p41 = scmp.eq.s32.totalorder %s19, 1
    %p42 = por %p40, %p41
    %p44 = scmp.ne.s32.totalorder %s27, %s43
    %p45 = scmp.eq.s32.totalorder %s19, 0
    %p46 = por %p44, %p45
    %s48 = sadd.s32 %s47, 1
    %p51 = scmp.eq.s32.totalorder %s13, 1
    %p52 = scmp.ne.s32.totalorder %s47, %s49
    %p53 = scmp.eq.s32.totalorder %s13, 0
    %p54 = por %p52, %p53
    %p55 = scmp.ne.s32.totalorder %s47, %s49
    %p56 = scmp.eq.s32.totalorder %s18, 1
    %p57 = por %p55, %p56
    %p58 = scmp.ne.s32.totalorder %s49, %s50
    %p59 = scmp.eq.s32.totalorder %s18, 0
    %p60 = por %p58, %p59
    %p61 = scmp.ne.s32.totalorder %s49, %s50
    %p62 = scmp.eq.s32.totalorder %s19, 1
    %p63 = por %p61, %p62
    %p65 = scmp.ne.s32.totalorder %s50, %s64
    %p66 = scmp.eq.s32.totalorder %s19, 0
    %p67 = por %p65, %p66
    %s69 = sadd.s32 %s68, 1
    %p72 = scmp.eq.s32.totalorder %s13, 1
    %p73 = scmp.ne.s32.totalorder %s68, %s70
    %p74 = scmp.eq.s32.totalorder %s13, 0
    %p75 = por %p73, %p74
    %p76 = scmp.ne.s32.totalorder %s68, %s70
    %p77 = scmp.eq.s32.totalorder %s18, 1
    %p78 = por %p76, %p77
    %p79 = scmp.ne.s32.totalorder %s70, %s71
    %p80 = scmp.eq.s32.totalorder %s18, 0
    %p81 = por %p79, %p80
    %p82 = scmp.ne.s32.totalorder %s70, %s71
    %p83 = scmp.eq.s32.totalorder %s19, 1
    %p84 = por %p82, %p83
    %p86 = scmp.ne.s32.totalorder %s71, %s85
    %p87 = scmp.eq.s32.totalorder %s19, 0
    %p88 = por %p86, %p87
    %s90 = sadd.s32 %s89, 1
    %p93 = scmp.eq.s32.totalorder %s13, 1
    %p94 = scmp.ne.s32.totalorder %s89, %s91
    %p95 = scmp.eq.s32.totalorder %s13, 0
    %p96 = por %p94, %p95
    %p97 = scmp.ne.s32.totalorder %s89, %s91
    %p98 = scmp.eq.s32.totalorder %s18, 1
    %p99 = por %p97, %p98
    %p100 = scmp.ne.s32.totalorder %s91, %s92
    %p101 = scmp.eq.s32.totalorder %s18, 0
    %p102 = por %p100, %p101
    %p103 = scmp.ne.s32.totalorder %s91, %s92
    %p104 = scmp.eq.s32.totalorder %s19, 1
    %p105 = por %p103, %p104
    %p107 = scmp.ne.s32.totalorder %s92, %s106
    %p108 = scmp.eq.s32.totalorder %s19, 0
    %p109 = por %p107, %p108
    %s111 = sadd.s32 %s110, 1
    %p114 = scmp.eq.s32.totalorder %s13, 1
    %p115 = scmp.ne.s32.totalorder %s110, %s112
    %p116 = scmp.eq.s32.totalorder %s13, 0
    %p117 = por %p115, %p116
    %p118 = scmp.ne.s32.totalorder %s110, %s112
    %p119 = scmp.eq.s32.totalorder %s18, 1
    %p120 = por %p118, %p119
    %p121 = scmp.ne.s32.totalorder %s112, %s113
    %p122 = scmp.eq.s32.totalorder %s18, 0
    %p123 = por %p121, %p122
    %p124 = scmp.ne.s32.totalorder %s112, %s113
    %p125 = scmp.eq.s32.totalorder %s19, 1
    %p126 = por %p124, %p125
    %p128 = scmp.ne.s32.totalorder %s113, %s127
    %p129 = scmp.eq.s32.totalorder %s19, 0
    %p130 = por %p128, %p129
    %s132 = sadd.s32 %s131, 1
    %p135 = scmp.eq.s32.totalorder %s13, 1
    %p136 = scmp.ne.s32.totalorder %s131, %s133
    %p137 = scmp.eq.s32.totalorder %s13, 0
    %p138 = por %p136, %p137
    %p139 = scmp.ne.s32.totalorder %s131, %s133
    %p140 = scmp.eq.s32.totalorder %s18, 1
    %p141 = por %p139, %p140
    %p142 = scmp.ne.s32.totalorder %s133, %s134
    %p143 = scmp.eq.s32.totalorder %s18, 0
    %p144 = por %p142, %p143
    %p145 = scmp.ne.s32.totalorder %s133, %s134
    %p146 = scmp.eq.s32.totalorder %s19, 1
    %p147 = por %p145, %p146
    %p149 = scmp.ne.s32.totalorder %s134, %s148
    %p150 = scmp.eq.s32.totalorder %s19, 0
    %p151 = por %p149, %p150
    %s153 = sadd.s32 %s152, 1
    %p156 = scmp.eq.s32.totalorder %s13, 1
    %p157 = scmp.ne.s32.totalorder %s152, %s154
    %p158 = scmp.eq.s32.totalorder %s13, 0
    %p159 = por %p157, %p158
    %p160 = scmp.ne.s32.totalorder %s152, %s154
    %p161 = scmp.eq.s32.totalorder %s18, 1
    %p162 = por %p160, %p161
    %p163 = scmp.ne.s32.totalorder %s154, %s155
    %p164 = scmp.eq.s32.totalorder %s18, 0
    %p165 = por %p163, %p164
    %p166 = scmp.ne.s32.totalorder %s154, %s155
    %p167 = scmp.eq.s32.totalorder %s19, 1
    %p168 = por %p166, %p167
    %p170 = scmp.ne.s32.totalorder %s155, %s169
    %p171 = scmp.eq.s32.totalorder %s19, 0
    %p172 = por %p170, %p171
    %s173 = ssub.s32 %s13, %s20
    %p174 = scmp.eq.s32.totalorder %s173, 0
    %s176 = sadd.s32 %s175, 1
    %s177 = scalar_select %p174, %s175, %s176
    %p180 = pneg %p174
    %p181 = scmp.eq.s32.totalorder %s13, 1
    %p182 = por %p180, %p181
    %p183 = scmp.ne.s32.totalorder %s175, %s178
    %p184 = scmp.eq.s32.totalorder %s13, 0
    %p185 = por %p183, %p184
    %p186 = scmp.ne.s32.totalorder %s175, %s178
    %p187 = scmp.eq.s32.totalorder %s18, 1
    %p188 = por %p186, %p187
    %p189 = scmp.ne.s32.totalorder %s178, %s179
    %p190 = scmp.eq.s32.totalorder %s18, 0
    %p191 = por %p189, %p190
    %p192 = scmp.ne.s32.totalorder %s178, %s179
    %p193 = scmp.eq.s32.totalorder %s19, 1
    %p194 = por %p192, %p193
    %p196 = scmp.ne.s32.totalorder %s179, %s195
    %p197 = scmp.eq.s32.totalorder %s19, 0
    %p198 = por %p196, %p197
    %p199 = scmp.le.s32.totalorder 1, %s13
    %p200 = scmp.lt.s32.totalorder %s13, 3
    %p201 = pnand %p199, %p200
    %p202 = pneg %p201
    // Predicated region
    $region9: #{fwd.1} parent=5 // pred_check
      _
    $region10: #{fwd.1} parent=5 // pred_check_branch
      %204 = sbr.rel (%p201) target = $region12
    $region11: #{fwd.1} parent=5 // pred_region
      %s205 = ssub.s32 %s13, 1
      // Predicated region
      $region13: #{fwd.1} parent=11 // pred_check
        %p206 = pneg %p60
      $region14: #{fwd.1} parent=11 // pred_check_branch
        %208 = sbr.rel (%p206) target = $region16
      $region15: #{fwd.1} parent=11 // pred_region
        _
      $region16: #{fwd.1} parent=11 // pred_fallthru
        _
      // Predicated region
      $region17: #{fwd.1} parent=11 // pred_check
        %p209 = pneg %p81
      $region18: #{fwd.1} parent=11 // pred_check_branch
        %211 = sbr.rel (%p209) target = $region20
      $region19: #{fwd.1} parent=11 // pred_region
        _
      $region20: #{fwd.1} parent=11 // pred_fallthru
        _
      // Predicated region
      $region21: #{fwd.1} parent=11 // pred_check
        %p212 = pneg %p102
      $region22: #{fwd.1} parent=11 // pred_check_branch
        %214 = sbr.rel (%p212) target = $region24
      $region23: #{fwd.1} parent=11 // pred_region
        _
      $region24: #{fwd.1} parent=11 // pred_fallthru
        _
      // Predicated region
      $region25: #{fwd.1} parent=11 // pred_check
        %p215 = pneg %p123
      $region26: #{fwd.1} parent=11 // pred_check_branch
        %217 = sbr.rel (%p215) target = $region28
      $region27: #{fwd.1} parent=11 // pred_region
        _
      $region28: #{fwd.1} parent=11 // pred_fallthru
        _
      // Predicated region
      $region29: #{fwd.1} parent=11 // pred_check
        %p218 = pneg %p144
      $region30: #{fwd.1} parent=11 // pred_check_branch
        %220 = sbr.rel (%p218) target = $region32
      $region31: #{fwd.1} parent=11 // pred_region
        _
      $region32: #{fwd.1} parent=11 // pred_fallthru
        _
      // Predicated region
      $region33: #{fwd.1} parent=11 // pred_check
        %p221 = pneg %p165
      $region34: #{fwd.1} parent=11 // pred_check_branch
        %223 = sbr.rel (%p221) target = $region36
      $region35: #{fwd.1} parent=11 // pred_region
        _
      $region36: #{fwd.1} parent=11 // pred_fallthru
        _
    $region12: #{fwd.1} parent=5 // pred_fallthru
      _
    %p224 = scmp.lt.s32.totalorder %s13, 2
    // Predicated region
    $region37: #{fwd.1} parent=5 // pred_check
      %p225 = pneg %p224
    $region38: #{fwd.1} parent=5 // pred_check_branch
      %227 = sbr.rel (%p225) target = $region40
    $region39: #{fwd.1} parent=5 // pred_region
      // Predicated region
      $region41: #{fwd.1} parent=39 // pred_check
        %p228 = pneg %p33
      $region42: #{fwd.1} parent=39 // pred_check_branch
        %230 = sbr.rel (%p228) target = $region44
      $region43: #{fwd.1} parent=39 // pred_region
        %p231 = scmp.lt.s32.totalorder %s13, 1
        %s232 = scalar_select %p231, %s13, 1
        %s233 = smul.addr %s232, 43
        %s234 = smul.addr %s233, 8
        %s235 = scalar_lea.vmem %s0, %s234
      $region44: #{fwd.1} parent=39 // pred_fallthru
        _
    $region40: #{fwd.1} parent=5 // pred_fallthru
      _
    %p236 = scmp.le.s32.totalorder 1, %s13
    %p237 = scmp.lt.s32.totalorder %s13, 3
    %p238 = pnand %p236, %p237
    %p239 = pneg %p238
    // Predicated region
    $region45: #{fwd.1} parent=5 // pred_check
      _
    $region46: #{fwd.1} parent=5 // pred_check_branch
      %241 = sbr.rel (%p238) target = $region48
    $region47: #{fwd.1} parent=5 // pred_region
      %s242 = ssub.s32 %s13, 1
      %p243 = scmp.lt.s32.totalorder %s18, 1
      %s244 = scalar_select %p243, %s18, 1
      %s245 = smul.addr %s244, 43
      %s246 = smul.addr %s245, 8
      %s247 = scalar_lea.vmem %s0, %s246
      %p248 = pneg %p39
      %p249 = pneg %p36
      %p250 = pneg %p60
      %p251 = pneg %p57
      %p252 = pneg %p81
      %p253 = pneg %p78
      %p254 = pneg %p102
      %p255 = pneg %p99
      %p256 = pneg %p123
      %p257 = pneg %p120
      %p258 = pneg %p144
      %p259 = pneg %p141
      %p260 = pneg %p165
      %p261 = pneg %p162
      %p262 = pneg %p191
      %p263 = pneg %p188
      %p264 = scmp.lt.s32.totalorder %s18, 1
      %s265 = scalar_select %p264, %s18, 1
      %s266 = smul.addr %s265, 2
      %s267 = smul.addr %s266, 8
      %s268 = scalar_lea.vmem %s7, %s267
      %p269 = scmp.lt.s32.totalorder %s18, 1
      %s270 = scalar_select %p269, %s18, 1
      %s271 = smul.addr %s270, 43
      %s272 = smul.addr %s271, 8
      %s273 = scalar_lea.vmem %s0, %s272
      %p274 = scmp.lt.s32.totalorder %s18, 1
      %s275 = scalar_select %p274, %s18, 1
      %s276 = smul.addr %s275, 2
      %s277 = smul.addr %s276, 8
      %s278 = scalar_lea.vmem %s7, %s277
      %v279 = vld [vmem:[%s273] sm:$0xff]
      %v280 = vld [vmem:[%s273 + $0x8] sm:$0xff]
      %v281 = vld [vmem:[%s273 + $0x10] sm:$0xff]
      %v282 = vld [vmem:[%s273 + $0x18] sm:$0xff]
      %v283 = vld [vmem:[%s273 + $0x20] sm:$0xff]
      %v284 = vld [vmem:[%s273 + $0x28] sm:$0xff]
      %v285 = vld [vmem:[%s273 + $0x30] sm:$0xff]
      %v286 = vld [vmem:[%s273 + $0x38] sm:$0xff]
      %v287 = vld [vmem:[%s273 + $0x40] sm:$0xff]
      %v288 = vld [vmem:[%s273 + $0x48] sm:$0xff]
      %v289 = vld [vmem:[%s273 + $0x50] sm:$0xff]
      %v290 = vld [vmem:[%s273 + $0x58] sm:$0xff]
      %v291 = vld [vmem:[%s273 + $0x60] sm:$0xff]
      %v292 = vld [vmem:[%s273 + $0x68] sm:$0xff]
      %v293 = vld [vmem:[%s273 + $0x70] sm:$0xff]
      %v294 = vld [vmem:[%s273 + $0x78] sm:$0xff]
      %v295 = vld [vmem:[%s273 + $0x80] sm:$0xff]
      %v296 = vld [vmem:[%s273 + $0x88] sm:$0xff]
      %v297 = vld [vmem:[%s273 + $0x90] sm:$0xff]
      %v298 = vld [vmem:[%s273 + $0x98] sm:$0xff]
      %v299 = vld [vmem:[%s273 + $0xa0] sm:$0xff]
      %v300 = vld [vmem:[%s273 + $0xa8] sm:$0xff]
      %v301 = vld [vmem:[%s273 + $0xb0] sm:$0xff]
      %v302 = vld [vmem:[%s273 + $0xb8] sm:$0xff]
      %v303 = vld [vmem:[%s273 + $0xc0] sm:$0xff]
      %v304 = vld [vmem:[%s273 + $0xc8] sm:$0xff]
      %v305 = vld [vmem:[%s273 + $0xd0] sm:$0xff]
      %v306 = vld [vmem:[%s273 + $0xd8] sm:$0xff]
      %v307 = vld [vmem:[%s273 + $0xe0] sm:$0xff]
      %v308 = vld [vmem:[%s273 + $0xe8] sm:$0xff]
      %v309 = vld [vmem:[%s273 + $0xf0] sm:$0xff]
      %v310 = vld [vmem:[%s273 + $0xf8] sm:$0xff]
      %v311 = vld [vmem:[%s273 + $0x100] sm:$0xff]
      %v312 = vld [vmem:[%s273 + $0x108] sm:$0xff]
      %v313 = vld [vmem:[%s273 + $0x110] sm:$0xff]
      %v314 = vld [vmem:[%s273 + $0x118] sm:$0xff]
      %v315 = vld [vmem:[%s273 + $0x120] sm:$0xff]
      %v316 = vld [vmem:[%s273 + $0x128] sm:$0xff]
      %v317 = vld [vmem:[%s273 + $0x130] sm:$0xff]
      %v318 = vld [vmem:[%s273 + $0x138] sm:$0xff]
      %v319 = vld [vmem:[%s273 + $0x140] sm:$0xff]
      %v320 = vld [vmem:[%s273 + $0x148] sm:$0xff]
      %v321 = vld [vmem:[%s273 + $0x150] sm:$0xff]
      %v322 = vld [vmem:[%s1] sm:$0xf]
      %v323 = vld [vmem:[%s1 + $0x4] sm:$0xf]
      %vm363 = vcmask 1046528
      %v364 = vrot.slane %v279, 1
      %v365 = vrot.slane %v280, 1
      %v366 = vsel %vm363, %v364, %v365
      %v367 = vrot.slane %v281, 1
      %v368 = vsel %vm363, %v365, %v367
      %v369 = vrot.slane %v282, 1
      %v370 = vsel %vm363, %v367, %v369
      %v371 = vrot.slane %v283, 1
      %v372 = vsel %vm363, %v369, %v371
      %v373 = vrot.slane %v284, 1
      %v374 = vsel %vm363, %v371, %v373
      %v375 = vrot.slane %v285, 1
      %v376 = vsel %vm363, %v373, %v375
      %v377 = vrot.slane %v286, 1
      %v378 = vsel %vm363, %v375, %v377
      %v379 = vrot.slane %v287, 1
      %v380 = vsel %vm363, %v377, %v379
      %v381 = vrot.slane %v288, 1
      %v382 = vsel %vm363, %v379, %v381
      %v383 = vrot.slane %v289, 1
      %v384 = vsel %vm363, %v381, %v383
      %v385 = vrot.slane %v290, 1
      %v386 = vsel %vm363, %v383, %v385
      %v387 = vrot.slane %v291, 1
      %v388 = vsel %vm363, %v385, %v387
      %v389 = vrot.slane %v292, 1
      %v390 = vsel %vm363, %v387, %v389
      %v391 = vrot.slane %v293, 1
      %v392 = vsel %vm363, %v389, %v391
      %v393 = vrot.slane %v294, 1
      %v394 = vsel %vm363, %v391, %v393
      %v395 = vrot.slane %v295, 1
      %v396 = vsel %vm363, %v393, %v395
      %v397 = vrot.slane %v296, 1
      %v398 = vsel %vm363, %v395, %v397
      %v399 = vrot.slane %v297, 1
      %v400 = vsel %vm363, %v397, %v399
      %v401 = vrot.slane %v298, 1
      %v402 = vsel %vm363, %v399, %v401
      %v403 = vrot.slane %v299, 1
      %v404 = vsel %vm363, %v401, %v403
      %v405 = vrot.slane %v300, 1
      %v406 = vsel %vm363, %v403, %v405
      %v407 = vrot.slane %v301, 1
      %v408 = vsel %vm363, %v405, %v407
      %v409 = vrot.slane %v302, 1
      %v410 = vsel %vm363, %v407, %v409
      %v411 = vrot.slane %v303, 1
      %v412 = vsel %vm363, %v409, %v411
      %v413 = vrot.slane %v304, 1
      %v414 = vsel %vm363, %v411, %v413
      %v415 = vrot.slane %v305, 1
      %v416 = vsel %vm363, %v413, %v415
      %v417 = vrot.slane %v306, 1
      %v418 = vsel %vm363, %v415, %v417
      %v419 = vrot.slane %v307, 1
      %v420 = vsel %vm363, %v417, %v419
      %v421 = vrot.slane %v308, 1
      %v422 = vsel %vm363, %v419, %v421
      %v423 = vrot.slane %v309, 1
      %v424 = vsel %vm363, %v421, %v423
      %v425 = vrot.slane %v310, 1
      %v426 = vsel %vm363, %v423, %v425
      %v427 = vrot.slane %v311, 1
      %v428 = vsel %vm363, %v425, %v427
      %v429 = vrot.slane %v312, 1
      %v430 = vsel %vm363, %v427, %v429
      %v431 = vrot.slane %v313, 1
      %v432 = vsel %vm363, %v429, %v431
      %v433 = vrot.slane %v314, 1
      %v434 = vsel %vm363, %v431, %v433
      %v435 = vrot.slane %v315, 1
      %v436 = vsel %vm363, %v433, %v435
      %v437 = vrot.slane %v316, 1
      %v438 = vsel %vm363, %v435, %v437
      %v439 = vrot.slane %v317, 1
      %v440 = vsel %vm363, %v437, %v439
      %vm441 = vcmask 31744
      %v442 = vsel %vm441, %v366, 0
      %v444 = vsel %vm441, %v368, 0
      %v446 = vsel %vm441, %v370, 0
      %v448 = vsel %vm441, %v372, 0
      %v450 = vsel %vm441, %v374, 0
      %v452 = vsel %vm441, %v376, 0
      %v454 = vsel %vm441, %v378, 0
      %v456 = vsel %vm441, %v380, 0
      %v458 = vsel %vm441, %v382, 0
      %v460 = vsel %vm441, %v384, 0
      %v462 = vsel %vm441, %v386, 0
      %v464 = vsel %vm441, %v388, 0
      %v466 = vsel %vm441, %v390, 0
      %v468 = vsel %vm441, %v392, 0
      %v470 = vsel %vm441, %v394, 0
      %v472 = vsel %vm441, %v396, 0
      %v474 = vsel %vm441, %v398, 0
      %v476 = vsel %vm441, %v400, 0
      %v478 = vsel %vm441, %v402, 0
      %v480 = vsel %vm441, %v404, 0
      %v482 = vsel %vm441, %v406, 0
      %v484 = vsel %vm441, %v408, 0
      %v486 = vsel %vm441, %v410, 0
      %v488 = vsel %vm441, %v412, 0
      %v490 = vsel %vm441, %v414, 0
      %v492 = vsel %vm441, %v416, 0
      %v494 = vsel %vm441, %v418, 0
      %v496 = vsel %vm441, %v420, 0
      %v498 = vsel %vm441, %v422, 0
      %v500 = vsel %vm441, %v424, 0
      %v502 = vsel %vm441, %v426, 0
      %v504 = vsel %vm441, %v428, 0
      %v506 = vsel %vm441, %v430, 0
      %v508 = vsel %vm441, %v432, 0
      %v510 = vsel %vm441, %v434, 0
      %v512 = vsel %vm441, %v436, 0
      %v514 = vsel %vm441, %v438, 0
      %v516 = vsel %vm441, %v440, 0
      %vm518 = vcmask 1043456
      %v520 = vsel %vm518, %v323, 0
      %522 = vmatprep.subr.mxu0 0.0
      %523 = vmatpush1.msra.mxu0 0.0
      %524 = vmatprep.subr.mxu0 0.0
      %525 = vmatpush1.msra.mxu0 0.0
      %526 = vmatprep.subr.mxu0 0.0
      %527 = vmatpush1.msra.mxu0 0.0
      %528 = vmatprep.subr.mxu0 0.0
      %529 = vmatpush1.msra.mxu0 0.0
      %530 = vmatprep.subr.mxu0 0.0
      %531 = vmatpush1.msra.mxu0 0.0
      %532 = vmatprep.subr.mxu0 0.0
      %533 = vmatpush1.msra.mxu0 0.0
      %534 = vmatprep.subr.mxu0 0.0
      %535 = vmatpush1.msra.mxu0 0.0
      %536 = vmatprep.subr.mxu0 0.0
      %537 = vmatpush1.msra.mxu0 0.0
      %538 = vmatprep.subr.mxu0 0.0
      %539 = vmatpush1.msra.mxu0 0.0
      %540 = vmatprep.subr.mxu0 0.0
      %541 = vmatpush1.msra.mxu0 0.0
      %542 = vmatprep.subr.mxu0 0.0
      %543 = vmatpush1.msra.mxu0 0.0
      %544 = vmatprep.subr.mxu0 0.0
      %545 = vmatpush1.msra.mxu0 0.0
      %546 = vmatprep.subr.mxu0 0.0
      %547 = vmatpush1.msra.mxu0 0.0
      %548 = vmatprep.subr.mxu0 0.0
      %549 = vmatpush1.msra.mxu0 0.0
      %550 = vmatprep.subr.mxu0 0.0
      %551 = vmatpush1.msra.mxu0 0.0
      %552 = vmatprep.subr.mxu0 0.0
      %553 = vmatpush1.msra.mxu0 %v520
      %554 = vmatprep.subr.mxu0 0.0
      %555 = vmatpush2.msra.mxu0 0.0
      %556 = vmatprep.subr.mxu0 0.0
      %557 = vmatpush2.msra.mxu0 0.0
      %558 = vmatprep.subr.mxu0 0.0
      %559 = vmatpush2.msra.mxu0 0.0
      %560 = vmatprep.subr.mxu0 0.0
      %561 = vmatpush2.msra.mxu0 0.0
      %562 = vmatprep.subr.mxu0 0.0
      %563 = vmatpush2.msra.mxu0 0.0
      %564 = vmatprep.subr.mxu0 0.0
      %565 = vmatpush2.msra.mxu0 0.0
      %566 = vmatprep.subr.mxu0 0.0
      %567 = vmatpush2.msra.mxu0 0.0
      %568 = vmatprep.subr.mxu0 0.0
      %569 = vmatpush2.msra.mxu0 0.0
      %570 = vmatprep.subr.mxu0 0.0
      %571 = vmatpush2.msra.mxu0 0.0
      %572 = vmatprep.subr.mxu0 0.0
      %573 = vmatpush2.msra.mxu0 0.0
      %574 = vmatprep.subr.mxu0 0.0
      %575 = vmatpush2.msra.mxu0 0.0
      %576 = vmatprep.subr.mxu0 0.0
      %577 = vmatpush2.msra.mxu0 0.0
      %578 = vmatprep.subr.mxu0 0.0
      %579 = vmatpush2.msra.mxu0 0.0
      %580 = vmatprep.subr.mxu0 0.0
      %581 = vmatpush2.msra.mxu0 0.0
      %582 = vmatprep.subr.mxu0 0.0
      %583 = vmatpush2.msra.mxu0 0.0
      %584 = vmatprep.subr.mxu0 0.0
      %585 = vmatpush2.msra.mxu0 0.0
      %586 = vmatprep.mubr.f32.mxu0 0.0
      %587 = vmatmul.mubr.f32.gmra.mxu0 %v442
      %v588 = vpop.f32.mrf.mxu0
      %v589 = vadd.f32 0.0, %v588
      %v590 = vpop.f32.mrf.mxu0
      %591 = vmatprep.mubr.f32.mxu0 0.0
      %592 = vmatmul.mubr.f32.gmra.mxu0 %v444
      %v593 = vpop.f32.mrf.mxu0
      %v594 = vadd.f32 0.0, %v593
      %v595 = vpop.f32.mrf.mxu0
      %596 = vmatprep.mubr.f32.mxu0 0.0
      %597 = vmatmul.mubr.f32.gmra.mxu0 %v446
      %v598 = vpop.f32.mrf.mxu0
      %v599 = vadd.f32 0.0, %v598
      %v600 = vpop.f32.mrf.mxu0
      %601 = vmatprep.mubr.f32.mxu0 0.0
      %602 = vmatmul.mubr.f32.gmra.mxu0 %v448
      %v603 = vpop.f32.mrf.mxu0
      %v604 = vadd.f32 0.0, %v603
      %v605 = vpop.f32.mrf.mxu0
      %606 = vmatprep.mubr.f32.mxu0 0.0
      %607 = vmatmul.mubr.f32.gmra.mxu0 %v450
      %v608 = vpop.f32.mrf.mxu0
      %v609 = vadd.f32 0.0, %v608
      %v610 = vpop.f32.mrf.mxu0
      %611 = vmatprep.mubr.f32.mxu0 0.0
      %612 = vmatmul.mubr.f32.gmra.mxu0 %v452
      %v613 = vpop.f32.mrf.mxu0
      %v614 = vadd.f32 0.0, %v613
      %v615 = vpop.f32.mrf.mxu0
      %616 = vmatprep.mubr.f32.mxu0 0.0
      %617 = vmatmul.mubr.f32.gmra.mxu0 %v454
      %v618 = vpop.f32.mrf.mxu0
      %v619 = vadd.f32 0.0, %v618
      %v620 = vpop.f32.mrf.mxu0
      %621 = vmatprep.mubr.f32.mxu0 0.0
      %622 = vmatmul.mubr.f32.gmra.mxu0 %v456
      %v623 = vpop.f32.mrf.mxu0
      %v624 = vadd.f32 0.0, %v623
      %v625 = vpop.f32.mrf.mxu0
      %626 = vmatprep.mubr.f32.mxu0 0.0
      %627 = vmatmul.mubr.f32.gmra.mxu0 %v458
      %v628 = vpop.f32.mrf.mxu0
      %v629 = vadd.f32 0.0, %v628
      %v630 = vpop.f32.mrf.mxu0
      %631 = vmatprep.mubr.f32.mxu0 0.0
      %632 = vmatmul.mubr.f32.gmra.mxu0 %v460
      %v633 = vpop.f32.mrf.mxu0
      %v634 = vadd.f32 0.0, %v633
      %v635 = vpop.f32.mrf.mxu0
      %636 = vmatprep.mubr.f32.mxu0 0.0
      %637 = vmatmul.mubr.f32.gmra.mxu0 %v462
      %v638 = vpop.f32.mrf.mxu0
      %v639 = vadd.f32 0.0, %v638
      %v640 = vpop.f32.mrf.mxu0
      %641 = vmatprep.mubr.f32.mxu0 0.0
      %642 = vmatmul.mubr.f32.gmra.mxu0 %v464
      %v643 = vpop.f32.mrf.mxu0
      %v644 = vadd.f32 0.0, %v643
      %v645 = vpop.f32.mrf.mxu0
      %646 = vmatprep.mubr.f32.mxu0 0.0
      %647 = vmatmul.mubr.f32.gmra.mxu0 %v466
      %v648 = vpop.f32.mrf.mxu0
      %v649 = vadd.f32 0.0, %v648
      %v650 = vpop.f32.mrf.mxu0
      %651 = vmatprep.mubr.f32.mxu0 0.0
      %652 = vmatmul.mubr.f32.gmra.mxu0 %v468
      %v653 = vpop.f32.mrf.mxu0
      %v654 = vadd.f32 0.0, %v653
      %v655 = vpop.f32.mrf.mxu0
      %656 = vmatprep.mubr.f32.mxu0 0.0
      %657 = vmatmul.mubr.f32.gmra.mxu0 %v470
      %v658 = vpop.f32.mrf.mxu0
      %v659 = vadd.f32 0.0, %v658
      %v660 = vpop.f32.mrf.mxu0
      %661 = vmatprep.mubr.f32.mxu0 0.0
      %662 = vmatmul.mubr.f32.gmra.mxu0 %v472
      %v663 = vpop.f32.mrf.mxu0
      %v664 = vadd.f32 0.0, %v663
      %v665 = vpop.f32.mrf.mxu0
      %666 = vmatprep.mubr.f32.mxu0 0.0
      %667 = vmatmul.mubr.f32.gmra.mxu0 %v474
      %v668 = vpop.f32.mrf.mxu0
      %v669 = vadd.f32 0.0, %v668
      %v670 = vpop.f32.mrf.mxu0
      %671 = vmatprep.mubr.f32.mxu0 0.0
      %672 = vmatmul.mubr.f32.gmra.mxu0 %v476
      %v673 = vpop.f32.mrf.mxu0
      %v674 = vadd.f32 0.0, %v673
      %v675 = vpop.f32.mrf.mxu0
      %676 = vmatprep.mubr.f32.mxu0 0.0
      %677 = vmatmul.mubr.f32.gmra.mxu0 %v478
      %v678 = vpop.f32.mrf.mxu0
      %v679 = vadd.f32 0.0, %v678
      %v680 = vpop.f32.mrf.mxu0
      %681 = vmatprep.mubr.f32.mxu0 0.0
      %682 = vmatmul.mubr.f32.gmra.mxu0 %v480
      %v683 = vpop.f32.mrf.mxu0
      %v684 = vadd.f32 0.0, %v683
      %v685 = vpop.f32.mrf.mxu0
      %686 = vmatprep.mubr.f32.mxu0 0.0
      %687 = vmatmul.mubr.f32.gmra.mxu0 %v482
      %v688 = vpop.f32.mrf.mxu0
      %v689 = vadd.f32 0.0, %v688
      %v690 = vpop.f32.mrf.mxu0
      %691 = vmatprep.mubr.f32.mxu0 0.0
      %692 = vmatmul.mubr.f32.gmra.mxu0 %v484
      %v693 = vpop.f32.mrf.mxu0
      %v694 = vadd.f32 0.0, %v693
      %v695 = vpop.f32.mrf.mxu0
      %696 = vmatprep.mubr.f32.mxu0 0.0
      %697 = vmatmul.mubr.f32.gmra.mxu0 %v486
      %v698 = vpop.f32.mrf.mxu0
      %v699 = vadd.f32 0.0, %v698
      %v700 = vpop.f32.mrf.mxu0
      %701 = vmatprep.mubr.f32.mxu0 0.0
      %702 = vmatmul.mubr.f32.gmra.mxu0 %v488
      %v703 = vpop.f32.mrf.mxu0
      %v704 = vadd.f32 0.0, %v703
      %v705 = vpop.f32.mrf.mxu0
      %706 = vmatprep.mubr.f32.mxu0 0.0
      %707 = vmatmul.mubr.f32.gmra.mxu0 %v490
      %v708 = vpop.f32.mrf.mxu0
      %v709 = vadd.f32 0.0, %v708
      %v710 = vpop.f32.mrf.mxu0
      %711 = vmatprep.mubr.f32.mxu0 0.0
      %712 = vmatmul.mubr.f32.gmra.mxu0 %v492
      %v713 = vpop.f32.mrf.mxu0
      %v714 = vadd.f32 0.0, %v713
      %v715 = vpop.f32.mrf.mxu0
      %716 = vmatprep.mubr.f32.mxu0 0.0
      %717 = vmatmul.mubr.f32.gmra.mxu0 %v494
      %v718 = vpop.f32.mrf.mxu0
      %v719 = vadd.f32 0.0, %v718
      %v720 = vpop.f32.mrf.mxu0
      %721 = vmatprep.mubr.f32.mxu0 0.0
      %722 = vmatmul.mubr.f32.gmra.mxu0 %v496
      %v723 = vpop.f32.mrf.mxu0
      %v724 = vadd.f32 0.0, %v723
      %v725 = vpop.f32.mrf.mxu0
      %726 = vmatprep.mubr.f32.mxu0 0.0
      %727 = vmatmul.mubr.f32.gmra.mxu0 %v498
      %v728 = vpop.f32.mrf.mxu0
      %v729 = vadd.f32 0.0, %v728
      %v730 = vpop.f32.mrf.mxu0
      %731 = vmatprep.mubr.f32.mxu0 0.0
      %732 = vmatmul.mubr.f32.gmra.mxu0 %v500
      %v733 = vpop.f32.mrf.mxu0
      %v734 = vadd.f32 0.0, %v733
      %v735 = vpop.f32.mrf.mxu0
      %736 = vmatprep.mubr.f32.mxu0 0.0
      %737 = vmatmul.mubr.f32.gmra.mxu0 %v502
      %v738 = vpop.f32.mrf.mxu0
      %v739 = vadd.f32 0.0, %v738
      %v740 = vpop.f32.mrf.mxu0
      %741 = vmatprep.mubr.f32.mxu0 0.0
      %742 = vmatmul.mubr.f32.gmra.mxu0 %v504
      %v743 = vpop.f32.mrf.mxu0
      %v744 = vadd.f32 0.0, %v743
      %v745 = vpop.f32.mrf.mxu0
      %746 = vmatprep.mubr.f32.mxu0 0.0
      %747 = vmatmul.mubr.f32.gmra.mxu0 %v506
      %v748 = vpop.f32.mrf.mxu0
      %v749 = vadd.f32 0.0, %v748
      %v750 = vpop.f32.mrf.mxu0
      %751 = vmatprep.mubr.f32.mxu0 0.0
      %752 = vmatmul.mubr.f32.gmra.mxu0 %v508
      %v753 = vpop.f32.mrf.mxu0
      %v754 = vadd.f32 0.0, %v753
      %v755 = vpop.f32.mrf.mxu0
      %756 = vmatprep.mubr.f32.mxu0 0.0
      %757 = vmatmul.mubr.f32.gmra.mxu0 %v510
      %v758 = vpop.f32.mrf.mxu0
      %v759 = vadd.f32 0.0, %v758
      %v760 = vpop.f32.mrf.mxu0
      %761 = vmatprep.mubr.f32.mxu0 0.0
      %762 = vmatmul.mubr.f32.gmra.mxu0 %v512
      %v763 = vpop.f32.mrf.mxu0
      %v764 = vadd.f32 0.0, %v763
      %v765 = vpop.f32.mrf.mxu0
      %766 = vmatprep.mubr.f32.mxu0 0.0
      %767 = vmatmul.mubr.f32.gmra.mxu0 %v514
      %v768 = vpop.f32.mrf.mxu0
      %v769 = vadd.f32 0.0, %v768
      %v770 = vpop.f32.mrf.mxu0
      %771 = vmatprep.mubr.f32.mxu0 0.0
      %772 = vmatmul.mubr.f32.gmra.mxu0 %v516
      %v773 = vpop.f32.mrf.mxu0
      %v774 = vadd.f32 0.0, %v773
      %v775 = vpop.f32.mrf.mxu0
      %776 = vdwg.mxu0
      %v777 = vsel %vm441, %v279, 0
      %v779 = vsel %vm441, %v280, 0
      %v781 = vsel %vm441, %v281, 0
      %v783 = vsel %vm441, %v282, 0
      %v785 = vsel %vm441, %v283, 0
      %v787 = vsel %vm441, %v284, 0
      %v789 = vsel %vm441, %v285, 0
      %v791 = vsel %vm441, %v286, 0
      %v793 = vsel %vm441, %v287, 0
      %v795 = vsel %vm441, %v288, 0
      %v797 = vsel %vm441, %v289, 0
      %v799 = vsel %vm441, %v290, 0
      %v801 = vsel %vm441, %v291, 0
      %v803 = vsel %vm441, %v292, 0
      %v805 = vsel %vm441, %v293, 0
      %v807 = vsel %vm441, %v294, 0
      %v809 = vsel %vm441, %v295, 0
      %v811 = vsel %vm441, %v296, 0
      %v813 = vsel %vm441, %v297, 0
      %v815 = vsel %vm441, %v298, 0
      %v817 = vsel %vm441, %v299, 0
      %v819 = vsel %vm441, %v300, 0
      %v821 = vsel %vm441, %v301, 0
      %v823 = vsel %vm441, %v302, 0
      %v825 = vsel %vm441, %v303, 0
      %v827 = vsel %vm441, %v304, 0
      %v829 = vsel %vm441, %v305, 0
      %v831 = vsel %vm441, %v306, 0
      %v833 = vsel %vm441, %v307, 0
      %v835 = vsel %vm441, %v308, 0
      %v837 = vsel %vm441, %v309, 0
      %v839 = vsel %vm441, %v310, 0
      %v841 = vsel %vm441, %v311, 0
      %v843 = vsel %vm441, %v312, 0
      %v845 = vsel %vm441, %v313, 0
      %v847 = vsel %vm441, %v314, 0
      %v849 = vsel %vm441, %v315, 0
      %v851 = vsel %vm441, %v316, 0
      %v854 = vsel %vm518, %v322, 0
      %856 = vmatprep.subr.mxu0 0.0
      %857 = vmatpush1.msra.mxu0 0.0
      %858 = vmatprep.subr.mxu0 0.0
      %859 = vmatpush1.msra.mxu0 0.0
      %860 = vmatprep.subr.mxu0 0.0
      %861 = vmatpush1.msra.mxu0 0.0
      %862 = vmatprep.subr.mxu0 0.0
      %863 = vmatpush1.msra.mxu0 0.0
      %864 = vmatprep.subr.mxu0 0.0
      %865 = vmatpush1.msra.mxu0 0.0
      %866 = vmatprep.subr.mxu0 0.0
      %867 = vmatpush1.msra.mxu0 0.0
      %868 = vmatprep.subr.mxu0 0.0
      %869 = vmatpush1.msra.mxu0 0.0
      %870 = vmatprep.subr.mxu0 0.0
      %871 = vmatpush1.msra.mxu0 0.0
      %872 = vmatprep.subr.mxu0 0.0
      %873 = vmatpush1.msra.mxu0 0.0
      %874 = vmatprep.subr.mxu0 0.0
      %875 = vmatpush1.msra.mxu0 0.0
      %876 = vmatprep.subr.mxu0 0.0
      %877 = vmatpush1.msra.mxu0 0.0
      %878 = vmatprep.subr.mxu0 0.0
      %879 = vmatpush1.msra.mxu0 0.0
      %880 = vmatprep.subr.mxu0 0.0
      %881 = vmatpush1.msra.mxu0 0.0
      %882 = vmatprep.subr.mxu0 0.0
      %883 = vmatpush1.msra.mxu0 0.0
      %884 = vmatprep.subr.mxu0 0.0
      %885 = vmatpush1.msra.mxu0 0.0
      %886 = vmatprep.subr.mxu0 0.0
      %887 = vmatpush1.msra.mxu0 %v854
      %888 = vmatprep.subr.mxu0 0.0
      %889 = vmatpush2.msra.mxu0 0.0
      %890 = vmatprep.subr.mxu0 0.0
      %891 = vmatpush2.msra.mxu0 0.0
      %892 = vmatprep.subr.mxu0 0.0
      %893 = vmatpush2.msra.mxu0 0.0
      %894 = vmatprep.subr.mxu0 0.0
      %895 = vmatpush2.msra.mxu0 0.0
      %896 = vmatprep.subr.mxu0 0.0
      %897 = vmatpush2.msra.mxu0 0.0
      %898 = vmatprep.subr.mxu0 0.0
      %899 = vmatpush2.msra.mxu0 0.0
      %900 = vmatprep.subr.mxu0 0.0
      %901 = vmatpush2.msra.mxu0 0.0
      %902 = vmatprep.subr.mxu0 0.0
      %903 = vmatpush2.msra.mxu0 0.0
      %904 = vmatprep.subr.mxu0 0.0
      %905 = vmatpush2.msra.mxu0 0.0
      %906 = vmatprep.subr.mxu0 0.0
      %907 = vmatpush2.msra.mxu0 0.0
      %908 = vmatprep.subr.mxu0 0.0
      %909 = vmatpush2.msra.mxu0 0.0
      %910 = vmatprep.subr.mxu0 0.0
      %911 = vmatpush2.msra.mxu0 0.0
      %912 = vmatprep.subr.mxu0 0.0
      %913 = vmatpush2.msra.mxu0 0.0
      %914 = vmatprep.subr.mxu0 0.0
      %915 = vmatpush2.msra.mxu0 0.0
      %916 = vmatprep.subr.mxu0 0.0
      %917 = vmatpush2.msra.mxu0 0.0
      %918 = vmatprep.subr.mxu0 0.0
      %919 = vmatpush2.msra.mxu0 0.0
      %920 = vmatprep.mubr.f32.mxu0 0.0
      %921 = vmatmul.mubr.f32.gmra.mxu0 %v777
      %v922 = vpop.f32.mrf.mxu0
      %v923 = vadd.f32 %v589, %v922
      %v924 = vpop.f32.mrf.mxu0
      %925 = vmatprep.mubr.f32.mxu0 0.0
      %926 = vmatmul.mubr.f32.gmra.mxu0 %v779
      %v927 = vpop.f32.mrf.mxu0
      %v928 = vadd.f32 %v594, %v927
      %v929 = vpop.f32.mrf.mxu0
      %930 = vmatprep.mubr.f32.mxu0 0.0
      %931 = vmatmul.mubr.f32.gmra.mxu0 %v781
      %v932 = vpop.f32.mrf.mxu0
      %v933 = vadd.f32 %v599, %v932
      %v934 = vpop.f32.mrf.mxu0
      %935 = vmatprep.mubr.f32.mxu0 0.0
      %936 = vmatmul.mubr.f32.gmra.mxu0 %v783
      %v937 = vpop.f32.mrf.mxu0
      %v938 = vadd.f32 %v604, %v937
      %v939 = vpop.f32.mrf.mxu0
      %940 = vmatprep.mubr.f32.mxu0 0.0
      %941 = vmatmul.mubr.f32.gmra.mxu0 %v785
      %v942 = vpop.f32.mrf.mxu0
      %v943 = vadd.f32 %v609, %v942
      %v944 = vpop.f32.mrf.mxu0
      %945 = vmatprep.mubr.f32.mxu0 0.0
      %946 = vmatmul.mubr.f32.gmra.mxu0 %v787
      %v947 = vpop.f32.mrf.mxu0
      %v948 = vadd.f32 %v614, %v947
      %v949 = vpop.f32.mrf.mxu0
      %950 = vmatprep.mubr.f32.mxu0 0.0
      %951 = vmatmul.mubr.f32.gmra.mxu0 %v789
      %v952 = vpop.f32.mrf.mxu0
      %v953 = vadd.f32 %v619, %v952
      %v954 = vpop.f32.mrf.mxu0
      %955 = vmatprep.mubr.f32.mxu0 0.0
      %956 = vmatmul.mubr.f32.gmra.mxu0 %v791
      %v957 = vpop.f32.mrf.mxu0
      %v958 = vadd.f32 %v624, %v957
      %v959 = vpop.f32.mrf.mxu0
      %960 = vmatprep.mubr.f32.mxu0 0.0
      %961 = vmatmul.mubr.f32.gmra.mxu0 %v793
      %v962 = vpop.f32.mrf.mxu0
      %v963 = vadd.f32 %v629, %v962
      %v964 = vpop.f32.mrf.mxu0
      %965 = vmatprep.mubr.f32.mxu0 0.0
      %966 = vmatmul.mubr.f32.gmra.mxu0 %v795
      %v967 = vpop.f32.mrf.mxu0
      %v968 = vadd.f32 %v634, %v967
      %v969 = vpop.f32.mrf.mxu0
      %970 = vmatprep.mubr.f32.mxu0 0.0
      %971 = vmatmul.mubr.f32.gmra.mxu0 %v797
      %v972 = vpop.f32.mrf.mxu0
      %v973 = vadd.f32 %v639, %v972
      %v974 = vpop.f32.mrf.mxu0
      %975 = vmatprep.mubr.f32.mxu0 0.0
      %976 = vmatmul.mubr.f32.gmra.mxu0 %v799
      %v977 = vpop.f32.mrf.mxu0
      %v978 = vadd.f32 %v644, %v977
      %v979 = vpop.f32.mrf.mxu0
      %980 = vmatprep.mubr.f32.mxu0 0.0
      %981 = vmatmul.mubr.f32.gmra.mxu0 %v801
      %v982 = vpop.f32.mrf.mxu0
      %v983 = vadd.f32 %v649, %v982
      %v984 = vpop.f32.mrf.mxu0
      %985 = vmatprep.mubr.f32.mxu0 0.0
      %986 = vmatmul.mubr.f32.gmra.mxu0 %v803
      %v987 = vpop.f32.mrf.mxu0
      %v988 = vadd.f32 %v654, %v987
      %v989 = vpop.f32.mrf.mxu0
      %990 = vmatprep.mubr.f32.mxu0 0.0
      %991 = vmatmul.mubr.f32.gmra.mxu0 %v805
      %v992 = vpop.f32.mrf.mxu0
      %v993 = vadd.f32 %v659, %v992
      %v994 = vpop.f32.mrf.mxu0
      %995 = vmatprep.mubr.f32.mxu0 0.0
      %996 = vmatmul.mubr.f32.gmra.mxu0 %v807
      %v997 = vpop.f32.mrf.mxu0
      %v998 = vadd.f32 %v664, %v997
      %v999 = vpop.f32.mrf.mxu0
      %1000 = vmatprep.mubr.f32.mxu0 0.0
      %1001 = vmatmul.mubr.f32.gmra.mxu0 %v809
      %v1002 = vpop.f32.mrf.mxu0
      %v1003 = vadd.f32 %v669, %v1002
      %v1004 = vpop.f32.mrf.mxu0
      %1005 = vmatprep.mubr.f32.mxu0 0.0
      %1006 = vmatmul.mubr.f32.gmra.mxu0 %v811
      %v1007 = vpop.f32.mrf.mxu0
      %v1008 = vadd.f32 %v674, %v1007
      %v1009 = vpop.f32.mrf.mxu0
      %1010 = vmatprep.mubr.f32.mxu0 0.0
      %1011 = vmatmul.mubr.f32.gmra.mxu0 %v813
      %v1012 = vpop.f32.mrf.mxu0
      %v1013 = vadd.f32 %v679, %v1012
      %v1014 = vpop.f32.mrf.mxu0
      %1015 = vmatprep.mubr.f32.mxu0 0.0
      %1016 = vmatmul.mubr.f32.gmra.mxu0 %v815
      %v1017 = vpop.f32.mrf.mxu0
      %v1018 = vadd.f32 %v684, %v1017
      %v1019 = vpop.f32.mrf.mxu0
      %1020 = vmatprep.mubr.f32.mxu0 0.0
      %1021 = vmatmul.mubr.f32.gmra.mxu0 %v817
      %v1022 = vpop.f32.mrf.mxu0
      %v1023 = vadd.f32 %v689, %v1022
      %v1024 = vpop.f32.mrf.mxu0
      %1025 = vmatprep.mubr.f32.mxu0 0.0
      %1026 = vmatmul.mubr.f32.gmra.mxu0 %v819
      %v1027 = vpop.f32.mrf.mxu0
      %v1028 = vadd.f32 %v694, %v1027
      %v1029 = vpop.f32.mrf.mxu0
      %1030 = vmatprep.mubr.f32.mxu0 0.0
      %1031 = vmatmul.mubr.f32.gmra.mxu0 %v821
      %v1032 = vpop.f32.mrf.mxu0
      %v1033 = vadd.f32 %v699, %v1032
      %v1034 = vpop.f32.mrf.mxu0
      %1035 = vmatprep.mubr.f32.mxu0 0.0
      %1036 = vmatmul.mubr.f32.gmra.mxu0 %v823
      %v1037 = vpop.f32.mrf.mxu0
      %v1038 = vadd.f32 %v704, %v1037
      %v1039 = vpop.f32.mrf.mxu0
      %1040 = vmatprep.mubr.f32.mxu0 0.0
      %1041 = vmatmul.mubr.f32.gmra.mxu0 %v825
      %v1042 = vpop.f32.mrf.mxu0
      %v1043 = vadd.f32 %v709, %v1042
      %v1044 = vpop.f32.mrf.mxu0
      %1045 = vmatprep.mubr.f32.mxu0 0.0
      %1046 = vmatmul.mubr.f32.gmra.mxu0 %v827
      %v1047 = vpop.f32.mrf.mxu0
      %v1048 = vadd.f32 %v714, %v1047
      %v1049 = vpop.f32.mrf.mxu0
      %1050 = vmatprep.mubr.f32.mxu0 0.0
      %1051 = vmatmul.mubr.f32.gmra.mxu0 %v829
      %v1052 = vpop.f32.mrf.mxu0
      %v1053 = vadd.f32 %v719, %v1052
      %v1054 = vpop.f32.mrf.mxu0
      %1055 = vmatprep.mubr.f32.mxu0 0.0
      %1056 = vmatmul.mubr.f32.gmra.mxu0 %v831
      %v1057 = vpop.f32.mrf.mxu0
      %v1058 = vadd.f32 %v724, %v1057
      %v1059 = vpop.f32.mrf.mxu0
      %1060 = vmatprep.mubr.f32.mxu0 0.0
      %1061 = vmatmul.mubr.f32.gmra.mxu0 %v833
      %v1062 = vpop.f32.mrf.mxu0
      %v1063 = vadd.f32 %v729, %v1062
      %v1064 = vpop.f32.mrf.mxu0
      %1065 = vmatprep.mubr.f32.mxu0 0.0
      %1066 = vmatmul.mubr.f32.gmra.mxu0 %v835
      %v1067 = vpop.f32.mrf.mxu0
      %v1068 = vadd.f32 %v734, %v1067
      %v1069 = vpop.f32.mrf.mxu0
      %1070 = vmatprep.mubr.f32.mxu0 0.0
      %1071 = vmatmul.mubr.f32.gmra.mxu0 %v837
      %v1072 = vpop.f32.mrf.mxu0
      %v1073 = vadd.f32 %v739, %v1072
      %v1074 = vpop.f32.mrf.mxu0
      %1075 = vmatprep.mubr.f32.mxu0 0.0
      %1076 = vmatmul.mubr.f32.gmra.mxu0 %v839
      %v1077 = vpop.f32.mrf.mxu0
      %v1078 = vadd.f32 %v744, %v1077
      %v1079 = vpop.f32.mrf.mxu0
      %1080 = vmatprep.mubr.f32.mxu0 0.0
      %1081 = vmatmul.mubr.f32.gmra.mxu0 %v841
      %v1082 = vpop.f32.mrf.mxu0
      %v1083 = vadd.f32 %v749, %v1082
      %v1084 = vpop.f32.mrf.mxu0
      %1085 = vmatprep.mubr.f32.mxu0 0.0
      %1086 = vmatmul.mubr.f32.gmra.mxu0 %v843
      %v1087 = vpop.f32.mrf.mxu0
      %v1088 = vadd.f32 %v754, %v1087
      %v1089 = vpop.f32.mrf.mxu0
      %1090 = vmatprep.mubr.f32.mxu0 0.0
      %1091 = vmatmul.mubr.f32.gmra.mxu0 %v845
      %v1092 = vpop.f32.mrf.mxu0
      %v1093 = vadd.f32 %v759, %v1092
      %v1094 = vpop.f32.mrf.mxu0
      %1095 = vmatprep.mubr.f32.mxu0 0.0
      %1096 = vmatmul.mubr.f32.gmra.mxu0 %v847
      %v1097 = vpop.f32.mrf.mxu0
      %v1098 = vadd.f32 %v764, %v1097
      %v1099 = vpop.f32.mrf.mxu0
      %1100 = vmatprep.mubr.f32.mxu0 0.0
      %1101 = vmatmul.mubr.f32.gmra.mxu0 %v849
      %v1102 = vpop.f32.mrf.mxu0
      %v1103 = vadd.f32 %v769, %v1102
      %v1104 = vpop.f32.mrf.mxu0
      %1105 = vmatprep.mubr.f32.mxu0 0.0
      %1106 = vmatmul.mubr.f32.gmra.mxu0 %v851
      %v1107 = vpop.f32.mrf.mxu0
      %v1108 = vadd.f32 %v774, %v1107
      %v1109 = vpop.f32.mrf.mxu0
      %1110 = vdwg.mxu0
      %v1111 = vld [vmem:[%s1 + $0x8] sm:$0xf]
      %vm1112 = vcmask 1045504
      %v1113 = vrot.slane %v279, 2
      %v1114 = vrot.slane %v280, 2
      %v1115 = vsel %vm1112, %v1113, %v1114
      %v1116 = vrot.slane %v281, 2
      %v1117 = vsel %vm1112, %v1114, %v1116
      %v1118 = vrot.slane %v282, 2
      %v1119 = vsel %vm1112, %v1116, %v1118
      %v1120 = vrot.slane %v283, 2
      %v1121 = vsel %vm1112, %v1118, %v1120
      %v1122 = vrot.slane %v284, 2
      %v1123 = vsel %vm1112, %v1120, %v1122
      %v1124 = vrot.slane %v285, 2
      %v1125 = vsel %vm1112, %v1122, %v1124
      %v1126 = vrot.slane %v286, 2
      %v1127 = vsel %vm1112, %v1124, %v1126
      %v1128 = vrot.slane %v287, 2
      %v1129 = vsel %vm1112, %v1126, %v1128
      %v1130 = vrot.slane %v288, 2
      %v1131 = vsel %vm1112, %v1128, %v1130
      %v1132 = vrot.slane %v289, 2
      %v1133 = vsel %vm1112, %v1130, %v1132
      %v1134 = vrot.slane %v290, 2
      %v1135 = vsel %vm1112, %v1132, %v1134
      %v1136 = vrot.slane %v291, 2
      %v1137 = vsel %vm1112, %v1134, %v1136
      %v1138 = vrot.slane %v292, 2
      %v1139 = vsel %vm1112, %v1136, %v1138
      %v1140 = vrot.slane %v293, 2
      %v1141 = vsel %vm1112, %v1138, %v1140
      %v1142 = vrot.slane %v294, 2
      %v1143 = vsel %vm1112, %v1140, %v1142
      %v1144 = vrot.slane %v295, 2
      %v1145 = vsel %vm1112, %v1142, %v1144
      %v1146 = vrot.slane %v296, 2
      %v1147 = vsel %vm1112, %v1144, %v1146
      %v1148 = vrot.slane %v297, 2
      %v1149 = vsel %vm1112, %v1146, %v1148
      %v1150 = vrot.slane %v298, 2
      %v1151 = vsel %vm1112, %v1148, %v1150
      %v1152 = vrot.slane %v299, 2
      %v1153 = vsel %vm1112, %v1150, %v1152
      %v1154 = vrot.slane %v300, 2
      %v1155 = vsel %vm1112, %v1152, %v1154
      %v1156 = vrot.slane %v301, 2
      %v1157 = vsel %vm1112, %v1154, %v1156
      %v1158 = vrot.slane %v302, 2
      %v1159 = vsel %vm1112, %v1156, %v1158
      %v1160 = vrot.slane %v303, 2
      %v1161 = vsel %vm1112, %v1158, %v1160
      %v1162 = vrot.slane %v304, 2
      %v1163 = vsel %vm1112, %v1160, %v1162
      %v1164 = vrot.slane %v305, 2
      %v1165 = vsel %vm1112, %v1162, %v1164
      %v1166 = vrot.slane %v306, 2
      %v1167 = vsel %vm1112, %v1164, %v1166
      %v1168 = vrot.slane %v307, 2
      %v1169 = vsel %vm1112, %v1166, %v1168
      %v1170 = vrot.slane %v308, 2
      %v1171 = vsel %vm1112, %v1168, %v1170
      %v1172 = vrot.slane %v309, 2
      %v1173 = vsel %vm1112, %v1170, %v1172
      %v1174 = vrot.slane %v310, 2
      %v1175 = vsel %vm1112, %v1172, %v1174
      %v1176 = vrot.slane %v311, 2
      %v1177 = vsel %vm1112, %v1174, %v1176
      %v1178 = vrot.slane %v312, 2
      %v1179 = vsel %vm1112, %v1176, %v1178
      %v1180 = vrot.slane %v313, 2
      %v1181 = vsel %vm1112, %v1178, %v1180
      %v1182 = vrot.slane %v314, 2
      %v1183 = vsel %vm1112, %v1180, %v1182
      %v1184 = vrot.slane %v315, 2
      %v1185 = vsel %vm1112, %v1182, %v1184
      %v1186 = vrot.slane %v316, 2
      %v1187 = vsel %vm1112, %v1184, %v1186
      %v1188 = vrot.slane %v317, 2
      %v1189 = vsel %vm1112, %v1186, %v1188
      %v1190 = vsel %vm441, %v1115, 0
      %v1192 = vsel %vm441, %v1117, 0
      %v1194 = vsel %vm441, %v1119, 0
      %v1196 = vsel %vm441, %v1121, 0
      %v1198 = vsel %vm441, %v1123, 0
      %v1200 = vsel %vm441, %v1125, 0
      %v1202 = vsel %vm441, %v1127, 0
      %v1204 = vsel %vm441, %v1129, 0
      %v1206 = vsel %vm441, %v1131, 0
      %v1208 = vsel %vm441, %v1133, 0
      %v1210 = vsel %vm441, %v1135, 0
      %v1212 = vsel %vm441, %v1137, 0
      %v1214 = vsel %vm441, %v1139, 0
      %v1216 = vsel %vm441, %v1141, 0
      %v1218 = vsel %vm441, %v1143, 0
      %v1220 = vsel %vm441, %v1145, 0
      %v1222 = vsel %vm441, %v1147, 0
      %v1224 = vsel %vm441, %v1149, 0
      %v1226 = vsel %vm441, %v1151, 0
      %v1228 = vsel %vm441, %v1153, 0
      %v1230 = vsel %vm441, %v1155, 0
      %v1232 = vsel %vm441, %v1157, 0
      %v1234 = vsel %vm441, %v1159, 0
      %v1236 = vsel %vm441, %v1161, 0
      %v1238 = vsel %vm441, %v1163, 0
      %v1240 = vsel %vm441, %v1165, 0
      %v1242 = vsel %vm441, %v1167, 0
      %v1244 = vsel %vm441, %v1169, 0
      %v1246 = vsel %vm441, %v1171, 0
      %v1248 = vsel %vm441, %v1173, 0
      %v1250 = vsel %vm441, %v1175, 0
      %v1252 = vsel %vm441, %v1177, 0
      %v1254 = vsel %vm441, %v1179, 0
      %v1256 = vsel %vm441, %v1181, 0
      %v1258 = vsel %vm441, %v1183, 0
      %v1260 = vsel %vm441, %v1185, 0
      %v1262 = vsel %vm441, %v1187, 0
      %v1264 = vsel %vm441, %v1189, 0
      %v1267 = vsel %vm518, %v1111, 0
      %1269 = vmatprep.subr.mxu0 0.0
      %1270 = vmatpush1.msra.mxu0 0.0
      %1271 = vmatprep.subr.mxu0 0.0
      %1272 = vmatpush1.msra.mxu0 0.0
      %1273 = vmatprep.subr.mxu0 0.0
      %1274 = vmatpush1.msra.mxu0 0.0
      %1275 = vmatprep.subr.mxu0 0.0
      %1276 = vmatpush1.msra.mxu0 0.0
      %1277 = vmatprep.subr.mxu0 0.0
      %1278 = vmatpush1.msra.mxu0 0.0
      %1279 = vmatprep.subr.mxu0 0.0
      %1280 = vmatpush1.msra.mxu0 0.0
      %1281 = vmatprep.subr.mxu0 0.0
      %1282 = vmatpush1.msra.mxu0 0.0
      %1283 = vmatprep.subr.mxu0 0.0
      %1284 = vmatpush1.msra.mxu0 0.0
      %1285 = vmatprep.subr.mxu0 0.0
      %1286 = vmatpush1.msra.mxu0 0.0
      %1287 = vmatprep.subr.mxu0 0.0
      %1288 = vmatpush1.msra.mxu0 0.0
      %1289 = vmatprep.subr.mxu0 0.0
      %1290 = vmatpush1.msra.mxu0 0.0
      %1291 = vmatprep.subr.mxu0 0.0
      %1292 = vmatpush1.msra.mxu0 0.0
      %1293 = vmatprep.subr.mxu0 0.0
      %1294 = vmatpush1.msra.mxu0 0.0
      %1295 = vmatprep.subr.mxu0 0.0
      %1296 = vmatpush1.msra.mxu0 0.0
      %1297 = vmatprep.subr.mxu0 0.0
      %1298 = vmatpush1.msra.mxu0 0.0
      %1299 = vmatprep.subr.mxu0 0.0
      %1300 = vmatpush1.msra.mxu0 %v1267
      %1301 = vmatprep.subr.mxu0 0.0
      %1302 = vmatpush2.msra.mxu0 0.0
      %1303 = vmatprep.subr.mxu0 0.0
      %1304 = vmatpush2.msra.mxu0 0.0
      %1305 = vmatprep.subr.mxu0 0.0
      %1306 = vmatpush2.msra.mxu0 0.0
      %1307 = vmatprep.subr.mxu0 0.0
      %1308 = vmatpush2.msra.mxu0 0.0
      %1309 = vmatprep.subr.mxu0 0.0
      %1310 = vmatpush2.msra.mxu0 0.0
      %1311 = vmatprep.subr.mxu0 0.0
      %1312 = vmatpush2.msra.mxu0 0.0
      %1313 = vmatprep.subr.mxu0 0.0
      %1314 = vmatpush2.msra.mxu0 0.0
      %1315 = vmatprep.subr.mxu0 0.0
      %1316 = vmatpush2.msra.mxu0 0.0
      %1317 = vmatprep.subr.mxu0 0.0
      %1318 = vmatpush2.msra.mxu0 0.0
      %1319 = vmatprep.subr.mxu0 0.0
      %1320 = vmatpush2.msra.mxu0 0.0
      %1321 = vmatprep.subr.mxu0 0.0
      %1322 = vmatpush2.msra.mxu0 0.0
      %1323 = vmatprep.subr.mxu0 0.0
      %1324 = vmatpush2.msra.mxu0 0.0
      %1325 = vmatprep.subr.mxu0 0.0
      %1326 = vmatpush2.msra.mxu0 0.0
      %1327 = vmatprep.subr.mxu0 0.0
      %1328 = vmatpush2.msra.mxu0 0.0
      %1329 = vmatprep.subr.mxu0 0.0
      %1330 = vmatpush2.msra.mxu0 0.0
      %1331 = vmatprep.subr.mxu0 0.0
      %1332 = vmatpush2.msra.mxu0 0.0
      %1333 = vmatprep.mubr.f32.mxu0 0.0
      %1334 = vmatmul.mubr.f32.gmra.mxu0 %v1190
      %v1335 = vpop.f32.mrf.mxu0
      %v1336 = vadd.f32 0.0, %v1335
      %v1337 = vpop.f32.mrf.mxu0
      %1338 = vmatprep.mubr.f32.mxu0 0.0
      %1339 = vmatmul.mubr.f32.gmra.mxu0 %v1192
      %v1340 = vpop.f32.mrf.mxu0
      %v1341 = vadd.f32 0.0, %v1340
      %v1342 = vpop.f32.mrf.mxu0
      %1343 = vmatprep.mubr.f32.mxu0 0.0
      %1344 = vmatmul.mubr.f32.gmra.mxu0 %v1194
      %v1345 = vpop.f32.mrf.mxu0
      %v1346 = vadd.f32 0.0, %v1345
      %v1347 = vpop.f32.mrf.mxu0
      %1348 = vmatprep.mubr.f32.mxu0 0.0
      %1349 = vmatmul.mubr.f32.gmra.mxu0 %v1196
      %v1350 = vpop.f32.mrf.mxu0
      %v1351 = vadd.f32 0.0, %v1350
      %v1352 = vpop.f32.mrf.mxu0
      %1353 = vmatprep.mubr.f32.mxu0 0.0
      %1354 = vmatmul.mubr.f32.gmra.mxu0 %v1198
      %v1355 = vpop.f32.mrf.mxu0
      %v1356 = vadd.f32 0.0, %v1355
      %v1357 = vpop.f32.mrf.mxu0
      %1358 = vmatprep.mubr.f32.mxu0 0.0
      %1359 = vmatmul.mubr.f32.gmra.mxu0 %v1200
      %v1360 = vpop.f32.mrf.mxu0
      %v1361 = vadd.f32 0.0, %v1360
      %v1362 = vpop.f32.mrf.mxu0
      %1363 = vmatprep.mubr.f32.mxu0 0.0
      %1364 = vmatmul.mubr.f32.gmra.mxu0 %v1202
      %v1365 = vpop.f32.mrf.mxu0
      %v1366 = vadd.f32 0.0, %v1365
      %v1367 = vpop.f32.mrf.mxu0
      %1368 = vmatprep.mubr.f32.mxu0 0.0
      %1369 = vmatmul.mubr.f32.gmra.mxu0 %v1204
      %v1370 = vpop.f32.mrf.mxu0
      %v1371 = vadd.f32 0.0, %v1370
      %v1372 = vpop.f32.mrf.mxu0
      %1373 = vmatprep.mubr.f32.mxu0 0.0
      %1374 = vmatmul.mubr.f32.gmra.mxu0 %v1206
      %v1375 = vpop.f32.mrf.mxu0
      %v1376 = vadd.f32 0.0, %v1375
      %v1377 = vpop.f32.mrf.mxu0
      %1378 = vmatprep.mubr.f32.mxu0 0.0
      %1379 = vmatmul.mubr.f32.gmra.mxu0 %v1208
      %v1380 = vpop.f32.mrf.mxu0
      %v1381 = vadd.f32 0.0, %v1380
      %v1382 = vpop.f32.mrf.mxu0
      %1383 = vmatprep.mubr.f32.mxu0 0.0
      %1384 = vmatmul.mubr.f32.gmra.mxu0 %v1210
      %v1385 = vpop.f32.mrf.mxu0
      %v1386 = vadd.f32 0.0, %v1385
      %v1387 = vpop.f32.mrf.mxu0
      %1388 = vmatprep.mubr.f32.mxu0 0.0
      %1389 = vmatmul.mubr.f32.gmra.mxu0 %v1212
      %v1390 = vpop.f32.mrf.mxu0
      %v1391 = vadd.f32 0.0, %v1390
      %v1392 = vpop.f32.mrf.mxu0
      %1393 = vmatprep.mubr.f32.mxu0 0.0
      %1394 = vmatmul.mubr.f32.gmra.mxu0 %v1214
      %v1395 = vpop.f32.mrf.mxu0
      %v1396 = vadd.f32 0.0, %v1395
      %v1397 = vpop.f32.mrf.mxu0
      %1398 = vmatprep.mubr.f32.mxu0 0.0
      %1399 = vmatmul.mubr.f32.gmra.mxu0 %v1216
      %v1400 = vpop.f32.mrf.mxu0
      %v1401 = vadd.f32 0.0, %v1400
      %v1402 = vpop.f32.mrf.mxu0
      %1403 = vmatprep.mubr.f32.mxu0 0.0
      %1404 = vmatmul.mubr.f32.gmra.mxu0 %v1218
      %v1405 = vpop.f32.mrf.mxu0
      %v1406 = vadd.f32 0.0, %v1405
      %v1407 = vpop.f32.mrf.mxu0
      %1408 = vmatprep.mubr.f32.mxu0 0.0
      %1409 = vmatmul.mubr.f32.gmra.mxu0 %v1220
      %v1410 = vpop.f32.mrf.mxu0
      %v1411 = vadd.f32 0.0, %v1410
      %v1412 = vpop.f32.mrf.mxu0
      %1413 = vmatprep.mubr.f32.mxu0 0.0
      %1414 = vmatmul.mubr.f32.gmra.mxu0 %v1222
      %v1415 = vpop.f32.mrf.mxu0
      %v1416 = vadd.f32 0.0, %v1415
      %v1417 = vpop.f32.mrf.mxu0
      %1418 = vmatprep.mubr.f32.mxu0 0.0
      %1419 = vmatmul.mubr.f32.gmra.mxu0 %v1224
      %v1420 = vpop.f32.mrf.mxu0
      %v1421 = vadd.f32 0.0, %v1420
      %v1422 = vpop.f32.mrf.mxu0
      %1423 = vmatprep.mubr.f32.mxu0 0.0
      %1424 = vmatmul.mubr.f32.gmra.mxu0 %v1226
      %v1425 = vpop.f32.mrf.mxu0
      %v1426 = vadd.f32 0.0, %v1425
      %v1427 = vpop.f32.mrf.mxu0
      %1428 = vmatprep.mubr.f32.mxu0 0.0
      %1429 = vmatmul.mubr.f32.gmra.mxu0 %v1228
      %v1430 = vpop.f32.mrf.mxu0
      %v1431 = vadd.f32 0.0, %v1430
      %v1432 = vpop.f32.mrf.mxu0
      %1433 = vmatprep.mubr.f32.mxu0 0.0
      %1434 = vmatmul.mubr.f32.gmra.mxu0 %v1230
      %v1435 = vpop.f32.mrf.mxu0
      %v1436 = vadd.f32 0.0, %v1435
      %v1437 = vpop.f32.mrf.mxu0
      %1438 = vmatprep.mubr.f32.mxu0 0.0
      %1439 = vmatmul.mubr.f32.gmra.mxu0 %v1232
      %v1440 = vpop.f32.mrf.mxu0
      %v1441 = vadd.f32 0.0, %v1440
      %v1442 = vpop.f32.mrf.mxu0
      %1443 = vmatprep.mubr.f32.mxu0 0.0
      %1444 = vmatmul.mubr.f32.gmra.mxu0 %v1234
      %v1445 = vpop.f32.mrf.mxu0
      %v1446 = vadd.f32 0.0, %v1445
      %v1447 = vpop.f32.mrf.mxu0
      %1448 = vmatprep.mubr.f32.mxu0 0.0
      %1449 = vmatmul.mubr.f32.gmra.mxu0 %v1236
      %v1450 = vpop.f32.mrf.mxu0
      %v1451 = vadd.f32 0.0, %v1450
      %v1452 = vpop.f32.mrf.mxu0
      %1453 = vmatprep.mubr.f32.mxu0 0.0
      %1454 = vmatmul.mubr.f32.gmra.mxu0 %v1238
      %v1455 = vpop.f32.mrf.mxu0
      %v1456 = vadd.f32 0.0, %v1455
      %v1457 = vpop.f32.mrf.mxu0
      %1458 = vmatprep.mubr.f32.mxu0 0.0
      %1459 = vmatmul.mubr.f32.gmra.mxu0 %v1240
      %v1460 = vpop.f32.mrf.mxu0
      %v1461 = vadd.f32 0.0, %v1460
      %v1462 = vpop.f32.mrf.mxu0
      %1463 = vmatprep.mubr.f32.mxu0 0.0
      %1464 = vmatmul.mubr.f32.gmra.mxu0 %v1242
      %v1465 = vpop.f32.mrf.mxu0
      %v1466 = vadd.f32 0.0, %v1465
      %v1467 = vpop.f32.mrf.mxu0
      %1468 = vmatprep.mubr.f32.mxu0 0.0
      %1469 = vmatmul.mubr.f32.gmra.mxu0 %v1244
      %v1470 = vpop.f32.mrf.mxu0
      %v1471 = vadd.f32 0.0, %v1470
      %v1472 = vpop.f32.mrf.mxu0
      %1473 = vmatprep.mubr.f32.mxu0 0.0
      %1474 = vmatmul.mubr.f32.gmra.mxu0 %v1246
      %v1475 = vpop.f32.mrf.mxu0
      %v1476 = vadd.f32 0.0, %v1475
      %v1477 = vpop.f32.mrf.mxu0
      %1478 = vmatprep.mubr.f32.mxu0 0.0
      %1479 = vmatmul.mubr.f32.gmra.mxu0 %v1248
      %v1480 = vpop.f32.mrf.mxu0
      %v1481 = vadd.f32 0.0, %v1480
      %v1482 = vpop.f32.mrf.mxu0
      %1483 = vmatprep.mubr.f32.mxu0 0.0
      %1484 = vmatmul.mubr.f32.gmra.mxu0 %v1250
      %v1485 = vpop.f32.mrf.mxu0
      %v1486 = vadd.f32 0.0, %v1485
      %v1487 = vpop.f32.mrf.mxu0
      %1488 = vmatprep.mubr.f32.mxu0 0.0
      %1489 = vmatmul.mubr.f32.gmra.mxu0 %v1252
      %v1490 = vpop.f32.mrf.mxu0
      %v1491 = vadd.f32 0.0, %v1490
      %v1492 = vpop.f32.mrf.mxu0
      %1493 = vmatprep.mubr.f32.mxu0 0.0
      %1494 = vmatmul.mubr.f32.gmra.mxu0 %v1254
      %v1495 = vpop.f32.mrf.mxu0
      %v1496 = vadd.f32 0.0, %v1495
      %v1497 = vpop.f32.mrf.mxu0
      %1498 = vmatprep.mubr.f32.mxu0 0.0
      %1499 = vmatmul.mubr.f32.gmra.mxu0 %v1256
      %v1500 = vpop.f32.mrf.mxu0
      %v1501 = vadd.f32 0.0, %v1500
      %v1502 = vpop.f32.mrf.mxu0
      %1503 = vmatprep.mubr.f32.mxu0 0.0
      %1504 = vmatmul.mubr.f32.gmra.mxu0 %v1258
      %v1505 = vpop.f32.mrf.mxu0
      %v1506 = vadd.f32 0.0, %v1505
      %v1507 = vpop.f32.mrf.mxu0
      %1508 = vmatprep.mubr.f32.mxu0 0.0
      %1509 = vmatmul.mubr.f32.gmra.mxu0 %v1260
      %v1510 = vpop.f32.mrf.mxu0
      %v1511 = vadd.f32 0.0, %v1510
      %v1512 = vpop.f32.mrf.mxu0
      %1513 = vmatprep.mubr.f32.mxu0 0.0
      %1514 = vmatmul.mubr.f32.gmra.mxu0 %v1262
      %v1515 = vpop.f32.mrf.mxu0
      %v1516 = vadd.f32 0.0, %v1515
      %v1517 = vpop.f32.mrf.mxu0
      %1518 = vmatprep.mubr.f32.mxu0 0.0
      %1519 = vmatmul.mubr.f32.gmra.mxu0 %v1264
      %v1520 = vpop.f32.mrf.mxu0
      %v1521 = vadd.f32 0.0, %v1520
      %v1522 = vpop.f32.mrf.mxu0
      %1523 = vdwg.mxu0
      %v1524 = vadd.f32 %v923, %v1336
      %v1525 = vadd.f32 %v928, %v1341
      %v1526 = vadd.f32 %v933, %v1346
      %v1527 = vadd.f32 %v938, %v1351
      %v1528 = vadd.f32 %v943, %v1356
      %v1529 = vadd.f32 %v948, %v1361
      %v1530 = vadd.f32 %v953, %v1366
      %v1531 = vadd.f32 %v958, %v1371
      %v1532 = vadd.f32 %v963, %v1376
      %v1533 = vadd.f32 %v968, %v1381
      %v1534 = vadd.f32 %v973, %v1386
      %v1535 = vadd.f32 %v978, %v1391
      %v1536 = vadd.f32 %v983, %v1396
      %v1537 = vadd.f32 %v988, %v1401
      %v1538 = vadd.f32 %v993, %v1406
      %v1539 = vadd.f32 %v998, %v1411
      %v1540 = vadd.f32 %v1003, %v1416
      %v1541 = vadd.f32 %v1008, %v1421
      %v1542 = vadd.f32 %v1013, %v1426
      %v1543 = vadd.f32 %v1018, %v1431
      %v1544 = vadd.f32 %v1023, %v1436
      %v1545 = vadd.f32 %v1028, %v1441
      %v1546 = vadd.f32 %v1033, %v1446
      %v1547 = vadd.f32 %v1038, %v1451
      %v1548 = vadd.f32 %v1043, %v1456
      %v1549 = vadd.f32 %v1048, %v1461
      %v1550 = vadd.f32 %v1053, %v1466
      %v1551 = vadd.f32 %v1058, %v1471
      %v1552 = vadd.f32 %v1063, %v1476
      %v1553 = vadd.f32 %v1068, %v1481
      %v1554 = vadd.f32 %v1073, %v1486
      %v1555 = vadd.f32 %v1078, %v1491
      %v1556 = vadd.f32 %v1083, %v1496
      %v1557 = vadd.f32 %v1088, %v1501
      %v1558 = vadd.f32 %v1093, %v1506
      %v1559 = vadd.f32 %v1098, %v1511
      %v1560 = vadd.f32 %v1103, %v1516
      %v1561 = vadd.f32 %v1108, %v1521
      %v1562 = vld [vmem:[%s1 + $0xc] sm:$0xf]
      %v1565 = vrot.slane %v318, 2
      %v1566 = vsel %vm1112, %v1188, %v1565
      %v1567 = vrot.slane %v319, 2
      %v1568 = vsel %vm1112, %v1565, %v1567
      %v1569 = vsel %vm441, %v1566, 0
      %v1571 = vsel %vm441, %v1568, 0
      %v1574 = vsel %vm518, %v1562, 0
      %1576 = vmatprep.subr.mxu0 0.0
      %1577 = vmatpush1.msra.mxu0 0.0
      %1578 = vmatprep.subr.mxu0 0.0
      %1579 = vmatpush1.msra.mxu0 0.0
      %1580 = vmatprep.subr.mxu0 0.0
      %1581 = vmatpush1.msra.mxu0 0.0
      %1582 = vmatprep.subr.mxu0 0.0
      %1583 = vmatpush1.msra.mxu0 0.0
      %1584 = vmatprep.subr.mxu0 0.0
      %1585 = vmatpush1.msra.mxu0 0.0
      %1586 = vmatprep.subr.mxu0 0.0
      %1587 = vmatpush1.msra.mxu0 0.0
      %1588 = vmatprep.subr.mxu0 0.0
      %1589 = vmatpush1.msra.mxu0 0.0
      %1590 = vmatprep.subr.mxu0 0.0
      %1591 = vmatpush1.msra.mxu0 0.0
      %1592 = vmatprep.subr.mxu0 0.0
      %1593 = vmatpush1.msra.mxu0 0.0
      %1594 = vmatprep.subr.mxu0 0.0
      %1595 = vmatpush1.msra.mxu0 0.0
      %1596 = vmatprep.subr.mxu0 0.0
      %1597 = vmatpush1.msra.mxu0 0.0
      %1598 = vmatprep.subr.mxu0 0.0
      %1599 = vmatpush1.msra.mxu0 0.0
      %1600 = vmatprep.subr.mxu0 0.0
      %1601 = vmatpush1.msra.mxu0 0.0
      %1602 = vmatprep.subr.mxu0 0.0
      %1603 = vmatpush1.msra.mxu0 0.0
      %1604 = vmatprep.subr.mxu0 0.0
      %1605 = vmatpush1.msra.mxu0 0.0
      %1606 = vmatprep.subr.mxu0 0.0
      %1607 = vmatpush1.msra.mxu0 %v1574
      %1608 = vmatprep.subr.mxu0 0.0
      %1609 = vmatpush2.msra.mxu0 0.0
      %1610 = vmatprep.subr.mxu0 0.0
      %1611 = vmatpush2.msra.mxu0 0.0
      %1612 = vmatprep.subr.mxu0 0.0
      %1613 = vmatpush2.msra.mxu0 0.0
      %1614 = vmatprep.subr.mxu0 0.0
      %1615 = vmatpush2.msra.mxu0 0.0
      %1616 = vmatprep.subr.mxu0 0.0
      %1617 = vmatpush2.msra.mxu0 0.0
      %1618 = vmatprep.subr.mxu0 0.0
      %1619 = vmatpush2.msra.mxu0 0.0
      %1620 = vmatprep.subr.mxu0 0.0
      %1621 = vmatpush2.msra.mxu0 0.0
      %1622 = vmatprep.subr.mxu0 0.0
      %1623 = vmatpush2.msra.mxu0 0.0
      %1624 = vmatprep.subr.mxu0 0.0
      %1625 = vmatpush2.msra.mxu0 0.0
      %1626 = vmatprep.subr.mxu0 0.0
      %1627 = vmatpush2.msra.mxu0 0.0
      %1628 = vmatprep.subr.mxu0 0.0
      %1629 = vmatpush2.msra.mxu0 0.0
      %1630 = vmatprep.subr.mxu0 0.0
      %1631 = vmatpush2.msra.mxu0 0.0
      %1632 = vmatprep.subr.mxu0 0.0
      %1633 = vmatpush2.msra.mxu0 0.0
      %1634 = vmatprep.subr.mxu0 0.0
      %1635 = vmatpush2.msra.mxu0 0.0
      %1636 = vmatprep.subr.mxu0 0.0
      %1637 = vmatpush2.msra.mxu0 0.0
      %1638 = vmatprep.subr.mxu0 0.0
      %1639 = vmatpush2.msra.mxu0 0.0
      %1640 = vmatprep.mubr.f32.mxu0 0.0
      %1641 = vmatmul.mubr.f32.gmra.mxu0 %v1194
      %v1642 = vpop.f32.mrf.mxu0
      %v1643 = vadd.f32 0.0, %v1642
      %v1644 = vpop.f32.mrf.mxu0
      %1645 = vmatprep.mubr.f32.mxu0 0.0
      %1646 = vmatmul.mubr.f32.gmra.mxu0 %v1196
      %v1647 = vpop.f32.mrf.mxu0
      %v1648 = vadd.f32 0.0, %v1647
      %v1649 = vpop.f32.mrf.mxu0
      %1650 = vmatprep.mubr.f32.mxu0 0.0
      %1651 = vmatmul.mubr.f32.gmra.mxu0 %v1198
      %v1652 = vpop.f32.mrf.mxu0
      %v1653 = vadd.f32 0.0, %v1652
      %v1654 = vpop.f32.mrf.mxu0
      %1655 = vmatprep.mubr.f32.mxu0 0.0
      %1656 = vmatmul.mubr.f32.gmra.mxu0 %v1200
      %v1657 = vpop.f32.mrf.mxu0
      %v1658 = vadd.f32 0.0, %v1657
      %v1659 = vpop.f32.mrf.mxu0
      %1660 = vmatprep.mubr.f32.mxu0 0.0
      %1661 = vmatmul.mubr.f32.gmra.mxu0 %v1202
      %v1662 = vpop.f32.mrf.mxu0
      %v1663 = vadd.f32 0.0, %v1662
      %v1664 = vpop.f32.mrf.mxu0
      %1665 = vmatprep.mubr.f32.mxu0 0.0
      %1666 = vmatmul.mubr.f32.gmra.mxu0 %v1204
      %v1667 = vpop.f32.mrf.mxu0
      %v1668 = vadd.f32 0.0, %v1667
      %v1669 = vpop.f32.mrf.mxu0
      %1670 = vmatprep.mubr.f32.mxu0 0.0
      %1671 = vmatmul.mubr.f32.gmra.mxu0 %v1206
      %v1672 = vpop.f32.mrf.mxu0
      %v1673 = vadd.f32 0.0, %v1672
      %v1674 = vpop.f32.mrf.mxu0
      %1675 = vmatprep.mubr.f32.mxu0 0.0
      %1676 = vmatmul.mubr.f32.gmra.mxu0 %v1208
      %v1677 = vpop.f32.mrf.mxu0
      %v1678 = vadd.f32 0.0, %v1677
      %v1679 = vpop.f32.mrf.mxu0
      %1680 = vmatprep.mubr.f32.mxu0 0.0
      %1681 = vmatmul.mubr.f32.gmra.mxu0 %v1210
      %v1682 = vpop.f32.mrf.mxu0
      %v1683 = vadd.f32 0.0, %v1682
      %v1684 = vpop.f32.mrf.mxu0
      %1685 = vmatprep.mubr.f32.mxu0 0.0
      %1686 = vmatmul.mubr.f32.gmra.mxu0 %v1212
      %v1687 = vpop.f32.mrf.mxu0
      %v1688 = vadd.f32 0.0, %v1687
      %v1689 = vpop.f32.mrf.mxu0
      %1690 = vmatprep.mubr.f32.mxu0 0.0
      %1691 = vmatmul.mubr.f32.gmra.mxu0 %v1214
      %v1692 = vpop.f32.mrf.mxu0
      %v1693 = vadd.f32 0.0, %v1692
      %v1694 = vpop.f32.mrf.mxu0
      %1695 = vmatprep.mubr.f32.mxu0 0.0
      %1696 = vmatmul.mubr.f32.gmra.mxu0 %v1216
      %v1697 = vpop.f32.mrf.mxu0
      %v1698 = vadd.f32 0.0, %v1697
      %v1699 = vpop.f32.mrf.mxu0
      %1700 = vmatprep.mubr.f32.mxu0 0.0
      %1701 = vmatmul.mubr.f32.gmra.mxu0 %v1218
      %v1702 = vpop.f32.mrf.mxu0
      %v1703 = vadd.f32 0.0, %v1702
      %v1704 = vpop.f32.mrf.mxu0
      %1705 = vmatprep.mubr.f32.mxu0 0.0
      %1706 = vmatmul.mubr.f32.gmra.mxu0 %v1220
      %v1707 = vpop.f32.mrf.mxu0
      %v1708 = vadd.f32 0.0, %v1707
      %v1709 = vpop.f32.mrf.mxu0
      %1710 = vmatprep.mubr.f32.mxu0 0.0
      %1711 = vmatmul.mubr.f32.gmra.mxu0 %v1222
      %v1712 = vpop.f32.mrf.mxu0
      %v1713 = vadd.f32 0.0, %v1712
      %v1714 = vpop.f32.mrf.mxu0
      %1715 = vmatprep.mubr.f32.mxu0 0.0
      %1716 = vmatmul.mubr.f32.gmra.mxu0 %v1224
      %v1717 = vpop.f32.mrf.mxu0
      %v1718 = vadd.f32 0.0, %v1717
      %v1719 = vpop.f32.mrf.mxu0
      %1720 = vmatprep.mubr.f32.mxu0 0.0
      %1721 = vmatmul.mubr.f32.gmra.mxu0 %v1226
      %v1722 = vpop.f32.mrf.mxu0
      %v1723 = vadd.f32 0.0, %v1722
      %v1724 = vpop.f32.mrf.mxu0
      %1725 = vmatprep.mubr.f32.mxu0 0.0
      %1726 = vmatmul.mubr.f32.gmra.mxu0 %v1228
      %v1727 = vpop.f32.mrf.mxu0
      %v1728 = vadd.f32 0.0, %v1727
      %v1729 = vpop.f32.mrf.mxu0
      %1730 = vmatprep.mubr.f32.mxu0 0.0
      %1731 = vmatmul.mubr.f32.gmra.mxu0 %v1230
      %v1732 = vpop.f32.mrf.mxu0
      %v1733 = vadd.f32 0.0, %v1732
      %v1734 = vpop.f32.mrf.mxu0
      %1735 = vmatprep.mubr.f32.mxu0 0.0
      %1736 = vmatmul.mubr.f32.gmra.mxu0 %v1232
      %v1737 = vpop.f32.mrf.mxu0
      %v1738 = vadd.f32 0.0, %v1737
      %v1739 = vpop.f32.mrf.mxu0
      %1740 = vmatprep.mubr.f32.mxu0 0.0
      %1741 = vmatmul.mubr.f32.gmra.mxu0 %v1234
      %v1742 = vpop.f32.mrf.mxu0
      %v1743 = vadd.f32 0.0, %v1742
      %v1744 = vpop.f32.mrf.mxu0
      %1745 = vmatprep.mubr.f32.mxu0 0.0
      %1746 = vmatmul.mubr.f32.gmra.mxu0 %v1236
      %v1747 = vpop.f32.mrf.mxu0
      %v1748 = vadd.f32 0.0, %v1747
      %v1749 = vpop.f32.mrf.mxu0
      %1750 = vmatprep.mubr.f32.mxu0 0.0
      %1751 = vmatmul.mubr.f32.gmra.mxu0 %v1238
      %v1752 = vpop.f32.mrf.mxu0
      %v1753 = vadd.f32 0.0, %v1752
      %v1754 = vpop.f32.mrf.mxu0
      %1755 = vmatprep.mubr.f32.mxu0 0.0
      %1756 = vmatmul.mubr.f32.gmra.mxu0 %v1240
      %v1757 = vpop.f32.mrf.mxu0
      %v1758 = vadd.f32 0.0, %v1757
      %v1759 = vpop.f32.mrf.mxu0
      %1760 = vmatprep.mubr.f32.mxu0 0.0
      %1761 = vmatmul.mubr.f32.gmra.mxu0 %v1242
      %v1762 = vpop.f32.mrf.mxu0
      %v1763 = vadd.f32 0.0, %v1762
      %v1764 = vpop.f32.mrf.mxu0
      %1765 = vmatprep.mubr.f32.mxu0 0.0
      %1766 = vmatmul.mubr.f32.gmra.mxu0 %v1244
      %v1767 = vpop.f32.mrf.mxu0
      %v1768 = vadd.f32 0.0, %v1767
      %v1769 = vpop.f32.mrf.mxu0
      %1770 = vmatprep.mubr.f32.mxu0 0.0
      %1771 = vmatmul.mubr.f32.gmra.mxu0 %v1246
      %v1772 = vpop.f32.mrf.mxu0
      %v1773 = vadd.f32 0.0, %v1772
      %v1774 = vpop.f32.mrf.mxu0
      %1775 = vmatprep.mubr.f32.mxu0 0.0
      %1776 = vmatmul.mubr.f32.gmra.mxu0 %v1248
      %v1777 = vpop.f32.mrf.mxu0
      %v1778 = vadd.f32 0.0, %v1777
      %v1779 = vpop.f32.mrf.mxu0
      %1780 = vmatprep.mubr.f32.mxu0 0.0
      %1781 = vmatmul.mubr.f32.gmra.mxu0 %v1250
      %v1782 = vpop.f32.mrf.mxu0
      %v1783 = vadd.f32 0.0, %v1782
      %v1784 = vpop.f32.mrf.mxu0
      %1785 = vmatprep.mubr.f32.mxu0 0.0
      %1786 = vmatmul.mubr.f32.gmra.mxu0 %v1252
      %v1787 = vpop.f32.mrf.mxu0
      %v1788 = vadd.f32 0.0, %v1787
      %v1789 = vpop.f32.mrf.mxu0
      %1790 = vmatprep.mubr.f32.mxu0 0.0
      %1791 = vmatmul.mubr.f32.gmra.mxu0 %v1254
      %v1792 = vpop.f32.mrf.mxu0
      %v1793 = vadd.f32 0.0, %v1792
      %v1794 = vpop.f32.mrf.mxu0
      %1795 = vmatprep.mubr.f32.mxu0 0.0
      %1796 = vmatmul.mubr.f32.gmra.mxu0 %v1256
      %v1797 = vpop.f32.mrf.mxu0
      %v1798 = vadd.f32 0.0, %v1797
      %v1799 = vpop.f32.mrf.mxu0
      %1800 = vmatprep.mubr.f32.mxu0 0.0
      %1801 = vmatmul.mubr.f32.gmra.mxu0 %v1258
      %v1802 = vpop.f32.mrf.mxu0
      %v1803 = vadd.f32 0.0, %v1802
      %v1804 = vpop.f32.mrf.mxu0
      %1805 = vmatprep.mubr.f32.mxu0 0.0
      %1806 = vmatmul.mubr.f32.gmra.mxu0 %v1260
      %v1807 = vpop.f32.mrf.mxu0
      %v1808 = vadd.f32 0.0, %v1807
      %v1809 = vpop.f32.mrf.mxu0
      %1810 = vmatprep.mubr.f32.mxu0 0.0
      %1811 = vmatmul.mubr.f32.gmra.mxu0 %v1262
      %v1812 = vpop.f32.mrf.mxu0
      %v1813 = vadd.f32 0.0, %v1812
      %v1814 = vpop.f32.mrf.mxu0
      %1815 = vmatprep.mubr.f32.mxu0 0.0
      %1816 = vmatmul.mubr.f32.gmra.mxu0 %v1264
      %v1817 = vpop.f32.mrf.mxu0
      %v1818 = vadd.f32 0.0, %v1817
      %v1819 = vpop.f32.mrf.mxu0
      %1820 = vmatprep.mubr.f32.mxu0 0.0
      %1821 = vmatmul.mubr.f32.gmra.mxu0 %v1569
      %v1822 = vpop.f32.mrf.mxu0
      %v1823 = vadd.f32 0.0, %v1822
      %v1824 = vpop.f32.mrf.mxu0
      %1825 = vmatprep.mubr.f32.mxu0 0.0
      %1826 = vmatmul.mubr.f32.gmra.mxu0 %v1571
      %v1827 = vpop.f32.mrf.mxu0
      %v1828 = vadd.f32 0.0, %v1827
      %v1829 = vpop.f32.mrf.mxu0
      %1830 = vdwg.mxu0
      %v1831 = vadd.f32 %v1524, %v1643
      %v1832 = vadd.f32 %v1525, %v1648
      %v1833 = vadd.f32 %v1526, %v1653
      %v1834 = vadd.f32 %v1527, %v1658
      %v1835 = vadd.f32 %v1528, %v1663
      %v1836 = vadd.f32 %v1529, %v1668
      %v1837 = vadd.f32 %v1530, %v1673
      %v1838 = vadd.f32 %v1531, %v1678
      %v1839 = vadd.f32 %v1532, %v1683
      %v1840 = vadd.f32 %v1533, %v1688
      %v1841 = vadd.f32 %v1534, %v1693
      %v1842 = vadd.f32 %v1535, %v1698
      %v1843 = vadd.f32 %v1536, %v1703
      %v1844 = vadd.f32 %v1537, %v1708
      %v1845 = vadd.f32 %v1538, %v1713
      %v1846 = vadd.f32 %v1539, %v1718
      %v1847 = vadd.f32 %v1540, %v1723
      %v1848 = vadd.f32 %v1541, %v1728
      %v1849 = vadd.f32 %v1542, %v1733
      %v1850 = vadd.f32 %v1543, %v1738
      %v1851 = vadd.f32 %v1544, %v1743
      %v1852 = vadd.f32 %v1545, %v1748
      %v1853 = vadd.f32 %v1546, %v1753
      %v1854 = vadd.f32 %v1547, %v1758
      %v1855 = vadd.f32 %v1548, %v1763
      %v1856 = vadd.f32 %v1549, %v1768
      %v1857 = vadd.f32 %v1550, %v1773
      %v1858 = vadd.f32 %v1551, %v1778
      %v1859 = vadd.f32 %v1552, %v1783
      %v1860 = vadd.f32 %v1553, %v1788
      %v1861 = vadd.f32 %v1554, %v1793
      %v1862 = vadd.f32 %v1555, %v1798
      %v1863 = vadd.f32 %v1556, %v1803
      %v1864 = vadd.f32 %v1557, %v1808
      %v1865 = vadd.f32 %v1558, %v1813
      %v1866 = vadd.f32 %v1559, %v1818
      %v1867 = vadd.f32 %v1560, %v1823
      %v1868 = vadd.f32 %v1561, %v1828
      %v1869 = vld [vmem:[%s1 + $0x10] sm:$0xf]
      %vm1870 = vcmask 1044480
      %v1871 = vrot.slane %v281, 3
      %v1872 = vrot.slane %v282, 3
      %v1873 = vsel %vm1870, %v1871, %v1872
      %v1874 = vrot.slane %v283, 3
      %v1875 = vsel %vm1870, %v1872, %v1874
      %v1876 = vrot.slane %v284, 3
      %v1877 = vsel %vm1870, %v1874, %v1876
      %v1878 = vrot.slane %v285, 3
      %v1879 = vsel %vm1870, %v1876, %v1878
      %v1880 = vrot.slane %v286, 3
      %v1881 = vsel %vm1870, %v1878, %v1880
      %v1882 = vrot.slane %v287, 3
      %v1883 = vsel %vm1870, %v1880, %v1882
      %v1884 = vrot.slane %v288, 3
      %v1885 = vsel %vm1870, %v1882, %v1884
      %v1886 = vrot.slane %v289, 3
      %v1887 = vsel %vm1870, %v1884, %v1886
      %v1888 = vrot.slane %v290, 3
      %v1889 = vsel %vm1870, %v1886, %v1888
      %v1890 = vrot.slane %v291, 3
      %v1891 = vsel %vm1870, %v1888, %v1890
      %v1892 = vrot.slane %v292, 3
      %v1893 = vsel %vm1870, %v1890, %v1892
      %v1894 = vrot.slane %v293, 3
      %v1895 = vsel %vm1870, %v1892, %v1894
      %v1896 = vrot.slane %v294, 3
      %v1897 = vsel %vm1870, %v1894, %v1896
      %v1898 = vrot.slane %v295, 3
      %v1899 = vsel %vm1870, %v1896, %v1898
      %v1900 = vrot.slane %v296, 3
      %v1901 = vsel %vm1870, %v1898, %v1900
      %v1902 = vrot.slane %v297, 3
      %v1903 = vsel %vm1870, %v1900, %v1902
      %v1904 = vrot.slane %v298, 3
      %v1905 = vsel %vm1870, %v1902, %v1904
      %v1906 = vrot.slane %v299, 3
      %v1907 = vsel %vm1870, %v1904, %v1906
      %v1908 = vrot.slane %v300, 3
      %v1909 = vsel %vm1870, %v1906, %v1908
      %v1910 = vrot.slane %v301, 3
      %v1911 = vsel %vm1870, %v1908, %v1910
      %v1912 = vrot.slane %v302, 3
      %v1913 = vsel %vm1870, %v1910, %v1912
      %v1914 = vrot.slane %v303, 3
      %v1915 = vsel %vm1870, %v1912, %v1914
      %v1916 = vrot.slane %v304, 3
      %v1917 = vsel %vm1870, %v1914, %v1916
      %v1918 = vrot.slane %v305, 3
      %v1919 = vsel %vm1870, %v1916, %v1918
      %v1920 = vrot.slane %v306, 3
      %v1921 = vsel %vm1870, %v1918, %v1920
      %v1922 = vrot.slane %v307, 3
      %v1923 = vsel %vm1870, %v1920, %v1922
      %v1924 = vrot.slane %v308, 3
      %v1925 = vsel %vm1870, %v1922, %v1924
      %v1926 = vrot.slane %v309, 3
      %v1927 = vsel %vm1870, %v1924, %v1926
      %v1928 = vrot.slane %v310, 3
      %v1929 = vsel %vm1870, %v1926, %v1928
      %v1930 = vrot.slane %v311, 3
      %v1931 = vsel %vm1870, %v1928, %v1930
      %v1932 = vrot.slane %v312, 3
      %v1933 = vsel %vm1870, %v1930, %v1932
      %v1934 = vrot.slane %v313, 3
      %v1935 = vsel %vm1870, %v1932, %v1934
      %v1936 = vrot.slane %v314, 3
      %v1937 = vsel %vm1870, %v1934, %v1936
      %v1938 = vrot.slane %v315, 3
      %v1939 = vsel %vm1870, %v1936, %v1938
      %v1940 = vrot.slane %v316, 3
      %v1941 = vsel %vm1870, %v1938, %v1940
      %v1942 = vrot.slane %v317, 3
      %v1943 = vsel %vm1870, %v1940, %v1942
      %v1944 = vrot.slane %v318, 3
      %v1945 = vsel %vm1870, %v1942, %v1944
      %v1946 = vrot.slane %v319, 3
      %v1947 = vsel %vm1870, %v1944, %v1946
      %v1948 = vsel %vm441, %v1873, 0
      %v1950 = vsel %vm441, %v1875, 0
      %v1952 = vsel %vm441, %v1877, 0
      %v1954 = vsel %vm441, %v1879, 0
      %v1956 = vsel %vm441, %v1881, 0
      %v1958 = vsel %vm441, %v1883, 0
      %v1960 = vsel %vm441, %v1885, 0
      %v1962 = vsel %vm441, %v1887, 0
      %v1964 = vsel %vm441, %v1889, 0
      %v1966 = vsel %vm441, %v1891, 0
      %v1968 = vsel %vm441, %v1893, 0
      %v1970 = vsel %vm441, %v1895, 0
      %v1972 = vsel %vm441, %v1897, 0
      %v1974 = vsel %vm441, %v1899, 0
      %v1976 = vsel %vm441, %v1901, 0
      %v1978 = vsel %vm441, %v1903, 0
      %v1980 = vsel %vm441, %v1905, 0
      %v1982 = vsel %vm441, %v1907, 0
      %v1984 = vsel %vm441, %v1909, 0
      %v1986 = vsel %vm441, %v1911, 0
      %v1988 = vsel %vm441, %v1913, 0
      %v1990 = vsel %vm441, %v1915, 0
      %v1992 = vsel %vm441, %v1917, 0
      %v1994 = vsel %vm441, %v1919, 0
      %v1996 = vsel %vm441, %v1921, 0
      %v1998 = vsel %vm441, %v1923, 0
      %v2000 = vsel %vm441, %v1925, 0
      %v2002 = vsel %vm441, %v1927, 0
      %v2004 = vsel %vm441, %v1929, 0
      %v2006 = vsel %vm441, %v1931, 0
      %v2008 = vsel %vm441, %v1933, 0
      %v2010 = vsel %vm441, %v1935, 0
      %v2012 = vsel %vm441, %v1937, 0
      %v2014 = vsel %vm441, %v1939, 0
      %v2016 = vsel %vm441, %v1941, 0
      %v2018 = vsel %vm441, %v1943, 0
      %v2020 = vsel %vm441, %v1945, 0
      %v2022 = vsel %vm441, %v1947, 0
      %v2025 = vsel %vm518, %v1869, 0
      %2027 = vmatprep.subr.mxu0 0.0
      %2028 = vmatpush1.msra.mxu0 0.0
      %2029 = vmatprep.subr.mxu0 0.0
      %2030 = vmatpush1.msra.mxu0 0.0
      %2031 = vmatprep.subr.mxu0 0.0
      %2032 = vmatpush1.msra.mxu0 0.0
      %2033 = vmatprep.subr.mxu0 0.0
      %2034 = vmatpush1.msra.mxu0 0.0
      %2035 = vmatprep.subr.mxu0 0.0
      %2036 = vmatpush1.msra.mxu0 0.0
      %2037 = vmatprep.subr.mxu0 0.0
      %2038 = vmatpush1.msra.mxu0 0.0
      %2039 = vmatprep.subr.mxu0 0.0
      %2040 = vmatpush1.msra.mxu0 0.0
      %2041 = vmatprep.subr.mxu0 0.0
      %2042 = vmatpush1.msra.mxu0 0.0
      %2043 = vmatprep.subr.mxu0 0.0
      %2044 = vmatpush1.msra.mxu0 0.0
      %2045 = vmatprep.subr.mxu0 0.0
      %2046 = vmatpush1.msra.mxu0 0.0
      %2047 = vmatprep.subr.mxu0 0.0
      %2048 = vmatpush1.msra.mxu0 0.0
      %2049 = vmatprep.subr.mxu0 0.0
      %2050 = vmatpush1.msra.mxu0 0.0
      %2051 = vmatprep.subr.mxu0 0.0
      %2052 = vmatpush1.msra.mxu0 0.0
      %2053 = vmatprep.subr.mxu0 0.0
      %2054 = vmatpush1.msra.mxu0 0.0
      %2055 = vmatprep.subr.mxu0 0.0
      %2056 = vmatpush1.msra.mxu0 0.0
      %2057 = vmatprep.subr.mxu0 0.0
      %2058 = vmatpush1.msra.mxu0 %v2025
      %2059 = vmatprep.subr.mxu0 0.0
      %2060 = vmatpush2.msra.mxu0 0.0
      %2061 = vmatprep.subr.mxu0 0.0
      %2062 = vmatpush2.msra.mxu0 0.0
      %2063 = vmatprep.subr.mxu0 0.0
      %2064 = vmatpush2.msra.mxu0 0.0
      %2065 = vmatprep.subr.mxu0 0.0
      %2066 = vmatpush2.msra.mxu0 0.0
      %2067 = vmatprep.subr.mxu0 0.0
      %2068 = vmatpush2.msra.mxu0 0.0
      %2069 = vmatprep.subr.mxu0 0.0
      %2070 = vmatpush2.msra.mxu0 0.0
      %2071 = vmatprep.subr.mxu0 0.0
      %2072 = vmatpush2.msra.mxu0 0.0
      %2073 = vmatprep.subr.mxu0 0.0
      %2074 = vmatpush2.msra.mxu0 0.0
      %2075 = vmatprep.subr.mxu0 0.0
      %2076 = vmatpush2.msra.mxu0 0.0
      %2077 = vmatprep.subr.mxu0 0.0
      %2078 = vmatpush2.msra.mxu0 0.0
      %2079 = vmatprep.subr.mxu0 0.0
      %2080 = vmatpush2.msra.mxu0 0.0
      %2081 = vmatprep.subr.mxu0 0.0
      %2082 = vmatpush2.msra.mxu0 0.0
      %2083 = vmatprep.subr.mxu0 0.0
      %2084 = vmatpush2.msra.mxu0 0.0
      %2085 = vmatprep.subr.mxu0 0.0
      %2086 = vmatpush2.msra.mxu0 0.0
      %2087 = vmatprep.subr.mxu0 0.0
      %2088 = vmatpush2.msra.mxu0 0.0
      %2089 = vmatprep.subr.mxu0 0.0
      %2090 = vmatpush2.msra.mxu0 0.0
      %2091 = vmatprep.mubr.f32.mxu0 0.0
      %2092 = vmatmul.mubr.f32.gmra.mxu0 %v1948
      %v2093 = vpop.f32.mrf.mxu0
      %v2094 = vadd.f32 0.0, %v2093
      %v2095 = vpop.f32.mrf.mxu0
      %2096 = vmatprep.mubr.f32.mxu0 0.0
      %2097 = vmatmul.mubr.f32.gmra.mxu0 %v1950
      %v2098 = vpop.f32.mrf.mxu0
      %v2099 = vadd.f32 0.0, %v2098
      %v2100 = vpop.f32.mrf.mxu0
      %2101 = vmatprep.mubr.f32.mxu0 0.0
      %2102 = vmatmul.mubr.f32.gmra.mxu0 %v1952
      %v2103 = vpop.f32.mrf.mxu0
      %v2104 = vadd.f32 0.0, %v2103
      %v2105 = vpop.f32.mrf.mxu0
      %2106 = vmatprep.mubr.f32.mxu0 0.0
      %2107 = vmatmul.mubr.f32.gmra.mxu0 %v1954
      %v2108 = vpop.f32.mrf.mxu0
      %v2109 = vadd.f32 0.0, %v2108
      %v2110 = vpop.f32.mrf.mxu0
      %2111 = vmatprep.mubr.f32.mxu0 0.0
      %2112 = vmatmul.mubr.f32.gmra.mxu0 %v1956
      %v2113 = vpop.f32.mrf.mxu0
      %v2114 = vadd.f32 0.0, %v2113
      %v2115 = vpop.f32.mrf.mxu0
      %2116 = vmatprep.mubr.f32.mxu0 0.0
      %2117 = vmatmul.mubr.f32.gmra.mxu0 %v1958
      %v2118 = vpop.f32.mrf.mxu0
      %v2119 = vadd.f32 0.0, %v2118
      %v2120 = vpop.f32.mrf.mxu0
      %2121 = vmatprep.mubr.f32.mxu0 0.0
      %2122 = vmatmul.mubr.f32.gmra.mxu0 %v1960
      %v2123 = vpop.f32.mrf.mxu0
      %v2124 = vadd.f32 0.0, %v2123
      %v2125 = vpop.f32.mrf.mxu0
      %2126 = vmatprep.mubr.f32.mxu0 0.0
      %2127 = vmatmul.mubr.f32.gmra.mxu0 %v1962
      %v2128 = vpop.f32.mrf.mxu0
      %v2129 = vadd.f32 0.0, %v2128
      %v2130 = vpop.f32.mrf.mxu0
      %2131 = vmatprep.mubr.f32.mxu0 0.0
      %2132 = vmatmul.mubr.f32.gmra.mxu0 %v1964
      %v2133 = vpop.f32.mrf.mxu0
      %v2134 = vadd.f32 0.0, %v2133
      %v2135 = vpop.f32.mrf.mxu0
      %2136 = vmatprep.mubr.f32.mxu0 0.0
      %2137 = vmatmul.mubr.f32.gmra.mxu0 %v1966
      %v2138 = vpop.f32.mrf.mxu0
      %v2139 = vadd.f32 0.0, %v2138
      %v2140 = vpop.f32.mrf.mxu0
      %2141 = vmatprep.mubr.f32.mxu0 0.0
      %2142 = vmatmul.mubr.f32.gmra.mxu0 %v1968
      %v2143 = vpop.f32.mrf.mxu0
      %v2144 = vadd.f32 0.0, %v2143
      %v2145 = vpop.f32.mrf.mxu0
      %2146 = vmatprep.mubr.f32.mxu0 0.0
      %2147 = vmatmul.mubr.f32.gmra.mxu0 %v1970
      %v2148 = vpop.f32.mrf.mxu0
      %v2149 = vadd.f32 0.0, %v2148
      %v2150 = vpop.f32.mrf.mxu0
      %2151 = vmatprep.mubr.f32.mxu0 0.0
      %2152 = vmatmul.mubr.f32.gmra.mxu0 %v1972
      %v2153 = vpop.f32.mrf.mxu0
      %v2154 = vadd.f32 0.0, %v2153
      %v2155 = vpop.f32.mrf.mxu0
      %2156 = vmatprep.mubr.f32.mxu0 0.0
      %2157 = vmatmul.mubr.f32.gmra.mxu0 %v1974
      %v2158 = vpop.f32.mrf.mxu0
      %v2159 = vadd.f32 0.0, %v2158
      %v2160 = vpop.f32.mrf.mxu0
      %2161 = vmatprep.mubr.f32.mxu0 0.0
      %2162 = vmatmul.mubr.f32.gmra.mxu0 %v1976
      %v2163 = vpop.f32.mrf.mxu0
      %v2164 = vadd.f32 0.0, %v2163
      %v2165 = vpop.f32.mrf.mxu0
      %2166 = vmatprep.mubr.f32.mxu0 0.0
      %2167 = vmatmul.mubr.f32.gmra.mxu0 %v1978
      %v2168 = vpop.f32.mrf.mxu0
      %v2169 = vadd.f32 0.0, %v2168
      %v2170 = vpop.f32.mrf.mxu0
      %2171 = vmatprep.mubr.f32.mxu0 0.0
      %2172 = vmatmul.mubr.f32.gmra.mxu0 %v1980
      %v2173 = vpop.f32.mrf.mxu0
      %v2174 = vadd.f32 0.0, %v2173
      %v2175 = vpop.f32.mrf.mxu0
      %2176 = vmatprep.mubr.f32.mxu0 0.0
      %2177 = vmatmul.mubr.f32.gmra.mxu0 %v1982
      %v2178 = vpop.f32.mrf.mxu0
      %v2179 = vadd.f32 0.0, %v2178
      %v2180 = vpop.f32.mrf.mxu0
      %2181 = vmatprep.mubr.f32.mxu0 0.0
      %2182 = vmatmul.mubr.f32.gmra.mxu0 %v1984
      %v2183 = vpop.f32.mrf.mxu0
      %v2184 = vadd.f32 0.0, %v2183
      %v2185 = vpop.f32.mrf.mxu0
      %2186 = vmatprep.mubr.f32.mxu0 0.0
      %2187 = vmatmul.mubr.f32.gmra.mxu0 %v1986
      %v2188 = vpop.f32.mrf.mxu0
      %v2189 = vadd.f32 0.0, %v2188
      %v2190 = vpop.f32.mrf.mxu0
      %2191 = vmatprep.mubr.f32.mxu0 0.0
      %2192 = vmatmul.mubr.f32.gmra.mxu0 %v1988
      %v2193 = vpop.f32.mrf.mxu0
      %v2194 = vadd.f32 0.0, %v2193
      %v2195 = vpop.f32.mrf.mxu0
      %2196 = vmatprep.mubr.f32.mxu0 0.0
      %2197 = vmatmul.mubr.f32.gmra.mxu0 %v1990
      %v2198 = vpop.f32.mrf.mxu0
      %v2199 = vadd.f32 0.0, %v2198
      %v2200 = vpop.f32.mrf.mxu0
      %2201 = vmatprep.mubr.f32.mxu0 0.0
      %2202 = vmatmul.mubr.f32.gmra.mxu0 %v1992
      %v2203 = vpop.f32.mrf.mxu0
      %v2204 = vadd.f32 0.0, %v2203
      %v2205 = vpop.f32.mrf.mxu0
      %2206 = vmatprep.mubr.f32.mxu0 0.0
      %2207 = vmatmul.mubr.f32.gmra.mxu0 %v1994
      %v2208 = vpop.f32.mrf.mxu0
      %v2209 = vadd.f32 0.0, %v2208
      %v2210 = vpop.f32.mrf.mxu0
      %2211 = vmatprep.mubr.f32.mxu0 0.0
      %2212 = vmatmul.mubr.f32.gmra.mxu0 %v1996
      %v2213 = vpop.f32.mrf.mxu0
      %v2214 = vadd.f32 0.0, %v2213
      %v2215 = vpop.f32.mrf.mxu0
      %2216 = vmatprep.mubr.f32.mxu0 0.0
      %2217 = vmatmul.mubr.f32.gmra.mxu0 %v1998
      %v2218 = vpop.f32.mrf.mxu0
      %v2219 = vadd.f32 0.0, %v2218
      %v2220 = vpop.f32.mrf.mxu0
      %2221 = vmatprep.mubr.f32.mxu0 0.0
      %2222 = vmatmul.mubr.f32.gmra.mxu0 %v2000
      %v2223 = vpop.f32.mrf.mxu0
      %v2224 = vadd.f32 0.0, %v2223
      %v2225 = vpop.f32.mrf.mxu0
      %2226 = vmatprep.mubr.f32.mxu0 0.0
      %2227 = vmatmul.mubr.f32.gmra.mxu0 %v2002
      %v2228 = vpop.f32.mrf.mxu0
      %v2229 = vadd.f32 0.0, %v2228
      %v2230 = vpop.f32.mrf.mxu0
      %2231 = vmatprep.mubr.f32.mxu0 0.0
      %2232 = vmatmul.mubr.f32.gmra.mxu0 %v2004
      %v2233 = vpop.f32.mrf.mxu0
      %v2234 = vadd.f32 0.0, %v2233
      %v2235 = vpop.f32.mrf.mxu0
      %2236 = vmatprep.mubr.f32.mxu0 0.0
      %2237 = vmatmul.mubr.f32.gmra.mxu0 %v2006
      %v2238 = vpop.f32.mrf.mxu0
      %v2239 = vadd.f32 0.0, %v2238
      %v2240 = vpop.f32.mrf.mxu0
      %2241 = vmatprep.mubr.f32.mxu0 0.0
      %2242 = vmatmul.mubr.f32.gmra.mxu0 %v2008
      %v2243 = vpop.f32.mrf.mxu0
      %v2244 = vadd.f32 0.0, %v2243
      %v2245 = vpop.f32.mrf.mxu0
      %2246 = vmatprep.mubr.f32.mxu0 0.0
      %2247 = vmatmul.mubr.f32.gmra.mxu0 %v2010
      %v2248 = vpop.f32.mrf.mxu0
      %v2249 = vadd.f32 0.0, %v2248
      %v2250 = vpop.f32.mrf.mxu0
      %2251 = vmatprep.mubr.f32.mxu0 0.0
      %2252 = vmatmul.mubr.f32.gmra.mxu0 %v2012
      %v2253 = vpop.f32.mrf.mxu0
      %v2254 = vadd.f32 0.0, %v2253
      %v2255 = vpop.f32.mrf.mxu0
      %2256 = vmatprep.mubr.f32.mxu0 0.0
      %2257 = vmatmul.mubr.f32.gmra.mxu0 %v2014
      %v2258 = vpop.f32.mrf.mxu0
      %v2259 = vadd.f32 0.0, %v2258
      %v2260 = vpop.f32.mrf.mxu0
      %2261 = vmatprep.mubr.f32.mxu0 0.0
      %2262 = vmatmul.mubr.f32.gmra.mxu0 %v2016
      %v2263 = vpop.f32.mrf.mxu0
      %v2264 = vadd.f32 0.0, %v2263
      %v2265 = vpop.f32.mrf.mxu0
      %2266 = vmatprep.mubr.f32.mxu0 0.0
      %2267 = vmatmul.mubr.f32.gmra.mxu0 %v2018
      %v2268 = vpop.f32.mrf.mxu0
      %v2269 = vadd.f32 0.0, %v2268
      %v2270 = vpop.f32.mrf.mxu0
      %2271 = vmatprep.mubr.f32.mxu0 0.0
      %2272 = vmatmul.mubr.f32.gmra.mxu0 %v2020
      %v2273 = vpop.f32.mrf.mxu0
      %v2274 = vadd.f32 0.0, %v2273
      %v2275 = vpop.f32.mrf.mxu0
      %2276 = vmatprep.mubr.f32.mxu0 0.0
      %2277 = vmatmul.mubr.f32.gmra.mxu0 %v2022
      %v2278 = vpop.f32.mrf.mxu0
      %v2279 = vadd.f32 0.0, %v2278
      %v2280 = vpop.f32.mrf.mxu0
      %2281 = vdwg.mxu0
      %v2282 = vadd.f32 %v1831, %v2094
      %v2283 = vadd.f32 %v1832, %v2099
      %v2284 = vadd.f32 %v1833, %v2104
      %v2285 = vadd.f32 %v1834, %v2109
      %v2286 = vadd.f32 %v1835, %v2114
      %v2287 = vadd.f32 %v1836, %v2119
      %v2288 = vadd.f32 %v1837, %v2124
      %v2289 = vadd.f32 %v1838, %v2129
      %v2290 = vadd.f32 %v1839, %v2134
      %v2291 = vadd.f32 %v1840, %v2139
      %v2292 = vadd.f32 %v1841, %v2144
      %v2293 = vadd.f32 %v1842, %v2149
      %v2294 = vadd.f32 %v1843, %v2154
      %v2295 = vadd.f32 %v1844, %v2159
      %v2296 = vadd.f32 %v1845, %v2164
      %v2297 = vadd.f32 %v1846, %v2169
      %v2298 = vadd.f32 %v1847, %v2174
      %v2299 = vadd.f32 %v1848, %v2179
      %v2300 = vadd.f32 %v1849, %v2184
      %v2301 = vadd.f32 %v1850, %v2189
      %v2302 = vadd.f32 %v1851, %v2194
      %v2303 = vadd.f32 %v1852, %v2199
      %v2304 = vadd.f32 %v1853, %v2204
      %v2305 = vadd.f32 %v1854, %v2209
      %v2306 = vadd.f32 %v1855, %v2214
      %v2307 = vadd.f32 %v1856, %v2219
      %v2308 = vadd.f32 %v1857, %v2224
      %v2309 = vadd.f32 %v1858, %v2229
      %v2310 = vadd.f32 %v1859, %v2234
      %v2311 = vadd.f32 %v1860, %v2239
      %v2312 = vadd.f32 %v1861, %v2244
      %v2313 = vadd.f32 %v1862, %v2249
      %v2314 = vadd.f32 %v1863, %v2254
      %v2315 = vadd.f32 %v1864, %v2259
      %v2316 = vadd.f32 %v1865, %v2264
      %v2317 = vadd.f32 %v1866, %v2269
      %v2318 = vadd.f32 %v1867, %v2274
      %v2319 = vadd.f32 %v1868, %v2279
      %v2320 = vld [vmem:[%s1 + $0x14] sm:$0xf]
      %v2321 = vrot.slane %v281, 4
      %v2322 = vrot.slane %v282, 4
      %v2323 = vsel %vm518, %v2321, %v2322
      %v2324 = vrot.slane %v283, 4
      %v2325 = vsel %vm518, %v2322, %v2324
      %v2326 = vrot.slane %v284, 4
      %v2327 = vsel %vm518, %v2324, %v2326
      %v2328 = vrot.slane %v285, 4
      %v2329 = vsel %vm518, %v2326, %v2328
      %v2330 = vrot.slane %v286, 4
      %v2331 = vsel %vm518, %v2328, %v2330
      %v2332 = vrot.slane %v287, 4
      %v2333 = vsel %vm518, %v2330, %v2332
      %v2334 = vrot.slane %v288, 4
      %v2335 = vsel %vm518, %v2332, %v2334
      %v2336 = vrot.slane %v289, 4
      %v2337 = vsel %vm518, %v2334, %v2336
      %v2338 = vrot.slane %v290, 4
      %v2339 = vsel %vm518, %v2336, %v2338
      %v2340 = vrot.slane %v291, 4
      %v2341 = vsel %vm518, %v2338, %v2340
      %v2342 = vrot.slane %v292, 4
      %v2343 = vsel %vm518, %v2340, %v2342
      %v2344 = vrot.slane %v293, 4
      %v2345 = vsel %vm518, %v2342, %v2344
      %v2346 = vrot.slane %v294, 4
      %v2347 = vsel %vm518, %v2344, %v2346
      %v2348 = vrot.slane %v295, 4
      %v2349 = vsel %vm518, %v2346, %v2348
      %v2350 = vrot.slane %v296, 4
      %v2351 = vsel %vm518, %v2348, %v2350
      %v2352 = vrot.slane %v297, 4
      %v2353 = vsel %vm518, %v2350, %v2352
      %v2354 = vrot.slane %v298, 4
      %v2355 = vsel %vm518, %v2352, %v2354
      %v2356 = vrot.slane %v299, 4
      %v2357 = vsel %vm518, %v2354, %v2356
      %v2358 = vrot.slane %v300, 4
      %v2359 = vsel %vm518, %v2356, %v2358
      %v2360 = vrot.slane %v301, 4
      %v2361 = vsel %vm518, %v2358, %v2360
      %v2362 = vrot.slane %v302, 4
      %v2363 = vsel %vm518, %v2360, %v2362
      %v2364 = vrot.slane %v303, 4
      %v2365 = vsel %vm518, %v2362, %v2364
      %v2366 = vrot.slane %v304, 4
      %v2367 = vsel %vm518, %v2364, %v2366
      %v2368 = vrot.slane %v305, 4
      %v2369 = vsel %vm518, %v2366, %v2368
      %v2370 = vrot.slane %v306, 4
      %v2371 = vsel %vm518, %v2368, %v2370
      %v2372 = vrot.slane %v307, 4
      %v2373 = vsel %vm518, %v2370, %v2372
      %v2374 = vrot.slane %v308, 4
      %v2375 = vsel %vm518, %v2372, %v2374
      %v2376 = vrot.slane %v309, 4
      %v2377 = vsel %vm518, %v2374, %v2376
      %v2378 = vrot.slane %v310, 4
      %v2379 = vsel %vm518, %v2376, %v2378
      %v2380 = vrot.slane %v311, 4
      %v2381 = vsel %vm518, %v2378, %v2380
      %v2382 = vrot.slane %v312, 4
      %v2383 = vsel %vm518, %v2380, %v2382
      %v2384 = vrot.slane %v313, 4
      %v2385 = vsel %vm518, %v2382, %v2384
      %v2386 = vrot.slane %v314, 4
      %v2387 = vsel %vm518, %v2384, %v2386
      %v2388 = vrot.slane %v315, 4
      %v2389 = vsel %vm518, %v2386, %v2388
      %v2390 = vrot.slane %v316, 4
      %v2391 = vsel %vm518, %v2388, %v2390
      %v2392 = vrot.slane %v317, 4
      %v2393 = vsel %vm518, %v2390, %v2392
      %v2394 = vrot.slane %v318, 4
      %v2395 = vsel %vm518, %v2392, %v2394
      %v2396 = vrot.slane %v319, 4
      %v2397 = vsel %vm518, %v2394, %v2396
      %v2398 = vsel %vm441, %v2323, 0
      %v2400 = vsel %vm441, %v2325, 0
      %v2402 = vsel %vm441, %v2327, 0
      %v2404 = vsel %vm441, %v2329, 0
      %v2406 = vsel %vm441, %v2331, 0
      %v2408 = vsel %vm441, %v2333, 0
      %v2410 = vsel %vm441, %v2335, 0
      %v2412 = vsel %vm441, %v2337, 0
      %v2414 = vsel %vm441, %v2339, 0
      %v2416 = vsel %vm441, %v2341, 0
      %v2418 = vsel %vm441, %v2343, 0
      %v2420 = vsel %vm441, %v2345, 0
      %v2422 = vsel %vm441, %v2347, 0
      %v2424 = vsel %vm441, %v2349, 0
      %v2426 = vsel %vm441, %v2351, 0
      %v2428 = vsel %vm441, %v2353, 0
      %v2430 = vsel %vm441, %v2355, 0
      %v2432 = vsel %vm441, %v2357, 0
      %v2434 = vsel %vm441, %v2359, 0
      %v2436 = vsel %vm441, %v2361, 0
      %v2438 = vsel %vm441, %v2363, 0
      %v2440 = vsel %vm441, %v2365, 0
      %v2442 = vsel %vm441, %v2367, 0
      %v2444 = vsel %vm441, %v2369, 0
      %v2446 = vsel %vm441, %v2371, 0
      %v2448 = vsel %vm441, %v2373, 0
      %v2450 = vsel %vm441, %v2375, 0
      %v2452 = vsel %vm441, %v2377, 0
      %v2454 = vsel %vm441, %v2379, 0
      %v2456 = vsel %vm441, %v2381, 0
      %v2458 = vsel %vm441, %v2383, 0
      %v2460 = vsel %vm441, %v2385, 0
      %v2462 = vsel %vm441, %v2387, 0
      %v2464 = vsel %vm441, %v2389, 0
      %v2466 = vsel %vm441, %v2391, 0
      %v2468 = vsel %vm441, %v2393, 0
      %v2470 = vsel %vm441, %v2395, 0
      %v2472 = vsel %vm441, %v2397, 0
      %v2475 = vsel %vm518, %v2320, 0
      %2477 = vmatprep.subr.mxu0 0.0
      %2478 = vmatpush1.msra.mxu0 0.0
      %2479 = vmatprep.subr.mxu0 0.0
      %2480 = vmatpush1.msra.mxu0 0.0
      %2481 = vmatprep.subr.mxu0 0.0
      %2482 = vmatpush1.msra.mxu0 0.0
      %2483 = vmatprep.subr.mxu0 0.0
      %2484 = vmatpush1.msra.mxu0 0.0
      %2485 = vmatprep.subr.mxu0 0.0
      %2486 = vmatpush1.msra.mxu0 0.0
      %2487 = vmatprep.subr.mxu0 0.0
      %2488 = vmatpush1.msra.mxu0 0.0
      %2489 = vmatprep.subr.mxu0 0.0
      %2490 = vmatpush1.msra.mxu0 0.0
      %2491 = vmatprep.subr.mxu0 0.0
      %2492 = vmatpush1.msra.mxu0 0.0
      %2493 = vmatprep.subr.mxu0 0.0
      %2494 = vmatpush1.msra.mxu0 0.0
      %2495 = vmatprep.subr.mxu0 0.0
      %2496 = vmatpush1.msra.mxu0 0.0
      %2497 = vmatprep.subr.mxu0 0.0
      %2498 = vmatpush1.msra.mxu0 0.0
      %2499 = vmatprep.subr.mxu0 0.0
      %2500 = vmatpush1.msra.mxu0 0.0
      %2501 = vmatprep.subr.mxu0 0.0
      %2502 = vmatpush1.msra.mxu0 0.0
      %2503 = vmatprep.subr.mxu0 0.0
      %2504 = vmatpush1.msra.mxu0 0.0
      %2505 = vmatprep.subr.mxu0 0.0
      %2506 = vmatpush1.msra.mxu0 0.0
      %2507 = vmatprep.subr.mxu0 0.0
      %2508 = vmatpush1.msra.mxu0 %v2475
      %2509 = vmatprep.subr.mxu0 0.0
      %2510 = vmatpush2.msra.mxu0 0.0
      %2511 = vmatprep.subr.mxu0 0.0
      %2512 = vmatpush2.msra.mxu0 0.0
      %2513 = vmatprep.subr.mxu0 0.0
      %2514 = vmatpush2.msra.mxu0 0.0
      %2515 = vmatprep.subr.mxu0 0.0
      %2516 = vmatpush2.msra.mxu0 0.0
      %2517 = vmatprep.subr.mxu0 0.0
      %2518 = vmatpush2.msra.mxu0 0.0
      %2519 = vmatprep.subr.mxu0 0.0
      %2520 = vmatpush2.msra.mxu0 0.0
      %2521 = vmatprep.subr.mxu0 0.0
      %2522 = vmatpush2.msra.mxu0 0.0
      %2523 = vmatprep.subr.mxu0 0.0
      %2524 = vmatpush2.msra.mxu0 0.0
      %2525 = vmatprep.subr.mxu0 0.0
      %2526 = vmatpush2.msra.mxu0 0.0
      %2527 = vmatprep.subr.mxu0 0.0
      %2528 = vmatpush2.msra.mxu0 0.0
      %2529 = vmatprep.subr.mxu0 0.0
      %2530 = vmatpush2.msra.mxu0 0.0
      %2531 = vmatprep.subr.mxu0 0.0
      %2532 = vmatpush2.msra.mxu0 0.0
      %2533 = vmatprep.subr.mxu0 0.0
      %2534 = vmatpush2.msra.mxu0 0.0
      %2535 = vmatprep.subr.mxu0 0.0
      %2536 = vmatpush2.msra.mxu0 0.0
      %2537 = vmatprep.subr.mxu0 0.0
      %2538 = vmatpush2.msra.mxu0 0.0
      %2539 = vmatprep.subr.mxu0 0.0
      %2540 = vmatpush2.msra.mxu0 0.0
      %2541 = vmatprep.mubr.f32.mxu0 0.0
      %2542 = vmatmul.mubr.f32.gmra.mxu0 %v2398
      %v2543 = vpop.f32.mrf.mxu0
      %v2544 = vadd.f32 0.0, %v2543
      %v2545 = vpop.f32.mrf.mxu0
      %2546 = vmatprep.mubr.f32.mxu0 0.0
      %2547 = vmatmul.mubr.f32.gmra.mxu0 %v2400
      %v2548 = vpop.f32.mrf.mxu0
      %v2549 = vadd.f32 0.0, %v2548
      %v2550 = vpop.f32.mrf.mxu0
      %2551 = vmatprep.mubr.f32.mxu0 0.0
      %2552 = vmatmul.mubr.f32.gmra.mxu0 %v2402
      %v2553 = vpop.f32.mrf.mxu0
      %v2554 = vadd.f32 0.0, %v2553
      %v2555 = vpop.f32.mrf.mxu0
      %2556 = vmatprep.mubr.f32.mxu0 0.0
      %2557 = vmatmul.mubr.f32.gmra.mxu0 %v2404
      %v2558 = vpop.f32.mrf.mxu0
      %v2559 = vadd.f32 0.0, %v2558
      %v2560 = vpop.f32.mrf.mxu0
      %2561 = vmatprep.mubr.f32.mxu0 0.0
      %2562 = vmatmul.mubr.f32.gmra.mxu0 %v2406
      %v2563 = vpop.f32.mrf.mxu0
      %v2564 = vadd.f32 0.0, %v2563
      %v2565 = vpop.f32.mrf.mxu0
      %2566 = vmatprep.mubr.f32.mxu0 0.0
      %2567 = vmatmul.mubr.f32.gmra.mxu0 %v2408
      %v2568 = vpop.f32.mrf.mxu0
      %v2569 = vadd.f32 0.0, %v2568
      %v2570 = vpop.f32.mrf.mxu0
      %2571 = vmatprep.mubr.f32.mxu0 0.0
      %2572 = vmatmul.mubr.f32.gmra.mxu0 %v2410
      %v2573 = vpop.f32.mrf.mxu0
      %v2574 = vadd.f32 0.0, %v2573
      %v2575 = vpop.f32.mrf.mxu0
      %2576 = vmatprep.mubr.f32.mxu0 0.0
      %2577 = vmatmul.mubr.f32.gmra.mxu0 %v2412
      %v2578 = vpop.f32.mrf.mxu0
      %v2579 = vadd.f32 0.0, %v2578
      %v2580 = vpop.f32.mrf.mxu0
      %2581 = vmatprep.mubr.f32.mxu0 0.0
      %2582 = vmatmul.mubr.f32.gmra.mxu0 %v2414
      %v2583 = vpop.f32.mrf.mxu0
      %v2584 = vadd.f32 0.0, %v2583
      %v2585 = vpop.f32.mrf.mxu0
      %2586 = vmatprep.mubr.f32.mxu0 0.0
      %2587 = vmatmul.mubr.f32.gmra.mxu0 %v2416
      %v2588 = vpop.f32.mrf.mxu0
      %v2589 = vadd.f32 0.0, %v2588
      %v2590 = vpop.f32.mrf.mxu0
      %2591 = vmatprep.mubr.f32.mxu0 0.0
      %2592 = vmatmul.mubr.f32.gmra.mxu0 %v2418
      %v2593 = vpop.f32.mrf.mxu0
      %v2594 = vadd.f32 0.0, %v2593
      %v2595 = vpop.f32.mrf.mxu0
      %2596 = vmatprep.mubr.f32.mxu0 0.0
      %2597 = vmatmul.mubr.f32.gmra.mxu0 %v2420
      %v2598 = vpop.f32.mrf.mxu0
      %v2599 = vadd.f32 0.0, %v2598
      %v2600 = vpop.f32.mrf.mxu0
      %2601 = vmatprep.mubr.f32.mxu0 0.0
      %2602 = vmatmul.mubr.f32.gmra.mxu0 %v2422
      %v2603 = vpop.f32.mrf.mxu0
      %v2604 = vadd.f32 0.0, %v2603
      %v2605 = vpop.f32.mrf.mxu0
      %2606 = vmatprep.mubr.f32.mxu0 0.0
      %2607 = vmatmul.mubr.f32.gmra.mxu0 %v2424
      %v2608 = vpop.f32.mrf.mxu0
      %v2609 = vadd.f32 0.0, %v2608
      %v2610 = vpop.f32.mrf.mxu0
      %2611 = vmatprep.mubr.f32.mxu0 0.0
      %2612 = vmatmul.mubr.f32.gmra.mxu0 %v2426
      %v2613 = vpop.f32.mrf.mxu0
      %v2614 = vadd.f32 0.0, %v2613
      %v2615 = vpop.f32.mrf.mxu0
      %2616 = vmatprep.mubr.f32.mxu0 0.0
      %2617 = vmatmul.mubr.f32.gmra.mxu0 %v2428
      %v2618 = vpop.f32.mrf.mxu0
      %v2619 = vadd.f32 0.0, %v2618
      %v2620 = vpop.f32.mrf.mxu0
      %2621 = vmatprep.mubr.f32.mxu0 0.0
      %2622 = vmatmul.mubr.f32.gmra.mxu0 %v2430
      %v2623 = vpop.f32.mrf.mxu0
      %v2624 = vadd.f32 0.0, %v2623
      %v2625 = vpop.f32.mrf.mxu0
      %2626 = vmatprep.mubr.f32.mxu0 0.0
      %2627 = vmatmul.mubr.f32.gmra.mxu0 %v2432
      %v2628 = vpop.f32.mrf.mxu0
      %v2629 = vadd.f32 0.0, %v2628
      %v2630 = vpop.f32.mrf.mxu0
      %2631 = vmatprep.mubr.f32.mxu0 0.0
      %2632 = vmatmul.mubr.f32.gmra.mxu0 %v2434
      %v2633 = vpop.f32.mrf.mxu0
      %v2634 = vadd.f32 0.0, %v2633
      %v2635 = vpop.f32.mrf.mxu0
      %2636 = vmatprep.mubr.f32.mxu0 0.0
      %2637 = vmatmul.mubr.f32.gmra.mxu0 %v2436
      %v2638 = vpop.f32.mrf.mxu0
      %v2639 = vadd.f32 0.0, %v2638
      %v2640 = vpop.f32.mrf.mxu0
      %2641 = vmatprep.mubr.f32.mxu0 0.0
      %2642 = vmatmul.mubr.f32.gmra.mxu0 %v2438
      %v2643 = vpop.f32.mrf.mxu0
      %v2644 = vadd.f32 0.0, %v2643
      %v2645 = vpop.f32.mrf.mxu0
      %2646 = vmatprep.mubr.f32.mxu0 0.0
      %2647 = vmatmul.mubr.f32.gmra.mxu0 %v2440
      %v2648 = vpop.f32.mrf.mxu0
      %v2649 = vadd.f32 0.0, %v2648
      %v2650 = vpop.f32.mrf.mxu0
      %2651 = vmatprep.mubr.f32.mxu0 0.0
      %2652 = vmatmul.mubr.f32.gmra.mxu0 %v2442
      %v2653 = vpop.f32.mrf.mxu0
      %v2654 = vadd.f32 0.0, %v2653
      %v2655 = vpop.f32.mrf.mxu0
      %2656 = vmatprep.mubr.f32.mxu0 0.0
      %2657 = vmatmul.mubr.f32.gmra.mxu0 %v2444
      %v2658 = vpop.f32.mrf.mxu0
      %v2659 = vadd.f32 0.0, %v2658
      %v2660 = vpop.f32.mrf.mxu0
      %2661 = vmatprep.mubr.f32.mxu0 0.0
      %2662 = vmatmul.mubr.f32.gmra.mxu0 %v2446
      %v2663 = vpop.f32.mrf.mxu0
      %v2664 = vadd.f32 0.0, %v2663
      %v2665 = vpop.f32.mrf.mxu0
      %2666 = vmatprep.mubr.f32.mxu0 0.0
      %2667 = vmatmul.mubr.f32.gmra.mxu0 %v2448
      %v2668 = vpop.f32.mrf.mxu0
      %v2669 = vadd.f32 0.0, %v2668
      %v2670 = vpop.f32.mrf.mxu0
      %2671 = vmatprep.mubr.f32.mxu0 0.0
      %2672 = vmatmul.mubr.f32.gmra.mxu0 %v2450
      %v2673 = vpop.f32.mrf.mxu0
      %v2674 = vadd.f32 0.0, %v2673
      %v2675 = vpop.f32.mrf.mxu0
      %2676 = vmatprep.mubr.f32.mxu0 0.0
      %2677 = vmatmul.mubr.f32.gmra.mxu0 %v2452
      %v2678 = vpop.f32.mrf.mxu0
      %v2679 = vadd.f32 0.0, %v2678
      %v2680 = vpop.f32.mrf.mxu0
      %2681 = vmatprep.mubr.f32.mxu0 0.0
      %2682 = vmatmul.mubr.f32.gmra.mxu0 %v2454
      %v2683 = vpop.f32.mrf.mxu0
      %v2684 = vadd.f32 0.0, %v2683
      %v2685 = vpop.f32.mrf.mxu0
      %2686 = vmatprep.mubr.f32.mxu0 0.0
      %2687 = vmatmul.mubr.f32.gmra.mxu0 %v2456
      %v2688 = vpop.f32.mrf.mxu0
      %v2689 = vadd.f32 0.0, %v2688
      %v2690 = vpop.f32.mrf.mxu0
      %2691 = vmatprep.mubr.f32.mxu0 0.0
      %2692 = vmatmul.mubr.f32.gmra.mxu0 %v2458
      %v2693 = vpop.f32.mrf.mxu0
      %v2694 = vadd.f32 0.0, %v2693
      %v2695 = vpop.f32.mrf.mxu0
      %2696 = vmatprep.mubr.f32.mxu0 0.0
      %2697 = vmatmul.mubr.f32.gmra.mxu0 %v2460
      %v2698 = vpop.f32.mrf.mxu0
      %v2699 = vadd.f32 0.0, %v2698
      %v2700 = vpop.f32.mrf.mxu0
      %2701 = vmatprep.mubr.f32.mxu0 0.0
      %2702 = vmatmul.mubr.f32.gmra.mxu0 %v2462
      %v2703 = vpop.f32.mrf.mxu0
      %v2704 = vadd.f32 0.0, %v2703
      %v2705 = vpop.f32.mrf.mxu0
      %2706 = vmatprep.mubr.f32.mxu0 0.0
      %2707 = vmatmul.mubr.f32.gmra.mxu0 %v2464
      %v2708 = vpop.f32.mrf.mxu0
      %v2709 = vadd.f32 0.0, %v2708
      %v2710 = vpop.f32.mrf.mxu0
      %2711 = vmatprep.mubr.f32.mxu0 0.0
      %2712 = vmatmul.mubr.f32.gmra.mxu0 %v2466
      %v2713 = vpop.f32.mrf.mxu0
      %v2714 = vadd.f32 0.0, %v2713
      %v2715 = vpop.f32.mrf.mxu0
      %2716 = vmatprep.mubr.f32.mxu0 0.0
      %2717 = vmatmul.mubr.f32.gmra.mxu0 %v2468
      %v2718 = vpop.f32.mrf.mxu0
      %v2719 = vadd.f32 0.0, %v2718
      %v2720 = vpop.f32.mrf.mxu0
      %2721 = vmatprep.mubr.f32.mxu0 0.0
      %2722 = vmatmul.mubr.f32.gmra.mxu0 %v2470
      %v2723 = vpop.f32.mrf.mxu0
      %v2724 = vadd.f32 0.0, %v2723
      %v2725 = vpop.f32.mrf.mxu0
      %2726 = vmatprep.mubr.f32.mxu0 0.0
      %2727 = vmatmul.mubr.f32.gmra.mxu0 %v2472
      %v2728 = vpop.f32.mrf.mxu0
      %v2729 = vadd.f32 0.0, %v2728
      %v2730 = vpop.f32.mrf.mxu0
      %2731 = vdwg.mxu0
      %v2732 = vadd.f32 %v2282, %v2544
      %v2733 = vadd.f32 %v2283, %v2549
      %v2734 = vadd.f32 %v2284, %v2554
      %v2735 = vadd.f32 %v2285, %v2559
      %v2736 = vadd.f32 %v2286, %v2564
      %v2737 = vadd.f32 %v2287, %v2569
      %v2738 = vadd.f32 %v2288, %v2574
      %v2739 = vadd.f32 %v2289, %v2579
      %v2740 = vadd.f32 %v2290, %v2584
      %v2741 = vadd.f32 %v2291, %v2589
      %v2742 = vadd.f32 %v2292, %v2594
      %v2743 = vadd.f32 %v2293, %v2599
      %v2744 = vadd.f32 %v2294, %v2604
      %v2745 = vadd.f32 %v2295, %v2609
      %v2746 = vadd.f32 %v2296, %v2614
      %v2747 = vadd.f32 %v2297, %v2619
      %v2748 = vadd.f32 %v2298, %v2624
      %v2749 = vadd.f32 %v2299, %v2629
      %v2750 = vadd.f32 %v2300, %v2634
      %v2751 = vadd.f32 %v2301, %v2639
      %v2752 = vadd.f32 %v2302, %v2644
      %v2753 = vadd.f32 %v2303, %v2649
      %v2754 = vadd.f32 %v2304, %v2654
      %v2755 = vadd.f32 %v2305, %v2659
      %v2756 = vadd.f32 %v2306, %v2664
      %v2757 = vadd.f32 %v2307, %v2669
      %v2758 = vadd.f32 %v2308, %v2674
      %v2759 = vadd.f32 %v2309, %v2679
      %v2760 = vadd.f32 %v2310, %v2684
      %v2761 = vadd.f32 %v2311, %v2689
      %v2762 = vadd.f32 %v2312, %v2694
      %v2763 = vadd.f32 %v2313, %v2699
      %v2764 = vadd.f32 %v2314, %v2704
      %v2765 = vadd.f32 %v2315, %v2709
      %v2766 = vadd.f32 %v2316, %v2714
      %v2767 = vadd.f32 %v2317, %v2719
      %v2768 = vadd.f32 %v2318, %v2724
      %v2769 = vadd.f32 %v2319, %v2729
      %v2770 = vld [vmem:[%s1 + $0x18] sm:$0xf]
      %v2773 = vrot.slane %v320, 4
      %v2774 = vsel %vm518, %v2396, %v2773
      %v2775 = vrot.slane %v321, 4
      %v2776 = vsel %vm518, %v2773, %v2775
      %v2777 = vsel %vm441, %v2774, 0
      %v2779 = vsel %vm441, %v2776, 0
      %v2782 = vsel %vm518, %v2770, 0
      %2784 = vmatprep.subr.mxu0 0.0
      %2785 = vmatpush1.msra.mxu0 0.0
      %2786 = vmatprep.subr.mxu0 0.0
      %2787 = vmatpush1.msra.mxu0 0.0
      %2788 = vmatprep.subr.mxu0 0.0
      %2789 = vmatpush1.msra.mxu0 0.0
      %2790 = vmatprep.subr.mxu0 0.0
      %2791 = vmatpush1.msra.mxu0 0.0
      %2792 = vmatprep.subr.mxu0 0.0
      %2793 = vmatpush1.msra.mxu0 0.0
      %2794 = vmatprep.subr.mxu0 0.0
      %2795 = vmatpush1.msra.mxu0 0.0
      %2796 = vmatprep.subr.mxu0 0.0
      %2797 = vmatpush1.msra.mxu0 0.0
      %2798 = vmatprep.subr.mxu0 0.0
      %2799 = vmatpush1.msra.mxu0 0.0
      %2800 = vmatprep.subr.mxu0 0.0
      %2801 = vmatpush1.msra.mxu0 0.0
      %2802 = vmatprep.subr.mxu0 0.0
      %2803 = vmatpush1.msra.mxu0 0.0
      %2804 = vmatprep.subr.mxu0 0.0
      %2805 = vmatpush1.msra.mxu0 0.0
      %2806 = vmatprep.subr.mxu0 0.0
      %2807 = vmatpush1.msra.mxu0 0.0
      %2808 = vmatprep.subr.mxu0 0.0
      %2809 = vmatpush1.msra.mxu0 0.0
      %2810 = vmatprep.subr.mxu0 0.0
      %2811 = vmatpush1.msra.mxu0 0.0
      %2812 = vmatprep.subr.mxu0 0.0
      %2813 = vmatpush1.msra.mxu0 0.0
      %2814 = vmatprep.subr.mxu0 0.0
      %2815 = vmatpush1.msra.mxu0 %v2782
      %2816 = vmatprep.subr.mxu0 0.0
      %2817 = vmatpush2.msra.mxu0 0.0
      %2818 = vmatprep.subr.mxu0 0.0
      %2819 = vmatpush2.msra.mxu0 0.0
      %2820 = vmatprep.subr.mxu0 0.0
      %2821 = vmatpush2.msra.mxu0 0.0
      %2822 = vmatprep.subr.mxu0 0.0
      %2823 = vmatpush2.msra.mxu0 0.0
      %2824 = vmatprep.subr.mxu0 0.0
      %2825 = vmatpush2.msra.mxu0 0.0
      %2826 = vmatprep.subr.mxu0 0.0
      %2827 = vmatpush2.msra.mxu0 0.0
      %2828 = vmatprep.subr.mxu0 0.0
      %2829 = vmatpush2.msra.mxu0 0.0
      %2830 = vmatprep.subr.mxu0 0.0
      %2831 = vmatpush2.msra.mxu0 0.0
      %2832 = vmatprep.subr.mxu0 0.0
      %2833 = vmatpush2.msra.mxu0 0.0
      %2834 = vmatprep.subr.mxu0 0.0
      %2835 = vmatpush2.msra.mxu0 0.0
      %2836 = vmatprep.subr.mxu0 0.0
      %2837 = vmatpush2.msra.mxu0 0.0
      %2838 = vmatprep.subr.mxu0 0.0
      %2839 = vmatpush2.msra.mxu0 0.0
      %2840 = vmatprep.subr.mxu0 0.0
      %2841 = vmatpush2.msra.mxu0 0.0
      %2842 = vmatprep.subr.mxu0 0.0
      %2843 = vmatpush2.msra.mxu0 0.0
      %2844 = vmatprep.subr.mxu0 0.0
      %2845 = vmatpush2.msra.mxu0 0.0
      %2846 = vmatprep.subr.mxu0 0.0
      %2847 = vmatpush2.msra.mxu0 0.0
      %2848 = vmatprep.mubr.f32.mxu0 0.0
      %2849 = vmatmul.mubr.f32.gmra.mxu0 %v2402
      %v2850 = vpop.f32.mrf.mxu0
      %v2851 = vadd.f32 0.0, %v2850
      %v2852 = vpop.f32.mrf.mxu0
      %2853 = vmatprep.mubr.f32.mxu0 0.0
      %2854 = vmatmul.mubr.f32.gmra.mxu0 %v2404
      %v2855 = vpop.f32.mrf.mxu0
      %v2856 = vadd.f32 0.0, %v2855
      %v2857 = vpop.f32.mrf.mxu0
      %2858 = vmatprep.mubr.f32.mxu0 0.0
      %2859 = vmatmul.mubr.f32.gmra.mxu0 %v2406
      %v2860 = vpop.f32.mrf.mxu0
      %v2861 = vadd.f32 0.0, %v2860
      %v2862 = vpop.f32.mrf.mxu0
      %2863 = vmatprep.mubr.f32.mxu0 0.0
      %2864 = vmatmul.mubr.f32.gmra.mxu0 %v2408
      %v2865 = vpop.f32.mrf.mxu0
      %v2866 = vadd.f32 0.0, %v2865
      %v2867 = vpop.f32.mrf.mxu0
      %2868 = vmatprep.mubr.f32.mxu0 0.0
      %2869 = vmatmul.mubr.f32.gmra.mxu0 %v2410
      %v2870 = vpop.f32.mrf.mxu0
      %v2871 = vadd.f32 0.0, %v2870
      %v2872 = vpop.f32.mrf.mxu0
      %2873 = vmatprep.mubr.f32.mxu0 0.0
      %2874 = vmatmul.mubr.f32.gmra.mxu0 %v2412
      %v2875 = vpop.f32.mrf.mxu0
      %v2876 = vadd.f32 0.0, %v2875
      %v2877 = vpop.f32.mrf.mxu0
      %2878 = vmatprep.mubr.f32.mxu0 0.0
      %2879 = vmatmul.mubr.f32.gmra.mxu0 %v2414
      %v2880 = vpop.f32.mrf.mxu0
      %v2881 = vadd.f32 0.0, %v2880
      %v2882 = vpop.f32.mrf.mxu0
      %2883 = vmatprep.mubr.f32.mxu0 0.0
      %2884 = vmatmul.mubr.f32.gmra.mxu0 %v2416
      %v2885 = vpop.f32.mrf.mxu0
      %v2886 = vadd.f32 0.0, %v2885
      %v2887 = vpop.f32.mrf.mxu0
      %2888 = vmatprep.mubr.f32.mxu0 0.0
      %2889 = vmatmul.mubr.f32.gmra.mxu0 %v2418
      %v2890 = vpop.f32.mrf.mxu0
      %v2891 = vadd.f32 0.0, %v2890
      %v2892 = vpop.f32.mrf.mxu0
      %2893 = vmatprep.mubr.f32.mxu0 0.0
      %2894 = vmatmul.mubr.f32.gmra.mxu0 %v2420
      %v2895 = vpop.f32.mrf.mxu0
      %v2896 = vadd.f32 0.0, %v2895
      %v2897 = vpop.f32.mrf.mxu0
      %2898 = vmatprep.mubr.f32.mxu0 0.0
      %2899 = vmatmul.mubr.f32.gmra.mxu0 %v2422
      %v2900 = vpop.f32.mrf.mxu0
      %v2901 = vadd.f32 0.0, %v2900
      %v2902 = vpop.f32.mrf.mxu0
      %2903 = vmatprep.mubr.f32.mxu0 0.0
      %2904 = vmatmul.mubr.f32.gmra.mxu0 %v2424
      %v2905 = vpop.f32.mrf.mxu0
      %v2906 = vadd.f32 0.0, %v2905
      %v2907 = vpop.f32.mrf.mxu0
      %2908 = vmatprep.mubr.f32.mxu0 0.0
      %2909 = vmatmul.mubr.f32.gmra.mxu0 %v2426
      %v2910 = vpop.f32.mrf.mxu0
      %v2911 = vadd.f32 0.0, %v2910
      %v2912 = vpop.f32.mrf.mxu0
      %2913 = vmatprep.mubr.f32.mxu0 0.0
      %2914 = vmatmul.mubr.f32.gmra.mxu0 %v2428
      %v2915 = vpop.f32.mrf.mxu0
      %v2916 = vadd.f32 0.0, %v2915
      %v2917 = vpop.f32.mrf.mxu0
      %2918 = vmatprep.mubr.f32.mxu0 0.0
      %2919 = vmatmul.mubr.f32.gmra.mxu0 %v2430
      %v2920 = vpop.f32.mrf.mxu0
      %v2921 = vadd.f32 0.0, %v2920
      %v2922 = vpop.f32.mrf.mxu0
      %2923 = vmatprep.mubr.f32.mxu0 0.0
      %2924 = vmatmul.mubr.f32.gmra.mxu0 %v2432
      %v2925 = vpop.f32.mrf.mxu0
      %v2926 = vadd.f32 0.0, %v2925
      %v2927 = vpop.f32.mrf.mxu0
      %2928 = vmatprep.mubr.f32.mxu0 0.0
      %2929 = vmatmul.mubr.f32.gmra.mxu0 %v2434
      %v2930 = vpop.f32.mrf.mxu0
      %v2931 = vadd.f32 0.0, %v2930
      %v2932 = vpop.f32.mrf.mxu0
      %2933 = vmatprep.mubr.f32.mxu0 0.0
      %2934 = vmatmul.mubr.f32.gmra.mxu0 %v2436
      %v2935 = vpop.f32.mrf.mxu0
      %v2936 = vadd.f32 0.0, %v2935
      %v2937 = vpop.f32.mrf.mxu0
      %2938 = vmatprep.mubr.f32.mxu0 0.0
      %2939 = vmatmul.mubr.f32.gmra.mxu0 %v2438
      %v2940 = vpop.f32.mrf.mxu0
      %v2941 = vadd.f32 0.0, %v2940
      %v2942 = vpop.f32.mrf.mxu0
      %2943 = vmatprep.mubr.f32.mxu0 0.0
      %2944 = vmatmul.mubr.f32.gmra.mxu0 %v2440
      %v2945 = vpop.f32.mrf.mxu0
      %v2946 = vadd.f32 0.0, %v2945
      %v2947 = vpop.f32.mrf.mxu0
      %2948 = vmatprep.mubr.f32.mxu0 0.0
      %2949 = vmatmul.mubr.f32.gmra.mxu0 %v2442
      %v2950 = vpop.f32.mrf.mxu0
      %v2951 = vadd.f32 0.0, %v2950
      %v2952 = vpop.f32.mrf.mxu0
      %2953 = vmatprep.mubr.f32.mxu0 0.0
      %2954 = vmatmul.mubr.f32.gmra.mxu0 %v2444
      %v2955 = vpop.f32.mrf.mxu0
      %v2956 = vadd.f32 0.0, %v2955
      %v2957 = vpop.f32.mrf.mxu0
      %2958 = vmatprep.mubr.f32.mxu0 0.0
      %2959 = vmatmul.mubr.f32.gmra.mxu0 %v2446
      %v2960 = vpop.f32.mrf.mxu0
      %v2961 = vadd.f32 0.0, %v2960
      %v2962 = vpop.f32.mrf.mxu0
      %2963 = vmatprep.mubr.f32.mxu0 0.0
      %2964 = vmatmul.mubr.f32.gmra.mxu0 %v2448
      %v2965 = vpop.f32.mrf.mxu0
      %v2966 = vadd.f32 0.0, %v2965
      %v2967 = vpop.f32.mrf.mxu0
      %2968 = vmatprep.mubr.f32.mxu0 0.0
      %2969 = vmatmul.mubr.f32.gmra.mxu0 %v2450
      %v2970 = vpop.f32.mrf.mxu0
      %v2971 = vadd.f32 0.0, %v2970
      %v2972 = vpop.f32.mrf.mxu0
      %2973 = vmatprep.mubr.f32.mxu0 0.0
      %2974 = vmatmul.mubr.f32.gmra.mxu0 %v2452
      %v2975 = vpop.f32.mrf.mxu0
      %v2976 = vadd.f32 0.0, %v2975
      %v2977 = vpop.f32.mrf.mxu0
      %2978 = vmatprep.mubr.f32.mxu0 0.0
      %2979 = vmatmul.mubr.f32.gmra.mxu0 %v2454
      %v2980 = vpop.f32.mrf.mxu0
      %v2981 = vadd.f32 0.0, %v2980
      %v2982 = vpop.f32.mrf.mxu0
      %2983 = vmatprep.mubr.f32.mxu0 0.0
      %2984 = vmatmul.mubr.f32.gmra.mxu0 %v2456
      %v2985 = vpop.f32.mrf.mxu0
      %v2986 = vadd.f32 0.0, %v2985
      %v2987 = vpop.f32.mrf.mxu0
      %2988 = vmatprep.mubr.f32.mxu0 0.0
      %2989 = vmatmul.mubr.f32.gmra.mxu0 %v2458
      %v2990 = vpop.f32.mrf.mxu0
      %v2991 = vadd.f32 0.0, %v2990
      %v2992 = vpop.f32.mrf.mxu0
      %2993 = vmatprep.mubr.f32.mxu0 0.0
      %2994 = vmatmul.mubr.f32.gmra.mxu0 %v2460
      %v2995 = vpop.f32.mrf.mxu0
      %v2996 = vadd.f32 0.0, %v2995
      %v2997 = vpop.f32.mrf.mxu0
      %2998 = vmatprep.mubr.f32.mxu0 0.0
      %2999 = vmatmul.mubr.f32.gmra.mxu0 %v2462
      %v3000 = vpop.f32.mrf.mxu0
      %v3001 = vadd.f32 0.0, %v3000
      %v3002 = vpop.f32.mrf.mxu0
      %3003 = vmatprep.mubr.f32.mxu0 0.0
      %3004 = vmatmul.mubr.f32.gmra.mxu0 %v2464
      %v3005 = vpop.f32.mrf.mxu0
      %v3006 = vadd.f32 0.0, %v3005
      %v3007 = vpop.f32.mrf.mxu0
      %3008 = vmatprep.mubr.f32.mxu0 0.0
      %3009 = vmatmul.mubr.f32.gmra.mxu0 %v2466
      %v3010 = vpop.f32.mrf.mxu0
      %v3011 = vadd.f32 0.0, %v3010
      %v3012 = vpop.f32.mrf.mxu0
      %3013 = vmatprep.mubr.f32.mxu0 0.0
      %3014 = vmatmul.mubr.f32.gmra.mxu0 %v2468
      %v3015 = vpop.f32.mrf.mxu0
      %v3016 = vadd.f32 0.0, %v3015
      %v3017 = vpop.f32.mrf.mxu0
      %3018 = vmatprep.mubr.f32.mxu0 0.0
      %3019 = vmatmul.mubr.f32.gmra.mxu0 %v2470
      %v3020 = vpop.f32.mrf.mxu0
      %v3021 = vadd.f32 0.0, %v3020
      %v3022 = vpop.f32.mrf.mxu0
      %3023 = vmatprep.mubr.f32.mxu0 0.0
      %3024 = vmatmul.mubr.f32.gmra.mxu0 %v2472
      %v3025 = vpop.f32.mrf.mxu0
      %v3026 = vadd.f32 0.0, %v3025
      %v3027 = vpop.f32.mrf.mxu0
      %3028 = vmatprep.mubr.f32.mxu0 0.0
      %3029 = vmatmul.mubr.f32.gmra.mxu0 %v2777
      %v3030 = vpop.f32.mrf.mxu0
      %v3031 = vadd.f32 0.0, %v3030
      %v3032 = vpop.f32.mrf.mxu0
      %3033 = vmatprep.mubr.f32.mxu0 0.0
      %3034 = vmatmul.mubr.f32.gmra.mxu0 %v2779
      %v3035 = vpop.f32.mrf.mxu0
      %v3036 = vadd.f32 0.0, %v3035
      %v3037 = vpop.f32.mrf.mxu0
      %3038 = vdwg.mxu0
      %v3039 = vadd.f32 %v2732, %v2851
      %v3040 = vadd.f32 %v2733, %v2856
      %v3041 = vadd.f32 %v2734, %v2861
      %v3042 = vadd.f32 %v2735, %v2866
      %v3043 = vadd.f32 %v2736, %v2871
      %v3044 = vadd.f32 %v2737, %v2876
      %v3045 = vadd.f32 %v2738, %v2881
      %v3046 = vadd.f32 %v2739, %v2886
      %v3047 = vadd.f32 %v2740, %v2891
      %v3048 = vadd.f32 %v2741, %v2896
      %v3049 = vadd.f32 %v2742, %v2901
      %v3050 = vadd.f32 %v2743, %v2906
      %v3051 = vadd.f32 %v2744, %v2911
      %v3052 = vadd.f32 %v2745, %v2916
      %v3053 = vadd.f32 %v2746, %v2921
      %v3054 = vadd.f32 %v2747, %v2926
      %v3055 = vadd.f32 %v2748, %v2931
      %v3056 = vadd.f32 %v2749, %v2936
      %v3057 = vadd.f32 %v2750, %v2941
      %v3058 = vadd.f32 %v2751, %v2946
      %v3059 = vadd.f32 %v2752, %v2951
      %v3060 = vadd.f32 %v2753, %v2956
      %v3061 = vadd.f32 %v2754, %v2961
      %v3062 = vadd.f32 %v2755, %v2966
      %v3063 = vadd.f32 %v2756, %v2971
      %v3064 = vadd.f32 %v2757, %v2976
      %v3065 = vadd.f32 %v2758, %v2981
      %v3066 = vadd.f32 %v2759, %v2986
      %v3067 = vadd.f32 %v2760, %v2991
      %v3068 = vadd.f32 %v2761, %v2996
      %v3069 = vadd.f32 %v2762, %v3001
      %v3070 = vadd.f32 %v2763, %v3006
      %v3071 = vadd.f32 %v2764, %v3011
      %v3072 = vadd.f32 %v2765, %v3016
      %v3073 = vadd.f32 %v2766, %v3021
      %v3074 = vadd.f32 %v2767, %v3026
      %v3075 = vadd.f32 %v2768, %v3031
      %v3076 = vadd.f32 %v2769, %v3036
      %v3077 = vld [vmem:[%s1 + $0x1c] sm:$0xf]
      %vm3078 = vcmask 1042432
      %v3079 = vrot.slane %v283, 5
      %v3080 = vrot.slane %v284, 5
      %v3081 = vsel %vm3078, %v3079, %v3080
      %v3082 = vrot.slane %v285, 5
      %v3083 = vsel %vm3078, %v3080, %v3082
      %v3084 = vrot.slane %v286, 5
      %v3085 = vsel %vm3078, %v3082, %v3084
      %v3086 = vrot.slane %v287, 5
      %v3087 = vsel %vm3078, %v3084, %v3086
      %v3088 = vrot.slane %v288, 5
      %v3089 = vsel %vm3078, %v3086, %v3088
      %v3090 = vrot.slane %v289, 5
      %v3091 = vsel %vm3078, %v3088, %v3090
      %v3092 = vrot.slane %v290, 5
      %v3093 = vsel %vm3078, %v3090, %v3092
      %v3094 = vrot.slane %v291, 5
      %v3095 = vsel %vm3078, %v3092, %v3094
      %v3096 = vrot.slane %v292, 5
      %v3097 = vsel %vm3078, %v3094, %v3096
      %v3098 = vrot.slane %v293, 5
      %v3099 = vsel %vm3078, %v3096, %v3098
      %v3100 = vrot.slane %v294, 5
      %v3101 = vsel %vm3078, %v3098, %v3100
      %v3102 = vrot.slane %v295, 5
      %v3103 = vsel %vm3078, %v3100, %v3102
      %v3104 = vrot.slane %v296, 5
      %v3105 = vsel %vm3078, %v3102, %v3104
      %v3106 = vrot.slane %v297, 5
      %v3107 = vsel %vm3078, %v3104, %v3106
      %v3108 = vrot.slane %v298, 5
      %v3109 = vsel %vm3078, %v3106, %v3108
      %v3110 = vrot.slane %v299, 5
      %v3111 = vsel %vm3078, %v3108, %v3110
      %v3112 = vrot.slane %v300, 5
      %v3113 = vsel %vm3078, %v3110, %v3112
      %v3114 = vrot.slane %v301, 5
      %v3115 = vsel %vm3078, %v3112, %v3114
      %v3116 = vrot.slane %v302, 5
      %v3117 = vsel %vm3078, %v3114, %v3116
      %v3118 = vrot.slane %v303, 5
      %v3119 = vsel %vm3078, %v3116, %v3118
      %v3120 = vrot.slane %v304, 5
      %v3121 = vsel %vm3078, %v3118, %v3120
      %v3122 = vrot.slane %v305, 5
      %v3123 = vsel %vm3078, %v3120, %v3122
      %v3124 = vrot.slane %v306, 5
      %v3125 = vsel %vm3078, %v3122, %v3124
      %v3126 = vrot.slane %v307, 5
      %v3127 = vsel %vm3078, %v3124, %v3126
      %v3128 = vrot.slane %v308, 5
      %v3129 = vsel %vm3078, %v3126, %v3128
      %v3130 = vrot.slane %v309, 5
      %v3131 = vsel %vm3078, %v3128, %v3130
      %v3132 = vrot.slane %v310, 5
      %v3133 = vsel %vm3078, %v3130, %v3132
      %v3134 = vrot.slane %v311, 5
      %v3135 = vsel %vm3078, %v3132, %v3134
      %v3136 = vrot.slane %v312, 5
      %v3137 = vsel %vm3078, %v3134, %v3136
      %v3138 = vrot.slane %v313, 5
      %v3139 = vsel %vm3078, %v3136, %v3138
      %v3140 = vrot.slane %v314, 5
      %v3141 = vsel %vm3078, %v3138, %v3140
      %v3142 = vrot.slane %v315, 5
      %v3143 = vsel %vm3078, %v3140, %v3142
      %v3144 = vrot.slane %v316, 5
      %v3145 = vsel %vm3078, %v3142, %v3144
      %v3146 = vrot.slane %v317, 5
      %v3147 = vsel %vm3078, %v3144, %v3146
      %v3148 = vrot.slane %v318, 5
      %v3149 = vsel %vm3078, %v3146, %v3148
      %v3150 = vrot.slane %v319, 5
      %v3151 = vsel %vm3078, %v3148, %v3150
      %v3152 = vrot.slane %v320, 5
      %v3153 = vsel %vm3078, %v3150, %v3152
      %v3154 = vrot.slane %v321, 5
      %v3155 = vsel %vm3078, %v3152, %v3154
      %v3156 = vsel %vm441, %v3081, 0
      %v3158 = vsel %vm441, %v3083, 0
      %v3160 = vsel %vm441, %v3085, 0
      %v3162 = vsel %vm441, %v3087, 0
      %v3164 = vsel %vm441, %v3089, 0
      %v3166 = vsel %vm441, %v3091, 0
      %v3168 = vsel %vm441, %v3093, 0
      %v3170 = vsel %vm441, %v3095, 0
      %v3172 = vsel %vm441, %v3097, 0
      %v3174 = vsel %vm441, %v3099, 0
      %v3176 = vsel %vm441, %v3101, 0
      %v3178 = vsel %vm441, %v3103, 0
      %v3180 = vsel %vm441, %v3105, 0
      %v3182 = vsel %vm441, %v3107, 0
      %v3184 = vsel %vm441, %v3109, 0
      %v3186 = vsel %vm441, %v3111, 0
      %v3188 = vsel %vm441, %v3113, 0
      %v3190 = vsel %vm441, %v3115, 0
      %v3192 = vsel %vm441, %v3117, 0
      %v3194 = vsel %vm441, %v3119, 0
      %v3196 = vsel %vm441, %v3121, 0
      %v3198 = vsel %vm441, %v3123, 0
      %v3200 = vsel %vm441, %v3125, 0
      %v3202 = vsel %vm441, %v3127, 0
      %v3204 = vsel %vm441, %v3129, 0
      %v3206 = vsel %vm441, %v3131, 0
      %v3208 = vsel %vm441, %v3133, 0
      %v3210 = vsel %vm441, %v3135, 0
      %v3212 = vsel %vm441, %v3137, 0
      %v3214 = vsel %vm441, %v3139, 0
      %v3216 = vsel %vm441, %v3141, 0
      %v3218 = vsel %vm441, %v3143, 0
      %v3220 = vsel %vm441, %v3145, 0
      %v3222 = vsel %vm441, %v3147, 0
      %v3224 = vsel %vm441, %v3149, 0
      %v3226 = vsel %vm441, %v3151, 0
      %v3228 = vsel %vm441, %v3153, 0
      %v3230 = vsel %vm441, %v3155, 0
      %v3233 = vsel %vm518, %v3077, 0
      %3235 = vmatprep.subr.mxu0 0.0
      %3236 = vmatpush1.msra.mxu0 0.0
      %3237 = vmatprep.subr.mxu0 0.0
      %3238 = vmatpush1.msra.mxu0 0.0
      %3239 = vmatprep.subr.mxu0 0.0
      %3240 = vmatpush1.msra.mxu0 0.0
      %3241 = vmatprep.subr.mxu0 0.0
      %3242 = vmatpush1.msra.mxu0 0.0
      %3243 = vmatprep.subr.mxu0 0.0
      %3244 = vmatpush1.msra.mxu0 0.0
      %3245 = vmatprep.subr.mxu0 0.0
      %3246 = vmatpush1.msra.mxu0 0.0
      %3247 = vmatprep.subr.mxu0 0.0
      %3248 = vmatpush1.msra.mxu0 0.0
      %3249 = vmatprep.subr.mxu0 0.0
      %3250 = vmatpush1.msra.mxu0 0.0
      %3251 = vmatprep.subr.mxu0 0.0
      %3252 = vmatpush1.msra.mxu0 0.0
      %3253 = vmatprep.subr.mxu0 0.0
      %3254 = vmatpush1.msra.mxu0 0.0
      %3255 = vmatprep.subr.mxu0 0.0
      %3256 = vmatpush1.msra.mxu0 0.0
      %3257 = vmatprep.subr.mxu0 0.0
      %3258 = vmatpush1.msra.mxu0 0.0
      %3259 = vmatprep.subr.mxu0 0.0
      %3260 = vmatpush1.msra.mxu0 0.0
      %3261 = vmatprep.subr.mxu0 0.0
      %3262 = vmatpush1.msra.mxu0 0.0
      %3263 = vmatprep.subr.mxu0 0.0
      %3264 = vmatpush1.msra.mxu0 0.0
      %3265 = vmatprep.subr.mxu0 0.0
      %3266 = vmatpush1.msra.mxu0 %v3233
      %3267 = vmatprep.subr.mxu0 0.0
      %3268 = vmatpush2.msra.mxu0 0.0
      %3269 = vmatprep.subr.mxu0 0.0
      %3270 = vmatpush2.msra.mxu0 0.0
      %3271 = vmatprep.subr.mxu0 0.0
      %3272 = vmatpush2.msra.mxu0 0.0
      %3273 = vmatprep.subr.mxu0 0.0
      %3274 = vmatpush2.msra.mxu0 0.0
      %3275 = vmatprep.subr.mxu0 0.0
      %3276 = vmatpush2.msra.mxu0 0.0
      %3277 = vmatprep.subr.mxu0 0.0
      %3278 = vmatpush2.msra.mxu0 0.0
      %3279 = vmatprep.subr.mxu0 0.0
      %3280 = vmatpush2.msra.mxu0 0.0
      %3281 = vmatprep.subr.mxu0 0.0
      %3282 = vmatpush2.msra.mxu0 0.0
      %3283 = vmatprep.subr.mxu0 0.0
      %3284 = vmatpush2.msra.mxu0 0.0
      %3285 = vmatprep.subr.mxu0 0.0
      %3286 = vmatpush2.msra.mxu0 0.0
      %3287 = vmatprep.subr.mxu0 0.0
      %3288 = vmatpush2.msra.mxu0 0.0
      %3289 = vmatprep.subr.mxu0 0.0
      %3290 = vmatpush2.msra.mxu0 0.0
      %3291 = vmatprep.subr.mxu0 0.0
      %3292 = vmatpush2.msra.mxu0 0.0
      %3293 = vmatprep.subr.mxu0 0.0
      %3294 = vmatpush2.msra.mxu0 0.0
      %3295 = vmatprep.subr.mxu0 0.0
      %3296 = vmatpush2.msra.mxu0 0.0
      %3297 = vmatprep.subr.mxu0 0.0
      %3298 = vmatpush2.msra.mxu0 0.0
      %3299 = vmatprep.mubr.f32.mxu0 0.0
      %3300 = vmatmul.mubr.f32.gmra.mxu0 %v3156
      %v3301 = vpop.f32.mrf.mxu0
      %v3302 = vadd.f32 0.0, %v3301
      %v3303 = vpop.f32.mrf.mxu0
      %3304 = vmatprep.mubr.f32.mxu0 0.0
      %3305 = vmatmul.mubr.f32.gmra.mxu0 %v3158
      %v3306 = vpop.f32.mrf.mxu0
      %v3307 = vadd.f32 0.0, %v3306
      %v3308 = vpop.f32.mrf.mxu0
      %3309 = vmatprep.mubr.f32.mxu0 0.0
      %3310 = vmatmul.mubr.f32.gmra.mxu0 %v3160
      %v3311 = vpop.f32.mrf.mxu0
      %v3312 = vadd.f32 0.0, %v3311
      %v3313 = vpop.f32.mrf.mxu0
      %3314 = vmatprep.mubr.f32.mxu0 0.0
      %3315 = vmatmul.mubr.f32.gmra.mxu0 %v3162
      %v3316 = vpop.f32.mrf.mxu0
      %v3317 = vadd.f32 0.0, %v3316
      %v3318 = vpop.f32.mrf.mxu0
      %3319 = vmatprep.mubr.f32.mxu0 0.0
      %3320 = vmatmul.mubr.f32.gmra.mxu0 %v3164
      %v3321 = vpop.f32.mrf.mxu0
      %v3322 = vadd.f32 0.0, %v3321
      %v3323 = vpop.f32.mrf.mxu0
      %3324 = vmatprep.mubr.f32.mxu0 0.0
      %3325 = vmatmul.mubr.f32.gmra.mxu0 %v3166
      %v3326 = vpop.f32.mrf.mxu0
      %v3327 = vadd.f32 0.0, %v3326
      %v3328 = vpop.f32.mrf.mxu0
      %3329 = vmatprep.mubr.f32.mxu0 0.0
      %3330 = vmatmul.mubr.f32.gmra.mxu0 %v3168
      %v3331 = vpop.f32.mrf.mxu0
      %v3332 = vadd.f32 0.0, %v3331
      %v3333 = vpop.f32.mrf.mxu0
      %3334 = vmatprep.mubr.f32.mxu0 0.0
      %3335 = vmatmul.mubr.f32.gmra.mxu0 %v3170
      %v3336 = vpop.f32.mrf.mxu0
      %v3337 = vadd.f32 0.0, %v3336
      %v3338 = vpop.f32.mrf.mxu0
      %3339 = vmatprep.mubr.f32.mxu0 0.0
      %3340 = vmatmul.mubr.f32.gmra.mxu0 %v3172
      %v3341 = vpop.f32.mrf.mxu0
      %v3342 = vadd.f32 0.0, %v3341
      %v3343 = vpop.f32.mrf.mxu0
      %3344 = vmatprep.mubr.f32.mxu0 0.0
      %3345 = vmatmul.mubr.f32.gmra.mxu0 %v3174
      %v3346 = vpop.f32.mrf.mxu0
      %v3347 = vadd.f32 0.0, %v3346
      %v3348 = vpop.f32.mrf.mxu0
      %3349 = vmatprep.mubr.f32.mxu0 0.0
      %3350 = vmatmul.mubr.f32.gmra.mxu0 %v3176
      %v3351 = vpop.f32.mrf.mxu0
      %v3352 = vadd.f32 0.0, %v3351
      %v3353 = vpop.f32.mrf.mxu0
      %3354 = vmatprep.mubr.f32.mxu0 0.0
      %3355 = vmatmul.mubr.f32.gmra.mxu0 %v3178
      %v3356 = vpop.f32.mrf.mxu0
      %v3357 = vadd.f32 0.0, %v3356
      %v3358 = vpop.f32.mrf.mxu0
      %3359 = vmatprep.mubr.f32.mxu0 0.0
      %3360 = vmatmul.mubr.f32.gmra.mxu0 %v3180
      %v3361 = vpop.f32.mrf.mxu0
      %v3362 = vadd.f32 0.0, %v3361
      %v3363 = vpop.f32.mrf.mxu0
      %3364 = vmatprep.mubr.f32.mxu0 0.0
      %3365 = vmatmul.mubr.f32.gmra.mxu0 %v3182
      %v3366 = vpop.f32.mrf.mxu0
      %v3367 = vadd.f32 0.0, %v3366
      %v3368 = vpop.f32.mrf.mxu0
      %3369 = vmatprep.mubr.f32.mxu0 0.0
      %3370 = vmatmul.mubr.f32.gmra.mxu0 %v3184
      %v3371 = vpop.f32.mrf.mxu0
      %v3372 = vadd.f32 0.0, %v3371
      %v3373 = vpop.f32.mrf.mxu0
      %3374 = vmatprep.mubr.f32.mxu0 0.0
      %3375 = vmatmul.mubr.f32.gmra.mxu0 %v3186
      %v3376 = vpop.f32.mrf.mxu0
      %v3377 = vadd.f32 0.0, %v3376
      %v3378 = vpop.f32.mrf.mxu0
      %3379 = vmatprep.mubr.f32.mxu0 0.0
      %3380 = vmatmul.mubr.f32.gmra.mxu0 %v3188
      %v3381 = vpop.f32.mrf.mxu0
      %v3382 = vadd.f32 0.0, %v3381
      %v3383 = vpop.f32.mrf.mxu0
      %3384 = vmatprep.mubr.f32.mxu0 0.0
      %3385 = vmatmul.mubr.f32.gmra.mxu0 %v3190
      %v3386 = vpop.f32.mrf.mxu0
      %v3387 = vadd.f32 0.0, %v3386
      %v3388 = vpop.f32.mrf.mxu0
      %3389 = vmatprep.mubr.f32.mxu0 0.0
      %3390 = vmatmul.mubr.f32.gmra.mxu0 %v3192
      %v3391 = vpop.f32.mrf.mxu0
      %v3392 = vadd.f32 0.0, %v3391
      %v3393 = vpop.f32.mrf.mxu0
      %3394 = vmatprep.mubr.f32.mxu0 0.0
      %3395 = vmatmul.mubr.f32.gmra.mxu0 %v3194
      %v3396 = vpop.f32.mrf.mxu0
      %v3397 = vadd.f32 0.0, %v3396
      %v3398 = vpop.f32.mrf.mxu0
      %3399 = vmatprep.mubr.f32.mxu0 0.0
      %3400 = vmatmul.mubr.f32.gmra.mxu0 %v3196
      %v3401 = vpop.f32.mrf.mxu0
      %v3402 = vadd.f32 0.0, %v3401
      %v3403 = vpop.f32.mrf.mxu0
      %3404 = vmatprep.mubr.f32.mxu0 0.0
      %3405 = vmatmul.mubr.f32.gmra.mxu0 %v3198
      %v3406 = vpop.f32.mrf.mxu0
      %v3407 = vadd.f32 0.0, %v3406
      %v3408 = vpop.f32.mrf.mxu0
      %3409 = vmatprep.mubr.f32.mxu0 0.0
      %3410 = vmatmul.mubr.f32.gmra.mxu0 %v3200
      %v3411 = vpop.f32.mrf.mxu0
      %v3412 = vadd.f32 0.0, %v3411
      %v3413 = vpop.f32.mrf.mxu0
      %3414 = vmatprep.mubr.f32.mxu0 0.0
      %3415 = vmatmul.mubr.f32.gmra.mxu0 %v3202
      %v3416 = vpop.f32.mrf.mxu0
      %v3417 = vadd.f32 0.0, %v3416
      %v3418 = vpop.f32.mrf.mxu0
      %3419 = vmatprep.mubr.f32.mxu0 0.0
      %3420 = vmatmul.mubr.f32.gmra.mxu0 %v3204
      %v3421 = vpop.f32.mrf.mxu0
      %v3422 = vadd.f32 0.0, %v3421
      %v3423 = vpop.f32.mrf.mxu0
      %3424 = vmatprep.mubr.f32.mxu0 0.0
      %3425 = vmatmul.mubr.f32.gmra.mxu0 %v3206
      %v3426 = vpop.f32.mrf.mxu0
      %v3427 = vadd.f32 0.0, %v3426
      %v3428 = vpop.f32.mrf.mxu0
      %3429 = vmatprep.mubr.f32.mxu0 0.0
      %3430 = vmatmul.mubr.f32.gmra.mxu0 %v3208
      %v3431 = vpop.f32.mrf.mxu0
      %v3432 = vadd.f32 0.0, %v3431
      %v3433 = vpop.f32.mrf.mxu0
      %3434 = vmatprep.mubr.f32.mxu0 0.0
      %3435 = vmatmul.mubr.f32.gmra.mxu0 %v3210
      %v3436 = vpop.f32.mrf.mxu0
      %v3437 = vadd.f32 0.0, %v3436
      %v3438 = vpop.f32.mrf.mxu0
      %3439 = vmatprep.mubr.f32.mxu0 0.0
      %3440 = vmatmul.mubr.f32.gmra.mxu0 %v3212
      %v3441 = vpop.f32.mrf.mxu0
      %v3442 = vadd.f32 0.0, %v3441
      %v3443 = vpop.f32.mrf.mxu0
      %3444 = vmatprep.mubr.f32.mxu0 0.0
      %3445 = vmatmul.mubr.f32.gmra.mxu0 %v3214
      %v3446 = vpop.f32.mrf.mxu0
      %v3447 = vadd.f32 0.0, %v3446
      %v3448 = vpop.f32.mrf.mxu0
      %3449 = vmatprep.mubr.f32.mxu0 0.0
      %3450 = vmatmul.mubr.f32.gmra.mxu0 %v3216
      %v3451 = vpop.f32.mrf.mxu0
      %v3452 = vadd.f32 0.0, %v3451
      %v3453 = vpop.f32.mrf.mxu0
      %3454 = vmatprep.mubr.f32.mxu0 0.0
      %3455 = vmatmul.mubr.f32.gmra.mxu0 %v3218
      %v3456 = vpop.f32.mrf.mxu0
      %v3457 = vadd.f32 0.0, %v3456
      %v3458 = vpop.f32.mrf.mxu0
      %3459 = vmatprep.mubr.f32.mxu0 0.0
      %3460 = vmatmul.mubr.f32.gmra.mxu0 %v3220
      %v3461 = vpop.f32.mrf.mxu0
      %v3462 = vadd.f32 0.0, %v3461
      %v3463 = vpop.f32.mrf.mxu0
      %3464 = vmatprep.mubr.f32.mxu0 0.0
      %3465 = vmatmul.mubr.f32.gmra.mxu0 %v3222
      %v3466 = vpop.f32.mrf.mxu0
      %v3467 = vadd.f32 0.0, %v3466
      %v3468 = vpop.f32.mrf.mxu0
      %3469 = vmatprep.mubr.f32.mxu0 0.0
      %3470 = vmatmul.mubr.f32.gmra.mxu0 %v3224
      %v3471 = vpop.f32.mrf.mxu0
      %v3472 = vadd.f32 0.0, %v3471
      %v3473 = vpop.f32.mrf.mxu0
      %3474 = vmatprep.mubr.f32.mxu0 0.0
      %3475 = vmatmul.mubr.f32.gmra.mxu0 %v3226
      %v3476 = vpop.f32.mrf.mxu0
      %v3477 = vadd.f32 0.0, %v3476
      %v3478 = vpop.f32.mrf.mxu0
      %3479 = vmatprep.mubr.f32.mxu0 0.0
      %3480 = vmatmul.mubr.f32.gmra.mxu0 %v3228
      %v3481 = vpop.f32.mrf.mxu0
      %v3482 = vadd.f32 0.0, %v3481
      %v3483 = vpop.f32.mrf.mxu0
      %3484 = vmatprep.mubr.f32.mxu0 0.0
      %3485 = vmatmul.mubr.f32.gmra.mxu0 %v3230
      %v3486 = vpop.f32.mrf.mxu0
      %v3487 = vadd.f32 0.0, %v3486
      %v3488 = vpop.f32.mrf.mxu0
      %3489 = vdwg.mxu0
      %v3490 = vadd.f32 %v3039, %v3302
      %v3491 = vadd.f32 %v3040, %v3307
      %v3492 = vadd.f32 %v3041, %v3312
      %v3493 = vadd.f32 %v3042, %v3317
      %v3494 = vadd.f32 %v3043, %v3322
      %v3495 = vadd.f32 %v3044, %v3327
      %v3496 = vadd.f32 %v3045, %v3332
      %v3497 = vadd.f32 %v3046, %v3337
      %v3498 = vadd.f32 %v3047, %v3342
      %v3499 = vadd.f32 %v3048, %v3347
      %v3500 = vadd.f32 %v3049, %v3352
      %v3501 = vadd.f32 %v3050, %v3357
      %v3502 = vadd.f32 %v3051, %v3362
      %v3503 = vadd.f32 %v3052, %v3367
      %v3504 = vadd.f32 %v3053, %v3372
      %v3505 = vadd.f32 %v3054, %v3377
      %v3506 = vadd.f32 %v3055, %v3382
      %v3507 = vadd.f32 %v3056, %v3387
      %v3508 = vadd.f32 %v3057, %v3392
      %v3509 = vadd.f32 %v3058, %v3397
      %v3510 = vadd.f32 %v3059, %v3402
      %v3511 = vadd.f32 %v3060, %v3407
      %v3512 = vadd.f32 %v3061, %v3412
      %v3513 = vadd.f32 %v3062, %v3417
      %v3514 = vadd.f32 %v3063, %v3422
      %v3515 = vadd.f32 %v3064, %v3427
      %v3516 = vadd.f32 %v3065, %v3432
      %v3517 = vadd.f32 %v3066, %v3437
      %v3518 = vadd.f32 %v3067, %v3442
      %v3519 = vadd.f32 %v3068, %v3447
      %v3520 = vadd.f32 %v3069, %v3452
      %v3521 = vadd.f32 %v3070, %v3457
      %v3522 = vadd.f32 %v3071, %v3462
      %v3523 = vadd.f32 %v3072, %v3467
      %v3524 = vadd.f32 %v3073, %v3472
      %v3525 = vadd.f32 %v3074, %v3477
      %v3526 = vadd.f32 %v3075, %v3482
      %v3527 = vadd.f32 %v3076, %v3487
      %v3528 = vld [vmem:[%s1 + $0x20] sm:$0xf]
      %vm3529 = vcmask 1041408
      %v3530 = vrot.slane %v283, 6
      %v3531 = vrot.slane %v284, 6
      %v3532 = vsel %vm3529, %v3530, %v3531
      %v3533 = vrot.slane %v285, 6
      %v3534 = vsel %vm3529, %v3531, %v3533
      %v3535 = vrot.slane %v286, 6
      %v3536 = vsel %vm3529, %v3533, %v3535
      %v3537 = vrot.slane %v287, 6
      %v3538 = vsel %vm3529, %v3535, %v3537
      %v3539 = vrot.slane %v288, 6
      %v3540 = vsel %vm3529, %v3537, %v3539
      %v3541 = vrot.slane %v289, 6
      %v3542 = vsel %vm3529, %v3539, %v3541
      %v3543 = vrot.slane %v290, 6
      %v3544 = vsel %vm3529, %v3541, %v3543
      %v3545 = vrot.slane %v291, 6
      %v3546 = vsel %vm3529, %v3543, %v3545
      %v3547 = vrot.slane %v292, 6
      %v3548 = vsel %vm3529, %v3545, %v3547
      %v3549 = vrot.slane %v293, 6
      %v3550 = vsel %vm3529, %v3547, %v3549
      %v3551 = vrot.slane %v294, 6
      %v3552 = vsel %vm3529, %v3549, %v3551
      %v3553 = vrot.slane %v295, 6
      %v3554 = vsel %vm3529, %v3551, %v3553
      %v3555 = vrot.slane %v296, 6
      %v3556 = vsel %vm3529, %v3553, %v3555
      %v3557 = vrot.slane %v297, 6
      %v3558 = vsel %vm3529, %v3555, %v3557
      %v3559 = vrot.slane %v298, 6
      %v3560 = vsel %vm3529, %v3557, %v3559
      %v3561 = vrot.slane %v299, 6
      %v3562 = vsel %vm3529, %v3559, %v3561
      %v3563 = vrot.slane %v300, 6
      %v3564 = vsel %vm3529, %v3561, %v3563
      %v3565 = vrot.slane %v301, 6
      %v3566 = vsel %vm3529, %v3563, %v3565
      %v3567 = vrot.slane %v302, 6
      %v3568 = vsel %vm3529, %v3565, %v3567
      %v3569 = vrot.slane %v303, 6
      %v3570 = vsel %vm3529, %v3567, %v3569
      %v3571 = vrot.slane %v304, 6
      %v3572 = vsel %vm3529, %v3569, %v3571
      %v3573 = vrot.slane %v305, 6
      %v3574 = vsel %vm3529, %v3571, %v3573
      %v3575 = vrot.slane %v306, 6
      %v3576 = vsel %vm3529, %v3573, %v3575
      %v3577 = vrot.slane %v307, 6
      %v3578 = vsel %vm3529, %v3575, %v3577
      %v3579 = vrot.slane %v308, 6
      %v3580 = vsel %vm3529, %v3577, %v3579
      %v3581 = vrot.slane %v309, 6
      %v3582 = vsel %vm3529, %v3579, %v3581
      %v3583 = vrot.slane %v310, 6
      %v3584 = vsel %vm3529, %v3581, %v3583
      %v3585 = vrot.slane %v311, 6
      %v3586 = vsel %vm3529, %v3583, %v3585
      %v3587 = vrot.slane %v312, 6
      %v3588 = vsel %vm3529, %v3585, %v3587
      %v3589 = vrot.slane %v313, 6
      %v3590 = vsel %vm3529, %v3587, %v3589
      %v3591 = vrot.slane %v314, 6
      %v3592 = vsel %vm3529, %v3589, %v3591
      %v3593 = vrot.slane %v315, 6
      %v3594 = vsel %vm3529, %v3591, %v3593
      %v3595 = vrot.slane %v316, 6
      %v3596 = vsel %vm3529, %v3593, %v3595
      %v3597 = vrot.slane %v317, 6
      %v3598 = vsel %vm3529, %v3595, %v3597
      %v3599 = vrot.slane %v318, 6
      %v3600 = vsel %vm3529, %v3597, %v3599
      %v3601 = vrot.slane %v319, 6
      %v3602 = vsel %vm3529, %v3599, %v3601
      %v3603 = vrot.slane %v320, 6
      %v3604 = vsel %vm3529, %v3601, %v3603
      %v3605 = vrot.slane %v321, 6
      %v3606 = vsel %vm3529, %v3603, %v3605
      %v3607 = vsel %vm441, %v3532, 0
      %v3609 = vsel %vm441, %v3534, 0
      %v3611 = vsel %vm441, %v3536, 0
      %v3613 = vsel %vm441, %v3538, 0
      %v3615 = vsel %vm441, %v3540, 0
      %v3617 = vsel %vm441, %v3542, 0
      %v3619 = vsel %vm441, %v3544, 0
      %v3621 = vsel %vm441, %v3546, 0
      %v3623 = vsel %vm441, %v3548, 0
      %v3625 = vsel %vm441, %v3550, 0
      %v3627 = vsel %vm441, %v3552, 0
      %v3629 = vsel %vm441, %v3554, 0
      %v3631 = vsel %vm441, %v3556, 0
      %v3633 = vsel %vm441, %v3558, 0
      %v3635 = vsel %vm441, %v3560, 0
      %v3637 = vsel %vm441, %v3562, 0
      %v3639 = vsel %vm441, %v3564, 0
      %v3641 = vsel %vm441, %v3566, 0
      %v3643 = vsel %vm441, %v3568, 0
      %v3645 = vsel %vm441, %v3570, 0
      %v3647 = vsel %vm441, %v3572, 0
      %v3649 = vsel %vm441, %v3574, 0
      %v3651 = vsel %vm441, %v3576, 0
      %v3653 = vsel %vm441, %v3578, 0
      %v3655 = vsel %vm441, %v3580, 0
      %v3657 = vsel %vm441, %v3582, 0
      %v3659 = vsel %vm441, %v3584, 0
      %v3661 = vsel %vm441, %v3586, 0
      %v3663 = vsel %vm441, %v3588, 0
      %v3665 = vsel %vm441, %v3590, 0
      %v3667 = vsel %vm441, %v3592, 0
      %v3669 = vsel %vm441, %v3594, 0
      %v3671 = vsel %vm441, %v3596, 0
      %v3673 = vsel %vm441, %v3598, 0
      %v3675 = vsel %vm441, %v3600, 0
      %v3677 = vsel %vm441, %v3602, 0
      %v3679 = vsel %vm441, %v3604, 0
      %v3681 = vsel %vm441, %v3606, 0
      %v3684 = vsel %vm518, %v3528, 0
      %3686 = vmatprep.subr.mxu0 0.0
      %3687 = vmatpush1.msra.mxu0 0.0
      %3688 = vmatprep.subr.mxu0 0.0
      %3689 = vmatpush1.msra.mxu0 0.0
      %3690 = vmatprep.subr.mxu0 0.0
      %3691 = vmatpush1.msra.mxu0 0.0
      %3692 = vmatprep.subr.mxu0 0.0
      %3693 = vmatpush1.msra.mxu0 0.0
      %3694 = vmatprep.subr.mxu0 0.0
      %3695 = vmatpush1.msra.mxu0 0.0
      %3696 = vmatprep.subr.mxu0 0.0
      %3697 = vmatpush1.msra.mxu0 0.0
      %3698 = vmatprep.subr.mxu0 0.0
      %3699 = vmatpush1.msra.mxu0 0.0
      %3700 = vmatprep.subr.mxu0 0.0
      %3701 = vmatpush1.msra.mxu0 0.0
      %3702 = vmatprep.subr.mxu0 0.0
      %3703 = vmatpush1.msra.mxu0 0.0
      %3704 = vmatprep.subr.mxu0 0.0
      %3705 = vmatpush1.msra.mxu0 0.0
      %3706 = vmatprep.subr.mxu0 0.0
      %3707 = vmatpush1.msra.mxu0 0.0
      %3708 = vmatprep.subr.mxu0 0.0
      %3709 = vmatpush1.msra.mxu0 0.0
      %3710 = vmatprep.subr.mxu0 0.0
      %3711 = vmatpush1.msra.mxu0 0.0
      %3712 = vmatprep.subr.mxu0 0.0
      %3713 = vmatpush1.msra.mxu0 0.0
      %3714 = vmatprep.subr.mxu0 0.0
      %3715 = vmatpush1.msra.mxu0 0.0
      %3716 = vmatprep.subr.mxu0 0.0
      %3717 = vmatpush1.msra.mxu0 %v3684
      %3718 = vmatprep.subr.mxu0 0.0
      %3719 = vmatpush2.msra.mxu0 0.0
      %3720 = vmatprep.subr.mxu0 0.0
      %3721 = vmatpush2.msra.mxu0 0.0
      %3722 = vmatprep.subr.mxu0 0.0
      %3723 = vmatpush2.msra.mxu0 0.0
      %3724 = vmatprep.subr.mxu0 0.0
      %3725 = vmatpush2.msra.mxu0 0.0
      %3726 = vmatprep.subr.mxu0 0.0
      %3727 = vmatpush2.msra.mxu0 0.0
      %3728 = vmatprep.subr.mxu0 0.0
      %3729 = vmatpush2.msra.mxu0 0.0
      %3730 = vmatprep.subr.mxu0 0.0
      %3731 = vmatpush2.msra.mxu0 0.0
      %3732 = vmatprep.subr.mxu0 0.0
      %3733 = vmatpush2.msra.mxu0 0.0
      %3734 = vmatprep.subr.mxu0 0.0
      %3735 = vmatpush2.msra.mxu0 0.0
      %3736 = vmatprep.subr.mxu0 0.0
      %3737 = vmatpush2.msra.mxu0 0.0
      %3738 = vmatprep.subr.mxu0 0.0
      %3739 = vmatpush2.msra.mxu0 0.0
      %3740 = vmatprep.subr.mxu0 0.0
      %3741 = vmatpush2.msra.mxu0 0.0
      %3742 = vmatprep.subr.mxu0 0.0
      %3743 = vmatpush2.msra.mxu0 0.0
      %3744 = vmatprep.subr.mxu0 0.0
      %3745 = vmatpush2.msra.mxu0 0.0
      %3746 = vmatprep.subr.mxu0 0.0
      %3747 = vmatpush2.msra.mxu0 0.0
      %3748 = vmatprep.subr.mxu0 0.0
      %3749 = vmatpush2.msra.mxu0 0.0
      %3750 = vmatprep.mubr.f32.mxu0 0.0
      %3751 = vmatmul.mubr.f32.gmra.mxu0 %v3607
      %v3752 = vpop.f32.mrf.mxu0
      %v3753 = vadd.f32 0.0, %v3752
      %v3754 = vpop.f32.mrf.mxu0
      %3755 = vmatprep.mubr.f32.mxu0 0.0
      %3756 = vmatmul.mubr.f32.gmra.mxu0 %v3609
      %v3757 = vpop.f32.mrf.mxu0
      %v3758 = vadd.f32 0.0, %v3757
      %v3759 = vpop.f32.mrf.mxu0
      %3760 = vmatprep.mubr.f32.mxu0 0.0
      %3761 = vmatmul.mubr.f32.gmra.mxu0 %v3611
      %v3762 = vpop.f32.mrf.mxu0
      %v3763 = vadd.f32 0.0, %v3762
      %v3764 = vpop.f32.mrf.mxu0
      %3765 = vmatprep.mubr.f32.mxu0 0.0
      %3766 = vmatmul.mubr.f32.gmra.mxu0 %v3613
      %v3767 = vpop.f32.mrf.mxu0
      %v3768 = vadd.f32 0.0, %v3767
      %v3769 = vpop.f32.mrf.mxu0
      %3770 = vmatprep.mubr.f32.mxu0 0.0
      %3771 = vmatmul.mubr.f32.gmra.mxu0 %v3615
      %v3772 = vpop.f32.mrf.mxu0
      %v3773 = vadd.f32 0.0, %v3772
      %v3774 = vpop.f32.mrf.mxu0
      %3775 = vmatprep.mubr.f32.mxu0 0.0
      %3776 = vmatmul.mubr.f32.gmra.mxu0 %v3617
      %v3777 = vpop.f32.mrf.mxu0
      %v3778 = vadd.f32 0.0, %v3777
      %v3779 = vpop.f32.mrf.mxu0
      %3780 = vmatprep.mubr.f32.mxu0 0.0
      %3781 = vmatmul.mubr.f32.gmra.mxu0 %v3619
      %v3782 = vpop.f32.mrf.mxu0
      %v3783 = vadd.f32 0.0, %v3782
      %v3784 = vpop.f32.mrf.mxu0
      %3785 = vmatprep.mubr.f32.mxu0 0.0
      %3786 = vmatmul.mubr.f32.gmra.mxu0 %v3621
      %v3787 = vpop.f32.mrf.mxu0
      %v3788 = vadd.f32 0.0, %v3787
      %v3789 = vpop.f32.mrf.mxu0
      %3790 = vmatprep.mubr.f32.mxu0 0.0
      %3791 = vmatmul.mubr.f32.gmra.mxu0 %v3623
      %v3792 = vpop.f32.mrf.mxu0
      %v3793 = vadd.f32 0.0, %v3792
      %v3794 = vpop.f32.mrf.mxu0
      %3795 = vmatprep.mubr.f32.mxu0 0.0
      %3796 = vmatmul.mubr.f32.gmra.mxu0 %v3625
      %v3797 = vpop.f32.mrf.mxu0
      %v3798 = vadd.f32 0.0, %v3797
      %v3799 = vpop.f32.mrf.mxu0
      %3800 = vmatprep.mubr.f32.mxu0 0.0
      %3801 = vmatmul.mubr.f32.gmra.mxu0 %v3627
      %v3802 = vpop.f32.mrf.mxu0
      %v3803 = vadd.f32 0.0, %v3802
      %v3804 = vpop.f32.mrf.mxu0
      %3805 = vmatprep.mubr.f32.mxu0 0.0
      %3806 = vmatmul.mubr.f32.gmra.mxu0 %v3629
      %v3807 = vpop.f32.mrf.mxu0
      %v3808 = vadd.f32 0.0, %v3807
      %v3809 = vpop.f32.mrf.mxu0
      %3810 = vmatprep.mubr.f32.mxu0 0.0
      %3811 = vmatmul.mubr.f32.gmra.mxu0 %v3631
      %v3812 = vpop.f32.mrf.mxu0
      %v3813 = vadd.f32 0.0, %v3812
      %v3814 = vpop.f32.mrf.mxu0
      %3815 = vmatprep.mubr.f32.mxu0 0.0
      %3816 = vmatmul.mubr.f32.gmra.mxu0 %v3633
      %v3817 = vpop.f32.mrf.mxu0
      %v3818 = vadd.f32 0.0, %v3817
      %v3819 = vpop.f32.mrf.mxu0
      %3820 = vmatprep.mubr.f32.mxu0 0.0
      %3821 = vmatmul.mubr.f32.gmra.mxu0 %v3635
      %v3822 = vpop.f32.mrf.mxu0
      %v3823 = vadd.f32 0.0, %v3822
      %v3824 = vpop.f32.mrf.mxu0
      %3825 = vmatprep.mubr.f32.mxu0 0.0
      %3826 = vmatmul.mubr.f32.gmra.mxu0 %v3637
      %v3827 = vpop.f32.mrf.mxu0
      %v3828 = vadd.f32 0.0, %v3827
      %v3829 = vpop.f32.mrf.mxu0
      %3830 = vmatprep.mubr.f32.mxu0 0.0
      %3831 = vmatmul.mubr.f32.gmra.mxu0 %v3639
      %v3832 = vpop.f32.mrf.mxu0
      %v3833 = vadd.f32 0.0, %v3832
      %v3834 = vpop.f32.mrf.mxu0
      %3835 = vmatprep.mubr.f32.mxu0 0.0
      %3836 = vmatmul.mubr.f32.gmra.mxu0 %v3641
      %v3837 = vpop.f32.mrf.mxu0
      %v3838 = vadd.f32 0.0, %v3837
      %v3839 = vpop.f32.mrf.mxu0
      %3840 = vmatprep.mubr.f32.mxu0 0.0
      %3841 = vmatmul.mubr.f32.gmra.mxu0 %v3643
      %v3842 = vpop.f32.mrf.mxu0
      %v3843 = vadd.f32 0.0, %v3842
      %v3844 = vpop.f32.mrf.mxu0
      %3845 = vmatprep.mubr.f32.mxu0 0.0
      %3846 = vmatmul.mubr.f32.gmra.mxu0 %v3645
      %v3847 = vpop.f32.mrf.mxu0
      %v3848 = vadd.f32 0.0, %v3847
      %v3849 = vpop.f32.mrf.mxu0
      %3850 = vmatprep.mubr.f32.mxu0 0.0
      %3851 = vmatmul.mubr.f32.gmra.mxu0 %v3647
      %v3852 = vpop.f32.mrf.mxu0
      %v3853 = vadd.f32 0.0, %v3852
      %v3854 = vpop.f32.mrf.mxu0
      %3855 = vmatprep.mubr.f32.mxu0 0.0
      %3856 = vmatmul.mubr.f32.gmra.mxu0 %v3649
      %v3857 = vpop.f32.mrf.mxu0
      %v3858 = vadd.f32 0.0, %v3857
      %v3859 = vpop.f32.mrf.mxu0
      %3860 = vmatprep.mubr.f32.mxu0 0.0
      %3861 = vmatmul.mubr.f32.gmra.mxu0 %v3651
      %v3862 = vpop.f32.mrf.mxu0
      %v3863 = vadd.f32 0.0, %v3862
      %v3864 = vpop.f32.mrf.mxu0
      %3865 = vmatprep.mubr.f32.mxu0 0.0
      %3866 = vmatmul.mubr.f32.gmra.mxu0 %v3653
      %v3867 = vpop.f32.mrf.mxu0
      %v3868 = vadd.f32 0.0, %v3867
      %v3869 = vpop.f32.mrf.mxu0
      %3870 = vmatprep.mubr.f32.mxu0 0.0
      %3871 = vmatmul.mubr.f32.gmra.mxu0 %v3655
      %v3872 = vpop.f32.mrf.mxu0
      %v3873 = vadd.f32 0.0, %v3872
      %v3874 = vpop.f32.mrf.mxu0
      %3875 = vmatprep.mubr.f32.mxu0 0.0
      %3876 = vmatmul.mubr.f32.gmra.mxu0 %v3657
      %v3877 = vpop.f32.mrf.mxu0
      %v3878 = vadd.f32 0.0, %v3877
      %v3879 = vpop.f32.mrf.mxu0
      %3880 = vmatprep.mubr.f32.mxu0 0.0
      %3881 = vmatmul.mubr.f32.gmra.mxu0 %v3659
      %v3882 = vpop.f32.mrf.mxu0
      %v3883 = vadd.f32 0.0, %v3882
      %v3884 = vpop.f32.mrf.mxu0
      %3885 = vmatprep.mubr.f32.mxu0 0.0
      %3886 = vmatmul.mubr.f32.gmra.mxu0 %v3661
      %v3887 = vpop.f32.mrf.mxu0
      %v3888 = vadd.f32 0.0, %v3887
      %v3889 = vpop.f32.mrf.mxu0
      %3890 = vmatprep.mubr.f32.mxu0 0.0
      %3891 = vmatmul.mubr.f32.gmra.mxu0 %v3663
      %v3892 = vpop.f32.mrf.mxu0
      %v3893 = vadd.f32 0.0, %v3892
      %v3894 = vpop.f32.mrf.mxu0
      %3895 = vmatprep.mubr.f32.mxu0 0.0
      %3896 = vmatmul.mubr.f32.gmra.mxu0 %v3665
      %v3897 = vpop.f32.mrf.mxu0
      %v3898 = vadd.f32 0.0, %v3897
      %v3899 = vpop.f32.mrf.mxu0
      %3900 = vmatprep.mubr.f32.mxu0 0.0
      %3901 = vmatmul.mubr.f32.gmra.mxu0 %v3667
      %v3902 = vpop.f32.mrf.mxu0
      %v3903 = vadd.f32 0.0, %v3902
      %v3904 = vpop.f32.mrf.mxu0
      %3905 = vmatprep.mubr.f32.mxu0 0.0
      %3906 = vmatmul.mubr.f32.gmra.mxu0 %v3669
      %v3907 = vpop.f32.mrf.mxu0
      %v3908 = vadd.f32 0.0, %v3907
      %v3909 = vpop.f32.mrf.mxu0
      %3910 = vmatprep.mubr.f32.mxu0 0.0
      %3911 = vmatmul.mubr.f32.gmra.mxu0 %v3671
      %v3912 = vpop.f32.mrf.mxu0
      %v3913 = vadd.f32 0.0, %v3912
      %v3914 = vpop.f32.mrf.mxu0
      %3915 = vmatprep.mubr.f32.mxu0 0.0
      %3916 = vmatmul.mubr.f32.gmra.mxu0 %v3673
      %v3917 = vpop.f32.mrf.mxu0
      %v3918 = vadd.f32 0.0, %v3917
      %v3919 = vpop.f32.mrf.mxu0
      %3920 = vmatprep.mubr.f32.mxu0 0.0
      %3921 = vmatmul.mubr.f32.gmra.mxu0 %v3675
      %v3922 = vpop.f32.mrf.mxu0
      %v3923 = vadd.f32 0.0, %v3922
      %v3924 = vpop.f32.mrf.mxu0
      %3925 = vmatprep.mubr.f32.mxu0 0.0
      %3926 = vmatmul.mubr.f32.gmra.mxu0 %v3677
      %v3927 = vpop.f32.mrf.mxu0
      %v3928 = vadd.f32 0.0, %v3927
      %v3929 = vpop.f32.mrf.mxu0
      %3930 = vmatprep.mubr.f32.mxu0 0.0
      %3931 = vmatmul.mubr.f32.gmra.mxu0 %v3679
      %v3932 = vpop.f32.mrf.mxu0
      %v3933 = vadd.f32 0.0, %v3932
      %v3934 = vpop.f32.mrf.mxu0
      %3935 = vmatprep.mubr.f32.mxu0 0.0
      %3936 = vmatmul.mubr.f32.gmra.mxu0 %v3681
      %v3937 = vpop.f32.mrf.mxu0
      %v3938 = vadd.f32 0.0, %v3937
      %v3939 = vpop.f32.mrf.mxu0
      %3940 = vdwg.mxu0
      %v3941 = vadd.f32 %v3490, %v3753
      %v3942 = vadd.f32 %v3491, %v3758
      %v3943 = vadd.f32 %v3492, %v3763
      %v3944 = vadd.f32 %v3493, %v3768
      %v3945 = vadd.f32 %v3494, %v3773
      %v3946 = vadd.f32 %v3495, %v3778
      %v3947 = vadd.f32 %v3496, %v3783
      %v3948 = vadd.f32 %v3497, %v3788
      %v3949 = vadd.f32 %v3498, %v3793
      %v3950 = vadd.f32 %v3499, %v3798
      %v3951 = vadd.f32 %v3500, %v3803
      %v3952 = vadd.f32 %v3501, %v3808
      %v3953 = vadd.f32 %v3502, %v3813
      %v3954 = vadd.f32 %v3503, %v3818
      %v3955 = vadd.f32 %v3504, %v3823
      %v3956 = vadd.f32 %v3505, %v3828
      %v3957 = vadd.f32 %v3506, %v3833
      %v3958 = vadd.f32 %v3507, %v3838
      %v3959 = vadd.f32 %v3508, %v3843
      %v3960 = vadd.f32 %v3509, %v3848
      %v3961 = vadd.f32 %v3510, %v3853
      %v3962 = vadd.f32 %v3511, %v3858
      %v3963 = vadd.f32 %v3512, %v3863
      %v3964 = vadd.f32 %v3513, %v3868
      %v3965 = vadd.f32 %v3514, %v3873
      %v3966 = vadd.f32 %v3515, %v3878
      %v3967 = vadd.f32 %v3516, %v3883
      %v3968 = vadd.f32 %v3517, %v3888
      %v3969 = vadd.f32 %v3518, %v3893
      %v3970 = vadd.f32 %v3519, %v3898
      %v3971 = vadd.f32 %v3520, %v3903
      %v3972 = vadd.f32 %v3521, %v3908
      %v3973 = vadd.f32 %v3522, %v3913
      %v3974 = vadd.f32 %v3523, %v3918
      %v3975 = vadd.f32 %v3524, %v3923
      %v3976 = vadd.f32 %v3525, %v3928
      %v3977 = vadd.f32 %v3526, %v3933
      %v3978 = vadd.f32 %v3527, %v3938
      %v3979 = vld [vmem:[%s2] sm:$0x1]
      %v3981 = vlaneseq
      %v3982 = vshrl.u32 %v3981, 7
      %v3983 = vsub.s32 0, %v3982
      %v3984 = vrot.slane %v3979, %v3983
      %v3986 = vadd.f32 %v3941, %v3984
      %v3987 = vadd.f32 %v3942, %v3984
      %v3988 = vadd.f32 %v3943, %v3984
      %v3989 = vadd.f32 %v3944, %v3984
      %v3990 = vadd.f32 %v3945, %v3984
      %v3991 = vadd.f32 %v3946, %v3984
      %v3992 = vadd.f32 %v3947, %v3984
      %v3993 = vadd.f32 %v3948, %v3984
      %v3994 = vadd.f32 %v3949, %v3984
      %v3995 = vadd.f32 %v3950, %v3984
      %v3996 = vadd.f32 %v3951, %v3984
      %v3997 = vadd.f32 %v3952, %v3984
      %v3998 = vadd.f32 %v3953, %v3984
      %v3999 = vadd.f32 %v3954, %v3984
      %v4000 = vadd.f32 %v3955, %v3984
      %v4001 = vadd.f32 %v3956, %v3984
      %v4002 = vadd.f32 %v3957, %v3984
      %v4003 = vadd.f32 %v3958, %v3984
      %v4004 = vadd.f32 %v3959, %v3984
      %v4005 = vadd.f32 %v3960, %v3984
      %v4006 = vadd.f32 %v3961, %v3984
      %v4007 = vadd.f32 %v3962, %v3984
      %v4008 = vadd.f32 %v3963, %v3984
      %v4009 = vadd.f32 %v3964, %v3984
      %v4010 = vadd.f32 %v3965, %v3984
      %v4011 = vadd.f32 %v3966, %v3984
      %v4012 = vadd.f32 %v3967, %v3984
      %v4013 = vadd.f32 %v3968, %v3984
      %v4014 = vadd.f32 %v3969, %v3984
      %v4015 = vadd.f32 %v3970, %v3984
      %v4016 = vadd.f32 %v3971, %v3984
      %v4017 = vadd.f32 %v3972, %v3984
      %v4018 = vadd.f32 %v3973, %v3984
      %v4019 = vadd.f32 %v3974, %v3984
      %v4020 = vadd.f32 %v3975, %v3984
      %v4021 = vadd.f32 %v3976, %v3984
      %v4022 = vadd.f32 %v3977, %v3984
      %v4023 = vadd.f32 %v3978, %v3984
      %v4024 = vmax.f32 %v3986, 0.0
      %v4025 = vmax.f32 %v3987, 0.0
      %v4026 = vmax.f32 %v3988, 0.0
      %v4027 = vmax.f32 %v3989, 0.0
      %v4028 = vmax.f32 %v3990, 0.0
      %v4029 = vmax.f32 %v3991, 0.0
      %v4030 = vmax.f32 %v3992, 0.0
      %v4031 = vmax.f32 %v3993, 0.0
      %v4032 = vmax.f32 %v3994, 0.0
      %v4033 = vmax.f32 %v3995, 0.0
      %v4034 = vmax.f32 %v3996, 0.0
      %v4035 = vmax.f32 %v3997, 0.0
      %v4036 = vmax.f32 %v3998, 0.0
      %v4037 = vmax.f32 %v3999, 0.0
      %v4038 = vmax.f32 %v4000, 0.0
      %v4039 = vmax.f32 %v4001, 0.0
      %v4040 = vmax.f32 %v4002, 0.0
      %v4041 = vmax.f32 %v4003, 0.0
      %v4042 = vmax.f32 %v4004, 0.0
      %v4043 = vmax.f32 %v4005, 0.0
      %v4044 = vmax.f32 %v4006, 0.0
      %v4045 = vmax.f32 %v4007, 0.0
      %v4046 = vmax.f32 %v4008, 0.0
      %v4047 = vmax.f32 %v4009, 0.0
      %v4048 = vmax.f32 %v4010, 0.0
      %v4049 = vmax.f32 %v4011, 0.0
      %v4050 = vmax.f32 %v4012, 0.0
      %v4051 = vmax.f32 %v4013, 0.0
      %v4052 = vmax.f32 %v4014, 0.0
      %v4053 = vmax.f32 %v4015, 0.0
      %v4054 = vmax.f32 %v4016, 0.0
      %v4055 = vmax.f32 %v4017, 0.0
      %v4056 = vmax.f32 %v4018, 0.0
      %v4057 = vmax.f32 %v4019, 0.0
      %v4058 = vmax.f32 %v4020, 0.0
      %v4059 = vmax.f32 %v4021, 0.0
      %v4060 = vmax.f32 %v4022, 0.0
      %v4061 = vmax.f32 %v4023, 0.0
      %v4100 = vrot.slane %v4024, 1
      %v4101 = vrot.slane %v4025, 1
      %v4102 = vsel %vm363, %v4100, %v4101
      %v4103 = vrot.slane %v4026, 1
      %v4104 = vsel %vm363, %v4101, %v4103
      %v4105 = vrot.slane %v4027, 1
      %v4106 = vsel %vm363, %v4103, %v4105
      %v4107 = vrot.slane %v4028, 1
      %v4108 = vsel %vm363, %v4105, %v4107
      %v4109 = vrot.slane %v4029, 1
      %v4110 = vsel %vm363, %v4107, %v4109
      %v4111 = vrot.slane %v4030, 1
      %v4112 = vsel %vm363, %v4109, %v4111
      %v4113 = vrot.slane %v4031, 1
      %v4114 = vsel %vm363, %v4111, %v4113
      %v4115 = vrot.slane %v4032, 1
      %v4116 = vsel %vm363, %v4113, %v4115
      %v4117 = vrot.slane %v4033, 1
      %v4118 = vsel %vm363, %v4115, %v4117
      %v4119 = vrot.slane %v4034, 1
      %v4120 = vsel %vm363, %v4117, %v4119
      %v4121 = vrot.slane %v4035, 1
      %v4122 = vsel %vm363, %v4119, %v4121
      %v4123 = vrot.slane %v4036, 1
      %v4124 = vsel %vm363, %v4121, %v4123
      %v4125 = vrot.slane %v4037, 1
      %v4126 = vsel %vm363, %v4123, %v4125
      %v4127 = vrot.slane %v4038, 1
      %v4128 = vsel %vm363, %v4125, %v4127
      %v4129 = vrot.slane %v4039, 1
      %v4130 = vsel %vm363, %v4127, %v4129
      %v4131 = vrot.slane %v4040, 1
      %v4132 = vsel %vm363, %v4129, %v4131
      %v4133 = vrot.slane %v4041, 1
      %v4134 = vsel %vm363, %v4131, %v4133
      %v4135 = vrot.slane %v4042, 1
      %v4136 = vsel %vm363, %v4133, %v4135
      %v4137 = vrot.slane %v4043, 1
      %v4138 = vsel %vm363, %v4135, %v4137
      %v4139 = vrot.slane %v4044, 1
      %v4140 = vsel %vm363, %v4137, %v4139
      %v4141 = vrot.slane %v4045, 1
      %v4142 = vsel %vm363, %v4139, %v4141
      %v4143 = vrot.slane %v4046, 1
      %v4144 = vsel %vm363, %v4141, %v4143
      %v4145 = vrot.slane %v4047, 1
      %v4146 = vsel %vm363, %v4143, %v4145
      %v4147 = vrot.slane %v4048, 1
      %v4148 = vsel %vm363, %v4145, %v4147
      %v4149 = vrot.slane %v4049, 1
      %v4150 = vsel %vm363, %v4147, %v4149
      %v4151 = vrot.slane %v4050, 1
      %v4152 = vsel %vm363, %v4149, %v4151
      %v4153 = vrot.slane %v4051, 1
      %v4154 = vsel %vm363, %v4151, %v4153
      %v4155 = vrot.slane %v4052, 1
      %v4156 = vsel %vm363, %v4153, %v4155
      %v4157 = vrot.slane %v4053, 1
      %v4158 = vsel %vm363, %v4155, %v4157
      %v4159 = vrot.slane %v4054, 1
      %v4160 = vsel %vm363, %v4157, %v4159
      %v4161 = vrot.slane %v4055, 1
      %v4162 = vsel %vm363, %v4159, %v4161
      %v4163 = vrot.slane %v4056, 1
      %v4164 = vsel %vm363, %v4161, %v4163
      %v4165 = vrot.slane %v4057, 1
      %v4166 = vsel %vm363, %v4163, %v4165
      %v4167 = vrot.slane %v4058, 1
      %v4168 = vsel %vm363, %v4165, %v4167
      %v4169 = vrot.slane %v4059, 1
      %v4170 = vsel %vm363, %v4167, %v4169
      %v4171 = vrot.slane %v4060, 1
      %v4172 = vsel %vm363, %v4169, %v4171
      %v4173 = vrot.slane %v4061, 1
      %v4174 = vsel %vm363, %v4171, %v4173
      %v4212 = vmax.f32 %v4024, %v4102
      %v4213 = vmax.f32 %v4025, %v4104
      %v4214 = vmax.f32 %v4026, %v4106
      %v4215 = vmax.f32 %v4027, %v4108
      %v4216 = vmax.f32 %v4028, %v4110
      %v4217 = vmax.f32 %v4029, %v4112
      %v4218 = vmax.f32 %v4030, %v4114
      %v4219 = vmax.f32 %v4031, %v4116
      %v4220 = vmax.f32 %v4032, %v4118
      %v4221 = vmax.f32 %v4033, %v4120
      %v4222 = vmax.f32 %v4034, %v4122
      %v4223 = vmax.f32 %v4035, %v4124
      %v4224 = vmax.f32 %v4036, %v4126
      %v4225 = vmax.f32 %v4037, %v4128
      %v4226 = vmax.f32 %v4038, %v4130
      %v4227 = vmax.f32 %v4039, %v4132
      %v4228 = vmax.f32 %v4040, %v4134
      %v4229 = vmax.f32 %v4041, %v4136
      %v4230 = vmax.f32 %v4042, %v4138
      %v4231 = vmax.f32 %v4043, %v4140
      %v4232 = vmax.f32 %v4044, %v4142
      %v4233 = vmax.f32 %v4045, %v4144
      %v4234 = vmax.f32 %v4046, %v4146
      %v4235 = vmax.f32 %v4047, %v4148
      %v4236 = vmax.f32 %v4048, %v4150
      %v4237 = vmax.f32 %v4049, %v4152
      %v4238 = vmax.f32 %v4050, %v4154
      %v4239 = vmax.f32 %v4051, %v4156
      %v4240 = vmax.f32 %v4052, %v4158
      %v4241 = vmax.f32 %v4053, %v4160
      %v4242 = vmax.f32 %v4054, %v4162
      %v4243 = vmax.f32 %v4055, %v4164
      %v4244 = vmax.f32 %v4056, %v4166
      %v4245 = vmax.f32 %v4057, %v4168
      %v4246 = vmax.f32 %v4058, %v4170
      %v4247 = vmax.f32 %v4059, %v4172
      %v4248 = vmax.f32 %v4060, %v4174
      %v4284 = vrot.slane %v4214, 2
      %v4285 = vrot.slane %v4215, 2
      %v4286 = vsel %vm1112, %v4284, %v4285
      %v4287 = vrot.slane %v4216, 2
      %v4288 = vsel %vm1112, %v4285, %v4287
      %v4289 = vrot.slane %v4217, 2
      %v4290 = vsel %vm1112, %v4287, %v4289
      %v4291 = vrot.slane %v4218, 2
      %v4292 = vsel %vm1112, %v4289, %v4291
      %v4293 = vrot.slane %v4219, 2
      %v4294 = vsel %vm1112, %v4291, %v4293
      %v4295 = vrot.slane %v4220, 2
      %v4296 = vsel %vm1112, %v4293, %v4295
      %v4297 = vrot.slane %v4221, 2
      %v4298 = vsel %vm1112, %v4295, %v4297
      %v4299 = vrot.slane %v4222, 2
      %v4300 = vsel %vm1112, %v4297, %v4299
      %v4301 = vrot.slane %v4223, 2
      %v4302 = vsel %vm1112, %v4299, %v4301
      %v4303 = vrot.slane %v4224, 2
      %v4304 = vsel %vm1112, %v4301, %v4303
      %v4305 = vrot.slane %v4225, 2
      %v4306 = vsel %vm1112, %v4303, %v4305
      %v4307 = vrot.slane %v4226, 2
      %v4308 = vsel %vm1112, %v4305, %v4307
      %v4309 = vrot.slane %v4227, 2
      %v4310 = vsel %vm1112, %v4307, %v4309
      %v4311 = vrot.slane %v4228, 2
      %v4312 = vsel %vm1112, %v4309, %v4311
      %v4313 = vrot.slane %v4229, 2
      %v4314 = vsel %vm1112, %v4311, %v4313
      %v4315 = vrot.slane %v4230, 2
      %v4316 = vsel %vm1112, %v4313, %v4315
      %v4317 = vrot.slane %v4231, 2
      %v4318 = vsel %vm1112, %v4315, %v4317
      %v4319 = vrot.slane %v4232, 2
      %v4320 = vsel %vm1112, %v4317, %v4319
      %v4321 = vrot.slane %v4233, 2
      %v4322 = vsel %vm1112, %v4319, %v4321
      %v4323 = vrot.slane %v4234, 2
      %v4324 = vsel %vm1112, %v4321, %v4323
      %v4325 = vrot.slane %v4235, 2
      %v4326 = vsel %vm1112, %v4323, %v4325
      %v4327 = vrot.slane %v4236, 2
      %v4328 = vsel %vm1112, %v4325, %v4327
      %v4329 = vrot.slane %v4237, 2
      %v4330 = vsel %vm1112, %v4327, %v4329
      %v4331 = vrot.slane %v4238, 2
      %v4332 = vsel %vm1112, %v4329, %v4331
      %v4333 = vrot.slane %v4239, 2
      %v4334 = vsel %vm1112, %v4331, %v4333
      %v4335 = vrot.slane %v4240, 2
      %v4336 = vsel %vm1112, %v4333, %v4335
      %v4337 = vrot.slane %v4241, 2
      %v4338 = vsel %vm1112, %v4335, %v4337
      %v4339 = vrot.slane %v4242, 2
      %v4340 = vsel %vm1112, %v4337, %v4339
      %v4341 = vrot.slane %v4243, 2
      %v4342 = vsel %vm1112, %v4339, %v4341
      %v4343 = vrot.slane %v4244, 2
      %v4344 = vsel %vm1112, %v4341, %v4343
      %v4345 = vrot.slane %v4245, 2
      %v4346 = vsel %vm1112, %v4343, %v4345
      %v4347 = vrot.slane %v4246, 2
      %v4348 = vsel %vm1112, %v4345, %v4347
      %v4349 = vrot.slane %v4247, 2
      %v4350 = vsel %vm1112, %v4347, %v4349
      %v4351 = vrot.slane %v4248, 2
      %v4352 = vsel %vm1112, %v4349, %v4351
      %v4387 = vmax.f32 %v4212, %v4286
      %v4388 = vmax.f32 %v4213, %v4288
      %v4389 = vmax.f32 %v4214, %v4290
      %v4390 = vmax.f32 %v4215, %v4292
      %v4391 = vmax.f32 %v4216, %v4294
      %v4392 = vmax.f32 %v4217, %v4296
      %v4393 = vmax.f32 %v4218, %v4298
      %v4394 = vmax.f32 %v4219, %v4300
      %v4395 = vmax.f32 %v4220, %v4302
      %v4396 = vmax.f32 %v4221, %v4304
      %v4397 = vmax.f32 %v4222, %v4306
      %v4398 = vmax.f32 %v4223, %v4308
      %v4399 = vmax.f32 %v4224, %v4310
      %v4400 = vmax.f32 %v4225, %v4312
      %v4401 = vmax.f32 %v4226, %v4314
      %v4402 = vmax.f32 %v4227, %v4316
      %v4403 = vmax.f32 %v4228, %v4318
      %v4404 = vmax.f32 %v4229, %v4320
      %v4405 = vmax.f32 %v4230, %v4322
      %v4406 = vmax.f32 %v4231, %v4324
      %v4407 = vmax.f32 %v4232, %v4326
      %v4408 = vmax.f32 %v4233, %v4328
      %v4409 = vmax.f32 %v4234, %v4330
      %v4410 = vmax.f32 %v4235, %v4332
      %v4411 = vmax.f32 %v4236, %v4334
      %v4412 = vmax.f32 %v4237, %v4336
      %v4413 = vmax.f32 %v4238, %v4338
      %v4414 = vmax.f32 %v4239, %v4340
      %v4415 = vmax.f32 %v4240, %v4342
      %v4416 = vmax.f32 %v4241, %v4344
      %v4417 = vmax.f32 %v4242, %v4346
      %v4418 = vmax.f32 %v4243, %v4348
      %v4419 = vmax.f32 %v4244, %v4350
      %v4420 = vmax.f32 %v4245, %v4352
      %v4421 = vld [vmem:[%s3] sm:$0xff]
      %v4422 = vld [vmem:[%s3 + $0x8] sm:$0xff]
      %v4423 = vld [vmem:[%s3 + $0x10] sm:$0xff]
      %v4424 = vld [vmem:[%s3 + $0x18] sm:$0xff]
      %v4425 = vld [vmem:[%s3 + $0x20] sm:$0xff]
      %v4426 = vld [vmem:[%s3 + $0x28] sm:$0xff]
      %v4427 = vld [vmem:[%s3 + $0x30] sm:$0xff]
      %v4428 = vld [vmem:[%s3 + $0x38] sm:$0xff]
      %v4429 = vld [vmem:[%s3 + $0x40] sm:$0xff]
      %v4430 = vld [vmem:[%s3 + $0x48] sm:$0xff]
      %v4431 = vld [vmem:[%s3 + $0x50] sm:$0xff]
      %v4432 = vld [vmem:[%s3 + $0x58] sm:$0xff]
      %v4433 = vld [vmem:[%s3 + $0x60] sm:$0xff]
      %v4434 = vld [vmem:[%s3 + $0x68] sm:$0xff]
      %v4435 = vld [vmem:[%s3 + $0x70] sm:$0xff]
      %v4436 = vld [vmem:[%s3 + $0x78] sm:$0xff]
      %v4437 = vld [vmem:[%s3 + $0x80] sm:$0xff]
      %v4438 = vld [vmem:[%s3 + $0x88] sm:$0xff]
      %v4439 = vld [vmem:[%s3 + $0x90] sm:$0xff]
      %v4440 = vld [vmem:[%s3 + $0x98] sm:$0xff]
      %v4441 = vld [vmem:[%s3 + $0xa0] sm:$0xff]
      %v4442 = vld [vmem:[%s3 + $0xa8] sm:$0xff]
      %v4443 = vld [vmem:[%s3 + $0xb0] sm:$0xff]
      %v4444 = vld [vmem:[%s3 + $0xb8] sm:$0xff]
      %v4445 = vld [vmem:[%s3 + $0xc0] sm:$0xff]
      %v4446 = vld [vmem:[%s3 + $0xc8] sm:$0xff]
      %v4447 = vld [vmem:[%s3 + $0xd0] sm:$0xff]
      %v4448 = vld [vmem:[%s3 + $0xd8] sm:$0xff]
      %v4449 = vld [vmem:[%s3 + $0xe0] sm:$0xff]
      %v4450 = vld [vmem:[%s3 + $0xe8] sm:$0xff]
      %v4451 = vld [vmem:[%s3 + $0xf0] sm:$0xff]
      %v4452 = vld [vmem:[%s3 + $0xf8] sm:$0xff]
      %v4453 = vld [vmem:[%s3 + $0x100] sm:$0xff]
      %v4454 = vld [vmem:[%s3 + $0x108] sm:$0xff]
      %v4455 = vld [vmem:[%s3 + $0x110] sm:$0xff]
      %v4456 = vld [vmem:[%s3 + $0x118] sm:$0xff]
      %v4457 = vld [vmem:[%s3 + $0x120] sm:$0xff]
      %v4458 = vld [vmem:[%s3 + $0x128] sm:$0xff]
      %v4459 = vld [vmem:[%s3 + $0x130] sm:$0xff]
      %v4460 = vld [vmem:[%s3 + $0x138] sm:$0xff]
      %v4461 = vld [vmem:[%s3 + $0x140] sm:$0xff]
      %v4462 = vld [vmem:[%s3 + $0x148] sm:$0xff]
      %v4463 = vld [vmem:[%s3 + $0x150] sm:$0xff]
      %v4464 = vld [vmem:[%s3 + $0x158] sm:$0xff]
      %v4465 = vld [vmem:[%s3 + $0x160] sm:$0xff]
      %vm4466 = vcmask 130048
      %v4468 = vsel %vm4466, %v4423, 0
      %v4471 = vsel %vm4466, %v4426, 0
      %v4474 = vsel %vm4466, %v4429, 0
      %v4477 = vsel %vm4466, %v4432, 0
      %v4480 = vsel %vm4466, %v4435, 0
      %v4483 = vsel %vm4466, %v4438, 0
      %v4486 = vsel %vm4466, %v4441, 0
      %v4489 = vsel %vm4466, %v4444, 0
      %v4492 = vsel %vm4466, %v4447, 0
      %v4495 = vsel %vm4466, %v4450, 0
      %v4498 = vsel %vm4466, %v4453, 0
      %v4501 = vsel %vm4466, %v4456, 0
      %v4504 = vsel %vm4466, %v4459, 0
      %v4507 = vsel %vm4466, %v4462, 0
      %v4510 = vsel %vm4466, %v4465, 0
      %4512 = vmatprep.subr.mxu0 0.0
      %4513 = vmatpush1.msra.mxu0 %v4402
      %4514 = vmatprep.subr.mxu0 0.0
      %4515 = vmatpush1.msra.mxu0 %v4401
      %4516 = vmatprep.subr.mxu0 0.0
      %4517 = vmatpush1.msra.mxu0 %v4400
      %4518 = vmatprep.subr.mxu0 0.0
      %4519 = vmatpush1.msra.mxu0 %v4399
      %4520 = vmatprep.subr.mxu0 0.0
      %4521 = vmatpush1.msra.mxu0 %v4398
      %4522 = vmatprep.subr.mxu0 0.0
      %4523 = vmatpush1.msra.mxu0 %v4397
      %4524 = vmatprep.subr.mxu0 0.0
      %4525 = vmatpush1.msra.mxu0 %v4396
      %4526 = vmatprep.subr.mxu0 0.0
      %4527 = vmatpush1.msra.mxu0 %v4395
      %4528 = vmatprep.subr.mxu0 0.0
      %4529 = vmatpush1.msra.mxu0 %v4394
      %4530 = vmatprep.subr.mxu0 0.0
      %4531 = vmatpush1.msra.mxu0 %v4393
      %4532 = vmatprep.subr.mxu0 0.0
      %4533 = vmatpush1.msra.mxu0 %v4392
      %4534 = vmatprep.subr.mxu0 0.0
      %4535 = vmatpush1.msra.mxu0 %v4391
      %4536 = vmatprep.subr.mxu0 0.0
      %4537 = vmatpush1.msra.mxu0 %v4390
      %4538 = vmatprep.subr.mxu0 0.0
      %4539 = vmatpush1.msra.mxu0 %v4389
      %4540 = vmatprep.subr.mxu0 0.0
      %4541 = vmatpush1.msra.mxu0 %v4388
      %4542 = vmatprep.subr.mxu0 0.0
      %4543 = vmatpush1.msra.mxu0 %v4387
      %4544 = vmatprep.subr.mxu0 0.0
      %4545 = vmatpush2.msra.mxu0 %v4418
      %4546 = vmatprep.subr.mxu0 0.0
      %4547 = vmatpush2.msra.mxu0 %v4417
      %4548 = vmatprep.subr.mxu0 0.0
      %4549 = vmatpush2.msra.mxu0 %v4416
      %4550 = vmatprep.subr.mxu0 0.0
      %4551 = vmatpush2.msra.mxu0 %v4415
      %4552 = vmatprep.subr.mxu0 0.0
      %4553 = vmatpush2.msra.mxu0 %v4414
      %4554 = vmatprep.subr.mxu0 0.0
      %4555 = vmatpush2.msra.mxu0 %v4413
      %4556 = vmatprep.subr.mxu0 0.0
      %4557 = vmatpush2.msra.mxu0 %v4412
      %4558 = vmatprep.subr.mxu0 0.0
      %4559 = vmatpush2.msra.mxu0 %v4411
      %4560 = vmatprep.subr.mxu0 0.0
      %4561 = vmatpush2.msra.mxu0 %v4410
      %4562 = vmatprep.subr.mxu0 0.0
      %4563 = vmatpush2.msra.mxu0 %v4409
      %4564 = vmatprep.subr.mxu0 0.0
      %4565 = vmatpush2.msra.mxu0 %v4408
      %4566 = vmatprep.subr.mxu0 0.0
      %4567 = vmatpush2.msra.mxu0 %v4407
      %4568 = vmatprep.subr.mxu0 0.0
      %4569 = vmatpush2.msra.mxu0 %v4406
      %4570 = vmatprep.subr.mxu0 0.0
      %4571 = vmatpush2.msra.mxu0 %v4405
      %4572 = vmatprep.subr.mxu0 0.0
      %4573 = vmatpush2.msra.mxu0 %v4404
      %4574 = vmatprep.subr.mxu0 0.0
      %4575 = vmatpush2.msra.mxu0 %v4403
      %4576 = vmatprep.mubr.f32.mxu0 %v4422
      %4577 = vmatmul.mubr.f32.gmra.mxu0 %v4421
      %v4578 = vpop.f32.mrf.mxu0
      %v4579 = vadd.f32 0.0, %v4578
      %v4580 = vpop.f32.mrf.mxu0
      %4581 = vmatprep.mubr.f32.mxu0 %v4425
      %4582 = vmatmul.mubr.f32.gmra.mxu0 %v4424
      %v4583 = vpop.f32.mrf.mxu0
      %v4584 = vadd.f32 0.0, %v4583
      %v4585 = vpop.f32.mrf.mxu0
      %4586 = vmatprep.mubr.f32.mxu0 %v4428
      %4587 = vmatmul.mubr.f32.gmra.mxu0 %v4427
      %v4588 = vpop.f32.mrf.mxu0
      %v4589 = vadd.f32 0.0, %v4588
      %v4590 = vpop.f32.mrf.mxu0
      %4591 = vmatprep.mubr.f32.mxu0 %v4431
      %4592 = vmatmul.mubr.f32.gmra.mxu0 %v4430
      %v4593 = vpop.f32.mrf.mxu0
      %v4594 = vadd.f32 0.0, %v4593
      %v4595 = vpop.f32.mrf.mxu0
      %4596 = vmatprep.mubr.f32.mxu0 %v4434
      %4597 = vmatmul.mubr.f32.gmra.mxu0 %v4433
      %v4598 = vpop.f32.mrf.mxu0
      %v4599 = vadd.f32 0.0, %v4598
      %v4600 = vpop.f32.mrf.mxu0
      %4601 = vmatprep.mubr.f32.mxu0 %v4437
      %4602 = vmatmul.mubr.f32.gmra.mxu0 %v4436
      %v4603 = vpop.f32.mrf.mxu0
      %v4604 = vadd.f32 0.0, %v4603
      %v4605 = vpop.f32.mrf.mxu0
      %4606 = vmatprep.mubr.f32.mxu0 %v4440
      %4607 = vmatmul.mubr.f32.gmra.mxu0 %v4439
      %v4608 = vpop.f32.mrf.mxu0
      %v4609 = vadd.f32 0.0, %v4608
      %v4610 = vpop.f32.mrf.mxu0
      %4611 = vmatprep.mubr.f32.mxu0 %v4443
      %4612 = vmatmul.mubr.f32.gmra.mxu0 %v4442
      %v4613 = vpop.f32.mrf.mxu0
      %v4614 = vadd.f32 0.0, %v4613
      %v4615 = vpop.f32.mrf.mxu0
      %4616 = vmatprep.mubr.f32.mxu0 %v4446
      %4617 = vmatmul.mubr.f32.gmra.mxu0 %v4445
      %v4618 = vpop.f32.mrf.mxu0
      %v4619 = vadd.f32 0.0, %v4618
      %v4620 = vpop.f32.mrf.mxu0
      %4621 = vmatprep.mubr.f32.mxu0 %v4449
      %4622 = vmatmul.mubr.f32.gmra.mxu0 %v4448
      %v4623 = vpop.f32.mrf.mxu0
      %v4624 = vadd.f32 0.0, %v4623
      %v4625 = vpop.f32.mrf.mxu0
      %4626 = vmatprep.mubr.f32.mxu0 %v4452
      %4627 = vmatmul.mubr.f32.gmra.mxu0 %v4451
      %v4628 = vpop.f32.mrf.mxu0
      %v4629 = vadd.f32 0.0, %v4628
      %v4630 = vpop.f32.mrf.mxu0
      %4631 = vmatprep.mubr.f32.mxu0 %v4455
      %4632 = vmatmul.mubr.f32.gmra.mxu0 %v4454
      %v4633 = vpop.f32.mrf.mxu0
      %v4634 = vadd.f32 0.0, %v4633
      %v4635 = vpop.f32.mrf.mxu0
      %4636 = vmatprep.mubr.f32.mxu0 %v4458
      %4637 = vmatmul.mubr.f32.gmra.mxu0 %v4457
      %v4638 = vpop.f32.mrf.mxu0
      %v4639 = vadd.f32 0.0, %v4638
      %v4640 = vpop.f32.mrf.mxu0
      %4641 = vmatprep.mubr.f32.mxu0 %v4461
      %4642 = vmatmul.mubr.f32.gmra.mxu0 %v4460
      %v4643 = vpop.f32.mrf.mxu0
      %v4644 = vadd.f32 0.0, %v4643
      %v4645 = vpop.f32.mrf.mxu0
      %4646 = vmatprep.mubr.f32.mxu0 %v4464
      %4647 = vmatmul.mubr.f32.gmra.mxu0 %v4463
      %v4648 = vpop.f32.mrf.mxu0
      %v4649 = vadd.f32 0.0, %v4648
      %v4650 = vpop.f32.mrf.mxu0
      %4651 = vdwg.mxu0
      %4652 = vmatprep.subr.mxu0 0.0
      %4653 = vmatpush1.msra.mxu0 0.0
      %4654 = vmatprep.subr.mxu0 0.0
      %4655 = vmatpush1.msra.mxu0 0.0
      %4656 = vmatprep.subr.mxu0 0.0
      %4657 = vmatpush1.msra.mxu0 0.0
      %4658 = vmatprep.subr.mxu0 0.0
      %4659 = vmatpush1.msra.mxu0 0.0
      %4660 = vmatprep.subr.mxu0 0.0
      %4661 = vmatpush1.msra.mxu0 0.0
      %4662 = vmatprep.subr.mxu0 0.0
      %4663 = vmatpush1.msra.mxu0 0.0
      %4664 = vmatprep.subr.mxu0 0.0
      %4665 = vmatpush1.msra.mxu0 0.0
      %4666 = vmatprep.subr.mxu0 0.0
      %4667 = vmatpush1.msra.mxu0 0.0
      %4668 = vmatprep.subr.mxu0 0.0
      %4669 = vmatpush1.msra.mxu0 0.0
      %4670 = vmatprep.subr.mxu0 0.0
      %4671 = vmatpush1.msra.mxu0 0.0
      %4672 = vmatprep.subr.mxu0 0.0
      %4673 = vmatpush1.msra.mxu0 0.0
      %4674 = vmatprep.subr.mxu0 0.0
      %4675 = vmatpush1.msra.mxu0 0.0
      %4676 = vmatprep.subr.mxu0 0.0
      %4677 = vmatpush1.msra.mxu0 0.0
      %4678 = vmatprep.subr.mxu0 0.0
      %4679 = vmatpush1.msra.mxu0 0.0
      %4680 = vmatprep.subr.mxu0 0.0
      %4681 = vmatpush1.msra.mxu0 %v4420
      %4682 = vmatprep.subr.mxu0 0.0
      %4683 = vmatpush1.msra.mxu0 %v4419
      %4684 = vmatprep.subr.mxu0 0.0
      %4685 = vmatpush2.msra.mxu0 0.0
      %4686 = vmatprep.subr.mxu0 0.0
      %4687 = vmatpush2.msra.mxu0 0.0
      %4688 = vmatprep.subr.mxu0 0.0
      %4689 = vmatpush2.msra.mxu0 0.0
      %4690 = vmatprep.subr.mxu0 0.0
      %4691 = vmatpush2.msra.mxu0 0.0
      %4692 = vmatprep.subr.mxu0 0.0
      %4693 = vmatpush2.msra.mxu0 0.0
      %4694 = vmatprep.subr.mxu0 0.0
      %4695 = vmatpush2.msra.mxu0 0.0
      %4696 = vmatprep.subr.mxu0 0.0
      %4697 = vmatpush2.msra.mxu0 0.0
      %4698 = vmatprep.subr.mxu0 0.0
      %4699 = vmatpush2.msra.mxu0 0.0
      %4700 = vmatprep.subr.mxu0 0.0
      %4701 = vmatpush2.msra.mxu0 0.0
      %4702 = vmatprep.subr.mxu0 0.0
      %4703 = vmatpush2.msra.mxu0 0.0
      %4704 = vmatprep.subr.mxu0 0.0
      %4705 = vmatpush2.msra.mxu0 0.0
      %4706 = vmatprep.subr.mxu0 0.0
      %4707 = vmatpush2.msra.mxu0 0.0
      %4708 = vmatprep.subr.mxu0 0.0
      %4709 = vmatpush2.msra.mxu0 0.0
      %4710 = vmatprep.subr.mxu0 0.0
      %4711 = vmatpush2.msra.mxu0 0.0
      %4712 = vmatprep.subr.mxu0 0.0
      %4713 = vmatpush2.msra.mxu0 0.0
      %4714 = vmatprep.subr.mxu0 0.0
      %4715 = vmatpush2.msra.mxu0 0.0
      %4716 = vmatprep.mubr.f32.mxu0 0.0
      %4717 = vmatmul.mubr.f32.gmra.mxu0 %v4468
      %v4718 = vpop.f32.mrf.mxu0
      %v4719 = vadd.f32 %v4579, %v4718
      %v4720 = vpop.f32.mrf.mxu0
      %4721 = vmatprep.mubr.f32.mxu0 0.0
      %4722 = vmatmul.mubr.f32.gmra.mxu0 %v4471
      %v4723 = vpop.f32.mrf.mxu0
      %v4724 = vadd.f32 %v4584, %v4723
      %v4725 = vpop.f32.mrf.mxu0
      %4726 = vmatprep.mubr.f32.mxu0 0.0
      %4727 = vmatmul.mubr.f32.gmra.mxu0 %v4474
      %v4728 = vpop.f32.mrf.mxu0
      %v4729 = vadd.f32 %v4589, %v4728
      %v4730 = vpop.f32.mrf.mxu0
      %4731 = vmatprep.mubr.f32.mxu0 0.0
      %4732 = vmatmul.mubr.f32.gmra.mxu0 %v4477
      %v4733 = vpop.f32.mrf.mxu0
      %v4734 = vadd.f32 %v4594, %v4733
      %v4735 = vpop.f32.mrf.mxu0
      %4736 = vmatprep.mubr.f32.mxu0 0.0
      %4737 = vmatmul.mubr.f32.gmra.mxu0 %v4480
      %v4738 = vpop.f32.mrf.mxu0
      %v4739 = vadd.f32 %v4599, %v4738
      %v4740 = vpop.f32.mrf.mxu0
      %4741 = vmatprep.mubr.f32.mxu0 0.0
      %4742 = vmatmul.mubr.f32.gmra.mxu0 %v4483
      %v4743 = vpop.f32.mrf.mxu0
      %v4744 = vadd.f32 %v4604, %v4743
      %v4745 = vpop.f32.mrf.mxu0
      %4746 = vmatprep.mubr.f32.mxu0 0.0
      %4747 = vmatmul.mubr.f32.gmra.mxu0 %v4486
      %v4748 = vpop.f32.mrf.mxu0
      %v4749 = vadd.f32 %v4609, %v4748
      %v4750 = vpop.f32.mrf.mxu0
      %4751 = vmatprep.mubr.f32.mxu0 0.0
      %4752 = vmatmul.mubr.f32.gmra.mxu0 %v4489
      %v4753 = vpop.f32.mrf.mxu0
      %v4754 = vadd.f32 %v4614, %v4753
      %v4755 = vpop.f32.mrf.mxu0
      %4756 = vmatprep.mubr.f32.mxu0 0.0
      %4757 = vmatmul.mubr.f32.gmra.mxu0 %v4492
      %v4758 = vpop.f32.mrf.mxu0
      %v4759 = vadd.f32 %v4619, %v4758
      %v4760 = vpop.f32.mrf.mxu0
      %4761 = vmatprep.mubr.f32.mxu0 0.0
      %4762 = vmatmul.mubr.f32.gmra.mxu0 %v4495
      %v4763 = vpop.f32.mrf.mxu0
      %v4764 = vadd.f32 %v4624, %v4763
      %v4765 = vpop.f32.mrf.mxu0
      %4766 = vmatprep.mubr.f32.mxu0 0.0
      %4767 = vmatmul.mubr.f32.gmra.mxu0 %v4498
      %v4768 = vpop.f32.mrf.mxu0
      %v4769 = vadd.f32 %v4629, %v4768
      %v4770 = vpop.f32.mrf.mxu0
      %4771 = vmatprep.mubr.f32.mxu0 0.0
      %4772 = vmatmul.mubr.f32.gmra.mxu0 %v4501
      %v4773 = vpop.f32.mrf.mxu0
      %v4774 = vadd.f32 %v4634, %v4773
      %v4775 = vpop.f32.mrf.mxu0
      %4776 = vmatprep.mubr.f32.mxu0 0.0
      %4777 = vmatmul.mubr.f32.gmra.mxu0 %v4504
      %v4778 = vpop.f32.mrf.mxu0
      %v4779 = vadd.f32 %v4639, %v4778
      %v4780 = vpop.f32.mrf.mxu0
      %4781 = vmatprep.mubr.f32.mxu0 0.0
      %4782 = vmatmul.mubr.f32.gmra.mxu0 %v4507
      %v4783 = vpop.f32.mrf.mxu0
      %v4784 = vadd.f32 %v4644, %v4783
      %v4785 = vpop.f32.mrf.mxu0
      %4786 = vmatprep.mubr.f32.mxu0 0.0
      %4787 = vmatmul.mubr.f32.gmra.mxu0 %v4510
      %v4788 = vpop.f32.mrf.mxu0
      %v4789 = vadd.f32 %v4649, %v4788
      %v4790 = vpop.f32.mrf.mxu0
      %4791 = vdwg.mxu0
      %v4792 = vld [vmem:[%s4] sm:$0xff]
      %v4793 = vld [vmem:[%s4 + $0x8] sm:$0xff]
      %v4807 = vrot.slane %v4719, 1
      %v4808 = vrot.slane %v4724, 1
      %v4809 = vsel %vm363, %v4807, %v4808
      %v4810 = vrot.slane %v4729, 1
      %v4811 = vsel %vm363, %v4808, %v4810
      %v4812 = vrot.slane %v4734, 1
      %v4813 = vsel %vm363, %v4810, %v4812
      %v4814 = vrot.slane %v4739, 1
      %v4815 = vsel %vm363, %v4812, %v4814
      %v4816 = vrot.slane %v4744, 1
      %v4817 = vsel %vm363, %v4814, %v4816
      %v4818 = vrot.slane %v4749, 1
      %v4819 = vsel %vm363, %v4816, %v4818
      %v4820 = vrot.slane %v4754, 1
      %v4821 = vsel %vm363, %v4818, %v4820
      %v4822 = vrot.slane %v4759, 1
      %v4823 = vsel %vm363, %v4820, %v4822
      %v4824 = vrot.slane %v4764, 1
      %v4825 = vsel %vm363, %v4822, %v4824
      %v4826 = vrot.slane %v4769, 1
      %v4827 = vsel %vm363, %v4824, %v4826
      %v4828 = vrot.slane %v4774, 1
      %v4829 = vsel %vm363, %v4826, %v4828
      %v4830 = vrot.slane %v4779, 1
      %v4831 = vsel %vm363, %v4828, %v4830
      %vm4832 = vcmask 64512
      %v4833 = vsel %vm4832, %v4809, 0
      %v4835 = vsel %vm4832, %v4811, 0
      %v4837 = vsel %vm4832, %v4813, 0
      %v4839 = vsel %vm4832, %v4815, 0
      %v4841 = vsel %vm4832, %v4817, 0
      %v4843 = vsel %vm4832, %v4819, 0
      %v4845 = vsel %vm4832, %v4821, 0
      %v4847 = vsel %vm4832, %v4823, 0
      %v4849 = vsel %vm4832, %v4825, 0
      %v4851 = vsel %vm4832, %v4827, 0
      %v4853 = vsel %vm4832, %v4829, 0
      %v4855 = vsel %vm4832, %v4831, 0
      %4857 = vmatprep.subr.mxu0 0.0
      %4858 = vmatpush1.msra.mxu0 0.0
      %4859 = vmatprep.subr.mxu0 0.0
      %4860 = vmatpush1.msra.mxu0 0.0
      %4861 = vmatprep.subr.mxu0 0.0
      %4862 = vmatpush1.msra.mxu0 0.0
      %4863 = vmatprep.subr.mxu0 0.0
      %4864 = vmatpush1.msra.mxu0 0.0
      %4865 = vmatprep.subr.mxu0 0.0
      %4866 = vmatpush1.msra.mxu0 0.0
      %4867 = vmatprep.subr.mxu0 0.0
      %4868 = vmatpush1.msra.mxu0 0.0
      %4869 = vmatprep.subr.mxu0 0.0
      %4870 = vmatpush1.msra.mxu0 0.0
      %4871 = vmatprep.subr.mxu0 0.0
      %4872 = vmatpush1.msra.mxu0 0.0
      %4873 = vmatprep.subr.mxu0 0.0
      %4874 = vmatpush1.msra.mxu0 0.0
      %4875 = vmatprep.subr.mxu0 0.0
      %4876 = vmatpush1.msra.mxu0 0.0
      %4877 = vmatprep.subr.mxu0 0.0
      %4878 = vmatpush1.msra.mxu0 0.0
      %4879 = vmatprep.subr.mxu0 0.0
      %4880 = vmatpush1.msra.mxu0 0.0
      %4881 = vmatprep.subr.mxu0 0.0
      %4882 = vmatpush1.msra.mxu0 0.0
      %4883 = vmatprep.subr.mxu0 0.0
      %4884 = vmatpush1.msra.mxu0 0.0
      %4885 = vmatprep.subr.mxu0 0.0
      %4886 = vmatpush1.msra.mxu0 0.0
      %4887 = vmatprep.subr.mxu0 0.0
      %4888 = vmatpush1.msra.mxu0 %v4793
      %4889 = vmatprep.subr.mxu0 0.0
      %4890 = vmatpush2.msra.mxu0 0.0
      %4891 = vmatprep.subr.mxu0 0.0
      %4892 = vmatpush2.msra.mxu0 0.0
      %4893 = vmatprep.subr.mxu0 0.0
      %4894 = vmatpush2.msra.mxu0 0.0
      %4895 = vmatprep.subr.mxu0 0.0
      %4896 = vmatpush2.msra.mxu0 0.0
      %4897 = vmatprep.subr.mxu0 0.0
      %4898 = vmatpush2.msra.mxu0 0.0
      %4899 = vmatprep.subr.mxu0 0.0
      %4900 = vmatpush2.msra.mxu0 0.0
      %4901 = vmatprep.subr.mxu0 0.0
      %4902 = vmatpush2.msra.mxu0 0.0
      %4903 = vmatprep.subr.mxu0 0.0
      %4904 = vmatpush2.msra.mxu0 0.0
      %4905 = vmatprep.subr.mxu0 0.0
      %4906 = vmatpush2.msra.mxu0 0.0
      %4907 = vmatprep.subr.mxu0 0.0
      %4908 = vmatpush2.msra.mxu0 0.0
      %4909 = vmatprep.subr.mxu0 0.0
      %4910 = vmatpush2.msra.mxu0 0.0
      %4911 = vmatprep.subr.mxu0 0.0
      %4912 = vmatpush2.msra.mxu0 0.0
      %4913 = vmatprep.subr.mxu0 0.0
      %4914 = vmatpush2.msra.mxu0 0.0
      %4915 = vmatprep.subr.mxu0 0.0
      %4916 = vmatpush2.msra.mxu0 0.0
      %4917 = vmatprep.subr.mxu0 0.0
      %4918 = vmatpush2.msra.mxu0 0.0
      %4919 = vmatprep.subr.mxu0 0.0
      %4920 = vmatpush2.msra.mxu0 0.0
      %4921 = vmatprep.mubr.f32.mxu0 0.0
      %4922 = vmatmul.mubr.f32.gmra.mxu0 %v4833
      %v4923 = vpop.f32.mrf.mxu0
      %v4924 = vadd.f32 0.0, %v4923
      %v4925 = vpop.f32.mrf.mxu0
      %4926 = vmatprep.mubr.f32.mxu0 0.0
      %4927 = vmatmul.mubr.f32.gmra.mxu0 %v4835
      %v4928 = vpop.f32.mrf.mxu0
      %v4929 = vadd.f32 0.0, %v4928
      %v4930 = vpop.f32.mrf.mxu0
      %4931 = vmatprep.mubr.f32.mxu0 0.0
      %4932 = vmatmul.mubr.f32.gmra.mxu0 %v4837
      %v4933 = vpop.f32.mrf.mxu0
      %v4934 = vadd.f32 0.0, %v4933
      %v4935 = vpop.f32.mrf.mxu0
      %4936 = vmatprep.mubr.f32.mxu0 0.0
      %4937 = vmatmul.mubr.f32.gmra.mxu0 %v4839
      %v4938 = vpop.f32.mrf.mxu0
      %v4939 = vadd.f32 0.0, %v4938
      %v4940 = vpop.f32.mrf.mxu0
      %4941 = vmatprep.mubr.f32.mxu0 0.0
      %4942 = vmatmul.mubr.f32.gmra.mxu0 %v4841
      %v4943 = vpop.f32.mrf.mxu0
      %v4944 = vadd.f32 0.0, %v4943
      %v4945 = vpop.f32.mrf.mxu0
      %4946 = vmatprep.mubr.f32.mxu0 0.0
      %4947 = vmatmul.mubr.f32.gmra.mxu0 %v4843
      %v4948 = vpop.f32.mrf.mxu0
      %v4949 = vadd.f32 0.0, %v4948
      %v4950 = vpop.f32.mrf.mxu0
      %4951 = vmatprep.mubr.f32.mxu0 0.0
      %4952 = vmatmul.mubr.f32.gmra.mxu0 %v4845
      %v4953 = vpop.f32.mrf.mxu0
      %v4954 = vadd.f32 0.0, %v4953
      %v4955 = vpop.f32.mrf.mxu0
      %4956 = vmatprep.mubr.f32.mxu0 0.0
      %4957 = vmatmul.mubr.f32.gmra.mxu0 %v4847
      %v4958 = vpop.f32.mrf.mxu0
      %v4959 = vadd.f32 0.0, %v4958
      %v4960 = vpop.f32.mrf.mxu0
      %4961 = vmatprep.mubr.f32.mxu0 0.0
      %4962 = vmatmul.mubr.f32.gmra.mxu0 %v4849
      %v4963 = vpop.f32.mrf.mxu0
      %v4964 = vadd.f32 0.0, %v4963
      %v4965 = vpop.f32.mrf.mxu0
      %4966 = vmatprep.mubr.f32.mxu0 0.0
      %4967 = vmatmul.mubr.f32.gmra.mxu0 %v4851
      %v4968 = vpop.f32.mrf.mxu0
      %v4969 = vadd.f32 0.0, %v4968
      %v4970 = vpop.f32.mrf.mxu0
      %4971 = vmatprep.mubr.f32.mxu0 0.0
      %4972 = vmatmul.mubr.f32.gmra.mxu0 %v4853
      %v4973 = vpop.f32.mrf.mxu0
      %v4974 = vadd.f32 0.0, %v4973
      %v4975 = vpop.f32.mrf.mxu0
      %4976 = vmatprep.mubr.f32.mxu0 0.0
      %4977 = vmatmul.mubr.f32.gmra.mxu0 %v4855
      %v4978 = vpop.f32.mrf.mxu0
      %v4979 = vadd.f32 0.0, %v4978
      %v4980 = vpop.f32.mrf.mxu0
      %4981 = vdwg.mxu0
      %v4982 = vsel %vm4832, %v4719, 0
      %v4984 = vsel %vm4832, %v4724, 0
      %v4986 = vsel %vm4832, %v4729, 0
      %v4988 = vsel %vm4832, %v4734, 0
      %v4990 = vsel %vm4832, %v4739, 0
      %v4992 = vsel %vm4832, %v4744, 0
      %v4994 = vsel %vm4832, %v4749, 0
      %v4996 = vsel %vm4832, %v4754, 0
      %v4998 = vsel %vm4832, %v4759, 0
      %v5000 = vsel %vm4832, %v4764, 0
      %v5002 = vsel %vm4832, %v4769, 0
      %v5004 = vsel %vm4832, %v4774, 0
      %5006 = vmatprep.subr.mxu0 0.0
      %5007 = vmatpush1.msra.mxu0 0.0
      %5008 = vmatprep.subr.mxu0 0.0
      %5009 = vmatpush1.msra.mxu0 0.0
      %5010 = vmatprep.subr.mxu0 0.0
      %5011 = vmatpush1.msra.mxu0 0.0
      %5012 = vmatprep.subr.mxu0 0.0
      %5013 = vmatpush1.msra.mxu0 0.0
      %5014 = vmatprep.subr.mxu0 0.0
      %5015 = vmatpush1.msra.mxu0 0.0
      %5016 = vmatprep.subr.mxu0 0.0
      %5017 = vmatpush1.msra.mxu0 0.0
      %5018 = vmatprep.subr.mxu0 0.0
      %5019 = vmatpush1.msra.mxu0 0.0
      %5020 = vmatprep.subr.mxu0 0.0
      %5021 = vmatpush1.msra.mxu0 0.0
      %5022 = vmatprep.subr.mxu0 0.0
      %5023 = vmatpush1.msra.mxu0 0.0
      %5024 = vmatprep.subr.mxu0 0.0
      %5025 = vmatpush1.msra.mxu0 0.0
      %5026 = vmatprep.subr.mxu0 0.0
      %5027 = vmatpush1.msra.mxu0 0.0
      %5028 = vmatprep.subr.mxu0 0.0
      %5029 = vmatpush1.msra.mxu0 0.0
      %5030 = vmatprep.subr.mxu0 0.0
      %5031 = vmatpush1.msra.mxu0 0.0
      %5032 = vmatprep.subr.mxu0 0.0
      %5033 = vmatpush1.msra.mxu0 0.0
      %5034 = vmatprep.subr.mxu0 0.0
      %5035 = vmatpush1.msra.mxu0 0.0
      %5036 = vmatprep.subr.mxu0 0.0
      %5037 = vmatpush1.msra.mxu0 %v4792
      %5038 = vmatprep.subr.mxu0 0.0
      %5039 = vmatpush2.msra.mxu0 0.0
      %5040 = vmatprep.subr.mxu0 0.0
      %5041 = vmatpush2.msra.mxu0 0.0
      %5042 = vmatprep.subr.mxu0 0.0
      %5043 = vmatpush2.msra.mxu0 0.0
      %5044 = vmatprep.subr.mxu0 0.0
      %5045 = vmatpush2.msra.mxu0 0.0
      %5046 = vmatprep.subr.mxu0 0.0
      %5047 = vmatpush2.msra.mxu0 0.0
      %5048 = vmatprep.subr.mxu0 0.0
      %5049 = vmatpush2.msra.mxu0 0.0
      %5050 = vmatprep.subr.mxu0 0.0
      %5051 = vmatpush2.msra.mxu0 0.0
      %5052 = vmatprep.subr.mxu0 0.0
      %5053 = vmatpush2.msra.mxu0 0.0
      %5054 = vmatprep.subr.mxu0 0.0
      %5055 = vmatpush2.msra.mxu0 0.0
      %5056 = vmatprep.subr.mxu0 0.0
      %5057 = vmatpush2.msra.mxu0 0.0
      %5058 = vmatprep.subr.mxu0 0.0
      %5059 = vmatpush2.msra.mxu0 0.0
      %5060 = vmatprep.subr.mxu0 0.0
      %5061 = vmatpush2.msra.mxu0 0.0
      %5062 = vmatprep.subr.mxu0 0.0
      %5063 = vmatpush2.msra.mxu0 0.0
      %5064 = vmatprep.subr.mxu0 0.0
      %5065 = vmatpush2.msra.mxu0 0.0
      %5066 = vmatprep.subr.mxu0 0.0
      %5067 = vmatpush2.msra.mxu0 0.0
      %5068 = vmatprep.subr.mxu0 0.0
      %5069 = vmatpush2.msra.mxu0 0.0
      %5070 = vmatprep.mubr.f32.mxu0 0.0
      %5071 = vmatmul.mubr.f32.gmra.mxu0 %v4982
      %v5072 = vpop.f32.mrf.mxu0
      %v5073 = vadd.f32 %v4924, %v5072
      %v5074 = vpop.f32.mrf.mxu0
      %5075 = vmatprep.mubr.f32.mxu0 0.0
      %5076 = vmatmul.mubr.f32.gmra.mxu0 %v4984
      %v5077 = vpop.f32.mrf.mxu0
      %v5078 = vadd.f32 %v4929, %v5077
      %v5079 = vpop.f32.mrf.mxu0
      %5080 = vmatprep.mubr.f32.mxu0 0.0
      %5081 = vmatmul.mubr.f32.gmra.mxu0 %v4986
      %v5082 = vpop.f32.mrf.mxu0
      %v5083 = vadd.f32 %v4934, %v5082
      %v5084 = vpop.f32.mrf.mxu0
      %5085 = vmatprep.mubr.f32.mxu0 0.0
      %5086 = vmatmul.mubr.f32.gmra.mxu0 %v4988
      %v5087 = vpop.f32.mrf.mxu0
      %v5088 = vadd.f32 %v4939, %v5087
      %v5089 = vpop.f32.mrf.mxu0
      %5090 = vmatprep.mubr.f32.mxu0 0.0
      %5091 = vmatmul.mubr.f32.gmra.mxu0 %v4990
      %v5092 = vpop.f32.mrf.mxu0
      %v5093 = vadd.f32 %v4944, %v5092
      %v5094 = vpop.f32.mrf.mxu0
      %5095 = vmatprep.mubr.f32.mxu0 0.0
      %5096 = vmatmul.mubr.f32.gmra.mxu0 %v4992
      %v5097 = vpop.f32.mrf.mxu0
      %v5098 = vadd.f32 %v4949, %v5097
      %v5099 = vpop.f32.mrf.mxu0
      %5100 = vmatprep.mubr.f32.mxu0 0.0
      %5101 = vmatmul.mubr.f32.gmra.mxu0 %v4994
      %v5102 = vpop.f32.mrf.mxu0
      %v5103 = vadd.f32 %v4954, %v5102
      %v5104 = vpop.f32.mrf.mxu0
      %5105 = vmatprep.mubr.f32.mxu0 0.0
      %5106 = vmatmul.mubr.f32.gmra.mxu0 %v4996
      %v5107 = vpop.f32.mrf.mxu0
      %v5108 = vadd.f32 %v4959, %v5107
      %v5109 = vpop.f32.mrf.mxu0
      %5110 = vmatprep.mubr.f32.mxu0 0.0
      %5111 = vmatmul.mubr.f32.gmra.mxu0 %v4998
      %v5112 = vpop.f32.mrf.mxu0
      %v5113 = vadd.f32 %v4964, %v5112
      %v5114 = vpop.f32.mrf.mxu0
      %5115 = vmatprep.mubr.f32.mxu0 0.0
      %5116 = vmatmul.mubr.f32.gmra.mxu0 %v5000
      %v5117 = vpop.f32.mrf.mxu0
      %v5118 = vadd.f32 %v4969, %v5117
      %v5119 = vpop.f32.mrf.mxu0
      %5120 = vmatprep.mubr.f32.mxu0 0.0
      %5121 = vmatmul.mubr.f32.gmra.mxu0 %v5002
      %v5122 = vpop.f32.mrf.mxu0
      %v5123 = vadd.f32 %v4974, %v5122
      %v5124 = vpop.f32.mrf.mxu0
      %5125 = vmatprep.mubr.f32.mxu0 0.0
      %5126 = vmatmul.mubr.f32.gmra.mxu0 %v5004
      %v5127 = vpop.f32.mrf.mxu0
      %v5128 = vadd.f32 %v4979, %v5127
      %v5129 = vpop.f32.mrf.mxu0
      %5130 = vdwg.mxu0
      %v5131 = vld [vmem:[%s4 + $0x10] sm:$0xff]
      %v5132 = vrot.slane %v4719, 2
      %v5133 = vrot.slane %v4724, 2
      %v5134 = vsel %vm1112, %v5132, %v5133
      %v5135 = vrot.slane %v4729, 2
      %v5136 = vsel %vm1112, %v5133, %v5135
      %v5137 = vrot.slane %v4734, 2
      %v5138 = vsel %vm1112, %v5135, %v5137
      %v5139 = vrot.slane %v4739, 2
      %v5140 = vsel %vm1112, %v5137, %v5139
      %v5141 = vrot.slane %v4744, 2
      %v5142 = vsel %vm1112, %v5139, %v5141
      %v5143 = vrot.slane %v4749, 2
      %v5144 = vsel %vm1112, %v5141, %v5143
      %v5145 = vrot.slane %v4754, 2
      %v5146 = vsel %vm1112, %v5143, %v5145
      %v5147 = vrot.slane %v4759, 2
      %v5148 = vsel %vm1112, %v5145, %v5147
      %v5149 = vrot.slane %v4764, 2
      %v5150 = vsel %vm1112, %v5147, %v5149
      %v5151 = vrot.slane %v4769, 2
      %v5152 = vsel %vm1112, %v5149, %v5151
      %v5153 = vrot.slane %v4774, 2
      %v5154 = vsel %vm1112, %v5151, %v5153
      %v5155 = vrot.slane %v4779, 2
      %v5156 = vsel %vm1112, %v5153, %v5155
      %v5157 = vsel %vm4832, %v5134, 0
      %v5159 = vsel %vm4832, %v5136, 0
      %v5161 = vsel %vm4832, %v5138, 0
      %v5163 = vsel %vm4832, %v5140, 0
      %v5165 = vsel %vm4832, %v5142, 0
      %v5167 = vsel %vm4832, %v5144, 0
      %v5169 = vsel %vm4832, %v5146, 0
      %v5171 = vsel %vm4832, %v5148, 0
      %v5173 = vsel %vm4832, %v5150, 0
      %v5175 = vsel %vm4832, %v5152, 0
      %v5177 = vsel %vm4832, %v5154, 0
      %v5179 = vsel %vm4832, %v5156, 0
      %5181 = vmatprep.subr.mxu0 0.0
      %5182 = vmatpush1.msra.mxu0 0.0
      %5183 = vmatprep.subr.mxu0 0.0
      %5184 = vmatpush1.msra.mxu0 0.0
      %5185 = vmatprep.subr.mxu0 0.0
      %5186 = vmatpush1.msra.mxu0 0.0
      %5187 = vmatprep.subr.mxu0 0.0
      %5188 = vmatpush1.msra.mxu0 0.0
      %5189 = vmatprep.subr.mxu0 0.0
      %5190 = vmatpush1.msra.mxu0 0.0
      %5191 = vmatprep.subr.mxu0 0.0
      %5192 = vmatpush1.msra.mxu0 0.0
      %5193 = vmatprep.subr.mxu0 0.0
      %5194 = vmatpush1.msra.mxu0 0.0
      %5195 = vmatprep.subr.mxu0 0.0
      %5196 = vmatpush1.msra.mxu0 0.0
      %5197 = vmatprep.subr.mxu0 0.0
      %5198 = vmatpush1.msra.mxu0 0.0
      %5199 = vmatprep.subr.mxu0 0.0
      %5200 = vmatpush1.msra.mxu0 0.0
      %5201 = vmatprep.subr.mxu0 0.0
      %5202 = vmatpush1.msra.mxu0 0.0
      %5203 = vmatprep.subr.mxu0 0.0
      %5204 = vmatpush1.msra.mxu0 0.0
      %5205 = vmatprep.subr.mxu0 0.0
      %5206 = vmatpush1.msra.mxu0 0.0
      %5207 = vmatprep.subr.mxu0 0.0
      %5208 = vmatpush1.msra.mxu0 0.0
      %5209 = vmatprep.subr.mxu0 0.0
      %5210 = vmatpush1.msra.mxu0 0.0
      %5211 = vmatprep.subr.mxu0 0.0
      %5212 = vmatpush1.msra.mxu0 %v5131
      %5213 = vmatprep.subr.mxu0 0.0
      %5214 = vmatpush2.msra.mxu0 0.0
      %5215 = vmatprep.subr.mxu0 0.0
      %5216 = vmatpush2.msra.mxu0 0.0
      %5217 = vmatprep.subr.mxu0 0.0
      %5218 = vmatpush2.msra.mxu0 0.0
      %5219 = vmatprep.subr.mxu0 0.0
      %5220 = vmatpush2.msra.mxu0 0.0
      %5221 = vmatprep.subr.mxu0 0.0
      %5222 = vmatpush2.msra.mxu0 0.0
      %5223 = vmatprep.subr.mxu0 0.0
      %5224 = vmatpush2.msra.mxu0 0.0
      %5225 = vmatprep.subr.mxu0 0.0
      %5226 = vmatpush2.msra.mxu0 0.0
      %5227 = vmatprep.subr.mxu0 0.0
      %5228 = vmatpush2.msra.mxu0 0.0
      %5229 = vmatprep.subr.mxu0 0.0
      %5230 = vmatpush2.msra.mxu0 0.0
      %5231 = vmatprep.subr.mxu0 0.0
      %5232 = vmatpush2.msra.mxu0 0.0
      %5233 = vmatprep.subr.mxu0 0.0
      %5234 = vmatpush2.msra.mxu0 0.0
      %5235 = vmatprep.subr.mxu0 0.0
      %5236 = vmatpush2.msra.mxu0 0.0
      %5237 = vmatprep.subr.mxu0 0.0
      %5238 = vmatpush2.msra.mxu0 0.0
      %5239 = vmatprep.subr.mxu0 0.0
      %5240 = vmatpush2.msra.mxu0 0.0
      %5241 = vmatprep.subr.mxu0 0.0
      %5242 = vmatpush2.msra.mxu0 0.0
      %5243 = vmatprep.subr.mxu0 0.0
      %5244 = vmatpush2.msra.mxu0 0.0
      %5245 = vmatprep.mubr.f32.mxu0 0.0
      %5246 = vmatmul.mubr.f32.gmra.mxu0 %v5157
      %v5247 = vpop.f32.mrf.mxu0
      %v5248 = vadd.f32 0.0, %v5247
      %v5249 = vpop.f32.mrf.mxu0
      %5250 = vmatprep.mubr.f32.mxu0 0.0
      %5251 = vmatmul.mubr.f32.gmra.mxu0 %v5159
      %v5252 = vpop.f32.mrf.mxu0
      %v5253 = vadd.f32 0.0, %v5252
      %v5254 = vpop.f32.mrf.mxu0
      %5255 = vmatprep.mubr.f32.mxu0 0.0
      %5256 = vmatmul.mubr.f32.gmra.mxu0 %v5161
      %v5257 = vpop.f32.mrf.mxu0
      %v5258 = vadd.f32 0.0, %v5257
      %v5259 = vpop.f32.mrf.mxu0
      %5260 = vmatprep.mubr.f32.mxu0 0.0
      %5261 = vmatmul.mubr.f32.gmra.mxu0 %v5163
      %v5262 = vpop.f32.mrf.mxu0
      %v5263 = vadd.f32 0.0, %v5262
      %v5264 = vpop.f32.mrf.mxu0
      %5265 = vmatprep.mubr.f32.mxu0 0.0
      %5266 = vmatmul.mubr.f32.gmra.mxu0 %v5165
      %v5267 = vpop.f32.mrf.mxu0
      %v5268 = vadd.f32 0.0, %v5267
      %v5269 = vpop.f32.mrf.mxu0
      %5270 = vmatprep.mubr.f32.mxu0 0.0
      %5271 = vmatmul.mubr.f32.gmra.mxu0 %v5167
      %v5272 = vpop.f32.mrf.mxu0
      %v5273 = vadd.f32 0.0, %v5272
      %v5274 = vpop.f32.mrf.mxu0
      %5275 = vmatprep.mubr.f32.mxu0 0.0
      %5276 = vmatmul.mubr.f32.gmra.mxu0 %v5169
      %v5277 = vpop.f32.mrf.mxu0
      %v5278 = vadd.f32 0.0, %v5277
      %v5279 = vpop.f32.mrf.mxu0
      %5280 = vmatprep.mubr.f32.mxu0 0.0
      %5281 = vmatmul.mubr.f32.gmra.mxu0 %v5171
      %v5282 = vpop.f32.mrf.mxu0
      %v5283 = vadd.f32 0.0, %v5282
      %v5284 = vpop.f32.mrf.mxu0
      %5285 = vmatprep.mubr.f32.mxu0 0.0
      %5286 = vmatmul.mubr.f32.gmra.mxu0 %v5173
      %v5287 = vpop.f32.mrf.mxu0
      %v5288 = vadd.f32 0.0, %v5287
      %v5289 = vpop.f32.mrf.mxu0
      %5290 = vmatprep.mubr.f32.mxu0 0.0
      %5291 = vmatmul.mubr.f32.gmra.mxu0 %v5175
      %v5292 = vpop.f32.mrf.mxu0
      %v5293 = vadd.f32 0.0, %v5292
      %v5294 = vpop.f32.mrf.mxu0
      %5295 = vmatprep.mubr.f32.mxu0 0.0
      %5296 = vmatmul.mubr.f32.gmra.mxu0 %v5177
      %v5297 = vpop.f32.mrf.mxu0
      %v5298 = vadd.f32 0.0, %v5297
      %v5299 = vpop.f32.mrf.mxu0
      %5300 = vmatprep.mubr.f32.mxu0 0.0
      %5301 = vmatmul.mubr.f32.gmra.mxu0 %v5179
      %v5302 = vpop.f32.mrf.mxu0
      %v5303 = vadd.f32 0.0, %v5302
      %v5304 = vpop.f32.mrf.mxu0
      %5305 = vdwg.mxu0
      %v5306 = vadd.f32 %v5073, %v5248
      %v5307 = vadd.f32 %v5078, %v5253
      %v5308 = vadd.f32 %v5083, %v5258
      %v5309 = vadd.f32 %v5088, %v5263
      %v5310 = vadd.f32 %v5093, %v5268
      %v5311 = vadd.f32 %v5098, %v5273
      %v5312 = vadd.f32 %v5103, %v5278
      %v5313 = vadd.f32 %v5108, %v5283
      %v5314 = vadd.f32 %v5113, %v5288
      %v5315 = vadd.f32 %v5118, %v5293
      %v5316 = vadd.f32 %v5123, %v5298
      %v5317 = vadd.f32 %v5128, %v5303
      %v5318 = vld [vmem:[%s4 + $0x18] sm:$0xff]
      %v5320 = vrot.slane %v4784, 2
      %v5321 = vsel %vm1112, %v5155, %v5320
      %v5322 = vsel %vm4832, %v5321, 0
      %5324 = vmatprep.subr.mxu0 0.0
      %5325 = vmatpush1.msra.mxu0 0.0
      %5326 = vmatprep.subr.mxu0 0.0
      %5327 = vmatpush1.msra.mxu0 0.0
      %5328 = vmatprep.subr.mxu0 0.0
      %5329 = vmatpush1.msra.mxu0 0.0
      %5330 = vmatprep.subr.mxu0 0.0
      %5331 = vmatpush1.msra.mxu0 0.0
      %5332 = vmatprep.subr.mxu0 0.0
      %5333 = vmatpush1.msra.mxu0 0.0
      %5334 = vmatprep.subr.mxu0 0.0
      %5335 = vmatpush1.msra.mxu0 0.0
      %5336 = vmatprep.subr.mxu0 0.0
      %5337 = vmatpush1.msra.mxu0 0.0
      %5338 = vmatprep.subr.mxu0 0.0
      %5339 = vmatpush1.msra.mxu0 0.0
      %5340 = vmatprep.subr.mxu0 0.0
      %5341 = vmatpush1.msra.mxu0 0.0
      %5342 = vmatprep.subr.mxu0 0.0
      %5343 = vmatpush1.msra.mxu0 0.0
      %5344 = vmatprep.subr.mxu0 0.0
      %5345 = vmatpush1.msra.mxu0 0.0
      %5346 = vmatprep.subr.mxu0 0.0
      %5347 = vmatpush1.msra.mxu0 0.0
      %5348 = vmatprep.subr.mxu0 0.0
      %5349 = vmatpush1.msra.mxu0 0.0
      %5350 = vmatprep.subr.mxu0 0.0
      %5351 = vmatpush1.msra.mxu0 0.0
      %5352 = vmatprep.subr.mxu0 0.0
      %5353 = vmatpush1.msra.mxu0 0.0
      %5354 = vmatprep.subr.mxu0 0.0
      %5355 = vmatpush1.msra.mxu0 %v5318
      %5356 = vmatprep.subr.mxu0 0.0
      %5357 = vmatpush2.msra.mxu0 0.0
      %5358 = vmatprep.subr.mxu0 0.0
      %5359 = vmatpush2.msra.mxu0 0.0
      %5360 = vmatprep.subr.mxu0 0.0
      %5361 = vmatpush2.msra.mxu0 0.0
      %5362 = vmatprep.subr.mxu0 0.0
      %5363 = vmatpush2.msra.mxu0 0.0
      %5364 = vmatprep.subr.mxu0 0.0
      %5365 = vmatpush2.msra.mxu0 0.0
      %5366 = vmatprep.subr.mxu0 0.0
      %5367 = vmatpush2.msra.mxu0 0.0
      %5368 = vmatprep.subr.mxu0 0.0
      %5369 = vmatpush2.msra.mxu0 0.0
      %5370 = vmatprep.subr.mxu0 0.0
      %5371 = vmatpush2.msra.mxu0 0.0
      %5372 = vmatprep.subr.mxu0 0.0
      %5373 = vmatpush2.msra.mxu0 0.0
      %5374 = vmatprep.subr.mxu0 0.0
      %5375 = vmatpush2.msra.mxu0 0.0
      %5376 = vmatprep.subr.mxu0 0.0
      %5377 = vmatpush2.msra.mxu0 0.0
      %5378 = vmatprep.subr.mxu0 0.0
      %5379 = vmatpush2.msra.mxu0 0.0
      %5380 = vmatprep.subr.mxu0 0.0
      %5381 = vmatpush2.msra.mxu0 0.0
      %5382 = vmatprep.subr.mxu0 0.0
      %5383 = vmatpush2.msra.mxu0 0.0
      %5384 = vmatprep.subr.mxu0 0.0
      %5385 = vmatpush2.msra.mxu0 0.0
      %5386 = vmatprep.subr.mxu0 0.0
      %5387 = vmatpush2.msra.mxu0 0.0
      %5388 = vmatprep.mubr.f32.mxu0 0.0
      %5389 = vmatmul.mubr.f32.gmra.mxu0 %v5159
      %v5390 = vpop.f32.mrf.mxu0
      %v5391 = vadd.f32 0.0, %v5390
      %v5392 = vpop.f32.mrf.mxu0
      %5393 = vmatprep.mubr.f32.mxu0 0.0
      %5394 = vmatmul.mubr.f32.gmra.mxu0 %v5161
      %v5395 = vpop.f32.mrf.mxu0
      %v5396 = vadd.f32 0.0, %v5395
      %v5397 = vpop.f32.mrf.mxu0
      %5398 = vmatprep.mubr.f32.mxu0 0.0
      %5399 = vmatmul.mubr.f32.gmra.mxu0 %v5163
      %v5400 = vpop.f32.mrf.mxu0
      %v5401 = vadd.f32 0.0, %v5400
      %v5402 = vpop.f32.mrf.mxu0
      %5403 = vmatprep.mubr.f32.mxu0 0.0
      %5404 = vmatmul.mubr.f32.gmra.mxu0 %v5165
      %v5405 = vpop.f32.mrf.mxu0
      %v5406 = vadd.f32 0.0, %v5405
      %v5407 = vpop.f32.mrf.mxu0
      %5408 = vmatprep.mubr.f32.mxu0 0.0
      %5409 = vmatmul.mubr.f32.gmra.mxu0 %v5167
      %v5410 = vpop.f32.mrf.mxu0
      %v5411 = vadd.f32 0.0, %v5410
      %v5412 = vpop.f32.mrf.mxu0
      %5413 = vmatprep.mubr.f32.mxu0 0.0
      %5414 = vmatmul.mubr.f32.gmra.mxu0 %v5169
      %v5415 = vpop.f32.mrf.mxu0
      %v5416 = vadd.f32 0.0, %v5415
      %v5417 = vpop.f32.mrf.mxu0
      %5418 = vmatprep.mubr.f32.mxu0 0.0
      %5419 = vmatmul.mubr.f32.gmra.mxu0 %v5171
      %v5420 = vpop.f32.mrf.mxu0
      %v5421 = vadd.f32 0.0, %v5420
      %v5422 = vpop.f32.mrf.mxu0
      %5423 = vmatprep.mubr.f32.mxu0 0.0
      %5424 = vmatmul.mubr.f32.gmra.mxu0 %v5173
      %v5425 = vpop.f32.mrf.mxu0
      %v5426 = vadd.f32 0.0, %v5425
      %v5427 = vpop.f32.mrf.mxu0
      %5428 = vmatprep.mubr.f32.mxu0 0.0
      %5429 = vmatmul.mubr.f32.gmra.mxu0 %v5175
      %v5430 = vpop.f32.mrf.mxu0
      %v5431 = vadd.f32 0.0, %v5430
      %v5432 = vpop.f32.mrf.mxu0
      %5433 = vmatprep.mubr.f32.mxu0 0.0
      %5434 = vmatmul.mubr.f32.gmra.mxu0 %v5177
      %v5435 = vpop.f32.mrf.mxu0
      %v5436 = vadd.f32 0.0, %v5435
      %v5437 = vpop.f32.mrf.mxu0
      %5438 = vmatprep.mubr.f32.mxu0 0.0
      %5439 = vmatmul.mubr.f32.gmra.mxu0 %v5179
      %v5440 = vpop.f32.mrf.mxu0
      %v5441 = vadd.f32 0.0, %v5440
      %v5442 = vpop.f32.mrf.mxu0
      %5443 = vmatprep.mubr.f32.mxu0 0.0
      %5444 = vmatmul.mubr.f32.gmra.mxu0 %v5322
      %v5445 = vpop.f32.mrf.mxu0
      %v5446 = vadd.f32 0.0, %v5445
      %v5447 = vpop.f32.mrf.mxu0
      %5448 = vdwg.mxu0
      %v5449 = vadd.f32 %v5306, %v5391
      %v5450 = vadd.f32 %v5307, %v5396
      %v5451 = vadd.f32 %v5308, %v5401
      %v5452 = vadd.f32 %v5309, %v5406
      %v5453 = vadd.f32 %v5310, %v5411
      %v5454 = vadd.f32 %v5311, %v5416
      %v5455 = vadd.f32 %v5312, %v5421
      %v5456 = vadd.f32 %v5313, %v5426
      %v5457 = vadd.f32 %v5314, %v5431
      %v5458 = vadd.f32 %v5315, %v5436
      %v5459 = vadd.f32 %v5316, %v5441
      %v5460 = vadd.f32 %v5317, %v5446
      %v5461 = vld [vmem:[%s4 + $0x20] sm:$0xff]
      %v5462 = vrot.slane %v4724, 3
      %v5463 = vrot.slane %v4729, 3
      %v5464 = vsel %vm1870, %v5462, %v5463
      %v5465 = vrot.slane %v4734, 3
      %v5466 = vsel %vm1870, %v5463, %v5465
      %v5467 = vrot.slane %v4739, 3
      %v5468 = vsel %vm1870, %v5465, %v5467
      %v5469 = vrot.slane %v4744, 3
      %v5470 = vsel %vm1870, %v5467, %v5469
      %v5471 = vrot.slane %v4749, 3
      %v5472 = vsel %vm1870, %v5469, %v5471
      %v5473 = vrot.slane %v4754, 3
      %v5474 = vsel %vm1870, %v5471, %v5473
      %v5475 = vrot.slane %v4759, 3
      %v5476 = vsel %vm1870, %v5473, %v5475
      %v5477 = vrot.slane %v4764, 3
      %v5478 = vsel %vm1870, %v5475, %v5477
      %v5479 = vrot.slane %v4769, 3
      %v5480 = vsel %vm1870, %v5477, %v5479
      %v5481 = vrot.slane %v4774, 3
      %v5482 = vsel %vm1870, %v5479, %v5481
      %v5483 = vrot.slane %v4779, 3
      %v5484 = vsel %vm1870, %v5481, %v5483
      %v5485 = vrot.slane %v4784, 3
      %v5486 = vsel %vm1870, %v5483, %v5485
      %v5487 = vsel %vm4832, %v5464, 0
      %v5489 = vsel %vm4832, %v5466, 0
      %v5491 = vsel %vm4832, %v5468, 0
      %v5493 = vsel %vm4832, %v5470, 0
      %v5495 = vsel %vm4832, %v5472, 0
      %v5497 = vsel %vm4832, %v5474, 0
      %v5499 = vsel %vm4832, %v5476, 0
      %v5501 = vsel %vm4832, %v5478, 0
      %v5503 = vsel %vm4832, %v5480, 0
      %v5505 = vsel %vm4832, %v5482, 0
      %v5507 = vsel %vm4832, %v5484, 0
      %v5509 = vsel %vm4832, %v5486, 0
      %5511 = vmatprep.subr.mxu0 0.0
      %5512 = vmatpush1.msra.mxu0 0.0
      %5513 = vmatprep.subr.mxu0 0.0
      %5514 = vmatpush1.msra.mxu0 0.0
      %5515 = vmatprep.subr.mxu0 0.0
      %5516 = vmatpush1.msra.mxu0 0.0
      %5517 = vmatprep.subr.mxu0 0.0
      %5518 = vmatpush1.msra.mxu0 0.0
      %5519 = vmatprep.subr.mxu0 0.0
      %5520 = vmatpush1.msra.mxu0 0.0
      %5521 = vmatprep.subr.mxu0 0.0
      %5522 = vmatpush1.msra.mxu0 0.0
      %5523 = vmatprep.subr.mxu0 0.0
      %5524 = vmatpush1.msra.mxu0 0.0
      %5525 = vmatprep.subr.mxu0 0.0
      %5526 = vmatpush1.msra.mxu0 0.0
      %5527 = vmatprep.subr.mxu0 0.0
      %5528 = vmatpush1.msra.mxu0 0.0
      %5529 = vmatprep.subr.mxu0 0.0
      %5530 = vmatpush1.msra.mxu0 0.0
      %5531 = vmatprep.subr.mxu0 0.0
      %5532 = vmatpush1.msra.mxu0 0.0
      %5533 = vmatprep.subr.mxu0 0.0
      %5534 = vmatpush1.msra.mxu0 0.0
      %5535 = vmatprep.subr.mxu0 0.0
      %5536 = vmatpush1.msra.mxu0 0.0
      %5537 = vmatprep.subr.mxu0 0.0
      %5538 = vmatpush1.msra.mxu0 0.0
      %5539 = vmatprep.subr.mxu0 0.0
      %5540 = vmatpush1.msra.mxu0 0.0
      %5541 = vmatprep.subr.mxu0 0.0
      %5542 = vmatpush1.msra.mxu0 %v5461
      %5543 = vmatprep.subr.mxu0 0.0
      %5544 = vmatpush2.msra.mxu0 0.0
      %5545 = vmatprep.subr.mxu0 0.0
      %5546 = vmatpush2.msra.mxu0 0.0
      %5547 = vmatprep.subr.mxu0 0.0
      %5548 = vmatpush2.msra.mxu0 0.0
      %5549 = vmatprep.subr.mxu0 0.0
      %5550 = vmatpush2.msra.mxu0 0.0
      %5551 = vmatprep.subr.mxu0 0.0
      %5552 = vmatpush2.msra.mxu0 0.0
      %5553 = vmatprep.subr.mxu0 0.0
      %5554 = vmatpush2.msra.mxu0 0.0
      %5555 = vmatprep.subr.mxu0 0.0
      %5556 = vmatpush2.msra.mxu0 0.0
      %5557 = vmatprep.subr.mxu0 0.0
      %5558 = vmatpush2.msra.mxu0 0.0
      %5559 = vmatprep.subr.mxu0 0.0
      %5560 = vmatpush2.msra.mxu0 0.0
      %5561 = vmatprep.subr.mxu0 0.0
      %5562 = vmatpush2.msra.mxu0 0.0
      %5563 = vmatprep.subr.mxu0 0.0
      %5564 = vmatpush2.msra.mxu0 0.0
      %5565 = vmatprep.subr.mxu0 0.0
      %5566 = vmatpush2.msra.mxu0 0.0
      %5567 = vmatprep.subr.mxu0 0.0
      %5568 = vmatpush2.msra.mxu0 0.0
      %5569 = vmatprep.subr.mxu0 0.0
      %5570 = vmatpush2.msra.mxu0 0.0
      %5571 = vmatprep.subr.mxu0 0.0
      %5572 = vmatpush2.msra.mxu0 0.0
      %5573 = vmatprep.subr.mxu0 0.0
      %5574 = vmatpush2.msra.mxu0 0.0
      %5575 = vmatprep.mubr.f32.mxu0 0.0
      %5576 = vmatmul.mubr.f32.gmra.mxu0 %v5487
      %v5577 = vpop.f32.mrf.mxu0
      %v5578 = vadd.f32 0.0, %v5577
      %v5579 = vpop.f32.mrf.mxu0
      %5580 = vmatprep.mubr.f32.mxu0 0.0
      %5581 = vmatmul.mubr.f32.gmra.mxu0 %v5489
      %v5582 = vpop.f32.mrf.mxu0
      %v5583 = vadd.f32 0.0, %v5582
      %v5584 = vpop.f32.mrf.mxu0
      %5585 = vmatprep.mubr.f32.mxu0 0.0
      %5586 = vmatmul.mubr.f32.gmra.mxu0 %v5491
      %v5587 = vpop.f32.mrf.mxu0
      %v5588 = vadd.f32 0.0, %v5587
      %v5589 = vpop.f32.mrf.mxu0
      %5590 = vmatprep.mubr.f32.mxu0 0.0
      %5591 = vmatmul.mubr.f32.gmra.mxu0 %v5493
      %v5592 = vpop.f32.mrf.mxu0
      %v5593 = vadd.f32 0.0, %v5592
      %v5594 = vpop.f32.mrf.mxu0
      %5595 = vmatprep.mubr.f32.mxu0 0.0
      %5596 = vmatmul.mubr.f32.gmra.mxu0 %v5495
      %v5597 = vpop.f32.mrf.mxu0
      %v5598 = vadd.f32 0.0, %v5597
      %v5599 = vpop.f32.mrf.mxu0
      %5600 = vmatprep.mubr.f32.mxu0 0.0
      %5601 = vmatmul.mubr.f32.gmra.mxu0 %v5497
      %v5602 = vpop.f32.mrf.mxu0
      %v5603 = vadd.f32 0.0, %v5602
      %v5604 = vpop.f32.mrf.mxu0
      %5605 = vmatprep.mubr.f32.mxu0 0.0
      %5606 = vmatmul.mubr.f32.gmra.mxu0 %v5499
      %v5607 = vpop.f32.mrf.mxu0
      %v5608 = vadd.f32 0.0, %v5607
      %v5609 = vpop.f32.mrf.mxu0
      %5610 = vmatprep.mubr.f32.mxu0 0.0
      %5611 = vmatmul.mubr.f32.gmra.mxu0 %v5501
      %v5612 = vpop.f32.mrf.mxu0
      %v5613 = vadd.f32 0.0, %v5612
      %v5614 = vpop.f32.mrf.mxu0
      %5615 = vmatprep.mubr.f32.mxu0 0.0
      %5616 = vmatmul.mubr.f32.gmra.mxu0 %v5503
      %v5617 = vpop.f32.mrf.mxu0
      %v5618 = vadd.f32 0.0, %v5617
      %v5619 = vpop.f32.mrf.mxu0
      %5620 = vmatprep.mubr.f32.mxu0 0.0
      %5621 = vmatmul.mubr.f32.gmra.mxu0 %v5505
      %v5622 = vpop.f32.mrf.mxu0
      %v5623 = vadd.f32 0.0, %v5622
      %v5624 = vpop.f32.mrf.mxu0
      %5625 = vmatprep.mubr.f32.mxu0 0.0
      %5626 = vmatmul.mubr.f32.gmra.mxu0 %v5507
      %v5627 = vpop.f32.mrf.mxu0
      %v5628 = vadd.f32 0.0, %v5627
      %v5629 = vpop.f32.mrf.mxu0
      %5630 = vmatprep.mubr.f32.mxu0 0.0
      %5631 = vmatmul.mubr.f32.gmra.mxu0 %v5509
      %v5632 = vpop.f32.mrf.mxu0
      %v5633 = vadd.f32 0.0, %v5632
      %v5634 = vpop.f32.mrf.mxu0
      %5635 = vdwg.mxu0
      %v5636 = vadd.f32 %v5449, %v5578
      %v5637 = vadd.f32 %v5450, %v5583
      %v5638 = vadd.f32 %v5451, %v5588
      %v5639 = vadd.f32 %v5452, %v5593
      %v5640 = vadd.f32 %v5453, %v5598
      %v5641 = vadd.f32 %v5454, %v5603
      %v5642 = vadd.f32 %v5455, %v5608
      %v5643 = vadd.f32 %v5456, %v5613
      %v5644 = vadd.f32 %v5457, %v5618
      %v5645 = vadd.f32 %v5458, %v5623
      %v5646 = vadd.f32 %v5459, %v5628
      %v5647 = vadd.f32 %v5460, %v5633
      %v5648 = vld [vmem:[%s4 + $0x28] sm:$0xff]
      %v5649 = vrot.slane %v4724, 4
      %v5650 = vrot.slane %v4729, 4
      %v5651 = vsel %vm518, %v5649, %v5650
      %v5652 = vrot.slane %v4734, 4
      %v5653 = vsel %vm518, %v5650, %v5652
      %v5654 = vrot.slane %v4739, 4
      %v5655 = vsel %vm518, %v5652, %v5654
      %v5656 = vrot.slane %v4744, 4
      %v5657 = vsel %vm518, %v5654, %v5656
      %v5658 = vrot.slane %v4749, 4
      %v5659 = vsel %vm518, %v5656, %v5658
      %v5660 = vrot.slane %v4754, 4
      %v5661 = vsel %vm518, %v5658, %v5660
      %v5662 = vrot.slane %v4759, 4
      %v5663 = vsel %vm518, %v5660, %v5662
      %v5664 = vrot.slane %v4764, 4
      %v5665 = vsel %vm518, %v5662, %v5664
      %v5666 = vrot.slane %v4769, 4
      %v5667 = vsel %vm518, %v5664, %v5666
      %v5668 = vrot.slane %v4774, 4
      %v5669 = vsel %vm518, %v5666, %v5668
      %v5670 = vrot.slane %v4779, 4
      %v5671 = vsel %vm518, %v5668, %v5670
      %v5672 = vrot.slane %v4784, 4
      %v5673 = vsel %vm518, %v5670, %v5672
      %v5674 = vsel %vm4832, %v5651, 0
      %v5676 = vsel %vm4832, %v5653, 0
      %v5678 = vsel %vm4832, %v5655, 0
      %v5680 = vsel %vm4832, %v5657, 0
      %v5682 = vsel %vm4832, %v5659, 0
      %v5684 = vsel %vm4832, %v5661, 0
      %v5686 = vsel %vm4832, %v5663, 0
      %v5688 = vsel %vm4832, %v5665, 0
      %v5690 = vsel %vm4832, %v5667, 0
      %v5692 = vsel %vm4832, %v5669, 0
      %v5694 = vsel %vm4832, %v5671, 0
      %v5696 = vsel %vm4832, %v5673, 0
      %5698 = vmatprep.subr.mxu0 0.0
      %5699 = vmatpush1.msra.mxu0 0.0
      %5700 = vmatprep.subr.mxu0 0.0
      %5701 = vmatpush1.msra.mxu0 0.0
      %5702 = vmatprep.subr.mxu0 0.0
      %5703 = vmatpush1.msra.mxu0 0.0
      %5704 = vmatprep.subr.mxu0 0.0
      %5705 = vmatpush1.msra.mxu0 0.0
      %5706 = vmatprep.subr.mxu0 0.0
      %5707 = vmatpush1.msra.mxu0 0.0
      %5708 = vmatprep.subr.mxu0 0.0
      %5709 = vmatpush1.msra.mxu0 0.0
      %5710 = vmatprep.subr.mxu0 0.0
      %5711 = vmatpush1.msra.mxu0 0.0
      %5712 = vmatprep.subr.mxu0 0.0
      %5713 = vmatpush1.msra.mxu0 0.0
      %5714 = vmatprep.subr.mxu0 0.0
      %5715 = vmatpush1.msra.mxu0 0.0
      %5716 = vmatprep.subr.mxu0 0.0
      %5717 = vmatpush1.msra.mxu0 0.0
      %5718 = vmatprep.subr.mxu0 0.0
      %5719 = vmatpush1.msra.mxu0 0.0
      %5720 = vmatprep.subr.mxu0 0.0
      %5721 = vmatpush1.msra.mxu0 0.0
      %5722 = vmatprep.subr.mxu0 0.0
      %5723 = vmatpush1.msra.mxu0 0.0
      %5724 = vmatprep.subr.mxu0 0.0
      %5725 = vmatpush1.msra.mxu0 0.0
      %5726 = vmatprep.subr.mxu0 0.0
      %5727 = vmatpush1.msra.mxu0 0.0
      %5728 = vmatprep.subr.mxu0 0.0
      %5729 = vmatpush1.msra.mxu0 %v5648
      %5730 = vmatprep.subr.mxu0 0.0
      %5731 = vmatpush2.msra.mxu0 0.0
      %5732 = vmatprep.subr.mxu0 0.0
      %5733 = vmatpush2.msra.mxu0 0.0
      %5734 = vmatprep.subr.mxu0 0.0
      %5735 = vmatpush2.msra.mxu0 0.0
      %5736 = vmatprep.subr.mxu0 0.0
      %5737 = vmatpush2.msra.mxu0 0.0
      %5738 = vmatprep.subr.mxu0 0.0
      %5739 = vmatpush2.msra.mxu0 0.0
      %5740 = vmatprep.subr.mxu0 0.0
      %5741 = vmatpush2.msra.mxu0 0.0
      %5742 = vmatprep.subr.mxu0 0.0
      %5743 = vmatpush2.msra.mxu0 0.0
      %5744 = vmatprep.subr.mxu0 0.0
      %5745 = vmatpush2.msra.mxu0 0.0
      %5746 = vmatprep.subr.mxu0 0.0
      %5747 = vmatpush2.msra.mxu0 0.0
      %5748 = vmatprep.subr.mxu0 0.0
      %5749 = vmatpush2.msra.mxu0 0.0
      %5750 = vmatprep.subr.mxu0 0.0
      %5751 = vmatpush2.msra.mxu0 0.0
      %5752 = vmatprep.subr.mxu0 0.0
      %5753 = vmatpush2.msra.mxu0 0.0
      %5754 = vmatprep.subr.mxu0 0.0
      %5755 = vmatpush2.msra.mxu0 0.0
      %5756 = vmatprep.subr.mxu0 0.0
      %5757 = vmatpush2.msra.mxu0 0.0
      %5758 = vmatprep.subr.mxu0 0.0
      %5759 = vmatpush2.msra.mxu0 0.0
      %5760 = vmatprep.subr.mxu0 0.0
      %5761 = vmatpush2.msra.mxu0 0.0
      %5762 = vmatprep.mubr.f32.mxu0 0.0
      %5763 = vmatmul.mubr.f32.gmra.mxu0 %v5674
      %v5764 = vpop.f32.mrf.mxu0
      %v5765 = vadd.f32 0.0, %v5764
      %v5766 = vpop.f32.mrf.mxu0
      %5767 = vmatprep.mubr.f32.mxu0 0.0
      %5768 = vmatmul.mubr.f32.gmra.mxu0 %v5676
      %v5769 = vpop.f32.mrf.mxu0
      %v5770 = vadd.f32 0.0, %v5769
      %v5771 = vpop.f32.mrf.mxu0
      %5772 = vmatprep.mubr.f32.mxu0 0.0
      %5773 = vmatmul.mubr.f32.gmra.mxu0 %v5678
      %v5774 = vpop.f32.mrf.mxu0
      %v5775 = vadd.f32 0.0, %v5774
      %v5776 = vpop.f32.mrf.mxu0
      %5777 = vmatprep.mubr.f32.mxu0 0.0
      %5778 = vmatmul.mubr.f32.gmra.mxu0 %v5680
      %v5779 = vpop.f32.mrf.mxu0
      %v5780 = vadd.f32 0.0, %v5779
      %v5781 = vpop.f32.mrf.mxu0
      %5782 = vmatprep.mubr.f32.mxu0 0.0
      %5783 = vmatmul.mubr.f32.gmra.mxu0 %v5682
      %v5784 = vpop.f32.mrf.mxu0
      %v5785 = vadd.f32 0.0, %v5784
      %v5786 = vpop.f32.mrf.mxu0
      %5787 = vmatprep.mubr.f32.mxu0 0.0
      %5788 = vmatmul.mubr.f32.gmra.mxu0 %v5684
      %v5789 = vpop.f32.mrf.mxu0
      %v5790 = vadd.f32 0.0, %v5789
      %v5791 = vpop.f32.mrf.mxu0
      %5792 = vmatprep.mubr.f32.mxu0 0.0
      %5793 = vmatmul.mubr.f32.gmra.mxu0 %v5686
      %v5794 = vpop.f32.mrf.mxu0
      %v5795 = vadd.f32 0.0, %v5794
      %v5796 = vpop.f32.mrf.mxu0
      %5797 = vmatprep.mubr.f32.mxu0 0.0
      %5798 = vmatmul.mubr.f32.gmra.mxu0 %v5688
      %v5799 = vpop.f32.mrf.mxu0
      %v5800 = vadd.f32 0.0, %v5799
      %v5801 = vpop.f32.mrf.mxu0
      %5802 = vmatprep.mubr.f32.mxu0 0.0
      %5803 = vmatmul.mubr.f32.gmra.mxu0 %v5690
      %v5804 = vpop.f32.mrf.mxu0
      %v5805 = vadd.f32 0.0, %v5804
      %v5806 = vpop.f32.mrf.mxu0
      %5807 = vmatprep.mubr.f32.mxu0 0.0
      %5808 = vmatmul.mubr.f32.gmra.mxu0 %v5692
      %v5809 = vpop.f32.mrf.mxu0
      %v5810 = vadd.f32 0.0, %v5809
      %v5811 = vpop.f32.mrf.mxu0
      %5812 = vmatprep.mubr.f32.mxu0 0.0
      %5813 = vmatmul.mubr.f32.gmra.mxu0 %v5694
      %v5814 = vpop.f32.mrf.mxu0
      %v5815 = vadd.f32 0.0, %v5814
      %v5816 = vpop.f32.mrf.mxu0
      %5817 = vmatprep.mubr.f32.mxu0 0.0
      %5818 = vmatmul.mubr.f32.gmra.mxu0 %v5696
      %v5819 = vpop.f32.mrf.mxu0
      %v5820 = vadd.f32 0.0, %v5819
      %v5821 = vpop.f32.mrf.mxu0
      %5822 = vdwg.mxu0
      %v5823 = vadd.f32 %v5636, %v5765
      %v5824 = vadd.f32 %v5637, %v5770
      %v5825 = vadd.f32 %v5638, %v5775
      %v5826 = vadd.f32 %v5639, %v5780
      %v5827 = vadd.f32 %v5640, %v5785
      %v5828 = vadd.f32 %v5641, %v5790
      %v5829 = vadd.f32 %v5642, %v5795
      %v5830 = vadd.f32 %v5643, %v5800
      %v5831 = vadd.f32 %v5644, %v5805
      %v5832 = vadd.f32 %v5645, %v5810
      %v5833 = vadd.f32 %v5646, %v5815
      %v5834 = vadd.f32 %v5647, %v5820
      %v5835 = vld [vmem:[%s4 + $0x30] sm:$0xff]
      %v5837 = vrot.slane %v4789, 4
      %v5838 = vsel %vm518, %v5672, %v5837
      %v5839 = vsel %vm4832, %v5838, 0
      %5841 = vmatprep.subr.mxu0 0.0
      %5842 = vmatpush1.msra.mxu0 0.0
      %5843 = vmatprep.subr.mxu0 0.0
      %5844 = vmatpush1.msra.mxu0 0.0
      %5845 = vmatprep.subr.mxu0 0.0
      %5846 = vmatpush1.msra.mxu0 0.0
      %5847 = vmatprep.subr.mxu0 0.0
      %5848 = vmatpush1.msra.mxu0 0.0
      %5849 = vmatprep.subr.mxu0 0.0
      %5850 = vmatpush1.msra.mxu0 0.0
      %5851 = vmatprep.subr.mxu0 0.0
      %5852 = vmatpush1.msra.mxu0 0.0
      %5853 = vmatprep.subr.mxu0 0.0
      %5854 = vmatpush1.msra.mxu0 0.0
      %5855 = vmatprep.subr.mxu0 0.0
      %5856 = vmatpush1.msra.mxu0 0.0
      %5857 = vmatprep.subr.mxu0 0.0
      %5858 = vmatpush1.msra.mxu0 0.0
      %5859 = vmatprep.subr.mxu0 0.0
      %5860 = vmatpush1.msra.mxu0 0.0
      %5861 = vmatprep.subr.mxu0 0.0
      %5862 = vmatpush1.msra.mxu0 0.0
      %5863 = vmatprep.subr.mxu0 0.0
      %5864 = vmatpush1.msra.mxu0 0.0
      %5865 = vmatprep.subr.mxu0 0.0
      %5866 = vmatpush1.msra.mxu0 0.0
      %5867 = vmatprep.subr.mxu0 0.0
      %5868 = vmatpush1.msra.mxu0 0.0
      %5869 = vmatprep.subr.mxu0 0.0
      %5870 = vmatpush1.msra.mxu0 0.0
      %5871 = vmatprep.subr.mxu0 0.0
      %5872 = vmatpush1.msra.mxu0 %v5835
      %5873 = vmatprep.subr.mxu0 0.0
      %5874 = vmatpush2.msra.mxu0 0.0
      %5875 = vmatprep.subr.mxu0 0.0
      %5876 = vmatpush2.msra.mxu0 0.0
      %5877 = vmatprep.subr.mxu0 0.0
      %5878 = vmatpush2.msra.mxu0 0.0
      %5879 = vmatprep.subr.mxu0 0.0
      %5880 = vmatpush2.msra.mxu0 0.0
      %5881 = vmatprep.subr.mxu0 0.0
      %5882 = vmatpush2.msra.mxu0 0.0
      %5883 = vmatprep.subr.mxu0 0.0
      %5884 = vmatpush2.msra.mxu0 0.0
      %5885 = vmatprep.subr.mxu0 0.0
      %5886 = vmatpush2.msra.mxu0 0.0
      %5887 = vmatprep.subr.mxu0 0.0
      %5888 = vmatpush2.msra.mxu0 0.0
      %5889 = vmatprep.subr.mxu0 0.0
      %5890 = vmatpush2.msra.mxu0 0.0
      %5891 = vmatprep.subr.mxu0 0.0
      %5892 = vmatpush2.msra.mxu0 0.0
      %5893 = vmatprep.subr.mxu0 0.0
      %5894 = vmatpush2.msra.mxu0 0.0
      %5895 = vmatprep.subr.mxu0 0.0
      %5896 = vmatpush2.msra.mxu0 0.0
      %5897 = vmatprep.subr.mxu0 0.0
      %5898 = vmatpush2.msra.mxu0 0.0
      %5899 = vmatprep.subr.mxu0 0.0
      %5900 = vmatpush2.msra.mxu0 0.0
      %5901 = vmatprep.subr.mxu0 0.0
      %5902 = vmatpush2.msra.mxu0 0.0
      %5903 = vmatprep.subr.mxu0 0.0
      %5904 = vmatpush2.msra.mxu0 0.0
      %5905 = vmatprep.mubr.f32.mxu0 0.0
      %5906 = vmatmul.mubr.f32.gmra.mxu0 %v5676
      %v5907 = vpop.f32.mrf.mxu0
      %v5908 = vadd.f32 0.0, %v5907
      %v5909 = vpop.f32.mrf.mxu0
      %5910 = vmatprep.mubr.f32.mxu0 0.0
      %5911 = vmatmul.mubr.f32.gmra.mxu0 %v5678
      %v5912 = vpop.f32.mrf.mxu0
      %v5913 = vadd.f32 0.0, %v5912
      %v5914 = vpop.f32.mrf.mxu0
      %5915 = vmatprep.mubr.f32.mxu0 0.0
      %5916 = vmatmul.mubr.f32.gmra.mxu0 %v5680
      %v5917 = vpop.f32.mrf.mxu0
      %v5918 = vadd.f32 0.0, %v5917
      %v5919 = vpop.f32.mrf.mxu0
      %5920 = vmatprep.mubr.f32.mxu0 0.0
      %5921 = vmatmul.mubr.f32.gmra.mxu0 %v5682
      %v5922 = vpop.f32.mrf.mxu0
      %v5923 = vadd.f32 0.0, %v5922
      %v5924 = vpop.f32.mrf.mxu0
      %5925 = vmatprep.mubr.f32.mxu0 0.0
      %5926 = vmatmul.mubr.f32.gmra.mxu0 %v5684
      %v5927 = vpop.f32.mrf.mxu0
      %v5928 = vadd.f32 0.0, %v5927
      %v5929 = vpop.f32.mrf.mxu0
      %5930 = vmatprep.mubr.f32.mxu0 0.0
      %5931 = vmatmul.mubr.f32.gmra.mxu0 %v5686
      %v5932 = vpop.f32.mrf.mxu0
      %v5933 = vadd.f32 0.0, %v5932
      %v5934 = vpop.f32.mrf.mxu0
      %5935 = vmatprep.mubr.f32.mxu0 0.0
      %5936 = vmatmul.mubr.f32.gmra.mxu0 %v5688
      %v5937 = vpop.f32.mrf.mxu0
      %v5938 = vadd.f32 0.0, %v5937
      %v5939 = vpop.f32.mrf.mxu0
      %5940 = vmatprep.mubr.f32.mxu0 0.0
      %5941 = vmatmul.mubr.f32.gmra.mxu0 %v5690
      %v5942 = vpop.f32.mrf.mxu0
      %v5943 = vadd.f32 0.0, %v5942
      %v5944 = vpop.f32.mrf.mxu0
      %5945 = vmatprep.mubr.f32.mxu0 0.0
      %5946 = vmatmul.mubr.f32.gmra.mxu0 %v5692
      %v5947 = vpop.f32.mrf.mxu0
      %v5948 = vadd.f32 0.0, %v5947
      %v5949 = vpop.f32.mrf.mxu0
      %5950 = vmatprep.mubr.f32.mxu0 0.0
      %5951 = vmatmul.mubr.f32.gmra.mxu0 %v5694
      %v5952 = vpop.f32.mrf.mxu0
      %v5953 = vadd.f32 0.0, %v5952
      %v5954 = vpop.f32.mrf.mxu0
      %5955 = vmatprep.mubr.f32.mxu0 0.0
      %5956 = vmatmul.mubr.f32.gmra.mxu0 %v5696
      %v5957 = vpop.f32.mrf.mxu0
      %v5958 = vadd.f32 0.0, %v5957
      %v5959 = vpop.f32.mrf.mxu0
      %5960 = vmatprep.mubr.f32.mxu0 0.0
      %5961 = vmatmul.mubr.f32.gmra.mxu0 %v5839
      %v5962 = vpop.f32.mrf.mxu0
      %v5963 = vadd.f32 0.0, %v5962
      %v5964 = vpop.f32.mrf.mxu0
      %5965 = vdwg.mxu0
      %v5966 = vadd.f32 %v5823, %v5908
      %v5967 = vadd.f32 %v5824, %v5913
      %v5968 = vadd.f32 %v5825, %v5918
      %v5969 = vadd.f32 %v5826, %v5923
      %v5970 = vadd.f32 %v5827, %v5928
      %v5971 = vadd.f32 %v5828, %v5933
      %v5972 = vadd.f32 %v5829, %v5938
      %v5973 = vadd.f32 %v5830, %v5943
      %v5974 = vadd.f32 %v5831, %v5948
      %v5975 = vadd.f32 %v5832, %v5953
      %v5976 = vadd.f32 %v5833, %v5958
      %v5977 = vadd.f32 %v5834, %v5963
      %v5978 = vld [vmem:[%s4 + $0x38] sm:$0xff]
      %v5979 = vrot.slane %v4729, 5
      %v5980 = vrot.slane %v4734, 5
      %v5981 = vsel %vm3078, %v5979, %v5980
      %v5982 = vrot.slane %v4739, 5
      %v5983 = vsel %vm3078, %v5980, %v5982
      %v5984 = vrot.slane %v4744, 5
      %v5985 = vsel %vm3078, %v5982, %v5984
      %v5986 = vrot.slane %v4749, 5
      %v5987 = vsel %vm3078, %v5984, %v5986
      %v5988 = vrot.slane %v4754, 5
      %v5989 = vsel %vm3078, %v5986, %v5988
      %v5990 = vrot.slane %v4759, 5
      %v5991 = vsel %vm3078, %v5988, %v5990
      %v5992 = vrot.slane %v4764, 5
      %v5993 = vsel %vm3078, %v5990, %v5992
      %v5994 = vrot.slane %v4769, 5
      %v5995 = vsel %vm3078, %v5992, %v5994
      %v5996 = vrot.slane %v4774, 5
      %v5997 = vsel %vm3078, %v5994, %v5996
      %v5998 = vrot.slane %v4779, 5
      %v5999 = vsel %vm3078, %v5996, %v5998
      %v6000 = vrot.slane %v4784, 5
      %v6001 = vsel %vm3078, %v5998, %v6000
      %v6002 = vrot.slane %v4789, 5
      %v6003 = vsel %vm3078, %v6000, %v6002
      %v6004 = vsel %vm4832, %v5981, 0
      %v6006 = vsel %vm4832, %v5983, 0
      %v6008 = vsel %vm4832, %v5985, 0
      %v6010 = vsel %vm4832, %v5987, 0
      %v6012 = vsel %vm4832, %v5989, 0
      %v6014 = vsel %vm4832, %v5991, 0
      %v6016 = vsel %vm4832, %v5993, 0
      %v6018 = vsel %vm4832, %v5995, 0
      %v6020 = vsel %vm4832, %v5997, 0
      %v6022 = vsel %vm4832, %v5999, 0
      %v6024 = vsel %vm4832, %v6001, 0
      %v6026 = vsel %vm4832, %v6003, 0
      %6028 = vmatprep.subr.mxu0 0.0
      %6029 = vmatpush1.msra.mxu0 0.0
      %6030 = vmatprep.subr.mxu0 0.0
      %6031 = vmatpush1.msra.mxu0 0.0
      %6032 = vmatprep.subr.mxu0 0.0
      %6033 = vmatpush1.msra.mxu0 0.0
      %6034 = vmatprep.subr.mxu0 0.0
      %6035 = vmatpush1.msra.mxu0 0.0
      %6036 = vmatprep.subr.mxu0 0.0
      %6037 = vmatpush1.msra.mxu0 0.0
      %6038 = vmatprep.subr.mxu0 0.0
      %6039 = vmatpush1.msra.mxu0 0.0
      %6040 = vmatprep.subr.mxu0 0.0
      %6041 = vmatpush1.msra.mxu0 0.0
      %6042 = vmatprep.subr.mxu0 0.0
      %6043 = vmatpush1.msra.mxu0 0.0
      %6044 = vmatprep.subr.mxu0 0.0
      %6045 = vmatpush1.msra.mxu0 0.0
      %6046 = vmatprep.subr.mxu0 0.0
      %6047 = vmatpush1.msra.mxu0 0.0
      %6048 = vmatprep.subr.mxu0 0.0
      %6049 = vmatpush1.msra.mxu0 0.0
      %6050 = vmatprep.subr.mxu0 0.0
      %6051 = vmatpush1.msra.mxu0 0.0
      %6052 = vmatprep.subr.mxu0 0.0
      %6053 = vmatpush1.msra.mxu0 0.0
      %6054 = vmatprep.subr.mxu0 0.0
      %6055 = vmatpush1.msra.mxu0 0.0
      %6056 = vmatprep.subr.mxu0 0.0
      %6057 = vmatpush1.msra.mxu0 0.0
      %6058 = vmatprep.subr.mxu0 0.0
      %6059 = vmatpush1.msra.mxu0 %v5978
      %6060 = vmatprep.subr.mxu0 0.0
      %6061 = vmatpush2.msra.mxu0 0.0
      %6062 = vmatprep.subr.mxu0 0.0
      %6063 = vmatpush2.msra.mxu0 0.0
      %6064 = vmatprep.subr.mxu0 0.0
      %6065 = vmatpush2.msra.mxu0 0.0
      %6066 = vmatprep.subr.mxu0 0.0
      %6067 = vmatpush2.msra.mxu0 0.0
      %6068 = vmatprep.subr.mxu0 0.0
      %6069 = vmatpush2.msra.mxu0 0.0
      %6070 = vmatprep.subr.mxu0 0.0
      %6071 = vmatpush2.msra.mxu0 0.0
      %6072 = vmatprep.subr.mxu0 0.0
      %6073 = vmatpush2.msra.mxu0 0.0
      %6074 = vmatprep.subr.mxu0 0.0
      %6075 = vmatpush2.msra.mxu0 0.0
      %6076 = vmatprep.subr.mxu0 0.0
      %6077 = vmatpush2.msra.mxu0 0.0
      %6078 = vmatprep.subr.mxu0 0.0
      %6079 = vmatpush2.msra.mxu0 0.0
      %6080 = vmatprep.subr.mxu0 0.0
      %6081 = vmatpush2.msra.mxu0 0.0
      %6082 = vmatprep.subr.mxu0 0.0
      %6083 = vmatpush2.msra.mxu0 0.0
      %6084 = vmatprep.subr.mxu0 0.0
      %6085 = vmatpush2.msra.mxu0 0.0
      %6086 = vmatprep.subr.mxu0 0.0
      %6087 = vmatpush2.msra.mxu0 0.0
      %6088 = vmatprep.subr.mxu0 0.0
      %6089 = vmatpush2.msra.mxu0 0.0
      %6090 = vmatprep.subr.mxu0 0.0
      %6091 = vmatpush2.msra.mxu0 0.0
      %6092 = vmatprep.mubr.f32.mxu0 0.0
      %6093 = vmatmul.mubr.f32.gmra.mxu0 %v6004
      %v6094 = vpop.f32.mrf.mxu0
      %v6095 = vadd.f32 0.0, %v6094
      %v6096 = vpop.f32.mrf.mxu0
      %6097 = vmatprep.mubr.f32.mxu0 0.0
      %6098 = vmatmul.mubr.f32.gmra.mxu0 %v6006
      %v6099 = vpop.f32.mrf.mxu0
      %v6100 = vadd.f32 0.0, %v6099
      %v6101 = vpop.f32.mrf.mxu0
      %6102 = vmatprep.mubr.f32.mxu0 0.0
      %6103 = vmatmul.mubr.f32.gmra.mxu0 %v6008
      %v6104 = vpop.f32.mrf.mxu0
      %v6105 = vadd.f32 0.0, %v6104
      %v6106 = vpop.f32.mrf.mxu0
      %6107 = vmatprep.mubr.f32.mxu0 0.0
      %6108 = vmatmul.mubr.f32.gmra.mxu0 %v6010
      %v6109 = vpop.f32.mrf.mxu0
      %v6110 = vadd.f32 0.0, %v6109
      %v6111 = vpop.f32.mrf.mxu0
      %6112 = vmatprep.mubr.f32.mxu0 0.0
      %6113 = vmatmul.mubr.f32.gmra.mxu0 %v6012
      %v6114 = vpop.f32.mrf.mxu0
      %v6115 = vadd.f32 0.0, %v6114
      %v6116 = vpop.f32.mrf.mxu0
      %6117 = vmatprep.mubr.f32.mxu0 0.0
      %6118 = vmatmul.mubr.f32.gmra.mxu0 %v6014
      %v6119 = vpop.f32.mrf.mxu0
      %v6120 = vadd.f32 0.0, %v6119
      %v6121 = vpop.f32.mrf.mxu0
      %6122 = vmatprep.mubr.f32.mxu0 0.0
      %6123 = vmatmul.mubr.f32.gmra.mxu0 %v6016
      %v6124 = vpop.f32.mrf.mxu0
      %v6125 = vadd.f32 0.0, %v6124
      %v6126 = vpop.f32.mrf.mxu0
      %6127 = vmatprep.mubr.f32.mxu0 0.0
      %6128 = vmatmul.mubr.f32.gmra.mxu0 %v6018
      %v6129 = vpop.f32.mrf.mxu0
      %v6130 = vadd.f32 0.0, %v6129
      %v6131 = vpop.f32.mrf.mxu0
      %6132 = vmatprep.mubr.f32.mxu0 0.0
      %6133 = vmatmul.mubr.f32.gmra.mxu0 %v6020
      %v6134 = vpop.f32.mrf.mxu0
      %v6135 = vadd.f32 0.0, %v6134
      %v6136 = vpop.f32.mrf.mxu0
      %6137 = vmatprep.mubr.f32.mxu0 0.0
      %6138 = vmatmul.mubr.f32.gmra.mxu0 %v6022
      %v6139 = vpop.f32.mrf.mxu0
      %v6140 = vadd.f32 0.0, %v6139
      %v6141 = vpop.f32.mrf.mxu0
      %6142 = vmatprep.mubr.f32.mxu0 0.0
      %6143 = vmatmul.mubr.f32.gmra.mxu0 %v6024
      %v6144 = vpop.f32.mrf.mxu0
      %v6145 = vadd.f32 0.0, %v6144
      %v6146 = vpop.f32.mrf.mxu0
      %6147 = vmatprep.mubr.f32.mxu0 0.0
      %6148 = vmatmul.mubr.f32.gmra.mxu0 %v6026
      %v6149 = vpop.f32.mrf.mxu0
      %v6150 = vadd.f32 0.0, %v6149
      %v6151 = vpop.f32.mrf.mxu0
      %6152 = vdwg.mxu0
      %v6153 = vadd.f32 %v5966, %v6095
      %v6154 = vadd.f32 %v5967, %v6100
      %v6155 = vadd.f32 %v5968, %v6105
      %v6156 = vadd.f32 %v5969, %v6110
      %v6157 = vadd.f32 %v5970, %v6115
      %v6158 = vadd.f32 %v5971, %v6120
      %v6159 = vadd.f32 %v5972, %v6125
      %v6160 = vadd.f32 %v5973, %v6130
      %v6161 = vadd.f32 %v5974, %v6135
      %v6162 = vadd.f32 %v5975, %v6140
      %v6163 = vadd.f32 %v5976, %v6145
      %v6164 = vadd.f32 %v5977, %v6150
      %v6165 = vld [vmem:[%s4 + $0x40] sm:$0xff]
      %v6166 = vrot.slane %v4729, 6
      %v6167 = vrot.slane %v4734, 6
      %v6168 = vsel %vm3529, %v6166, %v6167
      %v6169 = vrot.slane %v4739, 6
      %v6170 = vsel %vm3529, %v6167, %v6169
      %v6171 = vrot.slane %v4744, 6
      %v6172 = vsel %vm3529, %v6169, %v6171
      %v6173 = vrot.slane %v4749, 6
      %v6174 = vsel %vm3529, %v6171, %v6173
      %v6175 = vrot.slane %v4754, 6
      %v6176 = vsel %vm3529, %v6173, %v6175
      %v6177 = vrot.slane %v4759, 6
      %v6178 = vsel %vm3529, %v6175, %v6177
      %v6179 = vrot.slane %v4764, 6
      %v6180 = vsel %vm3529, %v6177, %v6179
      %v6181 = vrot.slane %v4769, 6
      %v6182 = vsel %vm3529, %v6179, %v6181
      %v6183 = vrot.slane %v4774, 6
      %v6184 = vsel %vm3529, %v6181, %v6183
      %v6185 = vrot.slane %v4779, 6
      %v6186 = vsel %vm3529, %v6183, %v6185
      %v6187 = vrot.slane %v4784, 6
      %v6188 = vsel %vm3529, %v6185, %v6187
      %v6189 = vrot.slane %v4789, 6
      %v6190 = vsel %vm3529, %v6187, %v6189
      %v6191 = vsel %vm4832, %v6168, 0
      %v6193 = vsel %vm4832, %v6170, 0
      %v6195 = vsel %vm4832, %v6172, 0
      %v6197 = vsel %vm4832, %v6174, 0
      %v6199 = vsel %vm4832, %v6176, 0
      %v6201 = vsel %vm4832, %v6178, 0
      %v6203 = vsel %vm4832, %v6180, 0
      %v6205 = vsel %vm4832, %v6182, 0
      %v6207 = vsel %vm4832, %v6184, 0
      %v6209 = vsel %vm4832, %v6186, 0
      %v6211 = vsel %vm4832, %v6188, 0
      %v6213 = vsel %vm4832, %v6190, 0
      %6215 = vmatprep.subr.mxu0 0.0
      %6216 = vmatpush1.msra.mxu0 0.0
      %6217 = vmatprep.subr.mxu0 0.0
      %6218 = vmatpush1.msra.mxu0 0.0
      %6219 = vmatprep.subr.mxu0 0.0
      %6220 = vmatpush1.msra.mxu0 0.0
      %6221 = vmatprep.subr.mxu0 0.0
      %6222 = vmatpush1.msra.mxu0 0.0
      %6223 = vmatprep.subr.mxu0 0.0
      %6224 = vmatpush1.msra.mxu0 0.0
      %6225 = vmatprep.subr.mxu0 0.0
      %6226 = vmatpush1.msra.mxu0 0.0
      %6227 = vmatprep.subr.mxu0 0.0
      %6228 = vmatpush1.msra.mxu0 0.0
      %6229 = vmatprep.subr.mxu0 0.0
      %6230 = vmatpush1.msra.mxu0 0.0
      %6231 = vmatprep.subr.mxu0 0.0
      %6232 = vmatpush1.msra.mxu0 0.0
      %6233 = vmatprep.subr.mxu0 0.0
      %6234 = vmatpush1.msra.mxu0 0.0
      %6235 = vmatprep.subr.mxu0 0.0
      %6236 = vmatpush1.msra.mxu0 0.0
      %6237 = vmatprep.subr.mxu0 0.0
      %6238 = vmatpush1.msra.mxu0 0.0
      %6239 = vmatprep.subr.mxu0 0.0
      %6240 = vmatpush1.msra.mxu0 0.0
      %6241 = vmatprep.subr.mxu0 0.0
      %6242 = vmatpush1.msra.mxu0 0.0
      %6243 = vmatprep.subr.mxu0 0.0
      %6244 = vmatpush1.msra.mxu0 0.0
      %6245 = vmatprep.subr.mxu0 0.0
      %6246 = vmatpush1.msra.mxu0 %v6165
      %6247 = vmatprep.subr.mxu0 0.0
      %6248 = vmatpush2.msra.mxu0 0.0
      %6249 = vmatprep.subr.mxu0 0.0
      %6250 = vmatpush2.msra.mxu0 0.0
      %6251 = vmatprep.subr.mxu0 0.0
      %6252 = vmatpush2.msra.mxu0 0.0
      %6253 = vmatprep.subr.mxu0 0.0
      %6254 = vmatpush2.msra.mxu0 0.0
      %6255 = vmatprep.subr.mxu0 0.0
      %6256 = vmatpush2.msra.mxu0 0.0
      %6257 = vmatprep.subr.mxu0 0.0
      %6258 = vmatpush2.msra.mxu0 0.0
      %6259 = vmatprep.subr.mxu0 0.0
      %6260 = vmatpush2.msra.mxu0 0.0
      %6261 = vmatprep.subr.mxu0 0.0
      %6262 = vmatpush2.msra.mxu0 0.0
      %6263 = vmatprep.subr.mxu0 0.0
      %6264 = vmatpush2.msra.mxu0 0.0
      %6265 = vmatprep.subr.mxu0 0.0
      %6266 = vmatpush2.msra.mxu0 0.0
      %6267 = vmatprep.subr.mxu0 0.0
      %6268 = vmatpush2.msra.mxu0 0.0
      %6269 = vmatprep.subr.mxu0 0.0
      %6270 = vmatpush2.msra.mxu0 0.0
      %6271 = vmatprep.subr.mxu0 0.0
      %6272 = vmatpush2.msra.mxu0 0.0
      %6273 = vmatprep.subr.mxu0 0.0
      %6274 = vmatpush2.msra.mxu0 0.0
      %6275 = vmatprep.subr.mxu0 0.0
      %6276 = vmatpush2.msra.mxu0 0.0
      %6277 = vmatprep.subr.mxu0 0.0
      %6278 = vmatpush2.msra.mxu0 0.0
      %6279 = vmatprep.mubr.f32.mxu0 0.0
      %6280 = vmatmul.mubr.f32.gmra.mxu0 %v6191
      %v6281 = vpop.f32.mrf.mxu0
      %v6282 = vadd.f32 0.0, %v6281
      %v6283 = vpop.f32.mrf.mxu0
      %6284 = vmatprep.mubr.f32.mxu0 0.0
      %6285 = vmatmul.mubr.f32.gmra.mxu0 %v6193
      %v6286 = vpop.f32.mrf.mxu0
      %v6287 = vadd.f32 0.0, %v6286
      %v6288 = vpop.f32.mrf.mxu0
      %6289 = vmatprep.mubr.f32.mxu0 0.0
      %6290 = vmatmul.mubr.f32.gmra.mxu0 %v6195
      %v6291 = vpop.f32.mrf.mxu0
      %v6292 = vadd.f32 0.0, %v6291
      %v6293 = vpop.f32.mrf.mxu0
      %6294 = vmatprep.mubr.f32.mxu0 0.0
      %6295 = vmatmul.mubr.f32.gmra.mxu0 %v6197
      %v6296 = vpop.f32.mrf.mxu0
      %v6297 = vadd.f32 0.0, %v6296
      %v6298 = vpop.f32.mrf.mxu0
      %6299 = vmatprep.mubr.f32.mxu0 0.0
      %6300 = vmatmul.mubr.f32.gmra.mxu0 %v6199
      %v6301 = vpop.f32.mrf.mxu0
      %v6302 = vadd.f32 0.0, %v6301
      %v6303 = vpop.f32.mrf.mxu0
      %6304 = vmatprep.mubr.f32.mxu0 0.0
      %6305 = vmatmul.mubr.f32.gmra.mxu0 %v6201
      %v6306 = vpop.f32.mrf.mxu0
      %v6307 = vadd.f32 0.0, %v6306
      %v6308 = vpop.f32.mrf.mxu0
      %6309 = vmatprep.mubr.f32.mxu0 0.0
      %6310 = vmatmul.mubr.f32.gmra.mxu0 %v6203
      %v6311 = vpop.f32.mrf.mxu0
      %v6312 = vadd.f32 0.0, %v6311
      %v6313 = vpop.f32.mrf.mxu0
      %6314 = vmatprep.mubr.f32.mxu0 0.0
      %6315 = vmatmul.mubr.f32.gmra.mxu0 %v6205
      %v6316 = vpop.f32.mrf.mxu0
      %v6317 = vadd.f32 0.0, %v6316
      %v6318 = vpop.f32.mrf.mxu0
      %6319 = vmatprep.mubr.f32.mxu0 0.0
      %6320 = vmatmul.mubr.f32.gmra.mxu0 %v6207
      %v6321 = vpop.f32.mrf.mxu0
      %v6322 = vadd.f32 0.0, %v6321
      %v6323 = vpop.f32.mrf.mxu0
      %6324 = vmatprep.mubr.f32.mxu0 0.0
      %6325 = vmatmul.mubr.f32.gmra.mxu0 %v6209
      %v6326 = vpop.f32.mrf.mxu0
      %v6327 = vadd.f32 0.0, %v6326
      %v6328 = vpop.f32.mrf.mxu0
      %6329 = vmatprep.mubr.f32.mxu0 0.0
      %6330 = vmatmul.mubr.f32.gmra.mxu0 %v6211
      %v6331 = vpop.f32.mrf.mxu0
      %v6332 = vadd.f32 0.0, %v6331
      %v6333 = vpop.f32.mrf.mxu0
      %6334 = vmatprep.mubr.f32.mxu0 0.0
      %6335 = vmatmul.mubr.f32.gmra.mxu0 %v6213
      %v6336 = vpop.f32.mrf.mxu0
      %v6337 = vadd.f32 0.0, %v6336
      %v6338 = vpop.f32.mrf.mxu0
      %6339 = vdwg.mxu0
      %v6340 = vadd.f32 %v6153, %v6282
      %v6341 = vadd.f32 %v6154, %v6287
      %v6342 = vadd.f32 %v6155, %v6292
      %v6343 = vadd.f32 %v6156, %v6297
      %v6344 = vadd.f32 %v6157, %v6302
      %v6345 = vadd.f32 %v6158, %v6307
      %v6346 = vadd.f32 %v6159, %v6312
      %v6347 = vadd.f32 %v6160, %v6317
      %v6348 = vadd.f32 %v6161, %v6322
      %v6349 = vadd.f32 %v6162, %v6327
      %v6350 = vadd.f32 %v6163, %v6332
      %v6351 = vadd.f32 %v6164, %v6337
      %v6352 = vld [vmem:[%s5] sm:$0x1]
      %v6354 = vlaneseq
      %v6355 = vshrl.u32 %v6354, 7
      %v6356 = vsub.s32 0, %v6355
      %v6357 = vrot.slane %v6352, %v6356
      %v6359 = vadd.f32 %v6340, %v6357
      %v6360 = vadd.f32 %v6341, %v6357
      %v6361 = vadd.f32 %v6342, %v6357
      %v6362 = vadd.f32 %v6343, %v6357
      %v6363 = vadd.f32 %v6344, %v6357
      %v6364 = vadd.f32 %v6345, %v6357
      %v6365 = vadd.f32 %v6346, %v6357
      %v6366 = vadd.f32 %v6347, %v6357
      %v6367 = vadd.f32 %v6348, %v6357
      %v6368 = vadd.f32 %v6349, %v6357
      %v6369 = vadd.f32 %v6350, %v6357
      %v6370 = vadd.f32 %v6351, %v6357
      %v6371 = vmax.f32 %v6359, 0.0
      %v6372 = vmax.f32 %v6360, 0.0
      %v6373 = vmax.f32 %v6361, 0.0
      %v6374 = vmax.f32 %v6362, 0.0
      %v6375 = vmax.f32 %v6363, 0.0
      %v6376 = vmax.f32 %v6364, 0.0
      %v6377 = vmax.f32 %v6365, 0.0
      %v6378 = vmax.f32 %v6366, 0.0
      %v6379 = vmax.f32 %v6367, 0.0
      %v6380 = vmax.f32 %v6368, 0.0
      %v6381 = vmax.f32 %v6369, 0.0
      %v6382 = vmax.f32 %v6370, 0.0
      %v6395 = vrot.slane %v6371, 1
      %v6396 = vrot.slane %v6372, 1
      %v6397 = vsel %vm363, %v6395, %v6396
      %v6398 = vrot.slane %v6373, 1
      %v6399 = vsel %vm363, %v6396, %v6398
      %v6400 = vrot.slane %v6374, 1
      %v6401 = vsel %vm363, %v6398, %v6400
      %v6402 = vrot.slane %v6375, 1
      %v6403 = vsel %vm363, %v6400, %v6402
      %v6404 = vrot.slane %v6376, 1
      %v6405 = vsel %vm363, %v6402, %v6404
      %v6406 = vrot.slane %v6377, 1
      %v6407 = vsel %vm363, %v6404, %v6406
      %v6408 = vrot.slane %v6378, 1
      %v6409 = vsel %vm363, %v6406, %v6408
      %v6410 = vrot.slane %v6379, 1
      %v6411 = vsel %vm363, %v6408, %v6410
      %v6412 = vrot.slane %v6380, 1
      %v6413 = vsel %vm363, %v6410, %v6412
      %v6414 = vrot.slane %v6381, 1
      %v6415 = vsel %vm363, %v6412, %v6414
      %v6416 = vrot.slane %v6382, 1
      %v6417 = vsel %vm363, %v6414, %v6416
      %v6429 = vmax.f32 %v6371, %v6397
      %v6430 = vmax.f32 %v6372, %v6399
      %v6431 = vmax.f32 %v6373, %v6401
      %v6432 = vmax.f32 %v6374, %v6403
      %v6433 = vmax.f32 %v6375, %v6405
      %v6434 = vmax.f32 %v6376, %v6407
      %v6435 = vmax.f32 %v6377, %v6409
      %v6436 = vmax.f32 %v6378, %v6411
      %v6437 = vmax.f32 %v6379, %v6413
      %v6438 = vmax.f32 %v6380, %v6415
      %v6439 = vmax.f32 %v6381, %v6417
      %v6450 = vrot.slane %v6430, 2
      %v6451 = vrot.slane %v6431, 2
      %v6452 = vsel %vm1112, %v6450, %v6451
      %v6453 = vrot.slane %v6432, 2
      %v6454 = vsel %vm1112, %v6451, %v6453
      %v6455 = vrot.slane %v6433, 2
      %v6456 = vsel %vm1112, %v6453, %v6455
      %v6457 = vrot.slane %v6434, 2
      %v6458 = vsel %vm1112, %v6455, %v6457
      %v6459 = vrot.slane %v6435, 2
      %v6460 = vsel %vm1112, %v6457, %v6459
      %v6461 = vrot.slane %v6436, 2
      %v6462 = vsel %vm1112, %v6459, %v6461
      %v6463 = vrot.slane %v6437, 2
      %v6464 = vsel %vm1112, %v6461, %v6463
      %v6465 = vrot.slane %v6438, 2
      %v6466 = vsel %vm1112, %v6463, %v6465
      %v6467 = vrot.slane %v6439, 2
      %v6468 = vsel %vm1112, %v6465, %v6467
      %v6478 = vmax.f32 %v6429, %v6452
      %v6479 = vmax.f32 %v6430, %v6454
      %v6480 = vmax.f32 %v6431, %v6456
      %v6481 = vmax.f32 %v6432, %v6458
      %v6482 = vmax.f32 %v6433, %v6460
      %v6483 = vmax.f32 %v6434, %v6462
      %v6484 = vmax.f32 %v6435, %v6464
      %v6485 = vmax.f32 %v6436, %v6466
      %v6486 = vmax.f32 %v6437, %v6468
      %v6487 = vld [vmem:[%s6] sm:$0xff]
      %v6488 = vld [vmem:[%s6 + $0x8] sm:$0xff]
      %vm6489 = vcmask 588800
      %v6491 = vsel %vm6489, %v6487, 0
      %v6494 = vsel %vm6489, %v6488, 0
      %6496 = vmatprep.subr.mxu0 0.0
      %6497 = vmatpush1.msra.mxu0 0.0
      %6498 = vmatprep.subr.mxu0 0.0
      %6499 = vmatpush1.msra.mxu0 0.0
      %6500 = vmatprep.subr.mxu0 0.0
      %6501 = vmatpush1.msra.mxu0 0.0
      %6502 = vmatprep.subr.mxu0 0.0
      %6503 = vmatpush1.msra.mxu0 0.0
      %6504 = vmatprep.subr.mxu0 0.0
      %6505 = vmatpush1.msra.mxu0 0.0
      %6506 = vmatprep.subr.mxu0 0.0
      %6507 = vmatpush1.msra.mxu0 0.0
      %6508 = vmatprep.subr.mxu0 0.0
      %6509 = vmatpush1.msra.mxu0 0.0
      %6510 = vmatprep.subr.mxu0 0.0
      %6511 = vmatpush1.msra.mxu0 %v6486
      %6512 = vmatprep.subr.mxu0 0.0
      %6513 = vmatpush1.msra.mxu0 %v6485
      %6514 = vmatprep.subr.mxu0 0.0
      %6515 = vmatpush1.msra.mxu0 %v6484
      %6516 = vmatprep.subr.mxu0 0.0
      %6517 = vmatpush1.msra.mxu0 %v6483
      %6518 = vmatprep.subr.mxu0 0.0
      %6519 = vmatpush1.msra.mxu0 %v6482
      %6520 = vmatprep.subr.mxu0 0.0
      %6521 = vmatpush1.msra.mxu0 %v6481
      %6522 = vmatprep.subr.mxu0 0.0
      %6523 = vmatpush1.msra.mxu0 %v6480
      %6524 = vmatprep.subr.mxu0 0.0
      %6525 = vmatpush1.msra.mxu0 %v6479
      %6526 = vmatprep.subr.mxu0 0.0
      %6527 = vmatpush1.msra.mxu0 %v6478
      %6528 = vmatprep.subr.mxu0 0.0
      %6529 = vmatpush2.msra.mxu0 0.0
      %6530 = vmatprep.subr.mxu0 0.0
      %6531 = vmatpush2.msra.mxu0 0.0
      %6532 = vmatprep.subr.mxu0 0.0
      %6533 = vmatpush2.msra.mxu0 0.0
      %6534 = vmatprep.subr.mxu0 0.0
      %6535 = vmatpush2.msra.mxu0 0.0
      %6536 = vmatprep.subr.mxu0 0.0
      %6537 = vmatpush2.msra.mxu0 0.0
      %6538 = vmatprep.subr.mxu0 0.0
      %6539 = vmatpush2.msra.mxu0 0.0
      %6540 = vmatprep.subr.mxu0 0.0
      %6541 = vmatpush2.msra.mxu0 0.0
      %6542 = vmatprep.subr.mxu0 0.0
      %6543 = vmatpush2.msra.mxu0 0.0
      %6544 = vmatprep.subr.mxu0 0.0
      %6545 = vmatpush2.msra.mxu0 0.0
      %6546 = vmatprep.subr.mxu0 0.0
      %6547 = vmatpush2.msra.mxu0 0.0
      %6548 = vmatprep.subr.mxu0 0.0
      %6549 = vmatpush2.msra.mxu0 0.0
      %6550 = vmatprep.subr.mxu0 0.0
      %6551 = vmatpush2.msra.mxu0 0.0
      %6552 = vmatprep.subr.mxu0 0.0
      %6553 = vmatpush2.msra.mxu0 0.0
      %6554 = vmatprep.subr.mxu0 0.0
      %6555 = vmatpush2.msra.mxu0 0.0
      %6556 = vmatprep.subr.mxu0 0.0
      %6557 = vmatpush2.msra.mxu0 0.0
      %6558 = vmatprep.subr.mxu0 0.0
      %6559 = vmatpush2.msra.mxu0 0.0
      %6560 = vmatprep.mubr.f32.mxu0 0.0
      %6561 = vmatmul.mubr.f32.gmra.mxu0 %v6491
      %v6562 = vpop.f32.mrf.mxu0
      %v6563 = vadd.f32 0.0, %v6562
      %v6564 = vpop.f32.mrf.mxu0
      %6565 = vmatprep.mubr.f32.mxu0 0.0
      %6566 = vmatmul.mubr.f32.gmra.mxu0 %v6494
      %v6567 = vpop.f32.mrf.mxu0
      %v6568 = vadd.f32 0.0, %v6567
      %v6569 = vpop.f32.mrf.mxu0
      %6570 = vdwg.mxu0
      %6571 = vst.msk [vmem:[%s278] sm:$0xff] %vm4466, %v6563
      %6572 = vst.msk [vmem:[%s278 + $0x8] sm:$0xff] %vm4466, %v6568
      %p6573 = scmp.lt.s32.totalorder %s18, 1
      %s6574 = scalar_select %p6573, %s18, 1
      %s6575 = smul.addr %s6574, 2
      %s6576 = smul.addr %s6575, 8
      %s6577 = scalar_lea.vmem %s7, %s6576
      // Predicated region
      $region49: #{fwd.1} parent=47 // pred_check
        %p6578 = pneg %p188
      $region50: #{fwd.1} parent=47 // pred_check_branch
        %6580 = sbr.rel (%p6578) target = $region52
      $region51: #{fwd.1} parent=47 // pred_region
        _
      $region52: #{fwd.1} parent=47 // pred_fallthru
        _
    $region48: #{fwd.1} parent=5 // pred_fallthru
      _
    %p6581 = scmp.le.s32.totalorder 2, %s13
    // Predicated region
    $region53: #{fwd.1} parent=5 // pred_check
      %p6582 = pneg %p6581
    $region54: #{fwd.1} parent=5 // pred_check_branch
      %6584 = sbr.rel (%p6582) target = $region56
    $region55: #{fwd.1} parent=5 // pred_region
      %s6585 = ssub.s32 %s13, 2
      // Predicated region
      $region57: #{fwd.1} parent=55 // pred_check
        %p6586 = pneg %p194
      $region58: #{fwd.1} parent=55 // pred_check_branch
        %6588 = sbr.rel (%p6586) target = $region60
      $region59: #{fwd.1} parent=55 // pred_region
        %p6589 = scmp.lt.s32.totalorder %s19, 1
        %s6590 = scalar_select %p6589, %s19, 1
        %s6591 = smul.addr %s6590, 2
        %s6592 = smul.addr %s6591, 8
        %s6593 = scalar_lea.vmem %s7, %s6592
      $region60: #{fwd.1} parent=55 // pred_fallthru
        _
    $region56: #{fwd.1} parent=5 // pred_fallthru
      _
  $region6: #{fwd.1} parent=0 // loop_footer
    %s17 = sadd.s32 1, %s13
  $region7: #{fwd.1} parent=0 // loop_footer_branch
    %12 = sbr.rel target = $region3
  $region8: #{fwd.1} parent=0 // loop_exit
    _

</llo_original>
